<compile_context>
chip_gen: v5e
topology: v5e:2x2
jax: 0.10.0
libtpu: 0.0.40
codegen_flags: <defaults>
</compile_context>

<pallas_src>
import functools

import jax
import jax.numpy as jnp
from jax.experimental import pallas as pl
from jax.experimental.pallas import tpu as pltpu


def _attn_gated_kernel(x_ref, wab_ref, bab_ref, wc_ref, bc_ref, a_ref, *,
                       n_tasks, bf16_act):
    """One tile_n-row slab of instances; weights are resident across the grid."""
    f32 = jnp.float32
    D = wab_ref.shape[1] // 2

    # In-kernel bf16 cast of the streamed x tile; f32 accumulation on the MXU.
    x = x_ref[...].astype(jnp.bfloat16)                                          # (T, L)
    pre = jnp.dot(x, wab_ref[...], preferred_element_type=f32) + bab_ref[...]    # (T, 2D) f32

    if bf16_act:
        # v6e/v7x: EUP/VPU have bf16 paths at ~2x the f32 rate.
        pre = pre.astype(jnp.bfloat16)

    a = jnp.tanh(pre[:, :D])
    # sigmoid(p) == 0.5*(tanh(0.5*p)+1): one EUP op instead of exp + reciprocal.
    b = 0.5 * (jnp.tanh(0.5 * pre[:, D:]) + 1.0)
    ab = a * b                                                                   # (T, D)

    if n_tasks == 1:
        # Degenerate (D -> 1) projection on the VPU/XLU: broadcast-multiply +
        # cross-lane reduce (f32 accumulation), stored as a lane-dense (1, T) row.
        prod = (ab * wc_ref[...].astype(ab.dtype)).astype(f32)                   # (T, D) f32
        col = jnp.sum(prod, axis=-1)                                             # (T,)
        a_ref[...] = col.reshape(1, -1) + bc_ref[...]                            # (1, T)
    else:
        # Small MXU matmul; wc arrives pre-transposed as (D, n_tasks).
        wc = wc_ref[...].astype(ab.dtype)
        a_ref[...] = jnp.dot(ab, wc, preferred_element_type=f32) + bc_ref[...]   # (T, n_tasks)


def _choose_tile_n(n, max_tile=1024):
    """Big enough to amortize per-step overhead, small enough for >=2 grid steps."""
    if n <= 256:
        return 256
    half = -(-n // 2)                       # cdiv(n, 2)
    half = ((half + 255) // 256) * 256      # round up to a multiple of 256
    return max(256, min(max_tile, half))


def _bf16_act_default():
    """Enable bf16 gating math only on generations with bf16 VPU/EUP (v6e / v7x)."""
    try:
        kind = jax.devices()[0].device_kind.lower()
    except Exception:
        return False
    return ("v6" in kind) or ("v7" in kind) or ("trillium" in kind)


def attn_net_gated_forward(x, params, *, tile_n=None, bf16_act=None):
    """Pallas equivalent of Attn_Net_Gated.forward: returns (A, x)."""
    N, L = x.shape
    n_tasks, D = params["wc"].shape

    if tile_n is None:
        tile_n = _choose_tile_n(N)
    if bf16_act is None:
        bf16_act = _bf16_act_default()

    num_tiles = pl.cdiv(N, tile_n)
    n_pad = num_tiles * tile_n  # garbage tail rows of the partial last block are sliced off

    # bf16 matmul weight (f32 accumulation in-kernel); biases / Wc stay f32.
    wab = jnp.concatenate([params["wa"], params["wb"]], axis=1).astype(jnp.bfloat16)  # (L, 2D)
    bab = jnp.concatenate([params["ba"], params["bb"]], axis=1).astype(jnp.float32)   # (1, 2D)
    bc = params["bc"].astype(jnp.float32).reshape(1, n_tasks)                          # (1, n_tasks)

    single = (n_tasks == 1)
    if single:
        wc = params["wc"].astype(jnp.float32).reshape(1, D)                 # (1, D)
        wc_spec = pl.BlockSpec((1, D), lambda i: (0, 0))
        out_shape = jax.ShapeDtypeStruct((1, n_pad), jnp.float32)           # lane-dense rows
        out_spec = pl.BlockSpec((1, tile_n), lambda i: (0, i))
    else:
        wc = params["wc"].astype(jnp.float32).T                             # (D, n_tasks)
        wc_spec = pl.BlockSpec((D, n_tasks), lambda i: (0, 0))
        out_shape = jax.ShapeDtypeStruct((n_pad, n_tasks), jnp.float32)
        out_spec = pl.BlockSpec((tile_n, n_tasks), lambda i: (i, 0))

    kernel = functools.partial(_attn_gated_kernel, n_tasks=n_tasks, bf16_act=bf16_act)

    flops = 2 * n_pad * L * (2 * D) + 2 * n_pad * D * n_tasks
    transcendentals = 2 * n_pad * D  # tanh + tanh-based sigmoid
    bytes_accessed = (x.size * x.dtype.itemsize + wab.size * 2 + bab.size * 4
                      + wc.size * 4 + bc.size * 4 + n_pad * n_tasks * 4)

    out = pl.pallas_call(
        kernel,
        out_shape=out_shape,
        grid_spec=pltpu.PrefetchScalarGridSpec(
            num_scalar_prefetch=0,
            grid=(num_tiles,),
            in_specs=[
                pl.BlockSpec((tile_n, L), lambda i: (i, 0)),    # x tile (streamed f32, cast in-kernel)
                pl.BlockSpec((L, 2 * D), lambda i: (0, 0)),     # Wa|Wb  (resident, bf16)
                pl.BlockSpec((1, 2 * D), lambda i: (0, 0)),     # ba|bb  (resident, f32)
                wc_spec,                                        # Wc     (resident, f32)
                pl.BlockSpec((1, n_tasks), lambda i: (0, 0)),   # bc     (resident, f32)
            ],
            out_specs=out_spec,
        ),
        compiler_params=pltpu.CompilerParams(
            dimension_semantics=("parallel",),          # independent tiles -> megacore on v7x
            vmem_limit_bytes=32 * 1024 * 1024,          # keep <= 32 MiB (v7x has 64 MiB/TC)
        ),
        cost_estimate=pl.CostEstimate(
            flops=flops,
            transcendentals=transcendentals,
            bytes_accessed=bytes_accessed,
        ),
    )(x, wab, bab, wc, bc)

    if single:
        A = out[0, :N].reshape(N, 1)
    else:
        A = out[:N]
    return A, x


def attn_net_gated_ref(x, params):
    """Pure-JAX f32 reference of the PyTorch forward."""
    a = jnp.tanh(x @ params["wa"] + params["ba"])
    b = jax.nn.sigmoid(x @ params["wb"] + params["bb"])
    A = (a * b) @ params["wc"].T + params["bc"]
    return A, x


def _xavier_normal(key, fan_in, fan_out, shape):
    std = (2.0 / (fan_in + fan_out)) ** 0.5
    return std * jax.random.normal(key, shape, jnp.float32)


def init_params(key, L=1024, D=256, n_tasks=1):
    """wa/wb stored pre-transposed to (in, out); wc kept PyTorch-style (n_tasks, D)."""
    ka, kb, kc = jax.random.split(key, 3)
    return {
        "wa": _xavier_normal(ka, L, D, (L, D)),
        "ba": jnp.zeros((1, D), jnp.float32),
        "wb": _xavier_normal(kb, L, D, (L, D)),
        "bb": jnp.zeros((1, D), jnp.float32),
        "wc": _xavier_normal(kc, D, n_tasks, (n_tasks, D)),
        "bc": jnp.zeros((1, n_tasks), jnp.float32),
    }


if __name__ == "__main__":
    key = jax.random.PRNGKey(0)
    k_x, k_p1, k_p2 = jax.random.split(key, 3)

    # Module defaults: L=1024, D=256; ragged bag of 600 instances exercises the
    # partial last grid block and the >=2-step grid.
    N, L, D = 600, 1024, 256
    x = jax.random.normal(k_x, (N, L), jnp.float32)

    # n_tasks = 1 (module default): lane-dense VPU projection path.
    params1 = init_params(k_p1, L=L, D=D, n_tasks=1)
    A1, x_out = attn_net_gated_forward(x, params1)
    jax.block_until_ready((A1, x_out))
    A1_ref, _ = attn_net_gated_ref(x, params1)
    assert A1.shape == (N, 1)
    assert x_out.shape == x.shape and bool(jnp.array_equal(x_out, x))
    err1 = float(jnp.max(jnp.abs(A1 - A1_ref)))
    assert bool(jnp.allclose(A1, A1_ref, atol=5e-2, rtol=5e-2)), f"n_tasks=1 max abs err {err1}"

    # n_tasks = 3: MXU projection path.
    params3 = init_params(k_p2, L=L, D=D, n_tasks=3)
    A3, _ = attn_net_gated_forward(x, params3)
    jax.block_until_ready(A3)
    A3_ref, _ = attn_net_gated_ref(x, params3)
    assert A3.shape == (N, 3)
    err3 = float(jnp.max(jnp.abs(A3 - A3_ref)))
    assert bool(jnp.allclose(A3, A3_ref, atol=5e-2, rtol=5e-2)), f"n_tasks=3 max abs err {err3}"

    print("KERNEL_OK")
</pallas_src>

<mosaic_0001>
module attributes {stable_mosaic.version = 11 : i64} {
  func.func @_attn_gated_kernel(%arg0: i32, %arg1: memref<512x1024xf32, #tpu.memory_space<vmem>>, %arg2: memref<1024x512xbf16, #tpu.memory_space<vmem>>, %arg3: memref<1x512xf32, #tpu.memory_space<vmem>>, %arg4: memref<1x256xf32, #tpu.memory_space<vmem>>, %arg5: memref<1x1xf32, #tpu.memory_space<vmem>>, %arg6: memref<1x512xf32, #tpu.memory_space<vmem>>) attributes {dimension_semantics = [#tpu.dimension_semantics<parallel>], iteration_bounds = array<i64: 2>, scalar_prefetch = 0 : i64, scratch_operands = 0 : i64, tpu.core_type = #tpu.core_type<tc>, window_params = [{transform_indices = @transform_0, window_bounds = array<i64: 512, 1024>}, {pipeline_mode = #tpu.pipeline_mode<synchronous>, transform_indices = @transform_1, window_bounds = array<i64: 1024, 512>}, {pipeline_mode = #tpu.pipeline_mode<synchronous>, transform_indices = @transform_2, window_bounds = array<i64: 1, 512>}, {pipeline_mode = #tpu.pipeline_mode<synchronous>, transform_indices = @transform_3, window_bounds = array<i64: 1, 256>}, {pipeline_mode = #tpu.pipeline_mode<synchronous>, transform_indices = @transform_4, window_bounds = array<i64: 1, 1>}, {transform_indices = @transform_5, window_bounds = array<i64: 1, 512>}]} {
    %c0 = arith.constant 0 : index
    %c0_0 = arith.constant 0 : index
    %0 = vector.load %arg1[%c0, %c0_0] : memref<512x1024xf32, #tpu.memory_space<vmem>>, vector<512x1024xf32>
    %1 = arith.truncf %0 : vector<512x1024xf32> to vector<512x1024xbf16>
    %c0_1 = arith.constant 0 : index
    %c0_2 = arith.constant 0 : index
    %2 = vector.load %arg2[%c0_1, %c0_2] : memref<1024x512xbf16, #tpu.memory_space<vmem>>, vector<1024x512xbf16>
    %cst = arith.constant dense<0.000000e+00> : vector<512x512xf32>
    %3 = tpu.matmul %1, %2, %cst {dimension_numbers = #tpu.dot_dimension_numbers<[1], [0], [0], [1], [0, 0, 1, 1], [], []>} : vector<512x1024xbf16>, vector<1024x512xbf16>, vector<512x512xf32> -> vector<512x512xf32>
    %c0_3 = arith.constant 0 : index
    %c0_4 = arith.constant 0 : index
    %4 = vector.load %arg3[%c0_3, %c0_4] : memref<1x512xf32, #tpu.memory_space<vmem>>, vector<1x512xf32>
    %5 = vector.broadcast %4 : vector<1x512xf32> to vector<512x512xf32>
    %6 = arith.addf %3, %5 : vector<512x512xf32>
    %7 = vector.extract_strided_slice %6 {offsets = [0, 0], sizes = [512, 256], strides = [1, 1]} : vector<512x512xf32> to vector<512x256xf32>
    %8 = math.tanh %7 : vector<512x256xf32>
    %9 = vector.extract_strided_slice %6 {offsets = [0, 256], sizes = [512, 256], strides = [1, 1]} : vector<512x512xf32> to vector<512x256xf32>
    %cst_5 = arith.constant 5.000000e-01 : f32
    %10 = vector.broadcast %cst_5 : f32 to vector<512x256xf32>
    %11 = arith.mulf %10, %9 : vector<512x256xf32>
    %12 = math.tanh %11 : vector<512x256xf32>
    %cst_6 = arith.constant 1.000000e+00 : f32
    %13 = vector.broadcast %cst_6 : f32 to vector<512x256xf32>
    %14 = arith.addf %12, %13 : vector<512x256xf32>
    %cst_7 = arith.constant 5.000000e-01 : f32
    %15 = vector.broadcast %cst_7 : f32 to vector<512x256xf32>
    %16 = arith.mulf %15, %14 : vector<512x256xf32>
    %17 = arith.mulf %8, %16 : vector<512x256xf32>
    %c0_8 = arith.constant 0 : index
    %c0_9 = arith.constant 0 : index
    %18 = vector.load %arg4[%c0_8, %c0_9] : memref<1x256xf32, #tpu.memory_space<vmem>>, vector<1x256xf32>
    %19 = vector.broadcast %18 : vector<1x256xf32> to vector<512x256xf32>
    %20 = arith.mulf %17, %19 : vector<512x256xf32>
    %cst_10 = arith.constant dense<0.000000e+00> : vector<512xf32>
    %21 = vector.multi_reduction <add>, %20, %cst_10 [1] : vector<512x256xf32> to vector<512xf32>
    %22 = vector.shape_cast %21 : vector<512xf32> to vector<1x512xf32>
    %c0_11 = arith.constant 0 : index
    %c0_12 = arith.constant 0 : index
    %23 = vector.load %arg5[%c0_11, %c0_12] : memref<1x1xf32, #tpu.memory_space<vmem>>, vector<1x1xf32>
    %24 = vector.broadcast %23 : vector<1x1xf32> to vector<1x512xf32>
    %25 = arith.addf %22, %24 : vector<1x512xf32>
    %c0_13 = arith.constant 0 : index
    %c0_14 = arith.constant 0 : index
    %26 = vector.load %arg6[%c0_13, %c0_14] : memref<1x512xf32, #tpu.memory_space<vmem>>, vector<1x512xf32>
    tpu.vector_store %arg6[%c0_13, %c0_14], %25 {strides = array<i32>} : memref<1x512xf32, #tpu.memory_space<vmem>>, vector<1x512xf32>,
    return
  }
  func.func @transform_0(%arg0: i32) -> (i32, i32) {
    %c0_i32 = arith.constant 0 : i32
    %c0_i32_0 = arith.constant 0 : i32
    return %arg0, %c0_i32 : i32, i32
  }
  func.func @transform_1(%arg0: i32) -> (i32, i32) {
    %c0_i32 = arith.constant 0 : i32
    %c0_i32_0 = arith.constant 0 : i32
    %c0_i32_1 = arith.constant 0 : i32
    return %c0_i32, %c0_i32_0 : i32, i32
  }
  func.func @transform_2(%arg0: i32) -> (i32, i32) {
    %c0_i32 = arith.constant 0 : i32
    %c0_i32_0 = arith.constant 0 : i32
    %c0_i32_1 = arith.constant 0 : i32
    return %c0_i32, %c0_i32_0 : i32, i32
  }
  func.func @transform_3(%arg0: i32) -> (i32, i32) {
    %c0_i32 = arith.constant 0 : i32
    %c0_i32_0 = arith.constant 0 : i32
    %c0_i32_1 = arith.constant 0 : i32
    return %c0_i32, %c0_i32_0 : i32, i32
  }
  func.func @transform_4(%arg0: i32) -> (i32, i32) {
    %c0_i32 = arith.constant 0 : i32
    %c0_i32_0 = arith.constant 0 : i32
    %c0_i32_1 = arith.constant 0 : i32
    return %c0_i32, %c0_i32_0 : i32, i32
  }
  func.func @transform_5(%arg0: i32) -> (i32, i32) {
    %c0_i32 = arith.constant 0 : i32
    %c0_i32_0 = arith.constant 0 : i32
    return %c0_i32, %arg0 : i32, i32
  }
}

</mosaic_0001>

<llo_original>
// kernel: tpu_custom_call.1
$region0: #{tpu_custom_call.1}
  #allocation0 [shape = 'u32[]', space=smem, size = 0x4, offset = 0x4, fixed_abs, tag = 'smem constant byte address 0x4 - core index']
  #allocation1 [shape = 'u32[72,128]{1,0:T(1,128)}', space=vmem, size = 0x9000, scoped, tag = 'internal scratch']
  #allocation2 [shape = 'f32[1,1]{1,0:T(1,128)S(1)}', space=vmem, size = 0x200, scoped, tag = 'scoped memory for tpu_custom_call.1']
  %s0 = inlined_call_operand.hbm [shape: f32[600,1024], index: 0, kind: input, shape index: {}]
  %s1 = inlined_call_operand.hbm [shape: bf16[1024,512], index: 1, kind: input, shape index: {}]
  %s2 = inlined_call_operand.hbm [shape: f32[1,512], index: 2, kind: input, shape index: {}]
  %s3 = inlined_call_operand.hbm [shape: f32[1,256], index: 3, kind: input, shape index: {}]
  %s4 = inlined_call_operand.<no memory space> [shape: f32[1,1], index: 4, kind: input, shape index: {}]
  %s5 = inlined_call_operand.hbm [shape: f32[1,1024], index: 5, kind: output, shape index: {}]
  %s6 = sld [smem:[#allocation0]]
  $region69: #{tpu_custom_call.1} parent=0
    _
  %s8 = ssub.s32 1, %s6
  %s9 = scalar_select 0, %s8, %s6
  %v10 = vstv %s4
  %11 = vst [vmem:[#allocation2] sm:$0x1] %v10
  $region1: #{tpu_custom_call.1} parent=0
    #allocation3 [shape = 'u8[4194304]{0}', space=vmem, size = 0x400000, scoped, tag = 'input window, operand 0']
    #allocation4 [shape = 's32[2]{0}', space=sflag, size = 0x8, scoped, tag = 'scoped memory for tpu_custom_call.1']
    #allocation5 [shape = 's32[2]{0}', space=sflag, size = 0x8, scoped, tag = 'scoped memory for tpu_custom_call.1']
    #allocation6 [shape = 'u8[1048576]{0}', space=vmem, size = 0x100000, scoped, tag = 'input window, operand 1, single buffered']
    #allocation7 [shape = 's32[1]{0}', space=sflag, size = 0x4, scoped, tag = 'scoped memory for tpu_custom_call.1']
    #allocation8 [shape = 'u8[2048]{0}', space=vmem, size = 0x800, scoped, tag = 'input window, operand 2, single buffered']
    #allocation9 [shape = 'u8[1024]{0}', space=vmem, size = 0x400, scoped, tag = 'input window, operand 3, single buffered']
    #allocation10 [shape = 's32[1]{0}', space=sflag, size = 0x4, scoped, tag = 'scoped memory for tpu_custom_call.1']
    #allocation11 [shape = 'u8[4096]{0}', space=vmem, size = 0x1000, scoped, tag = 'output window, operand 0']
    %12 = vsyncpa [#allocation4], 0
    %s13 = scalar_lea.sflag [#allocation4], 1
    %14 = vsyncpa %s13, 0
    %15 = vsyncpa [#allocation7], 0
    %16 = vsyncpa [#allocation10], 0
    %17 = vsyncpa [#allocation5], 0
    %s18 = scalar_lea.sflag [#allocation5], 1
    %19 = vsyncpa %s18, 0
    loop: start=0, step=1, limit=4
    $region2: #{tpu_custom_call.1} parent=1 // loop_pre_header
      _
    $region3: #{tpu_custom_call.1} parent=1 // loop_header
      %s21 = sphi 0, %s25
      %p22 = scmp.ge.s32.totalorder %s21, 4
      %s31 = sphi 0, %s33
      %s34 = sphi 0, %s31
      %s35 = sphi 0, %s34
      %s51 = sphi 0, %s35
      %s55 = sphi 0, %s55
      %s57 = sphi 0, %s55
      %s58 = sphi 0, %s57
      %s72 = sphi 0, %s58
      %s76 = sphi 0, %s76
      %s78 = sphi 0, %s76
      %s79 = sphi 0, %s78
      %s93 = sphi 0, %s79
      %s97 = sphi 0, %s97
      %s99 = sphi 0, %s97
      %s100 = sphi 0, %s99
      %s114 = sphi 0, %s100
      %s118 = sphi 0, %s118
      %s120 = sphi 0, %s118
      %s121 = sphi 0, %s120
      %s135 = sphi 0, %s121
      %s141 = sphi 0, %s143
      %s144 = sphi 0, %s141
      %s145 = sphi 0, %s144
      %s161 = sphi 0, %s145
    $region4: #{tpu_custom_call.1} parent=1 // loop_header_branch
      %24 = sbr.rel (%p22) target = $region8
    $region5: #{tpu_custom_call.1} parent=1 // loop_body
      %s26 = ssub.s32 %s21, 1
      %s27 = ssub.s32 %s21, 2
      %s28 = sadd.s32 %s21, 1
      %s29 = ssub.s32 %s21, %s28
      %p30 = scmp.eq.s32.totalorder %s29, 0
      %s32 = sadd.s32 %s31, 1
      %s33 = scalar_select %p30, %s31, %s32
      %p36 = pneg %p30
      %p37 = scmp.eq.s32.totalorder %s21, 1
      %p38 = por %p36, %p37
      %p39 = scmp.ne.s32.totalorder %s31, %s34
      %p40 = scmp.eq.s32.totalorder %s21, 0
      %p41 = por %p39, %p40
      %p42 = scmp.ne.s32.totalorder %s31, %s34
      %p43 = scmp.eq.s32.totalorder %s26, 1
      %p44 = por %p42, %p43
      %p45 = scmp.ne.s32.totalorder %s34, %s35
      %p46 = scmp.eq.s32.totalorder %s26, 0
      %p47 = por %p45, %p46
      %p48 = scmp.ne.s32.totalorder %s34, %s35
      %p49 = scmp.eq.s32.totalorder %s27, 1
      %p50 = por %p48, %p49
      %p52 = scmp.ne.s32.totalorder %s35, %s51
      %p53 = scmp.eq.s32.totalorder %s27, 0
      %p54 = por %p52, %p53
      %s56 = sadd.s32 %s55, 1
      %p59 = scmp.eq.s32.totalorder %s21, 1
      %p60 = scmp.ne.s32.totalorder %s55, %s57
      %p61 = scmp.eq.s32.totalorder %s21, 0
      %p62 = por %p60, %p61
      %p63 = scmp.ne.s32.totalorder %s55, %s57
      %p64 = scmp.eq.s32.totalorder %s26, 1
      %p65 = por %p63, %p64
      %p66 = scmp.ne.s32.totalorder %s57, %s58
      %p67 = scmp.eq.s32.totalorder %s26, 0
      %p68 = por %p66, %p67
      %p69 = scmp.ne.s32.totalorder %s57, %s58
      %p70 = scmp.eq.s32.totalorder %s27, 1
      %p71 = por %p69, %p70
      %p73 = scmp.ne.s32.totalorder %s58, %s72
      %p74 = scmp.eq.s32.totalorder %s27, 0
      %p75 = por %p73, %p74
      %s77 = sadd.s32 %s76, 1
      %p80 = scmp.eq.s32.totalorder %s21, 1
      %p81 = scmp.ne.s32.totalorder %s76, %s78
      %p82 = scmp.eq.s32.totalorder %s21, 0
      %p83 = por %p81, %p82
      %p84 = scmp.ne.s32.totalorder %s76, %s78
      %p85 = scmp.eq.s32.totalorder %s26, 1
      %p86 = por %p84, %p85
      %p87 = scmp.ne.s32.totalorder %s78, %s79
      %p88 = scmp.eq.s32.totalorder %s26, 0
      %p89 = por %p87, %p88
      %p90 = scmp.ne.s32.totalorder %s78, %s79
      %p91 = scmp.eq.s32.totalorder %s27, 1
      %p92 = por %p90, %p91
      %p94 = scmp.ne.s32.totalorder %s79, %s93
      %p95 = scmp.eq.s32.totalorder %s27, 0
      %p96 = por %p94, %p95
      %s98 = sadd.s32 %s97, 1
      %p101 = scmp.eq.s32.totalorder %s21, 1
      %p102 = scmp.ne.s32.totalorder %s97, %s99
      %p103 = scmp.eq.s32.totalorder %s21, 0
      %p104 = por %p102, %p103
      %p105 = scmp.ne.s32.totalorder %s97, %s99
      %p106 = scmp.eq.s32.totalorder %s26, 1
      %p107 = por %p105, %p106
      %p108 = scmp.ne.s32.totalorder %s99, %s100
      %p109 = scmp.eq.s32.totalorder %s26, 0
      %p110 = por %p108, %p109
      %p111 = scmp.ne.s32.totalorder %s99, %s100
      %p112 = scmp.eq.s32.totalorder %s27, 1
      %p113 = por %p111, %p112
      %p115 = scmp.ne.s32.totalorder %s100, %s114
      %p116 = scmp.eq.s32.totalorder %s27, 0
      %p117 = por %p115, %p116
      %s119 = sadd.s32 %s118, 1
      %p122 = scmp.eq.s32.totalorder %s21, 1
      %p123 = scmp.ne.s32.totalorder %s118, %s120
      %p124 = scmp.eq.s32.totalorder %s21, 0
      %p125 = por %p123, %p124
      %p126 = scmp.ne.s32.totalorder %s118, %s120
      %p127 = scmp.eq.s32.totalorder %s26, 1
      %p128 = por %p126, %p127
      %p129 = scmp.ne.s32.totalorder %s120, %s121
      %p130 = scmp.eq.s32.totalorder %s26, 0
      %p131 = por %p129, %p130
      %p132 = scmp.ne.s32.totalorder %s120, %s121
      %p133 = scmp.eq.s32.totalorder %s27, 1
      %p134 = por %p132, %p133
      %p136 = scmp.ne.s32.totalorder %s121, %s135
      %p137 = scmp.eq.s32.totalorder %s27, 0
      %p138 = por %p136, %p137
      %s139 = ssub.s32 %s21, %s28
      %p140 = scmp.eq.s32.totalorder %s139, 0
      %s142 = sadd.s32 %s141, 1
      %s143 = scalar_select %p140, %s141, %s142
      %p146 = pneg %p140
      %p147 = scmp.eq.s32.totalorder %s21, 1
      %p148 = por %p146, %p147
      %p149 = scmp.ne.s32.totalorder %s141, %s144
      %p150 = scmp.eq.s32.totalorder %s21, 0
      %p151 = por %p149, %p150
      %p152 = scmp.ne.s32.totalorder %s141, %s144
      %p153 = scmp.eq.s32.totalorder %s26, 1
      %p154 = por %p152, %p153
      %p155 = scmp.ne.s32.totalorder %s144, %s145
      %p156 = scmp.eq.s32.totalorder %s26, 0
      %p157 = por %p155, %p156
      %p158 = scmp.ne.s32.totalorder %s144, %s145
      %p159 = scmp.eq.s32.totalorder %s27, 1
      %p160 = por %p158, %p159
      %p162 = scmp.ne.s32.totalorder %s145, %s161
      %p163 = scmp.eq.s32.totalorder %s27, 0
      %p164 = por %p162, %p163
      %p165 = scmp.le.s32.totalorder 1, %s21
      %p166 = scmp.lt.s32.totalorder %s21, 3
      %p167 = pnand %p165, %p166
      %p168 = pneg %p167
      // Predicated region
      $region9: #{tpu_custom_call.1} parent=5 // pred_check
        _
      $region10: #{tpu_custom_call.1} parent=5 // pred_check_branch
        %170 = sbr.rel (%p167) target = $region12
      $region11: #{tpu_custom_call.1} parent=5 // pred_region
        %s171 = ssub.s32 %s21, 1
        // Predicated region
        $region13: #{tpu_custom_call.1} parent=11 // pred_check
          %p172 = pneg %p68
        $region14: #{tpu_custom_call.1} parent=11 // pred_check_branch
          %174 = sbr.rel (%p172) target = $region16
        $region15: #{tpu_custom_call.1} parent=11 // pred_region
          %176 = vsyncadd [#allocation7], 0
          %s177 = sshll.u32 %s1, 4
          %s178 = int_to_ptr.hbm [resolvable:$true] %s177
          %s179 = sshll.u32 [#allocation6], 4
          %s180 = int_to_ptr.vmem [resolvable:$true] %s179
          %185 = dma.hbm_to_vmem [thread:$0]  %s178, 32768, %s180, [#allocation7], 256, 256, 16
        $region16: #{tpu_custom_call.1} parent=11 // pred_fallthru
          _
        // Predicated region
        $region17: #{tpu_custom_call.1} parent=11 // pred_check
          %p186 = pneg %p89
        $region18: #{tpu_custom_call.1} parent=11 // pred_check_branch
          %188 = sbr.rel (%p186) target = $region20
        $region19: #{tpu_custom_call.1} parent=11 // pred_region
          %190 = vsyncadd [#allocation7], 0
          %s192 = sshll.u32 %s2, 4
          %s193 = int_to_ptr.hbm [resolvable:$true] %s192
          %s194 = sshll.u32 [#allocation8], 4
          %s195 = int_to_ptr.vmem [resolvable:$true] %s194
          %197 = dma.hbm_to_vmem [thread:$0]  %s193, 64, %s195, [#allocation7]
        $region20: #{tpu_custom_call.1} parent=11 // pred_fallthru
          _
        // Predicated region
        $region21: #{tpu_custom_call.1} parent=11 // pred_check
          %p198 = pneg %p110
        $region22: #{tpu_custom_call.1} parent=11 // pred_check_branch
          %200 = sbr.rel (%p198) target = $region24
        $region23: #{tpu_custom_call.1} parent=11 // pred_region
          %202 = vsyncadd [#allocation10], 0
          %s204 = sshll.u32 %s3, 4
          %s205 = int_to_ptr.hbm [resolvable:$true] %s204
          %s206 = sshll.u32 [#allocation9], 4
          %s207 = int_to_ptr.vmem [resolvable:$true] %s206
          %209 = dma.hbm_to_vmem [thread:$0]  %s205, 32, %s207, [#allocation10]
        $region24: #{tpu_custom_call.1} parent=11 // pred_fallthru
          _
        // Predicated region
        $region25: #{tpu_custom_call.1} parent=11 // pred_check
          %p210 = pneg %p131
        $region26: #{tpu_custom_call.1} parent=11 // pred_check_branch
          %212 = sbr.rel (%p210) target = $region28
        $region27: #{tpu_custom_call.1} parent=11 // pred_region
          _
        $region28: #{tpu_custom_call.1} parent=11 // pred_fallthru
          _
      $region12: #{tpu_custom_call.1} parent=5 // pred_fallthru
        _
      %p213 = scmp.lt.s32.totalorder %s21, 2
      // Predicated region
      $region29: #{tpu_custom_call.1} parent=5 // pred_check
        %p214 = pneg %p213
      $region30: #{tpu_custom_call.1} parent=5 // pred_check_branch
        %216 = sbr.rel (%p214) target = $region32
      $region31: #{tpu_custom_call.1} parent=5 // pred_region
        // Predicated region
        $region33: #{tpu_custom_call.1} parent=31 // pred_check
          %p217 = pneg %p41
        $region34: #{tpu_custom_call.1} parent=31 // pred_check_branch
          %219 = sbr.rel (%p217) target = $region36
        $region35: #{tpu_custom_call.1} parent=31 // pred_region
          %s220 = sand.u32 %s31, 1
          %s221 = scalar_lea.sflag [#allocation4], %s220
          %s222 = sand.u32 %s31, 1
          %s223 = smul.addr %s222, 4096
          %s224 = scalar_lea.vmem [#allocation3], %s223
          %s225 = smul.u32 64, %s21
          %s226 = ssub.s32 75, %s225
          %p227 = scmp.lt.s32.totalorder %s226, 64
          %s228 = scalar_select %p227, %s226, 64
          %s229 = smul.u32 8, %s228
          %s230 = smul.u32 %s229, 8
          %s231 = ssub.s32 4096, %s230
          %s232 = sshll.u32 %s231, 4
          %233 = vsyncadd %s221, %s232
          %p234 = scmp.ne.s32.totalorder 0, %s230
          %s235 = smul.addr %s225, 8
          %s236 = smul.addr %s235, 8
          %s237 = scalar_lea.hbm %s0, %s236
          %s238 = smul.u32 64, %s228
          %s239 = sshll.u32 %s237, 4
          %s240 = int_to_ptr.hbm [resolvable:$true] %s239
          %s241 = sshll.u32 %s224, 4
          %s242 = int_to_ptr.vmem [resolvable:$true] %s241
          %s243 = sshll.u32 %s238, 4
          %247 = dma.hbm_to_vmem [thread:$0]  (%p234), %s240, %s243, %s242, %s221, 1024, 1024, 64
        $region36: #{tpu_custom_call.1} parent=31 // pred_fallthru
          _
      $region32: #{tpu_custom_call.1} parent=5 // pred_fallthru
        _
      %p248 = scmp.le.s32.totalorder 1, %s21
      %p249 = scmp.lt.s32.totalorder %s21, 3
      %p250 = pnand %p248, %p249
      %p251 = pneg %p250
      // Predicated region
      $region37: #{tpu_custom_call.1} parent=5 // pred_check
        _
      $region38: #{tpu_custom_call.1} parent=5 // pred_check_branch
        %253 = sbr.rel (%p250) target = $region40
      $region39: #{tpu_custom_call.1} parent=5 // pred_region
        %s254 = ssub.s32 %s21, 1
        %s255 = sand.u32 %s34, 1
        %s256 = scalar_lea.sflag [#allocation4], %s255
        %s257 = sand.u32 %s34, 1
        %s258 = smul.addr %s257, 4096
        %s259 = scalar_lea.vmem [#allocation3], %s258
        // Predicated region
        $region41: #{tpu_custom_call.1} parent=39 // pred_check
          %p260 = pneg %p47
        $region42: #{tpu_custom_call.1} parent=39 // pred_check_branch
          %262 = sbr.rel (%p260) target = $region44
        $region43: #{tpu_custom_call.1} parent=39 // pred_region
          %264 = dma.done %s256, 65536
        $region44: #{tpu_custom_call.1} parent=39 // pred_fallthru
          _
        // Predicated region
        $region45: #{tpu_custom_call.1} parent=39 // pred_check
          %p265 = pneg %p68
        $region46: #{tpu_custom_call.1} parent=39 // pred_check_branch
          %267 = sbr.rel (%p265) target = $region48
        $region47: #{tpu_custom_call.1} parent=39 // pred_region
          %269 = dma.done [#allocation7], 32768
        $region48: #{tpu_custom_call.1} parent=39 // pred_fallthru
          _
        // Predicated region
        $region49: #{tpu_custom_call.1} parent=39 // pred_check
          %p270 = pneg %p89
        $region50: #{tpu_custom_call.1} parent=39 // pred_check_branch
          %272 = sbr.rel (%p270) target = $region52
        $region51: #{tpu_custom_call.1} parent=39 // pred_region
          %274 = dma.done [#allocation7], 64
        $region52: #{tpu_custom_call.1} parent=39 // pred_fallthru
          _
        // Predicated region
        $region53: #{tpu_custom_call.1} parent=39 // pred_check
          %p275 = pneg %p110
        $region54: #{tpu_custom_call.1} parent=39 // pred_check_branch
          %277 = sbr.rel (%p275) target = $region56
        $region55: #{tpu_custom_call.1} parent=39 // pred_region
          %279 = dma.done [#allocation10], 32
        $region56: #{tpu_custom_call.1} parent=39 // pred_fallthru
          _
        %s280 = sand.u32 %s34, 1
        %s281 = scalar_lea.sflag [#allocation4], %s280
        %s282 = sand.u32 %s34, 1
        %s283 = smul.addr %s282, 4096
        %s284 = scalar_lea.vmem [#allocation3], %s283
        %p285 = pneg %p47
        %p286 = pneg %p44
        %p287 = pneg %p68
        %p288 = pneg %p65
        %p289 = pneg %p89
        %p290 = pneg %p86
        %p291 = pneg %p110
        %p292 = pneg %p107
        %p293 = pneg %p131
        %p294 = pneg %p128
        %p295 = pneg %p157
        %p296 = pneg %p154
        %s297 = sand.u32 %s144, 1
        %s298 = scalar_lea.sflag [#allocation5], %s297
        %s299 = sand.u32 %s144, 1
        %s300 = smul.addr %s299, 4
        %s301 = scalar_lea.vmem [#allocation11], %s300
        %s302 = smul.u32 64, %s26
        %s303 = ssub.s32 75, %s302
        %p304 = scmp.lt.s32.totalorder %s303, 64
        %s305 = scalar_select %p304, %s303, 64
        %s306 = smul.u32 8, %s305
        %s307 = smul.u32 %s306, 8
        %s308 = smul.u32 4, %s26
        %v309 = vld [vmem:[%s259] sm:$0xff]
        %v310 = vld [vmem:[%s259 + $0x8] sm:$0xff]
        %v311 = vld [vmem:[%s259 + $0x10] sm:$0xff]
        %v312 = vld [vmem:[%s259 + $0x18] sm:$0xff]
        %v313 = vld [vmem:[%s259 + $0x20] sm:$0xff]
        %v314 = vld [vmem:[%s259 + $0x28] sm:$0xff]
        %v315 = vld [vmem:[%s259 + $0x30] sm:$0xff]
        %v316 = vld [vmem:[%s259 + $0x38] sm:$0xff]
        %v317 = vld [vmem:[%s259 + $0x40] sm:$0xff]
        %v318 = vld [vmem:[%s259 + $0x48] sm:$0xff]
        %v319 = vld [vmem:[%s259 + $0x50] sm:$0xff]
        %v320 = vld [vmem:[%s259 + $0x58] sm:$0xff]
        %v321 = vld [vmem:[%s259 + $0x60] sm:$0xff]
        %v322 = vld [vmem:[%s259 + $0x68] sm:$0xff]
        %v323 = vld [vmem:[%s259 + $0x70] sm:$0xff]
        %v324 = vld [vmem:[%s259 + $0x78] sm:$0xff]
        %v325 = vld [vmem:[%s259 + $0x80] sm:$0xff]
        %v326 = vld [vmem:[%s259 + $0x88] sm:$0xff]
        %v327 = vld [vmem:[%s259 + $0x90] sm:$0xff]
        %v328 = vld [vmem:[%s259 + $0x98] sm:$0xff]
        %v329 = vld [vmem:[%s259 + $0xa0] sm:$0xff]
        %v330 = vld [vmem:[%s259 + $0xa8] sm:$0xff]
        %v331 = vld [vmem:[%s259 + $0xb0] sm:$0xff]
        %v332 = vld [vmem:[%s259 + $0xb8] sm:$0xff]
        %v333 = vld [vmem:[%s259 + $0xc0] sm:$0xff]
        %v334 = vld [vmem:[%s259 + $0xc8] sm:$0xff]
        %v335 = vld [vmem:[%s259 + $0xd0] sm:$0xff]
        %v336 = vld [vmem:[%s259 + $0xd8] sm:$0xff]
        %v337 = vld [vmem:[%s259 + $0xe0] sm:$0xff]
        %v338 = vld [vmem:[%s259 + $0xe8] sm:$0xff]
        %v339 = vld [vmem:[%s259 + $0xf0] sm:$0xff]
        %v340 = vld [vmem:[%s259 + $0xf8] sm:$0xff]
        %v341 = vld [vmem:[%s259 + $0x100] sm:$0xff]
        %v342 = vld [vmem:[%s259 + $0x108] sm:$0xff]
        %v343 = vld [vmem:[%s259 + $0x110] sm:$0xff]
        %v344 = vld [vmem:[%s259 + $0x118] sm:$0xff]
        %v345 = vld [vmem:[%s259 + $0x120] sm:$0xff]
        %v346 = vld [vmem:[%s259 + $0x128] sm:$0xff]
        %v347 = vld [vmem:[%s259 + $0x130] sm:$0xff]
        %v348 = vld [vmem:[%s259 + $0x138] sm:$0xff]
        %v349 = vld [vmem:[%s259 + $0x140] sm:$0xff]
        %v350 = vld [vmem:[%s259 + $0x148] sm:$0xff]
        %v351 = vld [vmem:[%s259 + $0x150] sm:$0xff]
        %v352 = vld [vmem:[%s259 + $0x158] sm:$0xff]
        %v353 = vld [vmem:[%s259 + $0x160] sm:$0xff]
        %v354 = vld [vmem:[%s259 + $0x168] sm:$0xff]
        %v355 = vld [vmem:[%s259 + $0x170] sm:$0xff]
        %v356 = vld [vmem:[%s259 + $0x178] sm:$0xff]
        %v357 = vld [vmem:[%s259 + $0x180] sm:$0xff]
        %v358 = vld [vmem:[%s259 + $0x188] sm:$0xff]
        %v359 = vld [vmem:[%s259 + $0x190] sm:$0xff]
        %v360 = vld [vmem:[%s259 + $0x198] sm:$0xff]
        %v361 = vld [vmem:[%s259 + $0x1a0] sm:$0xff]
        %v362 = vld [vmem:[%s259 + $0x1a8] sm:$0xff]
        %v363 = vld [vmem:[%s259 + $0x1b0] sm:$0xff]
        %v364 = vld [vmem:[%s259 + $0x1b8] sm:$0xff]
        %v365 = vld [vmem:[%s259 + $0x1c0] sm:$0xff]
        %v366 = vld [vmem:[%s259 + $0x1c8] sm:$0xff]
        %v367 = vld [vmem:[%s259 + $0x1d0] sm:$0xff]
        %v368 = vld [vmem:[%s259 + $0x1d8] sm:$0xff]
        %v369 = vld [vmem:[%s259 + $0x1e0] sm:$0xff]
        %v370 = vld [vmem:[%s259 + $0x1e8] sm:$0xff]
        %v371 = vld [vmem:[%s259 + $0x1f0] sm:$0xff]
        %v372 = vld [vmem:[%s259 + $0x1f8] sm:$0xff]
        %v373 = vld [vmem:[%s259 + $0x200] sm:$0xff]
        %v374 = vld [vmem:[%s259 + $0x208] sm:$0xff]
        %v375 = vld [vmem:[%s259 + $0x210] sm:$0xff]
        %v376 = vld [vmem:[%s259 + $0x218] sm:$0xff]
        %v377 = vld [vmem:[%s259 + $0x220] sm:$0xff]
        %v378 = vld [vmem:[%s259 + $0x228] sm:$0xff]
        %v379 = vld [vmem:[%s259 + $0x230] sm:$0xff]
        %v380 = vld [vmem:[%s259 + $0x238] sm:$0xff]
        %v381 = vld [vmem:[%s259 + $0x240] sm:$0xff]
        %v382 = vld [vmem:[%s259 + $0x248] sm:$0xff]
        %v383 = vld [vmem:[%s259 + $0x250] sm:$0xff]
        %v384 = vld [vmem:[%s259 + $0x258] sm:$0xff]
        %v385 = vld [vmem:[%s259 + $0x260] sm:$0xff]
        %v386 = vld [vmem:[%s259 + $0x268] sm:$0xff]
        %v387 = vld [vmem:[%s259 + $0x270] sm:$0xff]
        %v388 = vld [vmem:[%s259 + $0x278] sm:$0xff]
        %v389 = vld [vmem:[%s259 + $0x280] sm:$0xff]
        %v390 = vld [vmem:[%s259 + $0x288] sm:$0xff]
        %v391 = vld [vmem:[%s259 + $0x290] sm:$0xff]
        %v392 = vld [vmem:[%s259 + $0x298] sm:$0xff]
        %v393 = vld [vmem:[%s259 + $0x2a0] sm:$0xff]
        %v394 = vld [vmem:[%s259 + $0x2a8] sm:$0xff]
        %v395 = vld [vmem:[%s259 + $0x2b0] sm:$0xff]
        %v396 = vld [vmem:[%s259 + $0x2b8] sm:$0xff]
        %v397 = vld [vmem:[%s259 + $0x2c0] sm:$0xff]
        %v398 = vld [vmem:[%s259 + $0x2c8] sm:$0xff]
        %v399 = vld [vmem:[%s259 + $0x2d0] sm:$0xff]
        %v400 = vld [vmem:[%s259 + $0x2d8] sm:$0xff]
        %v401 = vld [vmem:[%s259 + $0x2e0] sm:$0xff]
        %v402 = vld [vmem:[%s259 + $0x2e8] sm:$0xff]
        %v403 = vld [vmem:[%s259 + $0x2f0] sm:$0xff]
        %v404 = vld [vmem:[%s259 + $0x2f8] sm:$0xff]
        %v405 = vld [vmem:[%s259 + $0x300] sm:$0xff]
        %v406 = vld [vmem:[%s259 + $0x308] sm:$0xff]
        %v407 = vld [vmem:[%s259 + $0x310] sm:$0xff]
        %v408 = vld [vmem:[%s259 + $0x318] sm:$0xff]
        %v409 = vld [vmem:[%s259 + $0x320] sm:$0xff]
        %v410 = vld [vmem:[%s259 + $0x328] sm:$0xff]
        %v411 = vld [vmem:[%s259 + $0x330] sm:$0xff]
        %v412 = vld [vmem:[%s259 + $0x338] sm:$0xff]
        %v413 = vld [vmem:[%s259 + $0x340] sm:$0xff]
        %v414 = vld [vmem:[%s259 + $0x348] sm:$0xff]
        %v415 = vld [vmem:[%s259 + $0x350] sm:$0xff]
        %v416 = vld [vmem:[%s259 + $0x358] sm:$0xff]
        %v417 = vld [vmem:[%s259 + $0x360] sm:$0xff]
        %v418 = vld [vmem:[%s259 + $0x368] sm:$0xff]
        %v419 = vld [vmem:[%s259 + $0x370] sm:$0xff]
        %v420 = vld [vmem:[%s259 + $0x378] sm:$0xff]
        %v421 = vld [vmem:[%s259 + $0x380] sm:$0xff]
        %v422 = vld [vmem:[%s259 + $0x388] sm:$0xff]
        %v423 = vld [vmem:[%s259 + $0x390] sm:$0xff]
        %v424 = vld [vmem:[%s259 + $0x398] sm:$0xff]
        %v425 = vld [vmem:[%s259 + $0x3a0] sm:$0xff]
        %v426 = vld [vmem:[%s259 + $0x3a8] sm:$0xff]
        %v427 = vld [vmem:[%s259 + $0x3b0] sm:$0xff]
        %v428 = vld [vmem:[%s259 + $0x3b8] sm:$0xff]
        %v429 = vld [vmem:[%s259 + $0x3c0] sm:$0xff]
        %v430 = vld [vmem:[%s259 + $0x3c8] sm:$0xff]
        %v431 = vld [vmem:[%s259 + $0x3d0] sm:$0xff]
        %v432 = vld [vmem:[%s259 + $0x3d8] sm:$0xff]
        %v433 = vld [vmem:[%s259 + $0x3e0] sm:$0xff]
        %v434 = vld [vmem:[%s259 + $0x3e8] sm:$0xff]
        %v435 = vld [vmem:[%s259 + $0x3f0] sm:$0xff]
        %v436 = vld [vmem:[%s259 + $0x3f8] sm:$0xff]
        %v437 = vld [vmem:[%s259 + $0x400] sm:$0xff]
        %v438 = vld [vmem:[%s259 + $0x408] sm:$0xff]
        %v439 = vld [vmem:[%s259 + $0x410] sm:$0xff]
        %v440 = vld [vmem:[%s259 + $0x418] sm:$0xff]
        %v441 = vld [vmem:[%s259 + $0x420] sm:$0xff]
        %v442 = vld [vmem:[%s259 + $0x428] sm:$0xff]
        %v443 = vld [vmem:[%s259 + $0x430] sm:$0xff]
        %v444 = vld [vmem:[%s259 + $0x438] sm:$0xff]
        %v445 = vld [vmem:[%s259 + $0x440] sm:$0xff]
        %v446 = vld [vmem:[%s259 + $0x448] sm:$0xff]
        %v447 = vld [vmem:[%s259 + $0x450] sm:$0xff]
        %v448 = vld [vmem:[%s259 + $0x458] sm:$0xff]
        %v449 = vld [vmem:[%s259 + $0x460] sm:$0xff]
        %v450 = vld [vmem:[%s259 + $0x468] sm:$0xff]
        %v451 = vld [vmem:[%s259 + $0x470] sm:$0xff]
        %v452 = vld [vmem:[%s259 + $0x478] sm:$0xff]
        %v453 = vld [vmem:[%s259 + $0x480] sm:$0xff]
        %v454 = vld [vmem:[%s259 + $0x488] sm:$0xff]
        %v455 = vld [vmem:[%s259 + $0x490] sm:$0xff]
        %v456 = vld [vmem:[%s259 + $0x498] sm:$0xff]
        %v457 = vld [vmem:[%s259 + $0x4a0] sm:$0xff]
        %v458 = vld [vmem:[%s259 + $0x4a8] sm:$0xff]
        %v459 = vld [vmem:[%s259 + $0x4b0] sm:$0xff]
        %v460 = vld [vmem:[%s259 + $0x4b8] sm:$0xff]
        %v461 = vld [vmem:[%s259 + $0x4c0] sm:$0xff]
        %v462 = vld [vmem:[%s259 + $0x4c8] sm:$0xff]
        %v463 = vld [vmem:[%s259 + $0x4d0] sm:$0xff]
        %v464 = vld [vmem:[%s259 + $0x4d8] sm:$0xff]
        %v465 = vld [vmem:[%s259 + $0x4e0] sm:$0xff]
        %v466 = vld [vmem:[%s259 + $0x4e8] sm:$0xff]
        %v467 = vld [vmem:[%s259 + $0x4f0] sm:$0xff]
        %v468 = vld [vmem:[%s259 + $0x4f8] sm:$0xff]
        %v469 = vld [vmem:[%s259 + $0x500] sm:$0xff]
        %v470 = vld [vmem:[%s259 + $0x508] sm:$0xff]
        %v471 = vld [vmem:[%s259 + $0x510] sm:$0xff]
        %v472 = vld [vmem:[%s259 + $0x518] sm:$0xff]
        %v473 = vld [vmem:[%s259 + $0x520] sm:$0xff]
        %v474 = vld [vmem:[%s259 + $0x528] sm:$0xff]
        %v475 = vld [vmem:[%s259 + $0x530] sm:$0xff]
        %v476 = vld [vmem:[%s259 + $0x538] sm:$0xff]
        %v477 = vld [vmem:[%s259 + $0x540] sm:$0xff]
        %v478 = vld [vmem:[%s259 + $0x548] sm:$0xff]
        %v479 = vld [vmem:[%s259 + $0x550] sm:$0xff]
        %v480 = vld [vmem:[%s259 + $0x558] sm:$0xff]
        %v481 = vld [vmem:[%s259 + $0x560] sm:$0xff]
        %v482 = vld [vmem:[%s259 + $0x568] sm:$0xff]
        %v483 = vld [vmem:[%s259 + $0x570] sm:$0xff]
        %v484 = vld [vmem:[%s259 + $0x578] sm:$0xff]
        %v485 = vld [vmem:[%s259 + $0x580] sm:$0xff]
        %v486 = vld [vmem:[%s259 + $0x588] sm:$0xff]
        %v487 = vld [vmem:[%s259 + $0x590] sm:$0xff]
        %v488 = vld [vmem:[%s259 + $0x598] sm:$0xff]
        %v489 = vld [vmem:[%s259 + $0x5a0] sm:$0xff]
        %v490 = vld [vmem:[%s259 + $0x5a8] sm:$0xff]
        %v491 = vld [vmem:[%s259 + $0x5b0] sm:$0xff]
        %v492 = vld [vmem:[%s259 + $0x5b8] sm:$0xff]
        %v493 = vld [vmem:[%s259 + $0x5c0] sm:$0xff]
        %v494 = vld [vmem:[%s259 + $0x5c8] sm:$0xff]
        %v495 = vld [vmem:[%s259 + $0x5d0] sm:$0xff]
        %v496 = vld [vmem:[%s259 + $0x5d8] sm:$0xff]
        %v497 = vld [vmem:[%s259 + $0x5e0] sm:$0xff]
        %v498 = vld [vmem:[%s259 + $0x5e8] sm:$0xff]
        %v499 = vld [vmem:[%s259 + $0x5f0] sm:$0xff]
        %v500 = vld [vmem:[%s259 + $0x5f8] sm:$0xff]
        %v501 = vld [vmem:[%s259 + $0x600] sm:$0xff]
        %v502 = vld [vmem:[%s259 + $0x608] sm:$0xff]
        %v503 = vld [vmem:[%s259 + $0x610] sm:$0xff]
        %v504 = vld [vmem:[%s259 + $0x618] sm:$0xff]
        %v505 = vld [vmem:[%s259 + $0x620] sm:$0xff]
        %v506 = vld [vmem:[%s259 + $0x628] sm:$0xff]
        %v507 = vld [vmem:[%s259 + $0x630] sm:$0xff]
        %v508 = vld [vmem:[%s259 + $0x638] sm:$0xff]
        %v509 = vld [vmem:[%s259 + $0x640] sm:$0xff]
        %v510 = vld [vmem:[%s259 + $0x648] sm:$0xff]
        %v511 = vld [vmem:[%s259 + $0x650] sm:$0xff]
        %v512 = vld [vmem:[%s259 + $0x658] sm:$0xff]
        %v513 = vld [vmem:[%s259 + $0x660] sm:$0xff]
        %v514 = vld [vmem:[%s259 + $0x668] sm:$0xff]
        %v515 = vld [vmem:[%s259 + $0x670] sm:$0xff]
        %v516 = vld [vmem:[%s259 + $0x678] sm:$0xff]
        %v517 = vld [vmem:[%s259 + $0x680] sm:$0xff]
        %v518 = vld [vmem:[%s259 + $0x688] sm:$0xff]
        %v519 = vld [vmem:[%s259 + $0x690] sm:$0xff]
        %v520 = vld [vmem:[%s259 + $0x698] sm:$0xff]
        %v521 = vld [vmem:[%s259 + $0x6a0] sm:$0xff]
        %v522 = vld [vmem:[%s259 + $0x6a8] sm:$0xff]
        %v523 = vld [vmem:[%s259 + $0x6b0] sm:$0xff]
        %v524 = vld [vmem:[%s259 + $0x6b8] sm:$0xff]
        %v525 = vld [vmem:[%s259 + $0x6c0] sm:$0xff]
        %v526 = vld [vmem:[%s259 + $0x6c8] sm:$0xff]
        %v527 = vld [vmem:[%s259 + $0x6d0] sm:$0xff]
        %v528 = vld [vmem:[%s259 + $0x6d8] sm:$0xff]
        %v529 = vld [vmem:[%s259 + $0x6e0] sm:$0xff]
        %v530 = vld [vmem:[%s259 + $0x6e8] sm:$0xff]
        %v531 = vld [vmem:[%s259 + $0x6f0] sm:$0xff]
        %v532 = vld [vmem:[%s259 + $0x6f8] sm:$0xff]
        %v533 = vld [vmem:[%s259 + $0x700] sm:$0xff]
        %v534 = vld [vmem:[%s259 + $0x708] sm:$0xff]
        %v535 = vld [vmem:[%s259 + $0x710] sm:$0xff]
        %v536 = vld [vmem:[%s259 + $0x718] sm:$0xff]
        %v537 = vld [vmem:[%s259 + $0x720] sm:$0xff]
        %v538 = vld [vmem:[%s259 + $0x728] sm:$0xff]
        %v539 = vld [vmem:[%s259 + $0x730] sm:$0xff]
        %v540 = vld [vmem:[%s259 + $0x738] sm:$0xff]
        %v541 = vld [vmem:[%s259 + $0x740] sm:$0xff]
        %v542 = vld [vmem:[%s259 + $0x748] sm:$0xff]
        %v543 = vld [vmem:[%s259 + $0x750] sm:$0xff]
        %v544 = vld [vmem:[%s259 + $0x758] sm:$0xff]
        %v545 = vld [vmem:[%s259 + $0x760] sm:$0xff]
        %v546 = vld [vmem:[%s259 + $0x768] sm:$0xff]
        %v547 = vld [vmem:[%s259 + $0x770] sm:$0xff]
        %v548 = vld [vmem:[%s259 + $0x778] sm:$0xff]
        %v549 = vld [vmem:[%s259 + $0x780] sm:$0xff]
        %v550 = vld [vmem:[%s259 + $0x788] sm:$0xff]
        %v551 = vld [vmem:[%s259 + $0x790] sm:$0xff]
        %v552 = vld [vmem:[%s259 + $0x798] sm:$0xff]
        %v553 = vld [vmem:[%s259 + $0x7a0] sm:$0xff]
        %v554 = vld [vmem:[%s259 + $0x7a8] sm:$0xff]
        %v555 = vld [vmem:[%s259 + $0x7b0] sm:$0xff]
        %v556 = vld [vmem:[%s259 + $0x7b8] sm:$0xff]
        %v557 = vld [vmem:[%s259 + $0x7c0] sm:$0xff]
        %v558 = vld [vmem:[%s259 + $0x7c8] sm:$0xff]
        %v559 = vld [vmem:[%s259 + $0x7d0] sm:$0xff]
        %v560 = vld [vmem:[%s259 + $0x7d8] sm:$0xff]
        %v561 = vld [vmem:[%s259 + $0x7e0] sm:$0xff]
        %v562 = vld [vmem:[%s259 + $0x7e8] sm:$0xff]
        %v563 = vld [vmem:[%s259 + $0x7f0] sm:$0xff]
        %v564 = vld [vmem:[%s259 + $0x7f8] sm:$0xff]
        %v565 = vld [vmem:[%s259 + $0x800] sm:$0xff]
        %v566 = vld [vmem:[%s259 + $0x808] sm:$0xff]
        %v567 = vld [vmem:[%s259 + $0x810] sm:$0xff]
        %v568 = vld [vmem:[%s259 + $0x818] sm:$0xff]
        %v569 = vld [vmem:[%s259 + $0x820] sm:$0xff]
        %v570 = vld [vmem:[%s259 + $0x828] sm:$0xff]
        %v571 = vld [vmem:[%s259 + $0x830] sm:$0xff]
        %v572 = vld [vmem:[%s259 + $0x838] sm:$0xff]
        %v573 = vld [vmem:[%s259 + $0x840] sm:$0xff]
        %v574 = vld [vmem:[%s259 + $0x848] sm:$0xff]
        %v575 = vld [vmem:[%s259 + $0x850] sm:$0xff]
        %v576 = vld [vmem:[%s259 + $0x858] sm:$0xff]
        %v577 = vld [vmem:[%s259 + $0x860] sm:$0xff]
        %v578 = vld [vmem:[%s259 + $0x868] sm:$0xff]
        %v579 = vld [vmem:[%s259 + $0x870] sm:$0xff]
        %v580 = vld [vmem:[%s259 + $0x878] sm:$0xff]
        %v581 = vld [vmem:[%s259 + $0x880] sm:$0xff]
        %v582 = vld [vmem:[%s259 + $0x888] sm:$0xff]
        %v583 = vld [vmem:[%s259 + $0x890] sm:$0xff]
        %v584 = vld [vmem:[%s259 + $0x898] sm:$0xff]
        %v585 = vld [vmem:[%s259 + $0x8a0] sm:$0xff]
        %v586 = vld [vmem:[%s259 + $0x8a8] sm:$0xff]
        %v587 = vld [vmem:[%s259 + $0x8b0] sm:$0xff]
        %v588 = vld [vmem:[%s259 + $0x8b8] sm:$0xff]
        %v589 = vld [vmem:[%s259 + $0x8c0] sm:$0xff]
        %v590 = vld [vmem:[%s259 + $0x8c8] sm:$0xff]
        %v591 = vld [vmem:[%s259 + $0x8d0] sm:$0xff]
        %v592 = vld [vmem:[%s259 + $0x8d8] sm:$0xff]
        %v593 = vld [vmem:[%s259 + $0x8e0] sm:$0xff]
        %v594 = vld [vmem:[%s259 + $0x8e8] sm:$0xff]
        %v595 = vld [vmem:[%s259 + $0x8f0] sm:$0xff]
        %v596 = vld [vmem:[%s259 + $0x8f8] sm:$0xff]
        %v597 = vld [vmem:[%s259 + $0x900] sm:$0xff]
        %v598 = vld [vmem:[%s259 + $0x908] sm:$0xff]
        %v599 = vld [vmem:[%s259 + $0x910] sm:$0xff]
        %v600 = vld [vmem:[%s259 + $0x918] sm:$0xff]
        %v601 = vld [vmem:[%s259 + $0x920] sm:$0xff]
        %v602 = vld [vmem:[%s259 + $0x928] sm:$0xff]
        %v603 = vld [vmem:[%s259 + $0x930] sm:$0xff]
        %v604 = vld [vmem:[%s259 + $0x938] sm:$0xff]
        %v605 = vld [vmem:[%s259 + $0x940] sm:$0xff]
        %v606 = vld [vmem:[%s259 + $0x948] sm:$0xff]
        %v607 = vld [vmem:[%s259 + $0x950] sm:$0xff]
        %v608 = vld [vmem:[%s259 + $0x958] sm:$0xff]
        %v609 = vld [vmem:[%s259 + $0x960] sm:$0xff]
        %v610 = vld [vmem:[%s259 + $0x968] sm:$0xff]
        %v611 = vld [vmem:[%s259 + $0x970] sm:$0xff]
        %v612 = vld [vmem:[%s259 + $0x978] sm:$0xff]
        %v613 = vld [vmem:[%s259 + $0x980] sm:$0xff]
        %v614 = vld [vmem:[%s259 + $0x988] sm:$0xff]
        %v615 = vld [vmem:[%s259 + $0x990] sm:$0xff]
        %v616 = vld [vmem:[%s259 + $0x998] sm:$0xff]
        %v617 = vld [vmem:[%s259 + $0x9a0] sm:$0xff]
        %v618 = vld [vmem:[%s259 + $0x9a8] sm:$0xff]
        %v619 = vld [vmem:[%s259 + $0x9b0] sm:$0xff]
        %v620 = vld [vmem:[%s259 + $0x9b8] sm:$0xff]
        %v621 = vld [vmem:[%s259 + $0x9c0] sm:$0xff]
        %v622 = vld [vmem:[%s259 + $0x9c8] sm:$0xff]
        %v623 = vld [vmem:[%s259 + $0x9d0] sm:$0xff]
        %v624 = vld [vmem:[%s259 + $0x9d8] sm:$0xff]
        %v625 = vld [vmem:[%s259 + $0x9e0] sm:$0xff]
        %v626 = vld [vmem:[%s259 + $0x9e8] sm:$0xff]
        %v627 = vld [vmem:[%s259 + $0x9f0] sm:$0xff]
        %v628 = vld [vmem:[%s259 + $0x9f8] sm:$0xff]
        %v629 = vld [vmem:[%s259 + $0xa00] sm:$0xff]
        %v630 = vld [vmem:[%s259 + $0xa08] sm:$0xff]
        %v631 = vld [vmem:[%s259 + $0xa10] sm:$0xff]
        %v632 = vld [vmem:[%s259 + $0xa18] sm:$0xff]
        %v633 = vld [vmem:[%s259 + $0xa20] sm:$0xff]
        %v634 = vld [vmem:[%s259 + $0xa28] sm:$0xff]
        %v635 = vld [vmem:[%s259 + $0xa30] sm:$0xff]
        %v636 = vld [vmem:[%s259 + $0xa38] sm:$0xff]
        %v637 = vld [vmem:[%s259 + $0xa40] sm:$0xff]
        %v638 = vld [vmem:[%s259 + $0xa48] sm:$0xff]
        %v639 = vld [vmem:[%s259 + $0xa50] sm:$0xff]
        %v640 = vld [vmem:[%s259 + $0xa58] sm:$0xff]
        %v641 = vld [vmem:[%s259 + $0xa60] sm:$0xff]
        %v642 = vld [vmem:[%s259 + $0xa68] sm:$0xff]
        %v643 = vld [vmem:[%s259 + $0xa70] sm:$0xff]
        %v644 = vld [vmem:[%s259 + $0xa78] sm:$0xff]
        %v645 = vld [vmem:[%s259 + $0xa80] sm:$0xff]
        %v646 = vld [vmem:[%s259 + $0xa88] sm:$0xff]
        %v647 = vld [vmem:[%s259 + $0xa90] sm:$0xff]
        %v648 = vld [vmem:[%s259 + $0xa98] sm:$0xff]
        %v649 = vld [vmem:[%s259 + $0xaa0] sm:$0xff]
        %v650 = vld [vmem:[%s259 + $0xaa8] sm:$0xff]
        %v651 = vld [vmem:[%s259 + $0xab0] sm:$0xff]
        %v652 = vld [vmem:[%s259 + $0xab8] sm:$0xff]
        %v653 = vld [vmem:[%s259 + $0xac0] sm:$0xff]
        %v654 = vld [vmem:[%s259 + $0xac8] sm:$0xff]
        %v655 = vld [vmem:[%s259 + $0xad0] sm:$0xff]
        %v656 = vld [vmem:[%s259 + $0xad8] sm:$0xff]
        %v657 = vld [vmem:[%s259 + $0xae0] sm:$0xff]
        %v658 = vld [vmem:[%s259 + $0xae8] sm:$0xff]
        %v659 = vld [vmem:[%s259 + $0xaf0] sm:$0xff]
        %v660 = vld [vmem:[%s259 + $0xaf8] sm:$0xff]
        %v661 = vld [vmem:[%s259 + $0xb00] sm:$0xff]
        %v662 = vld [vmem:[%s259 + $0xb08] sm:$0xff]
        %v663 = vld [vmem:[%s259 + $0xb10] sm:$0xff]
        %v664 = vld [vmem:[%s259 + $0xb18] sm:$0xff]
        %v665 = vld [vmem:[%s259 + $0xb20] sm:$0xff]
        %v666 = vld [vmem:[%s259 + $0xb28] sm:$0xff]
        %v667 = vld [vmem:[%s259 + $0xb30] sm:$0xff]
        %v668 = vld [vmem:[%s259 + $0xb38] sm:$0xff]
        %v669 = vld [vmem:[%s259 + $0xb40] sm:$0xff]
        %v670 = vld [vmem:[%s259 + $0xb48] sm:$0xff]
        %v671 = vld [vmem:[%s259 + $0xb50] sm:$0xff]
        %v672 = vld [vmem:[%s259 + $0xb58] sm:$0xff]
        %v673 = vld [vmem:[%s259 + $0xb60] sm:$0xff]
        %v674 = vld [vmem:[%s259 + $0xb68] sm:$0xff]
        %v675 = vld [vmem:[%s259 + $0xb70] sm:$0xff]
        %v676 = vld [vmem:[%s259 + $0xb78] sm:$0xff]
        %v677 = vld [vmem:[%s259 + $0xb80] sm:$0xff]
        %v678 = vld [vmem:[%s259 + $0xb88] sm:$0xff]
        %v679 = vld [vmem:[%s259 + $0xb90] sm:$0xff]
        %v680 = vld [vmem:[%s259 + $0xb98] sm:$0xff]
        %v681 = vld [vmem:[%s259 + $0xba0] sm:$0xff]
        %v682 = vld [vmem:[%s259 + $0xba8] sm:$0xff]
        %v683 = vld [vmem:[%s259 + $0xbb0] sm:$0xff]
        %v684 = vld [vmem:[%s259 + $0xbb8] sm:$0xff]
        %v685 = vld [vmem:[%s259 + $0xbc0] sm:$0xff]
        %v686 = vld [vmem:[%s259 + $0xbc8] sm:$0xff]
        %v687 = vld [vmem:[%s259 + $0xbd0] sm:$0xff]
        %v688 = vld [vmem:[%s259 + $0xbd8] sm:$0xff]
        %v689 = vld [vmem:[%s259 + $0xbe0] sm:$0xff]
        %v690 = vld [vmem:[%s259 + $0xbe8] sm:$0xff]
        %v691 = vld [vmem:[%s259 + $0xbf0] sm:$0xff]
        %v692 = vld [vmem:[%s259 + $0xbf8] sm:$0xff]
        %v693 = vld [vmem:[%s259 + $0xc00] sm:$0xff]
        %v694 = vld [vmem:[%s259 + $0xc08] sm:$0xff]
        %v695 = vld [vmem:[%s259 + $0xc10] sm:$0xff]
        %v696 = vld [vmem:[%s259 + $0xc18] sm:$0xff]
        %v697 = vld [vmem:[%s259 + $0xc20] sm:$0xff]
        %v698 = vld [vmem:[%s259 + $0xc28] sm:$0xff]
        %v699 = vld [vmem:[%s259 + $0xc30] sm:$0xff]
        %v700 = vld [vmem:[%s259 + $0xc38] sm:$0xff]
        %v701 = vld [vmem:[%s259 + $0xc40] sm:$0xff]
        %v702 = vld [vmem:[%s259 + $0xc48] sm:$0xff]
        %v703 = vld [vmem:[%s259 + $0xc50] sm:$0xff]
        %v704 = vld [vmem:[%s259 + $0xc58] sm:$0xff]
        %v705 = vld [vmem:[%s259 + $0xc60] sm:$0xff]
        %v706 = vld [vmem:[%s259 + $0xc68] sm:$0xff]
        %v707 = vld [vmem:[%s259 + $0xc70] sm:$0xff]
        %v708 = vld [vmem:[%s259 + $0xc78] sm:$0xff]
        %v709 = vld [vmem:[%s259 + $0xc80] sm:$0xff]
        %v710 = vld [vmem:[%s259 + $0xc88] sm:$0xff]
        %v711 = vld [vmem:[%s259 + $0xc90] sm:$0xff]
        %v712 = vld [vmem:[%s259 + $0xc98] sm:$0xff]
        %v713 = vld [vmem:[%s259 + $0xca0] sm:$0xff]
        %v714 = vld [vmem:[%s259 + $0xca8] sm:$0xff]
        %v715 = vld [vmem:[%s259 + $0xcb0] sm:$0xff]
        %v716 = vld [vmem:[%s259 + $0xcb8] sm:$0xff]
        %v717 = vld [vmem:[%s259 + $0xcc0] sm:$0xff]
        %v718 = vld [vmem:[%s259 + $0xcc8] sm:$0xff]
        %v719 = vld [vmem:[%s259 + $0xcd0] sm:$0xff]
        %v720 = vld [vmem:[%s259 + $0xcd8] sm:$0xff]
        %v721 = vld [vmem:[%s259 + $0xce0] sm:$0xff]
        %v722 = vld [vmem:[%s259 + $0xce8] sm:$0xff]
        %v723 = vld [vmem:[%s259 + $0xcf0] sm:$0xff]
        %v724 = vld [vmem:[%s259 + $0xcf8] sm:$0xff]
        %v725 = vld [vmem:[%s259 + $0xd00] sm:$0xff]
        %v726 = vld [vmem:[%s259 + $0xd08] sm:$0xff]
        %v727 = vld [vmem:[%s259 + $0xd10] sm:$0xff]
        %v728 = vld [vmem:[%s259 + $0xd18] sm:$0xff]
        %v729 = vld [vmem:[%s259 + $0xd20] sm:$0xff]
        %v730 = vld [vmem:[%s259 + $0xd28] sm:$0xff]
        %v731 = vld [vmem:[%s259 + $0xd30] sm:$0xff]
        %v732 = vld [vmem:[%s259 + $0xd38] sm:$0xff]
        %v733 = vld [vmem:[%s259 + $0xd40] sm:$0xff]
        %v734 = vld [vmem:[%s259 + $0xd48] sm:$0xff]
        %v735 = vld [vmem:[%s259 + $0xd50] sm:$0xff]
        %v736 = vld [vmem:[%s259 + $0xd58] sm:$0xff]
        %v737 = vld [vmem:[%s259 + $0xd60] sm:$0xff]
        %v738 = vld [vmem:[%s259 + $0xd68] sm:$0xff]
        %v739 = vld [vmem:[%s259 + $0xd70] sm:$0xff]
        %v740 = vld [vmem:[%s259 + $0xd78] sm:$0xff]
        %v741 = vld [vmem:[%s259 + $0xd80] sm:$0xff]
        %v742 = vld [vmem:[%s259 + $0xd88] sm:$0xff]
        %v743 = vld [vmem:[%s259 + $0xd90] sm:$0xff]
        %v744 = vld [vmem:[%s259 + $0xd98] sm:$0xff]
        %v745 = vld [vmem:[%s259 + $0xda0] sm:$0xff]
        %v746 = vld [vmem:[%s259 + $0xda8] sm:$0xff]
        %v747 = vld [vmem:[%s259 + $0xdb0] sm:$0xff]
        %v748 = vld [vmem:[%s259 + $0xdb8] sm:$0xff]
        %v749 = vld [vmem:[%s259 + $0xdc0] sm:$0xff]
        %v750 = vld [vmem:[%s259 + $0xdc8] sm:$0xff]
        %v751 = vld [vmem:[%s259 + $0xdd0] sm:$0xff]
        %v752 = vld [vmem:[%s259 + $0xdd8] sm:$0xff]
        %v753 = vld [vmem:[%s259 + $0xde0] sm:$0xff]
        %v754 = vld [vmem:[%s259 + $0xde8] sm:$0xff]
        %v755 = vld [vmem:[%s259 + $0xdf0] sm:$0xff]
        %v756 = vld [vmem:[%s259 + $0xdf8] sm:$0xff]
        %v757 = vld [vmem:[%s259 + $0xe00] sm:$0xff]
        %v758 = vld [vmem:[%s259 + $0xe08] sm:$0xff]
        %v759 = vld [vmem:[%s259 + $0xe10] sm:$0xff]
        %v760 = vld [vmem:[%s259 + $0xe18] sm:$0xff]
        %v761 = vld [vmem:[%s259 + $0xe20] sm:$0xff]
        %v762 = vld [vmem:[%s259 + $0xe28] sm:$0xff]
        %v763 = vld [vmem:[%s259 + $0xe30] sm:$0xff]
        %v764 = vld [vmem:[%s259 + $0xe38] sm:$0xff]
        %v765 = vld [vmem:[%s259 + $0xe40] sm:$0xff]
        %v766 = vld [vmem:[%s259 + $0xe48] sm:$0xff]
        %v767 = vld [vmem:[%s259 + $0xe50] sm:$0xff]
        %v768 = vld [vmem:[%s259 + $0xe58] sm:$0xff]
        %v769 = vld [vmem:[%s259 + $0xe60] sm:$0xff]
        %v770 = vld [vmem:[%s259 + $0xe68] sm:$0xff]
        %v771 = vld [vmem:[%s259 + $0xe70] sm:$0xff]
        %v772 = vld [vmem:[%s259 + $0xe78] sm:$0xff]
        %v773 = vld [vmem:[%s259 + $0xe80] sm:$0xff]
        %v774 = vld [vmem:[%s259 + $0xe88] sm:$0xff]
        %v775 = vld [vmem:[%s259 + $0xe90] sm:$0xff]
        %v776 = vld [vmem:[%s259 + $0xe98] sm:$0xff]
        %v777 = vld [vmem:[%s259 + $0xea0] sm:$0xff]
        %v778 = vld [vmem:[%s259 + $0xea8] sm:$0xff]
        %v779 = vld [vmem:[%s259 + $0xeb0] sm:$0xff]
        %v780 = vld [vmem:[%s259 + $0xeb8] sm:$0xff]
        %v781 = vld [vmem:[%s259 + $0xec0] sm:$0xff]
        %v782 = vld [vmem:[%s259 + $0xec8] sm:$0xff]
        %v783 = vld [vmem:[%s259 + $0xed0] sm:$0xff]
        %v784 = vld [vmem:[%s259 + $0xed8] sm:$0xff]
        %v785 = vld [vmem:[%s259 + $0xee0] sm:$0xff]
        %v786 = vld [vmem:[%s259 + $0xee8] sm:$0xff]
        %v787 = vld [vmem:[%s259 + $0xef0] sm:$0xff]
        %v788 = vld [vmem:[%s259 + $0xef8] sm:$0xff]
        %v789 = vld [vmem:[%s259 + $0xf00] sm:$0xff]
        %v790 = vld [vmem:[%s259 + $0xf08] sm:$0xff]
        %v791 = vld [vmem:[%s259 + $0xf10] sm:$0xff]
        %v792 = vld [vmem:[%s259 + $0xf18] sm:$0xff]
        %v793 = vld [vmem:[%s259 + $0xf20] sm:$0xff]
        %v794 = vld [vmem:[%s259 + $0xf28] sm:$0xff]
        %v795 = vld [vmem:[%s259 + $0xf30] sm:$0xff]
        %v796 = vld [vmem:[%s259 + $0xf38] sm:$0xff]
        %v797 = vld [vmem:[%s259 + $0xf40] sm:$0xff]
        %v798 = vld [vmem:[%s259 + $0xf48] sm:$0xff]
        %v799 = vld [vmem:[%s259 + $0xf50] sm:$0xff]
        %v800 = vld [vmem:[%s259 + $0xf58] sm:$0xff]
        %v801 = vld [vmem:[%s259 + $0xf60] sm:$0xff]
        %v802 = vld [vmem:[%s259 + $0xf68] sm:$0xff]
        %v803 = vld [vmem:[%s259 + $0xf70] sm:$0xff]
        %v804 = vld [vmem:[%s259 + $0xf78] sm:$0xff]
        %v805 = vld [vmem:[%s259 + $0xf80] sm:$0xff]
        %v806 = vld [vmem:[%s259 + $0xf88] sm:$0xff]
        %v807 = vld [vmem:[%s259 + $0xf90] sm:$0xff]
        %v808 = vld [vmem:[%s259 + $0xf98] sm:$0xff]
        %v809 = vld [vmem:[%s259 + $0xfa0] sm:$0xff]
        %v810 = vld [vmem:[%s259 + $0xfa8] sm:$0xff]
        %v811 = vld [vmem:[%s259 + $0xfb0] sm:$0xff]
        %v812 = vld [vmem:[%s259 + $0xfb8] sm:$0xff]
        %v813 = vld [vmem:[%s259 + $0xfc0] sm:$0xff]
        %v814 = vld [vmem:[%s259 + $0xfc8] sm:$0xff]
        %v815 = vld [vmem:[%s259 + $0xfd0] sm:$0xff]
        %v816 = vld [vmem:[%s259 + $0xfd8] sm:$0xff]
        %v817 = vld [vmem:[%s259 + $0xfe0] sm:$0xff]
        %v818 = vld [vmem:[%s259 + $0xfe8] sm:$0xff]
        %v819 = vld [vmem:[%s259 + $0xff0] sm:$0xff]
        %v820 = vld [vmem:[%s259 + $0xff8] sm:$0xff]
        %v821 = vpack.c.bf16 %v317, %v309
        %v822 = vpack.c.bf16 %v318, %v310
        %v823 = vpack.c.bf16 %v319, %v311
        %v824 = vpack.c.bf16 %v320, %v312
        %v825 = vpack.c.bf16 %v321, %v313
        %v826 = vpack.c.bf16 %v322, %v314
        %v827 = vpack.c.bf16 %v323, %v315
        %v828 = vpack.c.bf16 %v324, %v316
        %v829 = vpack.c.bf16 %v333, %v325
        %v830 = vpack.c.bf16 %v334, %v326
        %v831 = vpack.c.bf16 %v335, %v327
        %v832 = vpack.c.bf16 %v336, %v328
        %v833 = vpack.c.bf16 %v337, %v329
        %v834 = vpack.c.bf16 %v338, %v330
        %v835 = vpack.c.bf16 %v339, %v331
        %v836 = vpack.c.bf16 %v340, %v332
        %v837 = vpack.c.bf16 %v349, %v341
        %v838 = vpack.c.bf16 %v350, %v342
        %v839 = vpack.c.bf16 %v351, %v343
        %v840 = vpack.c.bf16 %v352, %v344
        %v841 = vpack.c.bf16 %v353, %v345
        %v842 = vpack.c.bf16 %v354, %v346
        %v843 = vpack.c.bf16 %v355, %v347
        %v844 = vpack.c.bf16 %v356, %v348
        %v845 = vpack.c.bf16 %v365, %v357
        %v846 = vpack.c.bf16 %v366, %v358
        %v847 = vpack.c.bf16 %v367, %v359
        %v848 = vpack.c.bf16 %v368, %v360
        %v849 = vpack.c.bf16 %v369, %v361
        %v850 = vpack.c.bf16 %v370, %v362
        %v851 = vpack.c.bf16 %v371, %v363
        %v852 = vpack.c.bf16 %v372, %v364
        %v853 = vpack.c.bf16 %v381, %v373
        %v854 = vpack.c.bf16 %v382, %v374
        %v855 = vpack.c.bf16 %v383, %v375
        %v856 = vpack.c.bf16 %v384, %v376
        %v857 = vpack.c.bf16 %v385, %v377
        %v858 = vpack.c.bf16 %v386, %v378
        %v859 = vpack.c.bf16 %v387, %v379
        %v860 = vpack.c.bf16 %v388, %v380
        %v861 = vpack.c.bf16 %v397, %v389
        %v862 = vpack.c.bf16 %v398, %v390
        %v863 = vpack.c.bf16 %v399, %v391
        %v864 = vpack.c.bf16 %v400, %v392
        %v865 = vpack.c.bf16 %v401, %v393
        %v866 = vpack.c.bf16 %v402, %v394
        %v867 = vpack.c.bf16 %v403, %v395
        %v868 = vpack.c.bf16 %v404, %v396
        %v869 = vpack.c.bf16 %v413, %v405
        %v870 = vpack.c.bf16 %v414, %v406
        %v871 = vpack.c.bf16 %v415, %v407
        %v872 = vpack.c.bf16 %v416, %v408
        %v873 = vpack.c.bf16 %v417, %v409
        %v874 = vpack.c.bf16 %v418, %v410
        %v875 = vpack.c.bf16 %v419, %v411
        %v876 = vpack.c.bf16 %v420, %v412
        %v877 = vpack.c.bf16 %v429, %v421
        %v878 = vpack.c.bf16 %v430, %v422
        %v879 = vpack.c.bf16 %v431, %v423
        %v880 = vpack.c.bf16 %v432, %v424
        %v881 = vpack.c.bf16 %v433, %v425
        %v882 = vpack.c.bf16 %v434, %v426
        %v883 = vpack.c.bf16 %v435, %v427
        %v884 = vpack.c.bf16 %v436, %v428
        %v885 = vpack.c.bf16 %v445, %v437
        %v886 = vpack.c.bf16 %v446, %v438
        %v887 = vpack.c.bf16 %v447, %v439
        %v888 = vpack.c.bf16 %v448, %v440
        %v889 = vpack.c.bf16 %v449, %v441
        %v890 = vpack.c.bf16 %v450, %v442
        %v891 = vpack.c.bf16 %v451, %v443
        %v892 = vpack.c.bf16 %v452, %v444
        %v893 = vpack.c.bf16 %v461, %v453
        %v894 = vpack.c.bf16 %v462, %v454
        %v895 = vpack.c.bf16 %v463, %v455
        %v896 = vpack.c.bf16 %v464, %v456
        %v897 = vpack.c.bf16 %v465, %v457
        %v898 = vpack.c.bf16 %v466, %v458
        %v899 = vpack.c.bf16 %v467, %v459
        %v900 = vpack.c.bf16 %v468, %v460
        %v901 = vpack.c.bf16 %v477, %v469
        %v902 = vpack.c.bf16 %v478, %v470
        %v903 = vpack.c.bf16 %v479, %v471
        %v904 = vpack.c.bf16 %v480, %v472
        %v905 = vpack.c.bf16 %v481, %v473
        %v906 = vpack.c.bf16 %v482, %v474
        %v907 = vpack.c.bf16 %v483, %v475
        %v908 = vpack.c.bf16 %v484, %v476
        %v909 = vpack.c.bf16 %v493, %v485
        %v910 = vpack.c.bf16 %v494, %v486
        %v911 = vpack.c.bf16 %v495, %v487
        %v912 = vpack.c.bf16 %v496, %v488
        %v913 = vpack.c.bf16 %v497, %v489
        %v914 = vpack.c.bf16 %v498, %v490
        %v915 = vpack.c.bf16 %v499, %v491
        %v916 = vpack.c.bf16 %v500, %v492
        %v917 = vpack.c.bf16 %v509, %v501
        %v918 = vpack.c.bf16 %v510, %v502
        %v919 = vpack.c.bf16 %v511, %v503
        %v920 = vpack.c.bf16 %v512, %v504
        %v921 = vpack.c.bf16 %v513, %v505
        %v922 = vpack.c.bf16 %v514, %v506
        %v923 = vpack.c.bf16 %v515, %v507
        %v924 = vpack.c.bf16 %v516, %v508
        %v925 = vpack.c.bf16 %v525, %v517
        %v926 = vpack.c.bf16 %v526, %v518
        %v927 = vpack.c.bf16 %v527, %v519
        %v928 = vpack.c.bf16 %v528, %v520
        %v929 = vpack.c.bf16 %v529, %v521
        %v930 = vpack.c.bf16 %v530, %v522
        %v931 = vpack.c.bf16 %v531, %v523
        %v932 = vpack.c.bf16 %v532, %v524
        %v933 = vpack.c.bf16 %v541, %v533
        %v934 = vpack.c.bf16 %v542, %v534
        %v935 = vpack.c.bf16 %v543, %v535
        %v936 = vpack.c.bf16 %v544, %v536
        %v937 = vpack.c.bf16 %v545, %v537
        %v938 = vpack.c.bf16 %v546, %v538
        %v939 = vpack.c.bf16 %v547, %v539
        %v940 = vpack.c.bf16 %v548, %v540
        %v941 = vpack.c.bf16 %v557, %v549
        %v942 = vpack.c.bf16 %v558, %v550
        %v943 = vpack.c.bf16 %v559, %v551
        %v944 = vpack.c.bf16 %v560, %v552
        %v945 = vpack.c.bf16 %v561, %v553
        %v946 = vpack.c.bf16 %v562, %v554
        %v947 = vpack.c.bf16 %v563, %v555
        %v948 = vpack.c.bf16 %v564, %v556
        %v949 = vpack.c.bf16 %v573, %v565
        %v950 = vpack.c.bf16 %v574, %v566
        %v951 = vpack.c.bf16 %v575, %v567
        %v952 = vpack.c.bf16 %v576, %v568
        %v953 = vpack.c.bf16 %v577, %v569
        %v954 = vpack.c.bf16 %v578, %v570
        %v955 = vpack.c.bf16 %v579, %v571
        %v956 = vpack.c.bf16 %v580, %v572
        %v957 = vpack.c.bf16 %v589, %v581
        %v958 = vpack.c.bf16 %v590, %v582
        %v959 = vpack.c.bf16 %v591, %v583
        %v960 = vpack.c.bf16 %v592, %v584
        %v961 = vpack.c.bf16 %v593, %v585
        %v962 = vpack.c.bf16 %v594, %v586
        %v963 = vpack.c.bf16 %v595, %v587
        %v964 = vpack.c.bf16 %v596, %v588
        %v965 = vpack.c.bf16 %v605, %v597
        %v966 = vpack.c.bf16 %v606, %v598
        %v967 = vpack.c.bf16 %v607, %v599
        %v968 = vpack.c.bf16 %v608, %v600
        %v969 = vpack.c.bf16 %v609, %v601
        %v970 = vpack.c.bf16 %v610, %v602
        %v971 = vpack.c.bf16 %v611, %v603
        %v972 = vpack.c.bf16 %v612, %v604
        %v973 = vpack.c.bf16 %v621, %v613
        %v974 = vpack.c.bf16 %v622, %v614
        %v975 = vpack.c.bf16 %v623, %v615
        %v976 = vpack.c.bf16 %v624, %v616
        %v977 = vpack.c.bf16 %v625, %v617
        %v978 = vpack.c.bf16 %v626, %v618
        %v979 = vpack.c.bf16 %v627, %v619
        %v980 = vpack.c.bf16 %v628, %v620
        %v981 = vpack.c.bf16 %v637, %v629
        %v982 = vpack.c.bf16 %v638, %v630
        %v983 = vpack.c.bf16 %v639, %v631
        %v984 = vpack.c.bf16 %v640, %v632
        %v985 = vpack.c.bf16 %v641, %v633
        %v986 = vpack.c.bf16 %v642, %v634
        %v987 = vpack.c.bf16 %v643, %v635
        %v988 = vpack.c.bf16 %v644, %v636
        %v989 = vpack.c.bf16 %v653, %v645
        %v990 = vpack.c.bf16 %v654, %v646
        %v991 = vpack.c.bf16 %v655, %v647
        %v992 = vpack.c.bf16 %v656, %v648
        %v993 = vpack.c.bf16 %v657, %v649
        %v994 = vpack.c.bf16 %v658, %v650
        %v995 = vpack.c.bf16 %v659, %v651
        %v996 = vpack.c.bf16 %v660, %v652
        %v997 = vpack.c.bf16 %v669, %v661
        %v998 = vpack.c.bf16 %v670, %v662
        %v999 = vpack.c.bf16 %v671, %v663
        %v1000 = vpack.c.bf16 %v672, %v664
        %v1001 = vpack.c.bf16 %v673, %v665
        %v1002 = vpack.c.bf16 %v674, %v666
        %v1003 = vpack.c.bf16 %v675, %v667
        %v1004 = vpack.c.bf16 %v676, %v668
        %v1005 = vpack.c.bf16 %v685, %v677
        %v1006 = vpack.c.bf16 %v686, %v678
        %v1007 = vpack.c.bf16 %v687, %v679
        %v1008 = vpack.c.bf16 %v688, %v680
        %v1009 = vpack.c.bf16 %v689, %v681
        %v1010 = vpack.c.bf16 %v690, %v682
        %v1011 = vpack.c.bf16 %v691, %v683
        %v1012 = vpack.c.bf16 %v692, %v684
        %v1013 = vpack.c.bf16 %v701, %v693
        %v1014 = vpack.c.bf16 %v702, %v694
        %v1015 = vpack.c.bf16 %v703, %v695
        %v1016 = vpack.c.bf16 %v704, %v696
        %v1017 = vpack.c.bf16 %v705, %v697
        %v1018 = vpack.c.bf16 %v706, %v698
        %v1019 = vpack.c.bf16 %v707, %v699
        %v1020 = vpack.c.bf16 %v708, %v700
        %v1021 = vpack.c.bf16 %v717, %v709
        %v1022 = vpack.c.bf16 %v718, %v710
        %v1023 = vpack.c.bf16 %v719, %v711
        %v1024 = vpack.c.bf16 %v720, %v712
        %v1025 = vpack.c.bf16 %v721, %v713
        %v1026 = vpack.c.bf16 %v722, %v714
        %v1027 = vpack.c.bf16 %v723, %v715
        %v1028 = vpack.c.bf16 %v724, %v716
        %v1029 = vpack.c.bf16 %v733, %v725
        %v1030 = vpack.c.bf16 %v734, %v726
        %v1031 = vpack.c.bf16 %v735, %v727
        %v1032 = vpack.c.bf16 %v736, %v728
        %v1033 = vpack.c.bf16 %v737, %v729
        %v1034 = vpack.c.bf16 %v738, %v730
        %v1035 = vpack.c.bf16 %v739, %v731
        %v1036 = vpack.c.bf16 %v740, %v732
        %v1037 = vpack.c.bf16 %v749, %v741
        %v1038 = vpack.c.bf16 %v750, %v742
        %v1039 = vpack.c.bf16 %v751, %v743
        %v1040 = vpack.c.bf16 %v752, %v744
        %v1041 = vpack.c.bf16 %v753, %v745
        %v1042 = vpack.c.bf16 %v754, %v746
        %v1043 = vpack.c.bf16 %v755, %v747
        %v1044 = vpack.c.bf16 %v756, %v748
        %v1045 = vpack.c.bf16 %v765, %v757
        %v1046 = vpack.c.bf16 %v766, %v758
        %v1047 = vpack.c.bf16 %v767, %v759
        %v1048 = vpack.c.bf16 %v768, %v760
        %v1049 = vpack.c.bf16 %v769, %v761
        %v1050 = vpack.c.bf16 %v770, %v762
        %v1051 = vpack.c.bf16 %v771, %v763
        %v1052 = vpack.c.bf16 %v772, %v764
        %v1053 = vpack.c.bf16 %v781, %v773
        %v1054 = vpack.c.bf16 %v782, %v774
        %v1055 = vpack.c.bf16 %v783, %v775
        %v1056 = vpack.c.bf16 %v784, %v776
        %v1057 = vpack.c.bf16 %v785, %v777
        %v1058 = vpack.c.bf16 %v786, %v778
        %v1059 = vpack.c.bf16 %v787, %v779
        %v1060 = vpack.c.bf16 %v788, %v780
        %v1061 = vpack.c.bf16 %v797, %v789
        %v1062 = vpack.c.bf16 %v798, %v790
        %v1063 = vpack.c.bf16 %v799, %v791
        %v1064 = vpack.c.bf16 %v800, %v792
        %v1065 = vpack.c.bf16 %v801, %v793
        %v1066 = vpack.c.bf16 %v802, %v794
        %v1067 = vpack.c.bf16 %v803, %v795
        %v1068 = vpack.c.bf16 %v804, %v796
        %v1069 = vpack.c.bf16 %v813, %v805
        %v1070 = vpack.c.bf16 %v814, %v806
        %v1071 = vpack.c.bf16 %v815, %v807
        %v1072 = vpack.c.bf16 %v816, %v808
        %v1073 = vpack.c.bf16 %v817, %v809
        %v1074 = vpack.c.bf16 %v818, %v810
        %v1075 = vpack.c.bf16 %v819, %v811
        %v1076 = vpack.c.bf16 %v820, %v812
        %v1077 = vld [vmem:[#allocation6] sm:$0xff]
        %v1078 = vld [vmem:[#allocation6 + $0x8] sm:$0xff]
        %v1079 = vld [vmem:[#allocation6 + $0x10] sm:$0xff]
        %v1080 = vld [vmem:[#allocation6 + $0x18] sm:$0xff]
        %v1081 = vld [vmem:[#allocation6 + $0x20] sm:$0xff]
        %v1082 = vld [vmem:[#allocation6 + $0x28] sm:$0xff]
        %v1083 = vld [vmem:[#allocation6 + $0x30] sm:$0xff]
        %v1084 = vld [vmem:[#allocation6 + $0x38] sm:$0xff]
        %v1085 = vld [vmem:[#allocation6 + $0x40] sm:$0xff]
        %v1086 = vld [vmem:[#allocation6 + $0x48] sm:$0xff]
        %v1087 = vld [vmem:[#allocation6 + $0x50] sm:$0xff]
        %v1088 = vld [vmem:[#allocation6 + $0x58] sm:$0xff]
        %v1089 = vld [vmem:[#allocation6 + $0x60] sm:$0xff]
        %v1090 = vld [vmem:[#allocation6 + $0x68] sm:$0xff]
        %v1091 = vld [vmem:[#allocation6 + $0x70] sm:$0xff]
        %v1092 = vld [vmem:[#allocation6 + $0x78] sm:$0xff]
        %v1093 = vld [vmem:[#allocation6 + $0x80] sm:$0xff]
        %v1094 = vld [vmem:[#allocation6 + $0x88] sm:$0xff]
        %v1095 = vld [vmem:[#allocation6 + $0x90] sm:$0xff]
        %v1096 = vld [vmem:[#allocation6 + $0x98] sm:$0xff]
        %v1097 = vld [vmem:[#allocation6 + $0xa0] sm:$0xff]
        %v1098 = vld [vmem:[#allocation6 + $0xa8] sm:$0xff]
        %v1099 = vld [vmem:[#allocation6 + $0xb0] sm:$0xff]
        %v1100 = vld [vmem:[#allocation6 + $0xb8] sm:$0xff]
        %v1101 = vld [vmem:[#allocation6 + $0xc0] sm:$0xff]
        %v1102 = vld [vmem:[#allocation6 + $0xc8] sm:$0xff]
        %v1103 = vld [vmem:[#allocation6 + $0xd0] sm:$0xff]
        %v1104 = vld [vmem:[#allocation6 + $0xd8] sm:$0xff]
        %v1105 = vld [vmem:[#allocation6 + $0xe0] sm:$0xff]
        %v1106 = vld [vmem:[#allocation6 + $0xe8] sm:$0xff]
        %v1107 = vld [vmem:[#allocation6 + $0xf0] sm:$0xff]
        %v1108 = vld [vmem:[#allocation6 + $0xf8] sm:$0xff]
        %v1109 = vld [vmem:[#allocation6 + $0x100] sm:$0xff]
        %v1110 = vld [vmem:[#allocation6 + $0x108] sm:$0xff]
        %v1111 = vld [vmem:[#allocation6 + $0x110] sm:$0xff]
        %v1112 = vld [vmem:[#allocation6 + $0x118] sm:$0xff]
        %v1113 = vld [vmem:[#allocation6 + $0x120] sm:$0xff]
        %v1114 = vld [vmem:[#allocation6 + $0x128] sm:$0xff]
        %v1115 = vld [vmem:[#allocation6 + $0x130] sm:$0xff]
        %v1116 = vld [vmem:[#allocation6 + $0x138] sm:$0xff]
        %v1117 = vld [vmem:[#allocation6 + $0x140] sm:$0xff]
        %v1118 = vld [vmem:[#allocation6 + $0x148] sm:$0xff]
        %v1119 = vld [vmem:[#allocation6 + $0x150] sm:$0xff]
        %v1120 = vld [vmem:[#allocation6 + $0x158] sm:$0xff]
        %v1121 = vld [vmem:[#allocation6 + $0x160] sm:$0xff]
        %v1122 = vld [vmem:[#allocation6 + $0x168] sm:$0xff]
        %v1123 = vld [vmem:[#allocation6 + $0x170] sm:$0xff]
        %v1124 = vld [vmem:[#allocation6 + $0x178] sm:$0xff]
        %v1125 = vld [vmem:[#allocation6 + $0x180] sm:$0xff]
        %v1126 = vld [vmem:[#allocation6 + $0x188] sm:$0xff]
        %v1127 = vld [vmem:[#allocation6 + $0x190] sm:$0xff]
        %v1128 = vld [vmem:[#allocation6 + $0x198] sm:$0xff]
        %v1129 = vld [vmem:[#allocation6 + $0x1a0] sm:$0xff]
        %v1130 = vld [vmem:[#allocation6 + $0x1a8] sm:$0xff]
        %v1131 = vld [vmem:[#allocation6 + $0x1b0] sm:$0xff]
        %v1132 = vld [vmem:[#allocation6 + $0x1b8] sm:$0xff]
        %v1133 = vld [vmem:[#allocation6 + $0x1c0] sm:$0xff]
        %v1134 = vld [vmem:[#allocation6 + $0x1c8] sm:$0xff]
        %v1135 = vld [vmem:[#allocation6 + $0x1d0] sm:$0xff]
        %v1136 = vld [vmem:[#allocation6 + $0x1d8] sm:$0xff]
        %v1137 = vld [vmem:[#allocation6 + $0x1e0] sm:$0xff]
        %v1138 = vld [vmem:[#allocation6 + $0x1e8] sm:$0xff]
        %v1139 = vld [vmem:[#allocation6 + $0x1f0] sm:$0xff]
        %v1140 = vld [vmem:[#allocation6 + $0x1f8] sm:$0xff]
        %v1141 = vld [vmem:[#allocation6 + $0x200] sm:$0xff]
        %v1142 = vld [vmem:[#allocation6 + $0x208] sm:$0xff]
        %v1143 = vld [vmem:[#allocation6 + $0x210] sm:$0xff]
        %v1144 = vld [vmem:[#allocation6 + $0x218] sm:$0xff]
        %v1145 = vld [vmem:[#allocation6 + $0x220] sm:$0xff]
        %v1146 = vld [vmem:[#allocation6 + $0x228] sm:$0xff]
        %v1147 = vld [vmem:[#allocation6 + $0x230] sm:$0xff]
        %v1148 = vld [vmem:[#allocation6 + $0x238] sm:$0xff]
        %v1149 = vld [vmem:[#allocation6 + $0x240] sm:$0xff]
        %v1150 = vld [vmem:[#allocation6 + $0x248] sm:$0xff]
        %v1151 = vld [vmem:[#allocation6 + $0x250] sm:$0xff]
        %v1152 = vld [vmem:[#allocation6 + $0x258] sm:$0xff]
        %v1153 = vld [vmem:[#allocation6 + $0x260] sm:$0xff]
        %v1154 = vld [vmem:[#allocation6 + $0x268] sm:$0xff]
        %v1155 = vld [vmem:[#allocation6 + $0x270] sm:$0xff]
        %v1156 = vld [vmem:[#allocation6 + $0x278] sm:$0xff]
        %v1157 = vld [vmem:[#allocation6 + $0x280] sm:$0xff]
        %v1158 = vld [vmem:[#allocation6 + $0x288] sm:$0xff]
        %v1159 = vld [vmem:[#allocation6 + $0x290] sm:$0xff]
        %v1160 = vld [vmem:[#allocation6 + $0x298] sm:$0xff]
        %v1161 = vld [vmem:[#allocation6 + $0x2a0] sm:$0xff]
        %v1162 = vld [vmem:[#allocation6 + $0x2a8] sm:$0xff]
        %v1163 = vld [vmem:[#allocation6 + $0x2b0] sm:$0xff]
        %v1164 = vld [vmem:[#allocation6 + $0x2b8] sm:$0xff]
        %v1165 = vld [vmem:[#allocation6 + $0x2c0] sm:$0xff]
        %v1166 = vld [vmem:[#allocation6 + $0x2c8] sm:$0xff]
        %v1167 = vld [vmem:[#allocation6 + $0x2d0] sm:$0xff]
        %v1168 = vld [vmem:[#allocation6 + $0x2d8] sm:$0xff]
        %v1169 = vld [vmem:[#allocation6 + $0x2e0] sm:$0xff]
        %v1170 = vld [vmem:[#allocation6 + $0x2e8] sm:$0xff]
        %v1171 = vld [vmem:[#allocation6 + $0x2f0] sm:$0xff]
        %v1172 = vld [vmem:[#allocation6 + $0x2f8] sm:$0xff]
        %v1173 = vld [vmem:[#allocation6 + $0x300] sm:$0xff]
        %v1174 = vld [vmem:[#allocation6 + $0x308] sm:$0xff]
        %v1175 = vld [vmem:[#allocation6 + $0x310] sm:$0xff]
        %v1176 = vld [vmem:[#allocation6 + $0x318] sm:$0xff]
        %v1177 = vld [vmem:[#allocation6 + $0x320] sm:$0xff]
        %v1178 = vld [vmem:[#allocation6 + $0x328] sm:$0xff]
        %v1179 = vld [vmem:[#allocation6 + $0x330] sm:$0xff]
        %v1180 = vld [vmem:[#allocation6 + $0x338] sm:$0xff]
        %v1181 = vld [vmem:[#allocation6 + $0x340] sm:$0xff]
        %v1182 = vld [vmem:[#allocation6 + $0x348] sm:$0xff]
        %v1183 = vld [vmem:[#allocation6 + $0x350] sm:$0xff]
        %v1184 = vld [vmem:[#allocation6 + $0x358] sm:$0xff]
        %v1185 = vld [vmem:[#allocation6 + $0x360] sm:$0xff]
        %v1186 = vld [vmem:[#allocation6 + $0x368] sm:$0xff]
        %v1187 = vld [vmem:[#allocation6 + $0x370] sm:$0xff]
        %v1188 = vld [vmem:[#allocation6 + $0x378] sm:$0xff]
        %v1189 = vld [vmem:[#allocation6 + $0x380] sm:$0xff]
        %v1190 = vld [vmem:[#allocation6 + $0x388] sm:$0xff]
        %v1191 = vld [vmem:[#allocation6 + $0x390] sm:$0xff]
        %v1192 = vld [vmem:[#allocation6 + $0x398] sm:$0xff]
        %v1193 = vld [vmem:[#allocation6 + $0x3a0] sm:$0xff]
        %v1194 = vld [vmem:[#allocation6 + $0x3a8] sm:$0xff]
        %v1195 = vld [vmem:[#allocation6 + $0x3b0] sm:$0xff]
        %v1196 = vld [vmem:[#allocation6 + $0x3b8] sm:$0xff]
        %v1197 = vld [vmem:[#allocation6 + $0x3c0] sm:$0xff]
        %v1198 = vld [vmem:[#allocation6 + $0x3c8] sm:$0xff]
        %v1199 = vld [vmem:[#allocation6 + $0x3d0] sm:$0xff]
        %v1200 = vld [vmem:[#allocation6 + $0x3d8] sm:$0xff]
        %v1201 = vld [vmem:[#allocation6 + $0x3e0] sm:$0xff]
        %v1202 = vld [vmem:[#allocation6 + $0x3e8] sm:$0xff]
        %v1203 = vld [vmem:[#allocation6 + $0x3f0] sm:$0xff]
        %v1204 = vld [vmem:[#allocation6 + $0x3f8] sm:$0xff]
        %v1205 = vld [vmem:[#allocation6 + $0x400] sm:$0xff]
        %v1206 = vld [vmem:[#allocation6 + $0x408] sm:$0xff]
        %v1207 = vld [vmem:[#allocation6 + $0x410] sm:$0xff]
        %v1208 = vld [vmem:[#allocation6 + $0x418] sm:$0xff]
        %v1209 = vld [vmem:[#allocation6 + $0x420] sm:$0xff]
        %v1210 = vld [vmem:[#allocation6 + $0x428] sm:$0xff]
        %v1211 = vld [vmem:[#allocation6 + $0x430] sm:$0xff]
        %v1212 = vld [vmem:[#allocation6 + $0x438] sm:$0xff]
        %v1213 = vld [vmem:[#allocation6 + $0x440] sm:$0xff]
        %v1214 = vld [vmem:[#allocation6 + $0x448] sm:$0xff]
        %v1215 = vld [vmem:[#allocation6 + $0x450] sm:$0xff]
        %v1216 = vld [vmem:[#allocation6 + $0x458] sm:$0xff]
        %v1217 = vld [vmem:[#allocation6 + $0x460] sm:$0xff]
        %v1218 = vld [vmem:[#allocation6 + $0x468] sm:$0xff]
        %v1219 = vld [vmem:[#allocation6 + $0x470] sm:$0xff]
        %v1220 = vld [vmem:[#allocation6 + $0x478] sm:$0xff]
        %v1221 = vld [vmem:[#allocation6 + $0x480] sm:$0xff]
        %v1222 = vld [vmem:[#allocation6 + $0x488] sm:$0xff]
        %v1223 = vld [vmem:[#allocation6 + $0x490] sm:$0xff]
        %v1224 = vld [vmem:[#allocation6 + $0x498] sm:$0xff]
        %v1225 = vld [vmem:[#allocation6 + $0x4a0] sm:$0xff]
        %v1226 = vld [vmem:[#allocation6 + $0x4a8] sm:$0xff]
        %v1227 = vld [vmem:[#allocation6 + $0x4b0] sm:$0xff]
        %v1228 = vld [vmem:[#allocation6 + $0x4b8] sm:$0xff]
        %v1229 = vld [vmem:[#allocation6 + $0x4c0] sm:$0xff]
        %v1230 = vld [vmem:[#allocation6 + $0x4c8] sm:$0xff]
        %v1231 = vld [vmem:[#allocation6 + $0x4d0] sm:$0xff]
        %v1232 = vld [vmem:[#allocation6 + $0x4d8] sm:$0xff]
        %v1233 = vld [vmem:[#allocation6 + $0x4e0] sm:$0xff]
        %v1234 = vld [vmem:[#allocation6 + $0x4e8] sm:$0xff]
        %v1235 = vld [vmem:[#allocation6 + $0x4f0] sm:$0xff]
        %v1236 = vld [vmem:[#allocation6 + $0x4f8] sm:$0xff]
        %v1237 = vld [vmem:[#allocation6 + $0x500] sm:$0xff]
        %v1238 = vld [vmem:[#allocation6 + $0x508] sm:$0xff]
        %v1239 = vld [vmem:[#allocation6 + $0x510] sm:$0xff]
        %v1240 = vld [vmem:[#allocation6 + $0x518] sm:$0xff]
        %v1241 = vld [vmem:[#allocation6 + $0x520] sm:$0xff]
        %v1242 = vld [vmem:[#allocation6 + $0x528] sm:$0xff]
        %v1243 = vld [vmem:[#allocation6 + $0x530] sm:$0xff]
        %v1244 = vld [vmem:[#allocation6 + $0x538] sm:$0xff]
        %v1245 = vld [vmem:[#allocation6 + $0x540] sm:$0xff]
        %v1246 = vld [vmem:[#allocation6 + $0x548] sm:$0xff]
        %v1247 = vld [vmem:[#allocation6 + $0x550] sm:$0xff]
        %v1248 = vld [vmem:[#allocation6 + $0x558] sm:$0xff]
        %v1249 = vld [vmem:[#allocation6 + $0x560] sm:$0xff]
        %v1250 = vld [vmem:[#allocation6 + $0x568] sm:$0xff]
        %v1251 = vld [vmem:[#allocation6 + $0x570] sm:$0xff]
        %v1252 = vld [vmem:[#allocation6 + $0x578] sm:$0xff]
        %v1253 = vld [vmem:[#allocation6 + $0x580] sm:$0xff]
        %v1254 = vld [vmem:[#allocation6 + $0x588] sm:$0xff]
        %v1255 = vld [vmem:[#allocation6 + $0x590] sm:$0xff]
        %v1256 = vld [vmem:[#allocation6 + $0x598] sm:$0xff]
        %v1257 = vld [vmem:[#allocation6 + $0x5a0] sm:$0xff]
        %v1258 = vld [vmem:[#allocation6 + $0x5a8] sm:$0xff]
        %v1259 = vld [vmem:[#allocation6 + $0x5b0] sm:$0xff]
        %v1260 = vld [vmem:[#allocation6 + $0x5b8] sm:$0xff]
        %v1261 = vld [vmem:[#allocation6 + $0x5c0] sm:$0xff]
        %v1262 = vld [vmem:[#allocation6 + $0x5c8] sm:$0xff]
        %v1263 = vld [vmem:[#allocation6 + $0x5d0] sm:$0xff]
        %v1264 = vld [vmem:[#allocation6 + $0x5d8] sm:$0xff]
        %v1265 = vld [vmem:[#allocation6 + $0x5e0] sm:$0xff]
        %v1266 = vld [vmem:[#allocation6 + $0x5e8] sm:$0xff]
        %v1267 = vld [vmem:[#allocation6 + $0x5f0] sm:$0xff]
        %v1268 = vld [vmem:[#allocation6 + $0x5f8] sm:$0xff]
        %v1269 = vld [vmem:[#allocation6 + $0x600] sm:$0xff]
        %v1270 = vld [vmem:[#allocation6 + $0x608] sm:$0xff]
        %v1271 = vld [vmem:[#allocation6 + $0x610] sm:$0xff]
        %v1272 = vld [vmem:[#allocation6 + $0x618] sm:$0xff]
        %v1273 = vld [vmem:[#allocation6 + $0x620] sm:$0xff]
        %v1274 = vld [vmem:[#allocation6 + $0x628] sm:$0xff]
        %v1275 = vld [vmem:[#allocation6 + $0x630] sm:$0xff]
        %v1276 = vld [vmem:[#allocation6 + $0x638] sm:$0xff]
        %v1277 = vld [vmem:[#allocation6 + $0x640] sm:$0xff]
        %v1278 = vld [vmem:[#allocation6 + $0x648] sm:$0xff]
        %v1279 = vld [vmem:[#allocation6 + $0x650] sm:$0xff]
        %v1280 = vld [vmem:[#allocation6 + $0x658] sm:$0xff]
        %v1281 = vld [vmem:[#allocation6 + $0x660] sm:$0xff]
        %v1282 = vld [vmem:[#allocation6 + $0x668] sm:$0xff]
        %v1283 = vld [vmem:[#allocation6 + $0x670] sm:$0xff]
        %v1284 = vld [vmem:[#allocation6 + $0x678] sm:$0xff]
        %v1285 = vld [vmem:[#allocation6 + $0x680] sm:$0xff]
        %v1286 = vld [vmem:[#allocation6 + $0x688] sm:$0xff]
        %v1287 = vld [vmem:[#allocation6 + $0x690] sm:$0xff]
        %v1288 = vld [vmem:[#allocation6 + $0x698] sm:$0xff]
        %v1289 = vld [vmem:[#allocation6 + $0x6a0] sm:$0xff]
        %v1290 = vld [vmem:[#allocation6 + $0x6a8] sm:$0xff]
        %v1291 = vld [vmem:[#allocation6 + $0x6b0] sm:$0xff]
        %v1292 = vld [vmem:[#allocation6 + $0x6b8] sm:$0xff]
        %v1293 = vld [vmem:[#allocation6 + $0x6c0] sm:$0xff]
        %v1294 = vld [vmem:[#allocation6 + $0x6c8] sm:$0xff]
        %v1295 = vld [vmem:[#allocation6 + $0x6d0] sm:$0xff]
        %v1296 = vld [vmem:[#allocation6 + $0x6d8] sm:$0xff]
        %v1297 = vld [vmem:[#allocation6 + $0x6e0] sm:$0xff]
        %v1298 = vld [vmem:[#allocation6 + $0x6e8] sm:$0xff]
        %v1299 = vld [vmem:[#allocation6 + $0x6f0] sm:$0xff]
        %v1300 = vld [vmem:[#allocation6 + $0x6f8] sm:$0xff]
        %v1301 = vld [vmem:[#allocation6 + $0x700] sm:$0xff]
        %v1302 = vld [vmem:[#allocation6 + $0x708] sm:$0xff]
        %v1303 = vld [vmem:[#allocation6 + $0x710] sm:$0xff]
        %v1304 = vld [vmem:[#allocation6 + $0x718] sm:$0xff]
        %v1305 = vld [vmem:[#allocation6 + $0x720] sm:$0xff]
        %v1306 = vld [vmem:[#allocation6 + $0x728] sm:$0xff]
        %v1307 = vld [vmem:[#allocation6 + $0x730] sm:$0xff]
        %v1308 = vld [vmem:[#allocation6 + $0x738] sm:$0xff]
        %v1309 = vld [vmem:[#allocation6 + $0x740] sm:$0xff]
        %v1310 = vld [vmem:[#allocation6 + $0x748] sm:$0xff]
        %v1311 = vld [vmem:[#allocation6 + $0x750] sm:$0xff]
        %v1312 = vld [vmem:[#allocation6 + $0x758] sm:$0xff]
        %v1313 = vld [vmem:[#allocation6 + $0x760] sm:$0xff]
        %v1314 = vld [vmem:[#allocation6 + $0x768] sm:$0xff]
        %v1315 = vld [vmem:[#allocation6 + $0x770] sm:$0xff]
        %v1316 = vld [vmem:[#allocation6 + $0x778] sm:$0xff]
        %v1317 = vld [vmem:[#allocation6 + $0x780] sm:$0xff]
        %v1318 = vld [vmem:[#allocation6 + $0x788] sm:$0xff]
        %v1319 = vld [vmem:[#allocation6 + $0x790] sm:$0xff]
        %v1320 = vld [vmem:[#allocation6 + $0x798] sm:$0xff]
        %v1321 = vld [vmem:[#allocation6 + $0x7a0] sm:$0xff]
        %v1322 = vld [vmem:[#allocation6 + $0x7a8] sm:$0xff]
        %v1323 = vld [vmem:[#allocation6 + $0x7b0] sm:$0xff]
        %v1324 = vld [vmem:[#allocation6 + $0x7b8] sm:$0xff]
        %v1325 = vld [vmem:[#allocation6 + $0x7c0] sm:$0xff]
        %v1326 = vld [vmem:[#allocation6 + $0x7c8] sm:$0xff]
        %v1327 = vld [vmem:[#allocation6 + $0x7d0] sm:$0xff]
        %v1328 = vld [vmem:[#allocation6 + $0x7d8] sm:$0xff]
        %v1329 = vld [vmem:[#allocation6 + $0x7e0] sm:$0xff]
        %v1330 = vld [vmem:[#allocation6 + $0x7e8] sm:$0xff]
        %v1331 = vld [vmem:[#allocation6 + $0x7f0] sm:$0xff]
        %v1332 = vld [vmem:[#allocation6 + $0x7f8] sm:$0xff]
        %v1333 = vld [vmem:[#allocation8] sm:$0xf]
        %v1335 = vperm.slane %v1333, 0
        %v1336 = vperm.slane %v1333, 1
        %v1337 = vperm.slane %v1333, 2
        %v1338 = vperm.slane %v1333, 3
        %v1599 = vunpack.c.l.b16 %v1077
        %v1600 = vunpack.c.h.b16 %v1077
        %v1601 = vunpack.c.l.b16 %v1078
        %v1602 = vunpack.c.h.b16 %v1078
        %v1603 = vunpack.c.l.b16 %v1079
        %v1604 = vunpack.c.h.b16 %v1079
        %v1605 = vunpack.c.l.b16 %v1080
        %v1606 = vunpack.c.h.b16 %v1080
        %v1607 = vunpack.c.l.b16 %v1081
        %v1608 = vunpack.c.h.b16 %v1081
        %v1609 = vunpack.c.l.b16 %v1082
        %v1610 = vunpack.c.h.b16 %v1082
        %v1611 = vunpack.c.l.b16 %v1083
        %v1612 = vunpack.c.h.b16 %v1083
        %v1613 = vunpack.c.l.b16 %v1084
        %v1614 = vunpack.c.h.b16 %v1084
        %v1615 = vunpack.c.l.b16 %v1085
        %v1616 = vunpack.c.h.b16 %v1085
        %v1617 = vunpack.c.l.b16 %v1086
        %v1618 = vunpack.c.h.b16 %v1086
        %v1619 = vunpack.c.l.b16 %v1087
        %v1620 = vunpack.c.h.b16 %v1087
        %v1621 = vunpack.c.l.b16 %v1088
        %v1622 = vunpack.c.h.b16 %v1088
        %v1623 = vunpack.c.l.b16 %v1089
        %v1624 = vunpack.c.h.b16 %v1089
        %v1625 = vunpack.c.l.b16 %v1090
        %v1626 = vunpack.c.h.b16 %v1090
        %v1627 = vunpack.c.l.b16 %v1091
        %v1628 = vunpack.c.h.b16 %v1091
        %v1629 = vunpack.c.l.b16 %v1092
        %v1630 = vunpack.c.h.b16 %v1092
        %v1631 = vunpack.c.l.b16 %v1093
        %v1632 = vunpack.c.h.b16 %v1093
        %v1633 = vunpack.c.l.b16 %v1094
        %v1634 = vunpack.c.h.b16 %v1094
        %v1635 = vunpack.c.l.b16 %v1095
        %v1636 = vunpack.c.h.b16 %v1095
        %v1637 = vunpack.c.l.b16 %v1096
        %v1638 = vunpack.c.h.b16 %v1096
        %v1639 = vunpack.c.l.b16 %v1097
        %v1640 = vunpack.c.h.b16 %v1097
        %v1641 = vunpack.c.l.b16 %v1098
        %v1642 = vunpack.c.h.b16 %v1098
        %v1643 = vunpack.c.l.b16 %v1099
        %v1644 = vunpack.c.h.b16 %v1099
        %v1645 = vunpack.c.l.b16 %v1100
        %v1646 = vunpack.c.h.b16 %v1100
        %v1647 = vunpack.c.l.b16 %v1101
        %v1648 = vunpack.c.h.b16 %v1101
        %v1649 = vunpack.c.l.b16 %v1102
        %v1650 = vunpack.c.h.b16 %v1102
        %v1651 = vunpack.c.l.b16 %v1103
        %v1652 = vunpack.c.h.b16 %v1103
        %v1653 = vunpack.c.l.b16 %v1104
        %v1654 = vunpack.c.h.b16 %v1104
        %v1655 = vunpack.c.l.b16 %v1105
        %v1656 = vunpack.c.h.b16 %v1105
        %v1657 = vunpack.c.l.b16 %v1106
        %v1658 = vunpack.c.h.b16 %v1106
        %v1659 = vunpack.c.l.b16 %v1107
        %v1660 = vunpack.c.h.b16 %v1107
        %v1661 = vunpack.c.l.b16 %v1108
        %v1662 = vunpack.c.h.b16 %v1108
        %v1663 = vunpack.c.l.b16 %v1109
        %v1664 = vunpack.c.h.b16 %v1109
        %v1665 = vunpack.c.l.b16 %v1110
        %v1666 = vunpack.c.h.b16 %v1110
        %v1667 = vunpack.c.l.b16 %v1111
        %v1668 = vunpack.c.h.b16 %v1111
        %v1669 = vunpack.c.l.b16 %v1112
        %v1670 = vunpack.c.h.b16 %v1112
        %v1671 = vunpack.c.l.b16 %v1113
        %v1672 = vunpack.c.h.b16 %v1113
        %v1673 = vunpack.c.l.b16 %v1114
        %v1674 = vunpack.c.h.b16 %v1114
        %v1675 = vunpack.c.l.b16 %v1115
        %v1676 = vunpack.c.h.b16 %v1115
        %v1677 = vunpack.c.l.b16 %v1116
        %v1678 = vunpack.c.h.b16 %v1116
        %v1679 = vunpack.c.l.b16 %v1117
        %v1680 = vunpack.c.h.b16 %v1117
        %v1681 = vunpack.c.l.b16 %v1118
        %v1682 = vunpack.c.h.b16 %v1118
        %v1683 = vunpack.c.l.b16 %v1119
        %v1684 = vunpack.c.h.b16 %v1119
        %v1685 = vunpack.c.l.b16 %v1120
        %v1686 = vunpack.c.h.b16 %v1120
        %v1687 = vunpack.c.l.b16 %v1121
        %v1688 = vunpack.c.h.b16 %v1121
        %v1689 = vunpack.c.l.b16 %v1122
        %v1690 = vunpack.c.h.b16 %v1122
        %v1691 = vunpack.c.l.b16 %v1123
        %v1692 = vunpack.c.h.b16 %v1123
        %v1693 = vunpack.c.l.b16 %v1124
        %v1694 = vunpack.c.h.b16 %v1124
        %v1695 = vunpack.c.l.b16 %v1125
        %v1696 = vunpack.c.h.b16 %v1125
        %v1697 = vunpack.c.l.b16 %v1126
        %v1698 = vunpack.c.h.b16 %v1126
        %v1699 = vunpack.c.l.b16 %v1127
        %v1700 = vunpack.c.h.b16 %v1127
        %v1701 = vunpack.c.l.b16 %v1128
        %v1702 = vunpack.c.h.b16 %v1128
        %v1703 = vunpack.c.l.b16 %v1129
        %v1704 = vunpack.c.h.b16 %v1129
        %v1705 = vunpack.c.l.b16 %v1130
        %v1706 = vunpack.c.h.b16 %v1130
        %v1707 = vunpack.c.l.b16 %v1131
        %v1708 = vunpack.c.h.b16 %v1131
        %v1709 = vunpack.c.l.b16 %v1132
        %v1710 = vunpack.c.h.b16 %v1132
        %v1711 = vunpack.c.l.b16 %v1133
        %v1712 = vunpack.c.h.b16 %v1133
        %v1713 = vunpack.c.l.b16 %v1134
        %v1714 = vunpack.c.h.b16 %v1134
        %v1715 = vunpack.c.l.b16 %v1135
        %v1716 = vunpack.c.h.b16 %v1135
        %v1717 = vunpack.c.l.b16 %v1136
        %v1718 = vunpack.c.h.b16 %v1136
        %v1719 = vunpack.c.l.b16 %v1137
        %v1720 = vunpack.c.h.b16 %v1137
        %v1721 = vunpack.c.l.b16 %v1138
        %v1722 = vunpack.c.h.b16 %v1138
        %v1723 = vunpack.c.l.b16 %v1139
        %v1724 = vunpack.c.h.b16 %v1139
        %v1725 = vunpack.c.l.b16 %v1140
        %v1726 = vunpack.c.h.b16 %v1140
        %v1727 = vunpack.c.l.b16 %v1141
        %v1728 = vunpack.c.h.b16 %v1141
        %v1729 = vunpack.c.l.b16 %v1142
        %v1730 = vunpack.c.h.b16 %v1142
        %v1731 = vunpack.c.l.b16 %v1143
        %v1732 = vunpack.c.h.b16 %v1143
        %v1733 = vunpack.c.l.b16 %v1144
        %v1734 = vunpack.c.h.b16 %v1144
        %v1735 = vunpack.c.l.b16 %v1145
        %v1736 = vunpack.c.h.b16 %v1145
        %v1737 = vunpack.c.l.b16 %v1146
        %v1738 = vunpack.c.h.b16 %v1146
        %v1739 = vunpack.c.l.b16 %v1147
        %v1740 = vunpack.c.h.b16 %v1147
        %v1741 = vunpack.c.l.b16 %v1148
        %v1742 = vunpack.c.h.b16 %v1148
        %v1743 = vunpack.c.l.b16 %v1149
        %v1744 = vunpack.c.h.b16 %v1149
        %v1745 = vunpack.c.l.b16 %v1150
        %v1746 = vunpack.c.h.b16 %v1150
        %v1747 = vunpack.c.l.b16 %v1151
        %v1748 = vunpack.c.h.b16 %v1151
        %v1749 = vunpack.c.l.b16 %v1152
        %v1750 = vunpack.c.h.b16 %v1152
        %v1751 = vunpack.c.l.b16 %v1153
        %v1752 = vunpack.c.h.b16 %v1153
        %v1753 = vunpack.c.l.b16 %v1154
        %v1754 = vunpack.c.h.b16 %v1154
        %v1755 = vunpack.c.l.b16 %v1155
        %v1756 = vunpack.c.h.b16 %v1155
        %v1757 = vunpack.c.l.b16 %v1156
        %v1758 = vunpack.c.h.b16 %v1156
        %v1759 = vunpack.c.l.b16 %v1157
        %v1760 = vunpack.c.h.b16 %v1157
        %v1761 = vunpack.c.l.b16 %v1158
        %v1762 = vunpack.c.h.b16 %v1158
        %v1763 = vunpack.c.l.b16 %v1159
        %v1764 = vunpack.c.h.b16 %v1159
        %v1765 = vunpack.c.l.b16 %v1160
        %v1766 = vunpack.c.h.b16 %v1160
        %v1767 = vunpack.c.l.b16 %v1161
        %v1768 = vunpack.c.h.b16 %v1161
        %v1769 = vunpack.c.l.b16 %v1162
        %v1770 = vunpack.c.h.b16 %v1162
        %v1771 = vunpack.c.l.b16 %v1163
        %v1772 = vunpack.c.h.b16 %v1163
        %v1773 = vunpack.c.l.b16 %v1164
        %v1774 = vunpack.c.h.b16 %v1164
        %v1775 = vunpack.c.l.b16 %v1165
        %v1776 = vunpack.c.h.b16 %v1165
        %v1777 = vunpack.c.l.b16 %v1166
        %v1778 = vunpack.c.h.b16 %v1166
        %v1779 = vunpack.c.l.b16 %v1167
        %v1780 = vunpack.c.h.b16 %v1167
        %v1781 = vunpack.c.l.b16 %v1168
        %v1782 = vunpack.c.h.b16 %v1168
        %v1783 = vunpack.c.l.b16 %v1169
        %v1784 = vunpack.c.h.b16 %v1169
        %v1785 = vunpack.c.l.b16 %v1170
        %v1786 = vunpack.c.h.b16 %v1170
        %v1787 = vunpack.c.l.b16 %v1171
        %v1788 = vunpack.c.h.b16 %v1171
        %v1789 = vunpack.c.l.b16 %v1172
        %v1790 = vunpack.c.h.b16 %v1172
        %v1791 = vunpack.c.l.b16 %v1173
        %v1792 = vunpack.c.h.b16 %v1173
        %v1793 = vunpack.c.l.b16 %v1174
        %v1794 = vunpack.c.h.b16 %v1174
        %v1795 = vunpack.c.l.b16 %v1175
        %v1796 = vunpack.c.h.b16 %v1175
        %v1797 = vunpack.c.l.b16 %v1176
        %v1798 = vunpack.c.h.b16 %v1176
        %v1799 = vunpack.c.l.b16 %v1177
        %v1800 = vunpack.c.h.b16 %v1177
        %v1801 = vunpack.c.l.b16 %v1178
        %v1802 = vunpack.c.h.b16 %v1178
        %v1803 = vunpack.c.l.b16 %v1179
        %v1804 = vunpack.c.h.b16 %v1179
        %v1805 = vunpack.c.l.b16 %v1180
        %v1806 = vunpack.c.h.b16 %v1180
        %v1807 = vunpack.c.l.b16 %v1181
        %v1808 = vunpack.c.h.b16 %v1181
        %v1809 = vunpack.c.l.b16 %v1182
        %v1810 = vunpack.c.h.b16 %v1182
        %v1811 = vunpack.c.l.b16 %v1183
        %v1812 = vunpack.c.h.b16 %v1183
        %v1813 = vunpack.c.l.b16 %v1184
        %v1814 = vunpack.c.h.b16 %v1184
        %v1815 = vunpack.c.l.b16 %v1185
        %v1816 = vunpack.c.h.b16 %v1185
        %v1817 = vunpack.c.l.b16 %v1186
        %v1818 = vunpack.c.h.b16 %v1186
        %v1819 = vunpack.c.l.b16 %v1187
        %v1820 = vunpack.c.h.b16 %v1187
        %v1821 = vunpack.c.l.b16 %v1188
        %v1822 = vunpack.c.h.b16 %v1188
        %v1823 = vunpack.c.l.b16 %v1189
        %v1824 = vunpack.c.h.b16 %v1189
        %v1825 = vunpack.c.l.b16 %v1190
        %v1826 = vunpack.c.h.b16 %v1190
        %v1827 = vunpack.c.l.b16 %v1191
        %v1828 = vunpack.c.h.b16 %v1191
        %v1829 = vunpack.c.l.b16 %v1192
        %v1830 = vunpack.c.h.b16 %v1192
        %v1831 = vunpack.c.l.b16 %v1193
        %v1832 = vunpack.c.h.b16 %v1193
        %v1833 = vunpack.c.l.b16 %v1194
        %v1834 = vunpack.c.h.b16 %v1194
        %v1835 = vunpack.c.l.b16 %v1195
        %v1836 = vunpack.c.h.b16 %v1195
        %v1837 = vunpack.c.l.b16 %v1196
        %v1838 = vunpack.c.h.b16 %v1196
        %v1839 = vunpack.c.l.b16 %v1197
        %v1840 = vunpack.c.h.b16 %v1197
        %v1841 = vunpack.c.l.b16 %v1198
        %v1842 = vunpack.c.h.b16 %v1198
        %v1843 = vunpack.c.l.b16 %v1199
        %v1844 = vunpack.c.h.b16 %v1199
        %v1845 = vunpack.c.l.b16 %v1200
        %v1846 = vunpack.c.h.b16 %v1200
        %v1847 = vunpack.c.l.b16 %v1201
        %v1848 = vunpack.c.h.b16 %v1201
        %v1849 = vunpack.c.l.b16 %v1202
        %v1850 = vunpack.c.h.b16 %v1202
        %v1851 = vunpack.c.l.b16 %v1203
        %v1852 = vunpack.c.h.b16 %v1203
        %v1853 = vunpack.c.l.b16 %v1204
        %v1854 = vunpack.c.h.b16 %v1204
        %v1855 = vunpack.c.l.b16 %v1205
        %v1856 = vunpack.c.h.b16 %v1205
        %v1857 = vunpack.c.l.b16 %v1206
        %v1858 = vunpack.c.h.b16 %v1206
        %v1859 = vunpack.c.l.b16 %v1207
        %v1860 = vunpack.c.h.b16 %v1207
        %v1861 = vunpack.c.l.b16 %v1208
        %v1862 = vunpack.c.h.b16 %v1208
        %v1863 = vunpack.c.l.b16 %v1209
        %v1864 = vunpack.c.h.b16 %v1209
        %v1865 = vunpack.c.l.b16 %v1210
        %v1866 = vunpack.c.h.b16 %v1210
        %v1867 = vunpack.c.l.b16 %v1211
        %v1868 = vunpack.c.h.b16 %v1211
        %v1869 = vunpack.c.l.b16 %v1212
        %v1870 = vunpack.c.h.b16 %v1212
        %v1871 = vunpack.c.l.b16 %v1213
        %v1872 = vunpack.c.h.b16 %v1213
        %v1873 = vunpack.c.l.b16 %v1214
        %v1874 = vunpack.c.h.b16 %v1214
        %v1875 = vunpack.c.l.b16 %v1215
        %v1876 = vunpack.c.h.b16 %v1215
        %v1877 = vunpack.c.l.b16 %v1216
        %v1878 = vunpack.c.h.b16 %v1216
        %v1879 = vunpack.c.l.b16 %v1217
        %v1880 = vunpack.c.h.b16 %v1217
        %v1881 = vunpack.c.l.b16 %v1218
        %v1882 = vunpack.c.h.b16 %v1218
        %v1883 = vunpack.c.l.b16 %v1219
        %v1884 = vunpack.c.h.b16 %v1219
        %v1885 = vunpack.c.l.b16 %v1220
        %v1886 = vunpack.c.h.b16 %v1220
        %v1887 = vunpack.c.l.b16 %v1221
        %v1888 = vunpack.c.h.b16 %v1221
        %v1889 = vunpack.c.l.b16 %v1222
        %v1890 = vunpack.c.h.b16 %v1222
        %v1891 = vunpack.c.l.b16 %v1223
        %v1892 = vunpack.c.h.b16 %v1223
        %v1893 = vunpack.c.l.b16 %v1224
        %v1894 = vunpack.c.h.b16 %v1224
        %v1895 = vunpack.c.l.b16 %v1225
        %v1896 = vunpack.c.h.b16 %v1225
        %v1897 = vunpack.c.l.b16 %v1226
        %v1898 = vunpack.c.h.b16 %v1226
        %v1899 = vunpack.c.l.b16 %v1227
        %v1900 = vunpack.c.h.b16 %v1227
        %v1901 = vunpack.c.l.b16 %v1228
        %v1902 = vunpack.c.h.b16 %v1228
        %v1903 = vunpack.c.l.b16 %v1229
        %v1904 = vunpack.c.h.b16 %v1229
        %v1905 = vunpack.c.l.b16 %v1230
        %v1906 = vunpack.c.h.b16 %v1230
        %v1907 = vunpack.c.l.b16 %v1231
        %v1908 = vunpack.c.h.b16 %v1231
        %v1909 = vunpack.c.l.b16 %v1232
        %v1910 = vunpack.c.h.b16 %v1232
        %v1911 = vunpack.c.l.b16 %v1233
        %v1912 = vunpack.c.h.b16 %v1233
        %v1913 = vunpack.c.l.b16 %v1234
        %v1914 = vunpack.c.h.b16 %v1234
        %v1915 = vunpack.c.l.b16 %v1235
        %v1916 = vunpack.c.h.b16 %v1235
        %v1917 = vunpack.c.l.b16 %v1236
        %v1918 = vunpack.c.h.b16 %v1236
        %v1919 = vunpack.c.l.b16 %v1237
        %v1920 = vunpack.c.h.b16 %v1237
        %v1921 = vunpack.c.l.b16 %v1238
        %v1922 = vunpack.c.h.b16 %v1238
        %v1923 = vunpack.c.l.b16 %v1239
        %v1924 = vunpack.c.h.b16 %v1239
        %v1925 = vunpack.c.l.b16 %v1240
        %v1926 = vunpack.c.h.b16 %v1240
        %v1927 = vunpack.c.l.b16 %v1241
        %v1928 = vunpack.c.h.b16 %v1241
        %v1929 = vunpack.c.l.b16 %v1242
        %v1930 = vunpack.c.h.b16 %v1242
        %v1931 = vunpack.c.l.b16 %v1243
        %v1932 = vunpack.c.h.b16 %v1243
        %v1933 = vunpack.c.l.b16 %v1244
        %v1934 = vunpack.c.h.b16 %v1244
        %v1935 = vunpack.c.l.b16 %v1245
        %v1936 = vunpack.c.h.b16 %v1245
        %v1937 = vunpack.c.l.b16 %v1246
        %v1938 = vunpack.c.h.b16 %v1246
        %v1939 = vunpack.c.l.b16 %v1247
        %v1940 = vunpack.c.h.b16 %v1247
        %v1941 = vunpack.c.l.b16 %v1248
        %v1942 = vunpack.c.h.b16 %v1248
        %v1943 = vunpack.c.l.b16 %v1249
        %v1944 = vunpack.c.h.b16 %v1249
        %v1945 = vunpack.c.l.b16 %v1250
        %v1946 = vunpack.c.h.b16 %v1250
        %v1947 = vunpack.c.l.b16 %v1251
        %v1948 = vunpack.c.h.b16 %v1251
        %v1949 = vunpack.c.l.b16 %v1252
        %v1950 = vunpack.c.h.b16 %v1252
        %v1951 = vunpack.c.l.b16 %v1253
        %v1952 = vunpack.c.h.b16 %v1253
        %v1953 = vunpack.c.l.b16 %v1254
        %v1954 = vunpack.c.h.b16 %v1254
        %v1955 = vunpack.c.l.b16 %v1255
        %v1956 = vunpack.c.h.b16 %v1255
        %v1957 = vunpack.c.l.b16 %v1256
        %v1958 = vunpack.c.h.b16 %v1256
        %v1959 = vunpack.c.l.b16 %v1257
        %v1960 = vunpack.c.h.b16 %v1257
        %v1961 = vunpack.c.l.b16 %v1258
        %v1962 = vunpack.c.h.b16 %v1258
        %v1963 = vunpack.c.l.b16 %v1259
        %v1964 = vunpack.c.h.b16 %v1259
        %v1965 = vunpack.c.l.b16 %v1260
        %v1966 = vunpack.c.h.b16 %v1260
        %v1967 = vunpack.c.l.b16 %v1261
        %v1968 = vunpack.c.h.b16 %v1261
        %v1969 = vunpack.c.l.b16 %v1262
        %v1970 = vunpack.c.h.b16 %v1262
        %v1971 = vunpack.c.l.b16 %v1263
        %v1972 = vunpack.c.h.b16 %v1263
        %v1973 = vunpack.c.l.b16 %v1264
        %v1974 = vunpack.c.h.b16 %v1264
        %v1975 = vunpack.c.l.b16 %v1265
        %v1976 = vunpack.c.h.b16 %v1265
        %v1977 = vunpack.c.l.b16 %v1266
        %v1978 = vunpack.c.h.b16 %v1266
        %v1979 = vunpack.c.l.b16 %v1267
        %v1980 = vunpack.c.h.b16 %v1267
        %v1981 = vunpack.c.l.b16 %v1268
        %v1982 = vunpack.c.h.b16 %v1268
        %v1983 = vunpack.c.l.b16 %v1269
        %v1984 = vunpack.c.h.b16 %v1269
        %v1985 = vunpack.c.l.b16 %v1270
        %v1986 = vunpack.c.h.b16 %v1270
        %v1987 = vunpack.c.l.b16 %v1271
        %v1988 = vunpack.c.h.b16 %v1271
        %v1989 = vunpack.c.l.b16 %v1272
        %v1990 = vunpack.c.h.b16 %v1272
        %v1991 = vunpack.c.l.b16 %v1273
        %v1992 = vunpack.c.h.b16 %v1273
        %v1993 = vunpack.c.l.b16 %v1274
        %v1994 = vunpack.c.h.b16 %v1274
        %v1995 = vunpack.c.l.b16 %v1275
        %v1996 = vunpack.c.h.b16 %v1275
        %v1997 = vunpack.c.l.b16 %v1276
        %v1998 = vunpack.c.h.b16 %v1276
        %v1999 = vunpack.c.l.b16 %v1277
        %v2000 = vunpack.c.h.b16 %v1277
        %v2001 = vunpack.c.l.b16 %v1278
        %v2002 = vunpack.c.h.b16 %v1278
        %v2003 = vunpack.c.l.b16 %v1279
        %v2004 = vunpack.c.h.b16 %v1279
        %v2005 = vunpack.c.l.b16 %v1280
        %v2006 = vunpack.c.h.b16 %v1280
        %v2007 = vunpack.c.l.b16 %v1281
        %v2008 = vunpack.c.h.b16 %v1281
        %v2009 = vunpack.c.l.b16 %v1282
        %v2010 = vunpack.c.h.b16 %v1282
        %v2011 = vunpack.c.l.b16 %v1283
        %v2012 = vunpack.c.h.b16 %v1283
        %v2013 = vunpack.c.l.b16 %v1284
        %v2014 = vunpack.c.h.b16 %v1284
        %v2015 = vunpack.c.l.b16 %v1285
        %v2016 = vunpack.c.h.b16 %v1285
        %v2017 = vunpack.c.l.b16 %v1286
        %v2018 = vunpack.c.h.b16 %v1286
        %v2019 = vunpack.c.l.b16 %v1287
        %v2020 = vunpack.c.h.b16 %v1287
        %v2021 = vunpack.c.l.b16 %v1288
        %v2022 = vunpack.c.h.b16 %v1288
        %v2023 = vunpack.c.l.b16 %v1289
        %v2024 = vunpack.c.h.b16 %v1289
        %v2025 = vunpack.c.l.b16 %v1290
        %v2026 = vunpack.c.h.b16 %v1290
        %v2027 = vunpack.c.l.b16 %v1291
        %v2028 = vunpack.c.h.b16 %v1291
        %v2029 = vunpack.c.l.b16 %v1292
        %v2030 = vunpack.c.h.b16 %v1292
        %v2031 = vunpack.c.l.b16 %v1293
        %v2032 = vunpack.c.h.b16 %v1293
        %v2033 = vunpack.c.l.b16 %v1294
        %v2034 = vunpack.c.h.b16 %v1294
        %v2035 = vunpack.c.l.b16 %v1295
        %v2036 = vunpack.c.h.b16 %v1295
        %v2037 = vunpack.c.l.b16 %v1296
        %v2038 = vunpack.c.h.b16 %v1296
        %v2039 = vunpack.c.l.b16 %v1297
        %v2040 = vunpack.c.h.b16 %v1297
        %v2041 = vunpack.c.l.b16 %v1298
        %v2042 = vunpack.c.h.b16 %v1298
        %v2043 = vunpack.c.l.b16 %v1299
        %v2044 = vunpack.c.h.b16 %v1299
        %v2045 = vunpack.c.l.b16 %v1300
        %v2046 = vunpack.c.h.b16 %v1300
        %v2047 = vunpack.c.l.b16 %v1301
        %v2048 = vunpack.c.h.b16 %v1301
        %v2049 = vunpack.c.l.b16 %v1302
        %v2050 = vunpack.c.h.b16 %v1302
        %v2051 = vunpack.c.l.b16 %v1303
        %v2052 = vunpack.c.h.b16 %v1303
        %v2053 = vunpack.c.l.b16 %v1304
        %v2054 = vunpack.c.h.b16 %v1304
        %v2055 = vunpack.c.l.b16 %v1305
        %v2056 = vunpack.c.h.b16 %v1305
        %v2057 = vunpack.c.l.b16 %v1306
        %v2058 = vunpack.c.h.b16 %v1306
        %v2059 = vunpack.c.l.b16 %v1307
        %v2060 = vunpack.c.h.b16 %v1307
        %v2061 = vunpack.c.l.b16 %v1308
        %v2062 = vunpack.c.h.b16 %v1308
        %v2063 = vunpack.c.l.b16 %v1309
        %v2064 = vunpack.c.h.b16 %v1309
        %v2065 = vunpack.c.l.b16 %v1310
        %v2066 = vunpack.c.h.b16 %v1310
        %v2067 = vunpack.c.l.b16 %v1311
        %v2068 = vunpack.c.h.b16 %v1311
        %v2069 = vunpack.c.l.b16 %v1312
        %v2070 = vunpack.c.h.b16 %v1312
        %v2071 = vunpack.c.l.b16 %v1313
        %v2072 = vunpack.c.h.b16 %v1313
        %v2073 = vunpack.c.l.b16 %v1314
        %v2074 = vunpack.c.h.b16 %v1314
        %v2075 = vunpack.c.l.b16 %v1315
        %v2076 = vunpack.c.h.b16 %v1315
        %v2077 = vunpack.c.l.b16 %v1316
        %v2078 = vunpack.c.h.b16 %v1316
        %v2079 = vunpack.c.l.b16 %v1317
        %v2080 = vunpack.c.h.b16 %v1317
        %v2081 = vunpack.c.l.b16 %v1318
        %v2082 = vunpack.c.h.b16 %v1318
        %v2083 = vunpack.c.l.b16 %v1319
        %v2084 = vunpack.c.h.b16 %v1319
        %v2085 = vunpack.c.l.b16 %v1320
        %v2086 = vunpack.c.h.b16 %v1320
        %v2087 = vunpack.c.l.b16 %v1321
        %v2088 = vunpack.c.h.b16 %v1321
        %v2089 = vunpack.c.l.b16 %v1322
        %v2090 = vunpack.c.h.b16 %v1322
        %v2091 = vunpack.c.l.b16 %v1323
        %v2092 = vunpack.c.h.b16 %v1323
        %v2093 = vunpack.c.l.b16 %v1324
        %v2094 = vunpack.c.h.b16 %v1324
        %v2095 = vunpack.c.l.b16 %v1325
        %v2096 = vunpack.c.h.b16 %v1325
        %v2097 = vunpack.c.l.b16 %v1326
        %v2098 = vunpack.c.h.b16 %v1326
        %v2099 = vunpack.c.l.b16 %v1327
        %v2100 = vunpack.c.h.b16 %v1327
        %v2101 = vunpack.c.l.b16 %v1328
        %v2102 = vunpack.c.h.b16 %v1328
        %v2103 = vunpack.c.l.b16 %v1329
        %v2104 = vunpack.c.h.b16 %v1329
        %v2105 = vunpack.c.l.b16 %v1330
        %v2106 = vunpack.c.h.b16 %v1330
        %v2107 = vunpack.c.l.b16 %v1331
        %v2108 = vunpack.c.h.b16 %v1331
        %v2109 = vunpack.c.l.b16 %v1332
        %v2110 = vunpack.c.h.b16 %v1332
        %v2111 = vpack.c.b16 %v1603, %v1599
        %v2112 = vpack.c.b16 %v1604, %v1600
        %v2113 = vpack.c.b16 %v1605, %v1601
        %v2114 = vpack.c.b16 %v1606, %v1602
        %v2115 = vpack.c.b16 %v1611, %v1607
        %v2116 = vpack.c.b16 %v1612, %v1608
        %v2117 = vpack.c.b16 %v1613, %v1609
        %v2118 = vpack.c.b16 %v1614, %v1610
        %v2119 = vpack.c.b16 %v1619, %v1615
        %v2120 = vpack.c.b16 %v1620, %v1616
        %v2121 = vpack.c.b16 %v1621, %v1617
        %v2122 = vpack.c.b16 %v1622, %v1618
        %v2123 = vpack.c.b16 %v1627, %v1623
        %v2124 = vpack.c.b16 %v1628, %v1624
        %v2125 = vpack.c.b16 %v1629, %v1625
        %v2126 = vpack.c.b16 %v1630, %v1626
        %v2127 = vpack.c.b16 %v1635, %v1631
        %v2128 = vpack.c.b16 %v1636, %v1632
        %v2129 = vpack.c.b16 %v1637, %v1633
        %v2130 = vpack.c.b16 %v1638, %v1634
        %v2131 = vpack.c.b16 %v1643, %v1639
        %v2132 = vpack.c.b16 %v1644, %v1640
        %v2133 = vpack.c.b16 %v1645, %v1641
        %v2134 = vpack.c.b16 %v1646, %v1642
        %v2135 = vpack.c.b16 %v1651, %v1647
        %v2136 = vpack.c.b16 %v1652, %v1648
        %v2137 = vpack.c.b16 %v1653, %v1649
        %v2138 = vpack.c.b16 %v1654, %v1650
        %v2139 = vpack.c.b16 %v1659, %v1655
        %v2140 = vpack.c.b16 %v1660, %v1656
        %v2141 = vpack.c.b16 %v1661, %v1657
        %v2142 = vpack.c.b16 %v1662, %v1658
        %v2143 = vpack.c.b16 %v1667, %v1663
        %v2144 = vpack.c.b16 %v1668, %v1664
        %v2145 = vpack.c.b16 %v1669, %v1665
        %v2146 = vpack.c.b16 %v1670, %v1666
        %v2147 = vpack.c.b16 %v1675, %v1671
        %v2148 = vpack.c.b16 %v1676, %v1672
        %v2149 = vpack.c.b16 %v1677, %v1673
        %v2150 = vpack.c.b16 %v1678, %v1674
        %v2151 = vpack.c.b16 %v1683, %v1679
        %v2152 = vpack.c.b16 %v1684, %v1680
        %v2153 = vpack.c.b16 %v1685, %v1681
        %v2154 = vpack.c.b16 %v1686, %v1682
        %v2155 = vpack.c.b16 %v1691, %v1687
        %v2156 = vpack.c.b16 %v1692, %v1688
        %v2157 = vpack.c.b16 %v1693, %v1689
        %v2158 = vpack.c.b16 %v1694, %v1690
        %v2159 = vpack.c.b16 %v1699, %v1695
        %v2160 = vpack.c.b16 %v1700, %v1696
        %v2161 = vpack.c.b16 %v1701, %v1697
        %v2162 = vpack.c.b16 %v1702, %v1698
        %v2163 = vpack.c.b16 %v1707, %v1703
        %v2164 = vpack.c.b16 %v1708, %v1704
        %v2165 = vpack.c.b16 %v1709, %v1705
        %v2166 = vpack.c.b16 %v1710, %v1706
        %v2167 = vpack.c.b16 %v1715, %v1711
        %v2168 = vpack.c.b16 %v1716, %v1712
        %v2169 = vpack.c.b16 %v1717, %v1713
        %v2170 = vpack.c.b16 %v1718, %v1714
        %v2171 = vpack.c.b16 %v1723, %v1719
        %v2172 = vpack.c.b16 %v1724, %v1720
        %v2173 = vpack.c.b16 %v1725, %v1721
        %v2174 = vpack.c.b16 %v1726, %v1722
        %v2175 = vpack.c.b16 %v1731, %v1727
        %v2176 = vpack.c.b16 %v1732, %v1728
        %v2177 = vpack.c.b16 %v1733, %v1729
        %v2178 = vpack.c.b16 %v1734, %v1730
        %v2179 = vpack.c.b16 %v1739, %v1735
        %v2180 = vpack.c.b16 %v1740, %v1736
        %v2181 = vpack.c.b16 %v1741, %v1737
        %v2182 = vpack.c.b16 %v1742, %v1738
        %v2183 = vpack.c.b16 %v1747, %v1743
        %v2184 = vpack.c.b16 %v1748, %v1744
        %v2185 = vpack.c.b16 %v1749, %v1745
        %v2186 = vpack.c.b16 %v1750, %v1746
        %v2187 = vpack.c.b16 %v1755, %v1751
        %v2188 = vpack.c.b16 %v1756, %v1752
        %v2189 = vpack.c.b16 %v1757, %v1753
        %v2190 = vpack.c.b16 %v1758, %v1754
        %v2191 = vpack.c.b16 %v1763, %v1759
        %v2192 = vpack.c.b16 %v1764, %v1760
        %v2193 = vpack.c.b16 %v1765, %v1761
        %v2194 = vpack.c.b16 %v1766, %v1762
        %v2195 = vpack.c.b16 %v1771, %v1767
        %v2196 = vpack.c.b16 %v1772, %v1768
        %v2197 = vpack.c.b16 %v1773, %v1769
        %v2198 = vpack.c.b16 %v1774, %v1770
        %v2199 = vpack.c.b16 %v1779, %v1775
        %v2200 = vpack.c.b16 %v1780, %v1776
        %v2201 = vpack.c.b16 %v1781, %v1777
        %v2202 = vpack.c.b16 %v1782, %v1778
        %v2203 = vpack.c.b16 %v1787, %v1783
        %v2204 = vpack.c.b16 %v1788, %v1784
        %v2205 = vpack.c.b16 %v1789, %v1785
        %v2206 = vpack.c.b16 %v1790, %v1786
        %v2207 = vpack.c.b16 %v1795, %v1791
        %v2208 = vpack.c.b16 %v1796, %v1792
        %v2209 = vpack.c.b16 %v1797, %v1793
        %v2210 = vpack.c.b16 %v1798, %v1794
        %v2211 = vpack.c.b16 %v1803, %v1799
        %v2212 = vpack.c.b16 %v1804, %v1800
        %v2213 = vpack.c.b16 %v1805, %v1801
        %v2214 = vpack.c.b16 %v1806, %v1802
        %v2215 = vpack.c.b16 %v1811, %v1807
        %v2216 = vpack.c.b16 %v1812, %v1808
        %v2217 = vpack.c.b16 %v1813, %v1809
        %v2218 = vpack.c.b16 %v1814, %v1810
        %v2219 = vpack.c.b16 %v1819, %v1815
        %v2220 = vpack.c.b16 %v1820, %v1816
        %v2221 = vpack.c.b16 %v1821, %v1817
        %v2222 = vpack.c.b16 %v1822, %v1818
        %v2223 = vpack.c.b16 %v1827, %v1823
        %v2224 = vpack.c.b16 %v1828, %v1824
        %v2225 = vpack.c.b16 %v1829, %v1825
        %v2226 = vpack.c.b16 %v1830, %v1826
        %v2227 = vpack.c.b16 %v1835, %v1831
        %v2228 = vpack.c.b16 %v1836, %v1832
        %v2229 = vpack.c.b16 %v1837, %v1833
        %v2230 = vpack.c.b16 %v1838, %v1834
        %v2231 = vpack.c.b16 %v1843, %v1839
        %v2232 = vpack.c.b16 %v1844, %v1840
        %v2233 = vpack.c.b16 %v1845, %v1841
        %v2234 = vpack.c.b16 %v1846, %v1842
        %v2235 = vpack.c.b16 %v1851, %v1847
        %v2236 = vpack.c.b16 %v1852, %v1848
        %v2237 = vpack.c.b16 %v1853, %v1849
        %v2238 = vpack.c.b16 %v1854, %v1850
        %v2239 = vpack.c.b16 %v1859, %v1855
        %v2240 = vpack.c.b16 %v1860, %v1856
        %v2241 = vpack.c.b16 %v1861, %v1857
        %v2242 = vpack.c.b16 %v1862, %v1858
        %v2243 = vpack.c.b16 %v1867, %v1863
        %v2244 = vpack.c.b16 %v1868, %v1864
        %v2245 = vpack.c.b16 %v1869, %v1865
        %v2246 = vpack.c.b16 %v1870, %v1866
        %v2247 = vpack.c.b16 %v1875, %v1871
        %v2248 = vpack.c.b16 %v1876, %v1872
        %v2249 = vpack.c.b16 %v1877, %v1873
        %v2250 = vpack.c.b16 %v1878, %v1874
        %v2251 = vpack.c.b16 %v1883, %v1879
        %v2252 = vpack.c.b16 %v1884, %v1880
        %v2253 = vpack.c.b16 %v1885, %v1881
        %v2254 = vpack.c.b16 %v1886, %v1882
        %v2255 = vpack.c.b16 %v1891, %v1887
        %v2256 = vpack.c.b16 %v1892, %v1888
        %v2257 = vpack.c.b16 %v1893, %v1889
        %v2258 = vpack.c.b16 %v1894, %v1890
        %v2259 = vpack.c.b16 %v1899, %v1895
        %v2260 = vpack.c.b16 %v1900, %v1896
        %v2261 = vpack.c.b16 %v1901, %v1897
        %v2262 = vpack.c.b16 %v1902, %v1898
        %v2263 = vpack.c.b16 %v1907, %v1903
        %v2264 = vpack.c.b16 %v1908, %v1904
        %v2265 = vpack.c.b16 %v1909, %v1905
        %v2266 = vpack.c.b16 %v1910, %v1906
        %v2267 = vpack.c.b16 %v1915, %v1911
        %v2268 = vpack.c.b16 %v1916, %v1912
        %v2269 = vpack.c.b16 %v1917, %v1913
        %v2270 = vpack.c.b16 %v1918, %v1914
        %v2271 = vpack.c.b16 %v1923, %v1919
        %v2272 = vpack.c.b16 %v1924, %v1920
        %v2273 = vpack.c.b16 %v1925, %v1921
        %v2274 = vpack.c.b16 %v1926, %v1922
        %v2275 = vpack.c.b16 %v1931, %v1927
        %v2276 = vpack.c.b16 %v1932, %v1928
        %v2277 = vpack.c.b16 %v1933, %v1929
        %v2278 = vpack.c.b16 %v1934, %v1930
        %v2279 = vpack.c.b16 %v1939, %v1935
        %v2280 = vpack.c.b16 %v1940, %v1936
        %v2281 = vpack.c.b16 %v1941, %v1937
        %v2282 = vpack.c.b16 %v1942, %v1938
        %v2283 = vpack.c.b16 %v1947, %v1943
        %v2284 = vpack.c.b16 %v1948, %v1944
        %v2285 = vpack.c.b16 %v1949, %v1945
        %v2286 = vpack.c.b16 %v1950, %v1946
        %v2287 = vpack.c.b16 %v1955, %v1951
        %v2288 = vpack.c.b16 %v1956, %v1952
        %v2289 = vpack.c.b16 %v1957, %v1953
        %v2290 = vpack.c.b16 %v1958, %v1954
        %v2291 = vpack.c.b16 %v1963, %v1959
        %v2292 = vpack.c.b16 %v1964, %v1960
        %v2293 = vpack.c.b16 %v1965, %v1961
        %v2294 = vpack.c.b16 %v1966, %v1962
        %v2295 = vpack.c.b16 %v1971, %v1967
        %v2296 = vpack.c.b16 %v1972, %v1968
        %v2297 = vpack.c.b16 %v1973, %v1969
        %v2298 = vpack.c.b16 %v1974, %v1970
        %v2299 = vpack.c.b16 %v1979, %v1975
        %v2300 = vpack.c.b16 %v1980, %v1976
        %v2301 = vpack.c.b16 %v1981, %v1977
        %v2302 = vpack.c.b16 %v1982, %v1978
        %v2303 = vpack.c.b16 %v1987, %v1983
        %v2304 = vpack.c.b16 %v1988, %v1984
        %v2305 = vpack.c.b16 %v1989, %v1985
        %v2306 = vpack.c.b16 %v1990, %v1986
        %v2307 = vpack.c.b16 %v1995, %v1991
        %v2308 = vpack.c.b16 %v1996, %v1992
        %v2309 = vpack.c.b16 %v1997, %v1993
        %v2310 = vpack.c.b16 %v1998, %v1994
        %v2311 = vpack.c.b16 %v2003, %v1999
        %v2312 = vpack.c.b16 %v2004, %v2000
        %v2313 = vpack.c.b16 %v2005, %v2001
        %v2314 = vpack.c.b16 %v2006, %v2002
        %v2315 = vpack.c.b16 %v2011, %v2007
        %v2316 = vpack.c.b16 %v2012, %v2008
        %v2317 = vpack.c.b16 %v2013, %v2009
        %v2318 = vpack.c.b16 %v2014, %v2010
        %v2319 = vpack.c.b16 %v2019, %v2015
        %v2320 = vpack.c.b16 %v2020, %v2016
        %v2321 = vpack.c.b16 %v2021, %v2017
        %v2322 = vpack.c.b16 %v2022, %v2018
        %v2323 = vpack.c.b16 %v2027, %v2023
        %v2324 = vpack.c.b16 %v2028, %v2024
        %v2325 = vpack.c.b16 %v2029, %v2025
        %v2326 = vpack.c.b16 %v2030, %v2026
        %v2327 = vpack.c.b16 %v2035, %v2031
        %v2328 = vpack.c.b16 %v2036, %v2032
        %v2329 = vpack.c.b16 %v2037, %v2033
        %v2330 = vpack.c.b16 %v2038, %v2034
        %v2331 = vpack.c.b16 %v2043, %v2039
        %v2332 = vpack.c.b16 %v2044, %v2040
        %v2333 = vpack.c.b16 %v2045, %v2041
        %v2334 = vpack.c.b16 %v2046, %v2042
        %v2335 = vpack.c.b16 %v2051, %v2047
        %v2336 = vpack.c.b16 %v2052, %v2048
        %v2337 = vpack.c.b16 %v2053, %v2049
        %v2338 = vpack.c.b16 %v2054, %v2050
        %v2339 = vpack.c.b16 %v2059, %v2055
        %v2340 = vpack.c.b16 %v2060, %v2056
        %v2341 = vpack.c.b16 %v2061, %v2057
        %v2342 = vpack.c.b16 %v2062, %v2058
        %v2343 = vpack.c.b16 %v2067, %v2063
        %v2344 = vpack.c.b16 %v2068, %v2064
        %v2345 = vpack.c.b16 %v2069, %v2065
        %v2346 = vpack.c.b16 %v2070, %v2066
        %v2347 = vpack.c.b16 %v2075, %v2071
        %v2348 = vpack.c.b16 %v2076, %v2072
        %v2349 = vpack.c.b16 %v2077, %v2073
        %v2350 = vpack.c.b16 %v2078, %v2074
        %v2351 = vpack.c.b16 %v2083, %v2079
        %v2352 = vpack.c.b16 %v2084, %v2080
        %v2353 = vpack.c.b16 %v2085, %v2081
        %v2354 = vpack.c.b16 %v2086, %v2082
        %v2355 = vpack.c.b16 %v2091, %v2087
        %v2356 = vpack.c.b16 %v2092, %v2088
        %v2357 = vpack.c.b16 %v2093, %v2089
        %v2358 = vpack.c.b16 %v2094, %v2090
        %v2359 = vpack.c.b16 %v2099, %v2095
        %v2360 = vpack.c.b16 %v2100, %v2096
        %v2361 = vpack.c.b16 %v2101, %v2097
        %v2362 = vpack.c.b16 %v2102, %v2098
        %v2363 = vpack.c.b16 %v2107, %v2103
        %v2364 = vpack.c.b16 %v2108, %v2104
        %v2365 = vpack.c.b16 %v2109, %v2105
        %v2366 = vpack.c.b16 %v2110, %v2106
        %2623 = vmatpush.bf16.msra.mxu0 %v2139
        %2624 = vmatpush.bf16.msra.mxu0 %v2135
        %2625 = vmatpush.bf16.msra.mxu0 %v2131
        %2626 = vmatpush.bf16.msra.mxu0 %v2127
        %2627 = vmatpush.bf16.msra.mxu0 %v2123
        %2628 = vmatpush.bf16.msra.mxu0 %v2119
        %2629 = vmatpush.bf16.msra.mxu0 %v2115
        %2630 = vmatpush.bf16.msra.mxu0 %v2111
        %2631 = vmatmul.bf16.gmra.mxu0 %v821
        %v2632 = vpop.f32.mrf.mxu0
        %v2633 = vadd.f32 %v1335, %v2632
        %v2634 = vpop.f32.mrf.mxu0
        %v2635 = vadd.f32 %v1335, %v2634
        %2636 = vmatmul.bf16.gmra.mxu0 %v829
        %v2637 = vpop.f32.mrf.mxu0
        %v2638 = vadd.f32 %v1335, %v2637
        %v2639 = vpop.f32.mrf.mxu0
        %v2640 = vadd.f32 %v1335, %v2639
        %2641 = vmatmul.bf16.gmra.mxu0 %v837
        %v2642 = vpop.f32.mrf.mxu0
        %v2643 = vadd.f32 %v1335, %v2642
        %v2644 = vpop.f32.mrf.mxu0
        %v2645 = vadd.f32 %v1335, %v2644
        %2646 = vmatmul.bf16.gmra.mxu0 %v845
        %v2647 = vpop.f32.mrf.mxu0
        %v2648 = vadd.f32 %v1335, %v2647
        %v2649 = vpop.f32.mrf.mxu0
        %v2650 = vadd.f32 %v1335, %v2649
        %2651 = vmatmul.bf16.gmra.mxu0 %v853
        %v2652 = vpop.f32.mrf.mxu0
        %v2653 = vadd.f32 %v1335, %v2652
        %v2654 = vpop.f32.mrf.mxu0
        %v2655 = vadd.f32 %v1335, %v2654
        %2656 = vmatmul.bf16.gmra.mxu0 %v861
        %v2657 = vpop.f32.mrf.mxu0
        %v2658 = vadd.f32 %v1335, %v2657
        %v2659 = vpop.f32.mrf.mxu0
        %v2660 = vadd.f32 %v1335, %v2659
        %2661 = vmatmul.bf16.gmra.mxu0 %v869
        %v2662 = vpop.f32.mrf.mxu0
        %v2663 = vadd.f32 %v1335, %v2662
        %v2664 = vpop.f32.mrf.mxu0
        %v2665 = vadd.f32 %v1335, %v2664
        %2666 = vmatmul.bf16.gmra.mxu0 %v877
        %v2667 = vpop.f32.mrf.mxu0
        %v2668 = vadd.f32 %v1335, %v2667
        %v2669 = vpop.f32.mrf.mxu0
        %v2670 = vadd.f32 %v1335, %v2669
        %2671 = vmatmul.bf16.gmra.mxu0 %v885
        %v2672 = vpop.f32.mrf.mxu0
        %v2673 = vadd.f32 %v1335, %v2672
        %v2674 = vpop.f32.mrf.mxu0
        %v2675 = vadd.f32 %v1335, %v2674
        %2676 = vmatmul.bf16.gmra.mxu0 %v893
        %v2677 = vpop.f32.mrf.mxu0
        %v2678 = vadd.f32 %v1335, %v2677
        %v2679 = vpop.f32.mrf.mxu0
        %v2680 = vadd.f32 %v1335, %v2679
        %2681 = vmatmul.bf16.gmra.mxu0 %v901
        %v2682 = vpop.f32.mrf.mxu0
        %v2683 = vadd.f32 %v1335, %v2682
        %v2684 = vpop.f32.mrf.mxu0
        %v2685 = vadd.f32 %v1335, %v2684
        %2686 = vmatmul.bf16.gmra.mxu0 %v909
        %v2687 = vpop.f32.mrf.mxu0
        %v2688 = vadd.f32 %v1335, %v2687
        %v2689 = vpop.f32.mrf.mxu0
        %v2690 = vadd.f32 %v1335, %v2689
        %2691 = vmatmul.bf16.gmra.mxu0 %v917
        %v2692 = vpop.f32.mrf.mxu0
        %v2693 = vadd.f32 %v1335, %v2692
        %v2694 = vpop.f32.mrf.mxu0
        %v2695 = vadd.f32 %v1335, %v2694
        %2696 = vmatmul.bf16.gmra.mxu0 %v925
        %v2697 = vpop.f32.mrf.mxu0
        %v2698 = vadd.f32 %v1335, %v2697
        %v2699 = vpop.f32.mrf.mxu0
        %v2700 = vadd.f32 %v1335, %v2699
        %2701 = vmatmul.bf16.gmra.mxu0 %v933
        %v2702 = vpop.f32.mrf.mxu0
        %v2703 = vadd.f32 %v1335, %v2702
        %v2704 = vpop.f32.mrf.mxu0
        %v2705 = vadd.f32 %v1335, %v2704
        %2706 = vmatmul.bf16.gmra.mxu0 %v941
        %v2707 = vpop.f32.mrf.mxu0
        %v2708 = vadd.f32 %v1335, %v2707
        %v2709 = vpop.f32.mrf.mxu0
        %v2710 = vadd.f32 %v1335, %v2709
        %2711 = vmatmul.bf16.gmra.mxu0 %v949
        %v2712 = vpop.f32.mrf.mxu0
        %v2713 = vadd.f32 %v1335, %v2712
        %v2714 = vpop.f32.mrf.mxu0
        %v2715 = vadd.f32 %v1335, %v2714
        %2716 = vmatmul.bf16.gmra.mxu0 %v957
        %v2717 = vpop.f32.mrf.mxu0
        %v2718 = vadd.f32 %v1335, %v2717
        %v2719 = vpop.f32.mrf.mxu0
        %v2720 = vadd.f32 %v1335, %v2719
        %2721 = vmatmul.bf16.gmra.mxu0 %v965
        %v2722 = vpop.f32.mrf.mxu0
        %v2723 = vadd.f32 %v1335, %v2722
        %v2724 = vpop.f32.mrf.mxu0
        %v2725 = vadd.f32 %v1335, %v2724
        %2726 = vmatmul.bf16.gmra.mxu0 %v973
        %v2727 = vpop.f32.mrf.mxu0
        %v2728 = vadd.f32 %v1335, %v2727
        %v2729 = vpop.f32.mrf.mxu0
        %v2730 = vadd.f32 %v1335, %v2729
        %2731 = vmatmul.bf16.gmra.mxu0 %v981
        %v2732 = vpop.f32.mrf.mxu0
        %v2733 = vadd.f32 %v1335, %v2732
        %v2734 = vpop.f32.mrf.mxu0
        %v2735 = vadd.f32 %v1335, %v2734
        %2736 = vmatmul.bf16.gmra.mxu0 %v989
        %v2737 = vpop.f32.mrf.mxu0
        %v2738 = vadd.f32 %v1335, %v2737
        %v2739 = vpop.f32.mrf.mxu0
        %v2740 = vadd.f32 %v1335, %v2739
        %2741 = vmatmul.bf16.gmra.mxu0 %v997
        %v2742 = vpop.f32.mrf.mxu0
        %v2743 = vadd.f32 %v1335, %v2742
        %v2744 = vpop.f32.mrf.mxu0
        %v2745 = vadd.f32 %v1335, %v2744
        %2746 = vmatmul.bf16.gmra.mxu0 %v1005
        %v2747 = vpop.f32.mrf.mxu0
        %v2748 = vadd.f32 %v1335, %v2747
        %v2749 = vpop.f32.mrf.mxu0
        %v2750 = vadd.f32 %v1335, %v2749
        %2751 = vmatmul.bf16.gmra.mxu0 %v1013
        %v2752 = vpop.f32.mrf.mxu0
        %v2753 = vadd.f32 %v1335, %v2752
        %v2754 = vpop.f32.mrf.mxu0
        %v2755 = vadd.f32 %v1335, %v2754
        %2756 = vmatmul.bf16.gmra.mxu0 %v1021
        %v2757 = vpop.f32.mrf.mxu0
        %v2758 = vadd.f32 %v1335, %v2757
        %v2759 = vpop.f32.mrf.mxu0
        %v2760 = vadd.f32 %v1335, %v2759
        %2761 = vmatmul.bf16.gmra.mxu0 %v1029
        %v2762 = vpop.f32.mrf.mxu0
        %v2763 = vadd.f32 %v1335, %v2762
        %v2764 = vpop.f32.mrf.mxu0
        %v2765 = vadd.f32 %v1335, %v2764
        %2766 = vmatmul.bf16.gmra.mxu0 %v1037
        %v2767 = vpop.f32.mrf.mxu0
        %v2768 = vadd.f32 %v1335, %v2767
        %v2769 = vpop.f32.mrf.mxu0
        %v2770 = vadd.f32 %v1335, %v2769
        %2771 = vmatmul.bf16.gmra.mxu0 %v1045
        %v2772 = vpop.f32.mrf.mxu0
        %v2773 = vadd.f32 %v1335, %v2772
        %v2774 = vpop.f32.mrf.mxu0
        %v2775 = vadd.f32 %v1335, %v2774
        %2776 = vmatmul.bf16.gmra.mxu0 %v1053
        %v2777 = vpop.f32.mrf.mxu0
        %v2778 = vadd.f32 %v1335, %v2777
        %v2779 = vpop.f32.mrf.mxu0
        %v2780 = vadd.f32 %v1335, %v2779
        %2781 = vmatmul.bf16.gmra.mxu0 %v1061
        %v2782 = vpop.f32.mrf.mxu0
        %v2783 = vadd.f32 %v1335, %v2782
        %v2784 = vpop.f32.mrf.mxu0
        %v2785 = vadd.f32 %v1335, %v2784
        %2786 = vmatmul.bf16.gmra.mxu0 %v1069
        %v2787 = vpop.f32.mrf.mxu0
        %v2788 = vadd.f32 %v1335, %v2787
        %v2789 = vpop.f32.mrf.mxu0
        %v2790 = vadd.f32 %v1335, %v2789
        %2791 = vdwg.mxu0
        %2792 = vmatpush.bf16.msra.mxu0 %v2171
        %2793 = vmatpush.bf16.msra.mxu0 %v2167
        %2794 = vmatpush.bf16.msra.mxu0 %v2163
        %2795 = vmatpush.bf16.msra.mxu0 %v2159
        %2796 = vmatpush.bf16.msra.mxu0 %v2155
        %2797 = vmatpush.bf16.msra.mxu0 %v2151
        %2798 = vmatpush.bf16.msra.mxu0 %v2147
        %2799 = vmatpush.bf16.msra.mxu0 %v2143
        %2800 = vmatmul.bf16.gmra.mxu0 %v822
        %v2801 = vpop.f32.mrf.mxu0
        %v2802 = vadd.f32 %v2633, %v2801
        %v2803 = vpop.f32.mrf.mxu0
        %v2804 = vadd.f32 %v2635, %v2803
        %2805 = vmatmul.bf16.gmra.mxu0 %v830
        %v2806 = vpop.f32.mrf.mxu0
        %v2807 = vadd.f32 %v2638, %v2806
        %v2808 = vpop.f32.mrf.mxu0
        %v2809 = vadd.f32 %v2640, %v2808
        %2810 = vmatmul.bf16.gmra.mxu0 %v838
        %v2811 = vpop.f32.mrf.mxu0
        %v2812 = vadd.f32 %v2643, %v2811
        %v2813 = vpop.f32.mrf.mxu0
        %v2814 = vadd.f32 %v2645, %v2813
        %2815 = vmatmul.bf16.gmra.mxu0 %v846
        %v2816 = vpop.f32.mrf.mxu0
        %v2817 = vadd.f32 %v2648, %v2816
        %v2818 = vpop.f32.mrf.mxu0
        %v2819 = vadd.f32 %v2650, %v2818
        %2820 = vmatmul.bf16.gmra.mxu0 %v854
        %v2821 = vpop.f32.mrf.mxu0
        %v2822 = vadd.f32 %v2653, %v2821
        %v2823 = vpop.f32.mrf.mxu0
        %v2824 = vadd.f32 %v2655, %v2823
        %2825 = vmatmul.bf16.gmra.mxu0 %v862
        %v2826 = vpop.f32.mrf.mxu0
        %v2827 = vadd.f32 %v2658, %v2826
        %v2828 = vpop.f32.mrf.mxu0
        %v2829 = vadd.f32 %v2660, %v2828
        %2830 = vmatmul.bf16.gmra.mxu0 %v870
        %v2831 = vpop.f32.mrf.mxu0
        %v2832 = vadd.f32 %v2663, %v2831
        %v2833 = vpop.f32.mrf.mxu0
        %v2834 = vadd.f32 %v2665, %v2833
        %2835 = vmatmul.bf16.gmra.mxu0 %v878
        %v2836 = vpop.f32.mrf.mxu0
        %v2837 = vadd.f32 %v2668, %v2836
        %v2838 = vpop.f32.mrf.mxu0
        %v2839 = vadd.f32 %v2670, %v2838
        %2840 = vmatmul.bf16.gmra.mxu0 %v886
        %v2841 = vpop.f32.mrf.mxu0
        %v2842 = vadd.f32 %v2673, %v2841
        %v2843 = vpop.f32.mrf.mxu0
        %v2844 = vadd.f32 %v2675, %v2843
        %2845 = vmatmul.bf16.gmra.mxu0 %v894
        %v2846 = vpop.f32.mrf.mxu0
        %v2847 = vadd.f32 %v2678, %v2846
        %v2848 = vpop.f32.mrf.mxu0
        %v2849 = vadd.f32 %v2680, %v2848
        %2850 = vmatmul.bf16.gmra.mxu0 %v902
        %v2851 = vpop.f32.mrf.mxu0
        %v2852 = vadd.f32 %v2683, %v2851
        %v2853 = vpop.f32.mrf.mxu0
        %v2854 = vadd.f32 %v2685, %v2853
        %2855 = vmatmul.bf16.gmra.mxu0 %v910
        %v2856 = vpop.f32.mrf.mxu0
        %v2857 = vadd.f32 %v2688, %v2856
        %v2858 = vpop.f32.mrf.mxu0
        %v2859 = vadd.f32 %v2690, %v2858
        %2860 = vmatmul.bf16.gmra.mxu0 %v918
        %v2861 = vpop.f32.mrf.mxu0
        %v2862 = vadd.f32 %v2693, %v2861
        %v2863 = vpop.f32.mrf.mxu0
        %v2864 = vadd.f32 %v2695, %v2863
        %2865 = vmatmul.bf16.gmra.mxu0 %v926
        %v2866 = vpop.f32.mrf.mxu0
        %v2867 = vadd.f32 %v2698, %v2866
        %v2868 = vpop.f32.mrf.mxu0
        %v2869 = vadd.f32 %v2700, %v2868
        %2870 = vmatmul.bf16.gmra.mxu0 %v934
        %v2871 = vpop.f32.mrf.mxu0
        %v2872 = vadd.f32 %v2703, %v2871
        %v2873 = vpop.f32.mrf.mxu0
        %v2874 = vadd.f32 %v2705, %v2873
        %2875 = vmatmul.bf16.gmra.mxu0 %v942
        %v2876 = vpop.f32.mrf.mxu0
        %v2877 = vadd.f32 %v2708, %v2876
        %v2878 = vpop.f32.mrf.mxu0
        %v2879 = vadd.f32 %v2710, %v2878
        %2880 = vmatmul.bf16.gmra.mxu0 %v950
        %v2881 = vpop.f32.mrf.mxu0
        %v2882 = vadd.f32 %v2713, %v2881
        %v2883 = vpop.f32.mrf.mxu0
        %v2884 = vadd.f32 %v2715, %v2883
        %2885 = vmatmul.bf16.gmra.mxu0 %v958
        %v2886 = vpop.f32.mrf.mxu0
        %v2887 = vadd.f32 %v2718, %v2886
        %v2888 = vpop.f32.mrf.mxu0
        %v2889 = vadd.f32 %v2720, %v2888
        %2890 = vmatmul.bf16.gmra.mxu0 %v966
        %v2891 = vpop.f32.mrf.mxu0
        %v2892 = vadd.f32 %v2723, %v2891
        %v2893 = vpop.f32.mrf.mxu0
        %v2894 = vadd.f32 %v2725, %v2893
        %2895 = vmatmul.bf16.gmra.mxu0 %v974
        %v2896 = vpop.f32.mrf.mxu0
        %v2897 = vadd.f32 %v2728, %v2896
        %v2898 = vpop.f32.mrf.mxu0
        %v2899 = vadd.f32 %v2730, %v2898
        %2900 = vmatmul.bf16.gmra.mxu0 %v982
        %v2901 = vpop.f32.mrf.mxu0
        %v2902 = vadd.f32 %v2733, %v2901
        %v2903 = vpop.f32.mrf.mxu0
        %v2904 = vadd.f32 %v2735, %v2903
        %2905 = vmatmul.bf16.gmra.mxu0 %v990
        %v2906 = vpop.f32.mrf.mxu0
        %v2907 = vadd.f32 %v2738, %v2906
        %v2908 = vpop.f32.mrf.mxu0
        %v2909 = vadd.f32 %v2740, %v2908
        %2910 = vmatmul.bf16.gmra.mxu0 %v998
        %v2911 = vpop.f32.mrf.mxu0
        %v2912 = vadd.f32 %v2743, %v2911
        %v2913 = vpop.f32.mrf.mxu0
        %v2914 = vadd.f32 %v2745, %v2913
        %2915 = vmatmul.bf16.gmra.mxu0 %v1006
        %v2916 = vpop.f32.mrf.mxu0
        %v2917 = vadd.f32 %v2748, %v2916
        %v2918 = vpop.f32.mrf.mxu0
        %v2919 = vadd.f32 %v2750, %v2918
        %2920 = vmatmul.bf16.gmra.mxu0 %v1014
        %v2921 = vpop.f32.mrf.mxu0
        %v2922 = vadd.f32 %v2753, %v2921
        %v2923 = vpop.f32.mrf.mxu0
        %v2924 = vadd.f32 %v2755, %v2923
        %2925 = vmatmul.bf16.gmra.mxu0 %v1022
        %v2926 = vpop.f32.mrf.mxu0
        %v2927 = vadd.f32 %v2758, %v2926
        %v2928 = vpop.f32.mrf.mxu0
        %v2929 = vadd.f32 %v2760, %v2928
        %2930 = vmatmul.bf16.gmra.mxu0 %v1030
        %v2931 = vpop.f32.mrf.mxu0
        %v2932 = vadd.f32 %v2763, %v2931
        %v2933 = vpop.f32.mrf.mxu0
        %v2934 = vadd.f32 %v2765, %v2933
        %2935 = vmatmul.bf16.gmra.mxu0 %v1038
        %v2936 = vpop.f32.mrf.mxu0
        %v2937 = vadd.f32 %v2768, %v2936
        %v2938 = vpop.f32.mrf.mxu0
        %v2939 = vadd.f32 %v2770, %v2938
        %2940 = vmatmul.bf16.gmra.mxu0 %v1046
        %v2941 = vpop.f32.mrf.mxu0
        %v2942 = vadd.f32 %v2773, %v2941
        %v2943 = vpop.f32.mrf.mxu0
        %v2944 = vadd.f32 %v2775, %v2943
        %2945 = vmatmul.bf16.gmra.mxu0 %v1054
        %v2946 = vpop.f32.mrf.mxu0
        %v2947 = vadd.f32 %v2778, %v2946
        %v2948 = vpop.f32.mrf.mxu0
        %v2949 = vadd.f32 %v2780, %v2948
        %2950 = vmatmul.bf16.gmra.mxu0 %v1062
        %v2951 = vpop.f32.mrf.mxu0
        %v2952 = vadd.f32 %v2783, %v2951
        %v2953 = vpop.f32.mrf.mxu0
        %v2954 = vadd.f32 %v2785, %v2953
        %2955 = vmatmul.bf16.gmra.mxu0 %v1070
        %v2956 = vpop.f32.mrf.mxu0
        %v2957 = vadd.f32 %v2788, %v2956
        %v2958 = vpop.f32.mrf.mxu0
        %v2959 = vadd.f32 %v2790, %v2958
        %2960 = vdwg.mxu0
        %2961 = vmatpush.bf16.msra.mxu0 %v2203
        %2962 = vmatpush.bf16.msra.mxu0 %v2199
        %2963 = vmatpush.bf16.msra.mxu0 %v2195
        %2964 = vmatpush.bf16.msra.mxu0 %v2191
        %2965 = vmatpush.bf16.msra.mxu0 %v2187
        %2966 = vmatpush.bf16.msra.mxu0 %v2183
        %2967 = vmatpush.bf16.msra.mxu0 %v2179
        %2968 = vmatpush.bf16.msra.mxu0 %v2175
        %2969 = vmatmul.bf16.gmra.mxu0 %v823
        %v2970 = vpop.f32.mrf.mxu0
        %v2971 = vadd.f32 %v2802, %v2970
        %v2972 = vpop.f32.mrf.mxu0
        %v2973 = vadd.f32 %v2804, %v2972
        %2974 = vmatmul.bf16.gmra.mxu0 %v831
        %v2975 = vpop.f32.mrf.mxu0
        %v2976 = vadd.f32 %v2807, %v2975
        %v2977 = vpop.f32.mrf.mxu0
        %v2978 = vadd.f32 %v2809, %v2977
        %2979 = vmatmul.bf16.gmra.mxu0 %v839
        %v2980 = vpop.f32.mrf.mxu0
        %v2981 = vadd.f32 %v2812, %v2980
        %v2982 = vpop.f32.mrf.mxu0
        %v2983 = vadd.f32 %v2814, %v2982
        %2984 = vmatmul.bf16.gmra.mxu0 %v847
        %v2985 = vpop.f32.mrf.mxu0
        %v2986 = vadd.f32 %v2817, %v2985
        %v2987 = vpop.f32.mrf.mxu0
        %v2988 = vadd.f32 %v2819, %v2987
        %2989 = vmatmul.bf16.gmra.mxu0 %v855
        %v2990 = vpop.f32.mrf.mxu0
        %v2991 = vadd.f32 %v2822, %v2990
        %v2992 = vpop.f32.mrf.mxu0
        %v2993 = vadd.f32 %v2824, %v2992
        %2994 = vmatmul.bf16.gmra.mxu0 %v863
        %v2995 = vpop.f32.mrf.mxu0
        %v2996 = vadd.f32 %v2827, %v2995
        %v2997 = vpop.f32.mrf.mxu0
        %v2998 = vadd.f32 %v2829, %v2997
        %2999 = vmatmul.bf16.gmra.mxu0 %v871
        %v3000 = vpop.f32.mrf.mxu0
        %v3001 = vadd.f32 %v2832, %v3000
        %v3002 = vpop.f32.mrf.mxu0
        %v3003 = vadd.f32 %v2834, %v3002
        %3004 = vmatmul.bf16.gmra.mxu0 %v879
        %v3005 = vpop.f32.mrf.mxu0
        %v3006 = vadd.f32 %v2837, %v3005
        %v3007 = vpop.f32.mrf.mxu0
        %v3008 = vadd.f32 %v2839, %v3007
        %3009 = vmatmul.bf16.gmra.mxu0 %v887
        %v3010 = vpop.f32.mrf.mxu0
        %v3011 = vadd.f32 %v2842, %v3010
        %v3012 = vpop.f32.mrf.mxu0
        %v3013 = vadd.f32 %v2844, %v3012
        %3014 = vmatmul.bf16.gmra.mxu0 %v895
        %v3015 = vpop.f32.mrf.mxu0
        %v3016 = vadd.f32 %v2847, %v3015
        %v3017 = vpop.f32.mrf.mxu0
        %v3018 = vadd.f32 %v2849, %v3017
        %3019 = vmatmul.bf16.gmra.mxu0 %v903
        %v3020 = vpop.f32.mrf.mxu0
        %v3021 = vadd.f32 %v2852, %v3020
        %v3022 = vpop.f32.mrf.mxu0
        %v3023 = vadd.f32 %v2854, %v3022
        %3024 = vmatmul.bf16.gmra.mxu0 %v911
        %v3025 = vpop.f32.mrf.mxu0
        %v3026 = vadd.f32 %v2857, %v3025
        %v3027 = vpop.f32.mrf.mxu0
        %v3028 = vadd.f32 %v2859, %v3027
        %3029 = vmatmul.bf16.gmra.mxu0 %v919
        %v3030 = vpop.f32.mrf.mxu0
        %v3031 = vadd.f32 %v2862, %v3030
        %v3032 = vpop.f32.mrf.mxu0
        %v3033 = vadd.f32 %v2864, %v3032
        %3034 = vmatmul.bf16.gmra.mxu0 %v927
        %v3035 = vpop.f32.mrf.mxu0
        %v3036 = vadd.f32 %v2867, %v3035
        %v3037 = vpop.f32.mrf.mxu0
        %v3038 = vadd.f32 %v2869, %v3037
        %3039 = vmatmul.bf16.gmra.mxu0 %v935
        %v3040 = vpop.f32.mrf.mxu0
        %v3041 = vadd.f32 %v2872, %v3040
        %v3042 = vpop.f32.mrf.mxu0
        %v3043 = vadd.f32 %v2874, %v3042
        %3044 = vmatmul.bf16.gmra.mxu0 %v943
        %v3045 = vpop.f32.mrf.mxu0
        %v3046 = vadd.f32 %v2877, %v3045
        %v3047 = vpop.f32.mrf.mxu0
        %v3048 = vadd.f32 %v2879, %v3047
        %3049 = vmatmul.bf16.gmra.mxu0 %v951
        %v3050 = vpop.f32.mrf.mxu0
        %v3051 = vadd.f32 %v2882, %v3050
        %v3052 = vpop.f32.mrf.mxu0
        %v3053 = vadd.f32 %v2884, %v3052
        %3054 = vmatmul.bf16.gmra.mxu0 %v959
        %v3055 = vpop.f32.mrf.mxu0
        %v3056 = vadd.f32 %v2887, %v3055
        %v3057 = vpop.f32.mrf.mxu0
        %v3058 = vadd.f32 %v2889, %v3057
        %3059 = vmatmul.bf16.gmra.mxu0 %v967
        %v3060 = vpop.f32.mrf.mxu0
        %v3061 = vadd.f32 %v2892, %v3060
        %v3062 = vpop.f32.mrf.mxu0
        %v3063 = vadd.f32 %v2894, %v3062
        %3064 = vmatmul.bf16.gmra.mxu0 %v975
        %v3065 = vpop.f32.mrf.mxu0
        %v3066 = vadd.f32 %v2897, %v3065
        %v3067 = vpop.f32.mrf.mxu0
        %v3068 = vadd.f32 %v2899, %v3067
        %3069 = vmatmul.bf16.gmra.mxu0 %v983
        %v3070 = vpop.f32.mrf.mxu0
        %v3071 = vadd.f32 %v2902, %v3070
        %v3072 = vpop.f32.mrf.mxu0
        %v3073 = vadd.f32 %v2904, %v3072
        %3074 = vmatmul.bf16.gmra.mxu0 %v991
        %v3075 = vpop.f32.mrf.mxu0
        %v3076 = vadd.f32 %v2907, %v3075
        %v3077 = vpop.f32.mrf.mxu0
        %v3078 = vadd.f32 %v2909, %v3077
        %3079 = vmatmul.bf16.gmra.mxu0 %v999
        %v3080 = vpop.f32.mrf.mxu0
        %v3081 = vadd.f32 %v2912, %v3080
        %v3082 = vpop.f32.mrf.mxu0
        %v3083 = vadd.f32 %v2914, %v3082
        %3084 = vmatmul.bf16.gmra.mxu0 %v1007
        %v3085 = vpop.f32.mrf.mxu0
        %v3086 = vadd.f32 %v2917, %v3085
        %v3087 = vpop.f32.mrf.mxu0
        %v3088 = vadd.f32 %v2919, %v3087
        %3089 = vmatmul.bf16.gmra.mxu0 %v1015
        %v3090 = vpop.f32.mrf.mxu0
        %v3091 = vadd.f32 %v2922, %v3090
        %v3092 = vpop.f32.mrf.mxu0
        %v3093 = vadd.f32 %v2924, %v3092
        %3094 = vmatmul.bf16.gmra.mxu0 %v1023
        %v3095 = vpop.f32.mrf.mxu0
        %v3096 = vadd.f32 %v2927, %v3095
        %v3097 = vpop.f32.mrf.mxu0
        %v3098 = vadd.f32 %v2929, %v3097
        %3099 = vmatmul.bf16.gmra.mxu0 %v1031
        %v3100 = vpop.f32.mrf.mxu0
        %v3101 = vadd.f32 %v2932, %v3100
        %v3102 = vpop.f32.mrf.mxu0
        %v3103 = vadd.f32 %v2934, %v3102
        %3104 = vmatmul.bf16.gmra.mxu0 %v1039
        %v3105 = vpop.f32.mrf.mxu0
        %v3106 = vadd.f32 %v2937, %v3105
        %v3107 = vpop.f32.mrf.mxu0
        %v3108 = vadd.f32 %v2939, %v3107
        %3109 = vmatmul.bf16.gmra.mxu0 %v1047
        %v3110 = vpop.f32.mrf.mxu0
        %v3111 = vadd.f32 %v2942, %v3110
        %v3112 = vpop.f32.mrf.mxu0
        %v3113 = vadd.f32 %v2944, %v3112
        %3114 = vmatmul.bf16.gmra.mxu0 %v1055
        %v3115 = vpop.f32.mrf.mxu0
        %v3116 = vadd.f32 %v2947, %v3115
        %v3117 = vpop.f32.mrf.mxu0
        %v3118 = vadd.f32 %v2949, %v3117
        %3119 = vmatmul.bf16.gmra.mxu0 %v1063
        %v3120 = vpop.f32.mrf.mxu0
        %v3121 = vadd.f32 %v2952, %v3120
        %v3122 = vpop.f32.mrf.mxu0
        %v3123 = vadd.f32 %v2954, %v3122
        %3124 = vmatmul.bf16.gmra.mxu0 %v1071
        %v3125 = vpop.f32.mrf.mxu0
        %v3126 = vadd.f32 %v2957, %v3125
        %v3127 = vpop.f32.mrf.mxu0
        %v3128 = vadd.f32 %v2959, %v3127
        %3129 = vdwg.mxu0
        %3130 = vmatpush.bf16.msra.mxu0 %v2235
        %3131 = vmatpush.bf16.msra.mxu0 %v2231
        %3132 = vmatpush.bf16.msra.mxu0 %v2227
        %3133 = vmatpush.bf16.msra.mxu0 %v2223
        %3134 = vmatpush.bf16.msra.mxu0 %v2219
        %3135 = vmatpush.bf16.msra.mxu0 %v2215
        %3136 = vmatpush.bf16.msra.mxu0 %v2211
        %3137 = vmatpush.bf16.msra.mxu0 %v2207
        %3138 = vmatmul.bf16.gmra.mxu0 %v824
        %v3139 = vpop.f32.mrf.mxu0
        %v3140 = vadd.f32 %v2971, %v3139
        %v3141 = vpop.f32.mrf.mxu0
        %v3142 = vadd.f32 %v2973, %v3141
        %3143 = vmatmul.bf16.gmra.mxu0 %v832
        %v3144 = vpop.f32.mrf.mxu0
        %v3145 = vadd.f32 %v2976, %v3144
        %v3146 = vpop.f32.mrf.mxu0
        %v3147 = vadd.f32 %v2978, %v3146
        %3148 = vmatmul.bf16.gmra.mxu0 %v840
        %v3149 = vpop.f32.mrf.mxu0
        %v3150 = vadd.f32 %v2981, %v3149
        %v3151 = vpop.f32.mrf.mxu0
        %v3152 = vadd.f32 %v2983, %v3151
        %3153 = vmatmul.bf16.gmra.mxu0 %v848
        %v3154 = vpop.f32.mrf.mxu0
        %v3155 = vadd.f32 %v2986, %v3154
        %v3156 = vpop.f32.mrf.mxu0
        %v3157 = vadd.f32 %v2988, %v3156
        %3158 = vmatmul.bf16.gmra.mxu0 %v856
        %v3159 = vpop.f32.mrf.mxu0
        %v3160 = vadd.f32 %v2991, %v3159
        %v3161 = vpop.f32.mrf.mxu0
        %v3162 = vadd.f32 %v2993, %v3161
        %3163 = vmatmul.bf16.gmra.mxu0 %v864
        %v3164 = vpop.f32.mrf.mxu0
        %v3165 = vadd.f32 %v2996, %v3164
        %v3166 = vpop.f32.mrf.mxu0
        %v3167 = vadd.f32 %v2998, %v3166
        %3168 = vmatmul.bf16.gmra.mxu0 %v872
        %v3169 = vpop.f32.mrf.mxu0
        %v3170 = vadd.f32 %v3001, %v3169
        %v3171 = vpop.f32.mrf.mxu0
        %v3172 = vadd.f32 %v3003, %v3171
        %3173 = vmatmul.bf16.gmra.mxu0 %v880
        %v3174 = vpop.f32.mrf.mxu0
        %v3175 = vadd.f32 %v3006, %v3174
        %v3176 = vpop.f32.mrf.mxu0
        %v3177 = vadd.f32 %v3008, %v3176
        %3178 = vmatmul.bf16.gmra.mxu0 %v888
        %v3179 = vpop.f32.mrf.mxu0
        %v3180 = vadd.f32 %v3011, %v3179
        %v3181 = vpop.f32.mrf.mxu0
        %v3182 = vadd.f32 %v3013, %v3181
        %3183 = vmatmul.bf16.gmra.mxu0 %v896
        %v3184 = vpop.f32.mrf.mxu0
        %v3185 = vadd.f32 %v3016, %v3184
        %v3186 = vpop.f32.mrf.mxu0
        %v3187 = vadd.f32 %v3018, %v3186
        %3188 = vmatmul.bf16.gmra.mxu0 %v904
        %v3189 = vpop.f32.mrf.mxu0
        %v3190 = vadd.f32 %v3021, %v3189
        %v3191 = vpop.f32.mrf.mxu0
        %v3192 = vadd.f32 %v3023, %v3191
        %3193 = vmatmul.bf16.gmra.mxu0 %v912
        %v3194 = vpop.f32.mrf.mxu0
        %v3195 = vadd.f32 %v3026, %v3194
        %v3196 = vpop.f32.mrf.mxu0
        %v3197 = vadd.f32 %v3028, %v3196
        %3198 = vmatmul.bf16.gmra.mxu0 %v920
        %v3199 = vpop.f32.mrf.mxu0
        %v3200 = vadd.f32 %v3031, %v3199
        %v3201 = vpop.f32.mrf.mxu0
        %v3202 = vadd.f32 %v3033, %v3201
        %3203 = vmatmul.bf16.gmra.mxu0 %v928
        %v3204 = vpop.f32.mrf.mxu0
        %v3205 = vadd.f32 %v3036, %v3204
        %v3206 = vpop.f32.mrf.mxu0
        %v3207 = vadd.f32 %v3038, %v3206
        %3208 = vmatmul.bf16.gmra.mxu0 %v936
        %v3209 = vpop.f32.mrf.mxu0
        %v3210 = vadd.f32 %v3041, %v3209
        %v3211 = vpop.f32.mrf.mxu0
        %v3212 = vadd.f32 %v3043, %v3211
        %3213 = vmatmul.bf16.gmra.mxu0 %v944
        %v3214 = vpop.f32.mrf.mxu0
        %v3215 = vadd.f32 %v3046, %v3214
        %v3216 = vpop.f32.mrf.mxu0
        %v3217 = vadd.f32 %v3048, %v3216
        %3218 = vmatmul.bf16.gmra.mxu0 %v952
        %v3219 = vpop.f32.mrf.mxu0
        %v3220 = vadd.f32 %v3051, %v3219
        %v3221 = vpop.f32.mrf.mxu0
        %v3222 = vadd.f32 %v3053, %v3221
        %3223 = vmatmul.bf16.gmra.mxu0 %v960
        %v3224 = vpop.f32.mrf.mxu0
        %v3225 = vadd.f32 %v3056, %v3224
        %v3226 = vpop.f32.mrf.mxu0
        %v3227 = vadd.f32 %v3058, %v3226
        %3228 = vmatmul.bf16.gmra.mxu0 %v968
        %v3229 = vpop.f32.mrf.mxu0
        %v3230 = vadd.f32 %v3061, %v3229
        %v3231 = vpop.f32.mrf.mxu0
        %v3232 = vadd.f32 %v3063, %v3231
        %3233 = vmatmul.bf16.gmra.mxu0 %v976
        %v3234 = vpop.f32.mrf.mxu0
        %v3235 = vadd.f32 %v3066, %v3234
        %v3236 = vpop.f32.mrf.mxu0
        %v3237 = vadd.f32 %v3068, %v3236
        %3238 = vmatmul.bf16.gmra.mxu0 %v984
        %v3239 = vpop.f32.mrf.mxu0
        %v3240 = vadd.f32 %v3071, %v3239
        %v3241 = vpop.f32.mrf.mxu0
        %v3242 = vadd.f32 %v3073, %v3241
        %3243 = vmatmul.bf16.gmra.mxu0 %v992
        %v3244 = vpop.f32.mrf.mxu0
        %v3245 = vadd.f32 %v3076, %v3244
        %v3246 = vpop.f32.mrf.mxu0
        %v3247 = vadd.f32 %v3078, %v3246
        %3248 = vmatmul.bf16.gmra.mxu0 %v1000
        %v3249 = vpop.f32.mrf.mxu0
        %v3250 = vadd.f32 %v3081, %v3249
        %v3251 = vpop.f32.mrf.mxu0
        %v3252 = vadd.f32 %v3083, %v3251
        %3253 = vmatmul.bf16.gmra.mxu0 %v1008
        %v3254 = vpop.f32.mrf.mxu0
        %v3255 = vadd.f32 %v3086, %v3254
        %v3256 = vpop.f32.mrf.mxu0
        %v3257 = vadd.f32 %v3088, %v3256
        %3258 = vmatmul.bf16.gmra.mxu0 %v1016
        %v3259 = vpop.f32.mrf.mxu0
        %v3260 = vadd.f32 %v3091, %v3259
        %v3261 = vpop.f32.mrf.mxu0
        %v3262 = vadd.f32 %v3093, %v3261
        %3263 = vmatmul.bf16.gmra.mxu0 %v1024
        %v3264 = vpop.f32.mrf.mxu0
        %v3265 = vadd.f32 %v3096, %v3264
        %v3266 = vpop.f32.mrf.mxu0
        %v3267 = vadd.f32 %v3098, %v3266
        %3268 = vmatmul.bf16.gmra.mxu0 %v1032
        %v3269 = vpop.f32.mrf.mxu0
        %v3270 = vadd.f32 %v3101, %v3269
        %v3271 = vpop.f32.mrf.mxu0
        %v3272 = vadd.f32 %v3103, %v3271
        %3273 = vmatmul.bf16.gmra.mxu0 %v1040
        %v3274 = vpop.f32.mrf.mxu0
        %v3275 = vadd.f32 %v3106, %v3274
        %v3276 = vpop.f32.mrf.mxu0
        %v3277 = vadd.f32 %v3108, %v3276
        %3278 = vmatmul.bf16.gmra.mxu0 %v1048
        %v3279 = vpop.f32.mrf.mxu0
        %v3280 = vadd.f32 %v3111, %v3279
        %v3281 = vpop.f32.mrf.mxu0
        %v3282 = vadd.f32 %v3113, %v3281
        %3283 = vmatmul.bf16.gmra.mxu0 %v1056
        %v3284 = vpop.f32.mrf.mxu0
        %v3285 = vadd.f32 %v3116, %v3284
        %v3286 = vpop.f32.mrf.mxu0
        %v3287 = vadd.f32 %v3118, %v3286
        %3288 = vmatmul.bf16.gmra.mxu0 %v1064
        %v3289 = vpop.f32.mrf.mxu0
        %v3290 = vadd.f32 %v3121, %v3289
        %v3291 = vpop.f32.mrf.mxu0
        %v3292 = vadd.f32 %v3123, %v3291
        %3293 = vmatmul.bf16.gmra.mxu0 %v1072
        %v3294 = vpop.f32.mrf.mxu0
        %v3295 = vadd.f32 %v3126, %v3294
        %v3296 = vpop.f32.mrf.mxu0
        %v3297 = vadd.f32 %v3128, %v3296
        %3298 = vdwg.mxu0
        %3299 = vmatpush.bf16.msra.mxu0 %v2267
        %3300 = vmatpush.bf16.msra.mxu0 %v2263
        %3301 = vmatpush.bf16.msra.mxu0 %v2259
        %3302 = vmatpush.bf16.msra.mxu0 %v2255
        %3303 = vmatpush.bf16.msra.mxu0 %v2251
        %3304 = vmatpush.bf16.msra.mxu0 %v2247
        %3305 = vmatpush.bf16.msra.mxu0 %v2243
        %3306 = vmatpush.bf16.msra.mxu0 %v2239
        %3307 = vmatmul.bf16.gmra.mxu0 %v825
        %v3308 = vpop.f32.mrf.mxu0
        %v3309 = vadd.f32 %v3140, %v3308
        %v3310 = vpop.f32.mrf.mxu0
        %v3311 = vadd.f32 %v3142, %v3310
        %3312 = vmatmul.bf16.gmra.mxu0 %v833
        %v3313 = vpop.f32.mrf.mxu0
        %v3314 = vadd.f32 %v3145, %v3313
        %v3315 = vpop.f32.mrf.mxu0
        %v3316 = vadd.f32 %v3147, %v3315
        %3317 = vmatmul.bf16.gmra.mxu0 %v841
        %v3318 = vpop.f32.mrf.mxu0
        %v3319 = vadd.f32 %v3150, %v3318
        %v3320 = vpop.f32.mrf.mxu0
        %v3321 = vadd.f32 %v3152, %v3320
        %3322 = vmatmul.bf16.gmra.mxu0 %v849
        %v3323 = vpop.f32.mrf.mxu0
        %v3324 = vadd.f32 %v3155, %v3323
        %v3325 = vpop.f32.mrf.mxu0
        %v3326 = vadd.f32 %v3157, %v3325
        %3327 = vmatmul.bf16.gmra.mxu0 %v857
        %v3328 = vpop.f32.mrf.mxu0
        %v3329 = vadd.f32 %v3160, %v3328
        %v3330 = vpop.f32.mrf.mxu0
        %v3331 = vadd.f32 %v3162, %v3330
        %3332 = vmatmul.bf16.gmra.mxu0 %v865
        %v3333 = vpop.f32.mrf.mxu0
        %v3334 = vadd.f32 %v3165, %v3333
        %v3335 = vpop.f32.mrf.mxu0
        %v3336 = vadd.f32 %v3167, %v3335
        %3337 = vmatmul.bf16.gmra.mxu0 %v873
        %v3338 = vpop.f32.mrf.mxu0
        %v3339 = vadd.f32 %v3170, %v3338
        %v3340 = vpop.f32.mrf.mxu0
        %v3341 = vadd.f32 %v3172, %v3340
        %3342 = vmatmul.bf16.gmra.mxu0 %v881
        %v3343 = vpop.f32.mrf.mxu0
        %v3344 = vadd.f32 %v3175, %v3343
        %v3345 = vpop.f32.mrf.mxu0
        %v3346 = vadd.f32 %v3177, %v3345
        %3347 = vmatmul.bf16.gmra.mxu0 %v889
        %v3348 = vpop.f32.mrf.mxu0
        %v3349 = vadd.f32 %v3180, %v3348
        %v3350 = vpop.f32.mrf.mxu0
        %v3351 = vadd.f32 %v3182, %v3350
        %3352 = vmatmul.bf16.gmra.mxu0 %v897
        %v3353 = vpop.f32.mrf.mxu0
        %v3354 = vadd.f32 %v3185, %v3353
        %v3355 = vpop.f32.mrf.mxu0
        %v3356 = vadd.f32 %v3187, %v3355
        %3357 = vmatmul.bf16.gmra.mxu0 %v905
        %v3358 = vpop.f32.mrf.mxu0
        %v3359 = vadd.f32 %v3190, %v3358
        %v3360 = vpop.f32.mrf.mxu0
        %v3361 = vadd.f32 %v3192, %v3360
        %3362 = vmatmul.bf16.gmra.mxu0 %v913
        %v3363 = vpop.f32.mrf.mxu0
        %v3364 = vadd.f32 %v3195, %v3363
        %v3365 = vpop.f32.mrf.mxu0
        %v3366 = vadd.f32 %v3197, %v3365
        %3367 = vmatmul.bf16.gmra.mxu0 %v921
        %v3368 = vpop.f32.mrf.mxu0
        %v3369 = vadd.f32 %v3200, %v3368
        %v3370 = vpop.f32.mrf.mxu0
        %v3371 = vadd.f32 %v3202, %v3370
        %3372 = vmatmul.bf16.gmra.mxu0 %v929
        %v3373 = vpop.f32.mrf.mxu0
        %v3374 = vadd.f32 %v3205, %v3373
        %v3375 = vpop.f32.mrf.mxu0
        %v3376 = vadd.f32 %v3207, %v3375
        %3377 = vmatmul.bf16.gmra.mxu0 %v937
        %v3378 = vpop.f32.mrf.mxu0
        %v3379 = vadd.f32 %v3210, %v3378
        %v3380 = vpop.f32.mrf.mxu0
        %v3381 = vadd.f32 %v3212, %v3380
        %3382 = vmatmul.bf16.gmra.mxu0 %v945
        %v3383 = vpop.f32.mrf.mxu0
        %v3384 = vadd.f32 %v3215, %v3383
        %v3385 = vpop.f32.mrf.mxu0
        %v3386 = vadd.f32 %v3217, %v3385
        %3387 = vmatmul.bf16.gmra.mxu0 %v953
        %v3388 = vpop.f32.mrf.mxu0
        %v3389 = vadd.f32 %v3220, %v3388
        %v3390 = vpop.f32.mrf.mxu0
        %v3391 = vadd.f32 %v3222, %v3390
        %3392 = vmatmul.bf16.gmra.mxu0 %v961
        %v3393 = vpop.f32.mrf.mxu0
        %v3394 = vadd.f32 %v3225, %v3393
        %v3395 = vpop.f32.mrf.mxu0
        %v3396 = vadd.f32 %v3227, %v3395
        %3397 = vmatmul.bf16.gmra.mxu0 %v969
        %v3398 = vpop.f32.mrf.mxu0
        %v3399 = vadd.f32 %v3230, %v3398
        %v3400 = vpop.f32.mrf.mxu0
        %v3401 = vadd.f32 %v3232, %v3400
        %3402 = vmatmul.bf16.gmra.mxu0 %v977
        %v3403 = vpop.f32.mrf.mxu0
        %v3404 = vadd.f32 %v3235, %v3403
        %v3405 = vpop.f32.mrf.mxu0
        %v3406 = vadd.f32 %v3237, %v3405
        %3407 = vmatmul.bf16.gmra.mxu0 %v985
        %v3408 = vpop.f32.mrf.mxu0
        %v3409 = vadd.f32 %v3240, %v3408
        %v3410 = vpop.f32.mrf.mxu0
        %v3411 = vadd.f32 %v3242, %v3410
        %3412 = vmatmul.bf16.gmra.mxu0 %v993
        %v3413 = vpop.f32.mrf.mxu0
        %v3414 = vadd.f32 %v3245, %v3413
        %v3415 = vpop.f32.mrf.mxu0
        %v3416 = vadd.f32 %v3247, %v3415
        %3417 = vmatmul.bf16.gmra.mxu0 %v1001
        %v3418 = vpop.f32.mrf.mxu0
        %v3419 = vadd.f32 %v3250, %v3418
        %v3420 = vpop.f32.mrf.mxu0
        %v3421 = vadd.f32 %v3252, %v3420
        %3422 = vmatmul.bf16.gmra.mxu0 %v1009
        %v3423 = vpop.f32.mrf.mxu0
        %v3424 = vadd.f32 %v3255, %v3423
        %v3425 = vpop.f32.mrf.mxu0
        %v3426 = vadd.f32 %v3257, %v3425
        %3427 = vmatmul.bf16.gmra.mxu0 %v1017
        %v3428 = vpop.f32.mrf.mxu0
        %v3429 = vadd.f32 %v3260, %v3428
        %v3430 = vpop.f32.mrf.mxu0
        %v3431 = vadd.f32 %v3262, %v3430
        %3432 = vmatmul.bf16.gmra.mxu0 %v1025
        %v3433 = vpop.f32.mrf.mxu0
        %v3434 = vadd.f32 %v3265, %v3433
        %v3435 = vpop.f32.mrf.mxu0
        %v3436 = vadd.f32 %v3267, %v3435
        %3437 = vmatmul.bf16.gmra.mxu0 %v1033
        %v3438 = vpop.f32.mrf.mxu0
        %v3439 = vadd.f32 %v3270, %v3438
        %v3440 = vpop.f32.mrf.mxu0
        %v3441 = vadd.f32 %v3272, %v3440
        %3442 = vmatmul.bf16.gmra.mxu0 %v1041
        %v3443 = vpop.f32.mrf.mxu0
        %v3444 = vadd.f32 %v3275, %v3443
        %v3445 = vpop.f32.mrf.mxu0
        %v3446 = vadd.f32 %v3277, %v3445
        %3447 = vmatmul.bf16.gmra.mxu0 %v1049
        %v3448 = vpop.f32.mrf.mxu0
        %v3449 = vadd.f32 %v3280, %v3448
        %v3450 = vpop.f32.mrf.mxu0
        %v3451 = vadd.f32 %v3282, %v3450
        %3452 = vmatmul.bf16.gmra.mxu0 %v1057
        %v3453 = vpop.f32.mrf.mxu0
        %v3454 = vadd.f32 %v3285, %v3453
        %v3455 = vpop.f32.mrf.mxu0
        %v3456 = vadd.f32 %v3287, %v3455
        %3457 = vmatmul.bf16.gmra.mxu0 %v1065
        %v3458 = vpop.f32.mrf.mxu0
        %v3459 = vadd.f32 %v3290, %v3458
        %v3460 = vpop.f32.mrf.mxu0
        %v3461 = vadd.f32 %v3292, %v3460
        %3462 = vmatmul.bf16.gmra.mxu0 %v1073
        %v3463 = vpop.f32.mrf.mxu0
        %v3464 = vadd.f32 %v3295, %v3463
        %v3465 = vpop.f32.mrf.mxu0
        %v3466 = vadd.f32 %v3297, %v3465
        %3467 = vdwg.mxu0
        %3468 = vmatpush.bf16.msra.mxu0 %v2299
        %3469 = vmatpush.bf16.msra.mxu0 %v2295
        %3470 = vmatpush.bf16.msra.mxu0 %v2291
        %3471 = vmatpush.bf16.msra.mxu0 %v2287
        %3472 = vmatpush.bf16.msra.mxu0 %v2283
        %3473 = vmatpush.bf16.msra.mxu0 %v2279
        %3474 = vmatpush.bf16.msra.mxu0 %v2275
        %3475 = vmatpush.bf16.msra.mxu0 %v2271
        %3476 = vmatmul.bf16.gmra.mxu0 %v826
        %v3477 = vpop.f32.mrf.mxu0
        %v3478 = vadd.f32 %v3309, %v3477
        %v3479 = vpop.f32.mrf.mxu0
        %v3480 = vadd.f32 %v3311, %v3479
        %3481 = vmatmul.bf16.gmra.mxu0 %v834
        %v3482 = vpop.f32.mrf.mxu0
        %v3483 = vadd.f32 %v3314, %v3482
        %v3484 = vpop.f32.mrf.mxu0
        %v3485 = vadd.f32 %v3316, %v3484
        %3486 = vmatmul.bf16.gmra.mxu0 %v842
        %v3487 = vpop.f32.mrf.mxu0
        %v3488 = vadd.f32 %v3319, %v3487
        %v3489 = vpop.f32.mrf.mxu0
        %v3490 = vadd.f32 %v3321, %v3489
        %3491 = vmatmul.bf16.gmra.mxu0 %v850
        %v3492 = vpop.f32.mrf.mxu0
        %v3493 = vadd.f32 %v3324, %v3492
        %v3494 = vpop.f32.mrf.mxu0
        %v3495 = vadd.f32 %v3326, %v3494
        %3496 = vmatmul.bf16.gmra.mxu0 %v858
        %v3497 = vpop.f32.mrf.mxu0
        %v3498 = vadd.f32 %v3329, %v3497
        %v3499 = vpop.f32.mrf.mxu0
        %v3500 = vadd.f32 %v3331, %v3499
        %3501 = vmatmul.bf16.gmra.mxu0 %v866
        %v3502 = vpop.f32.mrf.mxu0
        %v3503 = vadd.f32 %v3334, %v3502
        %v3504 = vpop.f32.mrf.mxu0
        %v3505 = vadd.f32 %v3336, %v3504
        %3506 = vmatmul.bf16.gmra.mxu0 %v874
        %v3507 = vpop.f32.mrf.mxu0
        %v3508 = vadd.f32 %v3339, %v3507
        %v3509 = vpop.f32.mrf.mxu0
        %v3510 = vadd.f32 %v3341, %v3509
        %3511 = vmatmul.bf16.gmra.mxu0 %v882
        %v3512 = vpop.f32.mrf.mxu0
        %v3513 = vadd.f32 %v3344, %v3512
        %v3514 = vpop.f32.mrf.mxu0
        %v3515 = vadd.f32 %v3346, %v3514
        %3516 = vmatmul.bf16.gmra.mxu0 %v890
        %v3517 = vpop.f32.mrf.mxu0
        %v3518 = vadd.f32 %v3349, %v3517
        %v3519 = vpop.f32.mrf.mxu0
        %v3520 = vadd.f32 %v3351, %v3519
        %3521 = vmatmul.bf16.gmra.mxu0 %v898
        %v3522 = vpop.f32.mrf.mxu0
        %v3523 = vadd.f32 %v3354, %v3522
        %v3524 = vpop.f32.mrf.mxu0
        %v3525 = vadd.f32 %v3356, %v3524
        %3526 = vmatmul.bf16.gmra.mxu0 %v906
        %v3527 = vpop.f32.mrf.mxu0
        %v3528 = vadd.f32 %v3359, %v3527
        %v3529 = vpop.f32.mrf.mxu0
        %v3530 = vadd.f32 %v3361, %v3529
        %3531 = vmatmul.bf16.gmra.mxu0 %v914
        %v3532 = vpop.f32.mrf.mxu0
        %v3533 = vadd.f32 %v3364, %v3532
        %v3534 = vpop.f32.mrf.mxu0
        %v3535 = vadd.f32 %v3366, %v3534
        %3536 = vmatmul.bf16.gmra.mxu0 %v922
        %v3537 = vpop.f32.mrf.mxu0
        %v3538 = vadd.f32 %v3369, %v3537
        %v3539 = vpop.f32.mrf.mxu0
        %v3540 = vadd.f32 %v3371, %v3539
        %3541 = vmatmul.bf16.gmra.mxu0 %v930
        %v3542 = vpop.f32.mrf.mxu0
        %v3543 = vadd.f32 %v3374, %v3542
        %v3544 = vpop.f32.mrf.mxu0
        %v3545 = vadd.f32 %v3376, %v3544
        %3546 = vmatmul.bf16.gmra.mxu0 %v938
        %v3547 = vpop.f32.mrf.mxu0
        %v3548 = vadd.f32 %v3379, %v3547
        %v3549 = vpop.f32.mrf.mxu0
        %v3550 = vadd.f32 %v3381, %v3549
        %3551 = vmatmul.bf16.gmra.mxu0 %v946
        %v3552 = vpop.f32.mrf.mxu0
        %v3553 = vadd.f32 %v3384, %v3552
        %v3554 = vpop.f32.mrf.mxu0
        %v3555 = vadd.f32 %v3386, %v3554
        %3556 = vmatmul.bf16.gmra.mxu0 %v954
        %v3557 = vpop.f32.mrf.mxu0
        %v3558 = vadd.f32 %v3389, %v3557
        %v3559 = vpop.f32.mrf.mxu0
        %v3560 = vadd.f32 %v3391, %v3559
        %3561 = vmatmul.bf16.gmra.mxu0 %v962
        %v3562 = vpop.f32.mrf.mxu0
        %v3563 = vadd.f32 %v3394, %v3562
        %v3564 = vpop.f32.mrf.mxu0
        %v3565 = vadd.f32 %v3396, %v3564
        %3566 = vmatmul.bf16.gmra.mxu0 %v970
        %v3567 = vpop.f32.mrf.mxu0
        %v3568 = vadd.f32 %v3399, %v3567
        %v3569 = vpop.f32.mrf.mxu0
        %v3570 = vadd.f32 %v3401, %v3569
        %3571 = vmatmul.bf16.gmra.mxu0 %v978
        %v3572 = vpop.f32.mrf.mxu0
        %v3573 = vadd.f32 %v3404, %v3572
        %v3574 = vpop.f32.mrf.mxu0
        %v3575 = vadd.f32 %v3406, %v3574
        %3576 = vmatmul.bf16.gmra.mxu0 %v986
        %v3577 = vpop.f32.mrf.mxu0
        %v3578 = vadd.f32 %v3409, %v3577
        %v3579 = vpop.f32.mrf.mxu0
        %v3580 = vadd.f32 %v3411, %v3579
        %3581 = vmatmul.bf16.gmra.mxu0 %v994
        %v3582 = vpop.f32.mrf.mxu0
        %v3583 = vadd.f32 %v3414, %v3582
        %v3584 = vpop.f32.mrf.mxu0
        %v3585 = vadd.f32 %v3416, %v3584
        %3586 = vmatmul.bf16.gmra.mxu0 %v1002
        %v3587 = vpop.f32.mrf.mxu0
        %v3588 = vadd.f32 %v3419, %v3587
        %v3589 = vpop.f32.mrf.mxu0
        %v3590 = vadd.f32 %v3421, %v3589
        %3591 = vmatmul.bf16.gmra.mxu0 %v1010
        %v3592 = vpop.f32.mrf.mxu0
        %v3593 = vadd.f32 %v3424, %v3592
        %v3594 = vpop.f32.mrf.mxu0
        %v3595 = vadd.f32 %v3426, %v3594
        %3596 = vmatmul.bf16.gmra.mxu0 %v1018
        %v3597 = vpop.f32.mrf.mxu0
        %v3598 = vadd.f32 %v3429, %v3597
        %v3599 = vpop.f32.mrf.mxu0
        %v3600 = vadd.f32 %v3431, %v3599
        %3601 = vmatmul.bf16.gmra.mxu0 %v1026
        %v3602 = vpop.f32.mrf.mxu0
        %v3603 = vadd.f32 %v3434, %v3602
        %v3604 = vpop.f32.mrf.mxu0
        %v3605 = vadd.f32 %v3436, %v3604
        %3606 = vmatmul.bf16.gmra.mxu0 %v1034
        %v3607 = vpop.f32.mrf.mxu0
        %v3608 = vadd.f32 %v3439, %v3607
        %v3609 = vpop.f32.mrf.mxu0
        %v3610 = vadd.f32 %v3441, %v3609
        %3611 = vmatmul.bf16.gmra.mxu0 %v1042
        %v3612 = vpop.f32.mrf.mxu0
        %v3613 = vadd.f32 %v3444, %v3612
        %v3614 = vpop.f32.mrf.mxu0
        %v3615 = vadd.f32 %v3446, %v3614
        %3616 = vmatmul.bf16.gmra.mxu0 %v1050
        %v3617 = vpop.f32.mrf.mxu0
        %v3618 = vadd.f32 %v3449, %v3617
        %v3619 = vpop.f32.mrf.mxu0
        %v3620 = vadd.f32 %v3451, %v3619
        %3621 = vmatmul.bf16.gmra.mxu0 %v1058
        %v3622 = vpop.f32.mrf.mxu0
        %v3623 = vadd.f32 %v3454, %v3622
        %v3624 = vpop.f32.mrf.mxu0
        %v3625 = vadd.f32 %v3456, %v3624
        %3626 = vmatmul.bf16.gmra.mxu0 %v1066
        %v3627 = vpop.f32.mrf.mxu0
        %v3628 = vadd.f32 %v3459, %v3627
        %v3629 = vpop.f32.mrf.mxu0
        %v3630 = vadd.f32 %v3461, %v3629
        %3631 = vmatmul.bf16.gmra.mxu0 %v1074
        %v3632 = vpop.f32.mrf.mxu0
        %v3633 = vadd.f32 %v3464, %v3632
        %v3634 = vpop.f32.mrf.mxu0
        %v3635 = vadd.f32 %v3466, %v3634
        %3636 = vdwg.mxu0
        %3637 = vmatpush.bf16.msra.mxu0 %v2331
        %3638 = vmatpush.bf16.msra.mxu0 %v2327
        %3639 = vmatpush.bf16.msra.mxu0 %v2323
        %3640 = vmatpush.bf16.msra.mxu0 %v2319
        %3641 = vmatpush.bf16.msra.mxu0 %v2315
        %3642 = vmatpush.bf16.msra.mxu0 %v2311
        %3643 = vmatpush.bf16.msra.mxu0 %v2307
        %3644 = vmatpush.bf16.msra.mxu0 %v2303
        %3645 = vmatmul.bf16.gmra.mxu0 %v827
        %v3646 = vpop.f32.mrf.mxu0
        %v3647 = vadd.f32 %v3478, %v3646
        %v3648 = vpop.f32.mrf.mxu0
        %v3649 = vadd.f32 %v3480, %v3648
        %3650 = vmatmul.bf16.gmra.mxu0 %v835
        %v3651 = vpop.f32.mrf.mxu0
        %v3652 = vadd.f32 %v3483, %v3651
        %v3653 = vpop.f32.mrf.mxu0
        %v3654 = vadd.f32 %v3485, %v3653
        %3655 = vmatmul.bf16.gmra.mxu0 %v843
        %v3656 = vpop.f32.mrf.mxu0
        %v3657 = vadd.f32 %v3488, %v3656
        %v3658 = vpop.f32.mrf.mxu0
        %v3659 = vadd.f32 %v3490, %v3658
        %3660 = vmatmul.bf16.gmra.mxu0 %v851
        %v3661 = vpop.f32.mrf.mxu0
        %v3662 = vadd.f32 %v3493, %v3661
        %v3663 = vpop.f32.mrf.mxu0
        %v3664 = vadd.f32 %v3495, %v3663
        %3665 = vmatmul.bf16.gmra.mxu0 %v859
        %v3666 = vpop.f32.mrf.mxu0
        %v3667 = vadd.f32 %v3498, %v3666
        %v3668 = vpop.f32.mrf.mxu0
        %v3669 = vadd.f32 %v3500, %v3668
        %3670 = vmatmul.bf16.gmra.mxu0 %v867
        %v3671 = vpop.f32.mrf.mxu0
        %v3672 = vadd.f32 %v3503, %v3671
        %v3673 = vpop.f32.mrf.mxu0
        %v3674 = vadd.f32 %v3505, %v3673
        %3675 = vmatmul.bf16.gmra.mxu0 %v875
        %v3676 = vpop.f32.mrf.mxu0
        %v3677 = vadd.f32 %v3508, %v3676
        %v3678 = vpop.f32.mrf.mxu0
        %v3679 = vadd.f32 %v3510, %v3678
        %3680 = vmatmul.bf16.gmra.mxu0 %v883
        %v3681 = vpop.f32.mrf.mxu0
        %v3682 = vadd.f32 %v3513, %v3681
        %v3683 = vpop.f32.mrf.mxu0
        %v3684 = vadd.f32 %v3515, %v3683
        %3685 = vmatmul.bf16.gmra.mxu0 %v891
        %v3686 = vpop.f32.mrf.mxu0
        %v3687 = vadd.f32 %v3518, %v3686
        %v3688 = vpop.f32.mrf.mxu0
        %v3689 = vadd.f32 %v3520, %v3688
        %3690 = vmatmul.bf16.gmra.mxu0 %v899
        %v3691 = vpop.f32.mrf.mxu0
        %v3692 = vadd.f32 %v3523, %v3691
        %v3693 = vpop.f32.mrf.mxu0
        %v3694 = vadd.f32 %v3525, %v3693
        %3695 = vmatmul.bf16.gmra.mxu0 %v907
        %v3696 = vpop.f32.mrf.mxu0
        %v3697 = vadd.f32 %v3528, %v3696
        %v3698 = vpop.f32.mrf.mxu0
        %v3699 = vadd.f32 %v3530, %v3698
        %3700 = vmatmul.bf16.gmra.mxu0 %v915
        %v3701 = vpop.f32.mrf.mxu0
        %v3702 = vadd.f32 %v3533, %v3701
        %v3703 = vpop.f32.mrf.mxu0
        %v3704 = vadd.f32 %v3535, %v3703
        %3705 = vmatmul.bf16.gmra.mxu0 %v923
        %v3706 = vpop.f32.mrf.mxu0
        %v3707 = vadd.f32 %v3538, %v3706
        %v3708 = vpop.f32.mrf.mxu0
        %v3709 = vadd.f32 %v3540, %v3708
        %3710 = vmatmul.bf16.gmra.mxu0 %v931
        %v3711 = vpop.f32.mrf.mxu0
        %v3712 = vadd.f32 %v3543, %v3711
        %v3713 = vpop.f32.mrf.mxu0
        %v3714 = vadd.f32 %v3545, %v3713
        %3715 = vmatmul.bf16.gmra.mxu0 %v939
        %v3716 = vpop.f32.mrf.mxu0
        %v3717 = vadd.f32 %v3548, %v3716
        %v3718 = vpop.f32.mrf.mxu0
        %v3719 = vadd.f32 %v3550, %v3718
        %3720 = vmatmul.bf16.gmra.mxu0 %v947
        %v3721 = vpop.f32.mrf.mxu0
        %v3722 = vadd.f32 %v3553, %v3721
        %v3723 = vpop.f32.mrf.mxu0
        %v3724 = vadd.f32 %v3555, %v3723
        %3725 = vmatmul.bf16.gmra.mxu0 %v955
        %v3726 = vpop.f32.mrf.mxu0
        %v3727 = vadd.f32 %v3558, %v3726
        %v3728 = vpop.f32.mrf.mxu0
        %v3729 = vadd.f32 %v3560, %v3728
        %3730 = vmatmul.bf16.gmra.mxu0 %v963
        %v3731 = vpop.f32.mrf.mxu0
        %v3732 = vadd.f32 %v3563, %v3731
        %v3733 = vpop.f32.mrf.mxu0
        %v3734 = vadd.f32 %v3565, %v3733
        %3735 = vmatmul.bf16.gmra.mxu0 %v971
        %v3736 = vpop.f32.mrf.mxu0
        %v3737 = vadd.f32 %v3568, %v3736
        %v3738 = vpop.f32.mrf.mxu0
        %v3739 = vadd.f32 %v3570, %v3738
        %3740 = vmatmul.bf16.gmra.mxu0 %v979
        %v3741 = vpop.f32.mrf.mxu0
        %v3742 = vadd.f32 %v3573, %v3741
        %v3743 = vpop.f32.mrf.mxu0
        %v3744 = vadd.f32 %v3575, %v3743
        %3745 = vmatmul.bf16.gmra.mxu0 %v987
        %v3746 = vpop.f32.mrf.mxu0
        %v3747 = vadd.f32 %v3578, %v3746
        %v3748 = vpop.f32.mrf.mxu0
        %v3749 = vadd.f32 %v3580, %v3748
        %3750 = vmatmul.bf16.gmra.mxu0 %v995
        %v3751 = vpop.f32.mrf.mxu0
        %v3752 = vadd.f32 %v3583, %v3751
        %v3753 = vpop.f32.mrf.mxu0
        %v3754 = vadd.f32 %v3585, %v3753
        %3755 = vmatmul.bf16.gmra.mxu0 %v1003
        %v3756 = vpop.f32.mrf.mxu0
        %v3757 = vadd.f32 %v3588, %v3756
        %v3758 = vpop.f32.mrf.mxu0
        %v3759 = vadd.f32 %v3590, %v3758
        %3760 = vmatmul.bf16.gmra.mxu0 %v1011
        %v3761 = vpop.f32.mrf.mxu0
        %v3762 = vadd.f32 %v3593, %v3761
        %v3763 = vpop.f32.mrf.mxu0
        %v3764 = vadd.f32 %v3595, %v3763
        %3765 = vmatmul.bf16.gmra.mxu0 %v1019
        %v3766 = vpop.f32.mrf.mxu0
        %v3767 = vadd.f32 %v3598, %v3766
        %v3768 = vpop.f32.mrf.mxu0
        %v3769 = vadd.f32 %v3600, %v3768
        %3770 = vmatmul.bf16.gmra.mxu0 %v1027
        %v3771 = vpop.f32.mrf.mxu0
        %v3772 = vadd.f32 %v3603, %v3771
        %v3773 = vpop.f32.mrf.mxu0
        %v3774 = vadd.f32 %v3605, %v3773
        %3775 = vmatmul.bf16.gmra.mxu0 %v1035
        %v3776 = vpop.f32.mrf.mxu0
        %v3777 = vadd.f32 %v3608, %v3776
        %v3778 = vpop.f32.mrf.mxu0
        %v3779 = vadd.f32 %v3610, %v3778
        %3780 = vmatmul.bf16.gmra.mxu0 %v1043
        %v3781 = vpop.f32.mrf.mxu0
        %v3782 = vadd.f32 %v3613, %v3781
        %v3783 = vpop.f32.mrf.mxu0
        %v3784 = vadd.f32 %v3615, %v3783
        %3785 = vmatmul.bf16.gmra.mxu0 %v1051
        %v3786 = vpop.f32.mrf.mxu0
        %v3787 = vadd.f32 %v3618, %v3786
        %v3788 = vpop.f32.mrf.mxu0
        %v3789 = vadd.f32 %v3620, %v3788
        %3790 = vmatmul.bf16.gmra.mxu0 %v1059
        %v3791 = vpop.f32.mrf.mxu0
        %v3792 = vadd.f32 %v3623, %v3791
        %v3793 = vpop.f32.mrf.mxu0
        %v3794 = vadd.f32 %v3625, %v3793
        %3795 = vmatmul.bf16.gmra.mxu0 %v1067
        %v3796 = vpop.f32.mrf.mxu0
        %v3797 = vadd.f32 %v3628, %v3796
        %v3798 = vpop.f32.mrf.mxu0
        %v3799 = vadd.f32 %v3630, %v3798
        %3800 = vmatmul.bf16.gmra.mxu0 %v1075
        %v3801 = vpop.f32.mrf.mxu0
        %v3802 = vadd.f32 %v3633, %v3801
        %v3803 = vpop.f32.mrf.mxu0
        %v3804 = vadd.f32 %v3635, %v3803
        %3805 = vdwg.mxu0
        %3806 = vmatpush.bf16.msra.mxu0 %v2363
        %3807 = vmatpush.bf16.msra.mxu0 %v2359
        %3808 = vmatpush.bf16.msra.mxu0 %v2355
        %3809 = vmatpush.bf16.msra.mxu0 %v2351
        %3810 = vmatpush.bf16.msra.mxu0 %v2347
        %3811 = vmatpush.bf16.msra.mxu0 %v2343
        %3812 = vmatpush.bf16.msra.mxu0 %v2339
        %3813 = vmatpush.bf16.msra.mxu0 %v2335
        %3814 = vmatmul.bf16.gmra.mxu0 %v828
        %v3815 = vpop.f32.mrf.mxu0
        %v3816 = vadd.f32 %v3647, %v3815
        %v3817 = vpop.f32.mrf.mxu0
        %v3818 = vadd.f32 %v3649, %v3817
        %3819 = vmatmul.bf16.gmra.mxu0 %v836
        %v3820 = vpop.f32.mrf.mxu0
        %v3821 = vadd.f32 %v3652, %v3820
        %v3822 = vpop.f32.mrf.mxu0
        %v3823 = vadd.f32 %v3654, %v3822
        %3824 = vmatmul.bf16.gmra.mxu0 %v844
        %v3825 = vpop.f32.mrf.mxu0
        %v3826 = vadd.f32 %v3657, %v3825
        %v3827 = vpop.f32.mrf.mxu0
        %v3828 = vadd.f32 %v3659, %v3827
        %3829 = vmatmul.bf16.gmra.mxu0 %v852
        %v3830 = vpop.f32.mrf.mxu0
        %v3831 = vadd.f32 %v3662, %v3830
        %v3832 = vpop.f32.mrf.mxu0
        %v3833 = vadd.f32 %v3664, %v3832
        %3834 = vmatmul.bf16.gmra.mxu0 %v860
        %v3835 = vpop.f32.mrf.mxu0
        %v3836 = vadd.f32 %v3667, %v3835
        %v3837 = vpop.f32.mrf.mxu0
        %v3838 = vadd.f32 %v3669, %v3837
        %3839 = vmatmul.bf16.gmra.mxu0 %v868
        %v3840 = vpop.f32.mrf.mxu0
        %v3841 = vadd.f32 %v3672, %v3840
        %v3842 = vpop.f32.mrf.mxu0
        %v3843 = vadd.f32 %v3674, %v3842
        %3844 = vmatmul.bf16.gmra.mxu0 %v876
        %v3845 = vpop.f32.mrf.mxu0
        %v3846 = vadd.f32 %v3677, %v3845
        %v3847 = vpop.f32.mrf.mxu0
        %v3848 = vadd.f32 %v3679, %v3847
        %3849 = vmatmul.bf16.gmra.mxu0 %v884
        %v3850 = vpop.f32.mrf.mxu0
        %v3851 = vadd.f32 %v3682, %v3850
        %v3852 = vpop.f32.mrf.mxu0
        %v3853 = vadd.f32 %v3684, %v3852
        %3854 = vmatmul.bf16.gmra.mxu0 %v892
        %v3855 = vpop.f32.mrf.mxu0
        %v3856 = vadd.f32 %v3687, %v3855
        %v3857 = vpop.f32.mrf.mxu0
        %v3858 = vadd.f32 %v3689, %v3857
        %3859 = vmatmul.bf16.gmra.mxu0 %v900
        %v3860 = vpop.f32.mrf.mxu0
        %v3861 = vadd.f32 %v3692, %v3860
        %v3862 = vpop.f32.mrf.mxu0
        %v3863 = vadd.f32 %v3694, %v3862
        %3864 = vmatmul.bf16.gmra.mxu0 %v908
        %v3865 = vpop.f32.mrf.mxu0
        %v3866 = vadd.f32 %v3697, %v3865
        %v3867 = vpop.f32.mrf.mxu0
        %v3868 = vadd.f32 %v3699, %v3867
        %3869 = vmatmul.bf16.gmra.mxu0 %v916
        %v3870 = vpop.f32.mrf.mxu0
        %v3871 = vadd.f32 %v3702, %v3870
        %v3872 = vpop.f32.mrf.mxu0
        %v3873 = vadd.f32 %v3704, %v3872
        %3874 = vmatmul.bf16.gmra.mxu0 %v924
        %v3875 = vpop.f32.mrf.mxu0
        %v3876 = vadd.f32 %v3707, %v3875
        %v3877 = vpop.f32.mrf.mxu0
        %v3878 = vadd.f32 %v3709, %v3877
        %3879 = vmatmul.bf16.gmra.mxu0 %v932
        %v3880 = vpop.f32.mrf.mxu0
        %v3881 = vadd.f32 %v3712, %v3880
        %v3882 = vpop.f32.mrf.mxu0
        %v3883 = vadd.f32 %v3714, %v3882
        %3884 = vmatmul.bf16.gmra.mxu0 %v940
        %v3885 = vpop.f32.mrf.mxu0
        %v3886 = vadd.f32 %v3717, %v3885
        %v3887 = vpop.f32.mrf.mxu0
        %v3888 = vadd.f32 %v3719, %v3887
        %3889 = vmatmul.bf16.gmra.mxu0 %v948
        %v3890 = vpop.f32.mrf.mxu0
        %v3891 = vadd.f32 %v3722, %v3890
        %v3892 = vpop.f32.mrf.mxu0
        %v3893 = vadd.f32 %v3724, %v3892
        %3894 = vmatmul.bf16.gmra.mxu0 %v956
        %v3895 = vpop.f32.mrf.mxu0
        %v3896 = vadd.f32 %v3727, %v3895
        %v3897 = vpop.f32.mrf.mxu0
        %v3898 = vadd.f32 %v3729, %v3897
        %3899 = vmatmul.bf16.gmra.mxu0 %v964
        %v3900 = vpop.f32.mrf.mxu0
        %v3901 = vadd.f32 %v3732, %v3900
        %v3902 = vpop.f32.mrf.mxu0
        %v3903 = vadd.f32 %v3734, %v3902
        %3904 = vmatmul.bf16.gmra.mxu0 %v972
        %v3905 = vpop.f32.mrf.mxu0
        %v3906 = vadd.f32 %v3737, %v3905
        %v3907 = vpop.f32.mrf.mxu0
        %v3908 = vadd.f32 %v3739, %v3907
        %3909 = vmatmul.bf16.gmra.mxu0 %v980
        %v3910 = vpop.f32.mrf.mxu0
        %v3911 = vadd.f32 %v3742, %v3910
        %v3912 = vpop.f32.mrf.mxu0
        %v3913 = vadd.f32 %v3744, %v3912
        %3914 = vmatmul.bf16.gmra.mxu0 %v988
        %v3915 = vpop.f32.mrf.mxu0
        %v3916 = vadd.f32 %v3747, %v3915
        %v3917 = vpop.f32.mrf.mxu0
        %v3918 = vadd.f32 %v3749, %v3917
        %3919 = vmatmul.bf16.gmra.mxu0 %v996
        %v3920 = vpop.f32.mrf.mxu0
        %v3921 = vadd.f32 %v3752, %v3920
        %v3922 = vpop.f32.mrf.mxu0
        %v3923 = vadd.f32 %v3754, %v3922
        %3924 = vmatmul.bf16.gmra.mxu0 %v1004
        %v3925 = vpop.f32.mrf.mxu0
        %v3926 = vadd.f32 %v3757, %v3925
        %v3927 = vpop.f32.mrf.mxu0
        %v3928 = vadd.f32 %v3759, %v3927
        %3929 = vmatmul.bf16.gmra.mxu0 %v1012
        %v3930 = vpop.f32.mrf.mxu0
        %v3931 = vadd.f32 %v3762, %v3930
        %v3932 = vpop.f32.mrf.mxu0
        %v3933 = vadd.f32 %v3764, %v3932
        %3934 = vmatmul.bf16.gmra.mxu0 %v1020
        %v3935 = vpop.f32.mrf.mxu0
        %v3936 = vadd.f32 %v3767, %v3935
        %v3937 = vpop.f32.mrf.mxu0
        %v3938 = vadd.f32 %v3769, %v3937
        %3939 = vmatmul.bf16.gmra.mxu0 %v1028
        %v3940 = vpop.f32.mrf.mxu0
        %v3941 = vadd.f32 %v3772, %v3940
        %v3942 = vpop.f32.mrf.mxu0
        %v3943 = vadd.f32 %v3774, %v3942
        %3944 = vmatmul.bf16.gmra.mxu0 %v1036
        %v3945 = vpop.f32.mrf.mxu0
        %v3946 = vadd.f32 %v3777, %v3945
        %v3947 = vpop.f32.mrf.mxu0
        %v3948 = vadd.f32 %v3779, %v3947
        %3949 = vmatmul.bf16.gmra.mxu0 %v1044
        %v3950 = vpop.f32.mrf.mxu0
        %v3951 = vadd.f32 %v3782, %v3950
        %v3952 = vpop.f32.mrf.mxu0
        %v3953 = vadd.f32 %v3784, %v3952
        %3954 = vmatmul.bf16.gmra.mxu0 %v1052
        %v3955 = vpop.f32.mrf.mxu0
        %v3956 = vadd.f32 %v3787, %v3955
        %v3957 = vpop.f32.mrf.mxu0
        %v3958 = vadd.f32 %v3789, %v3957
        %3959 = vmatmul.bf16.gmra.mxu0 %v1060
        %v3960 = vpop.f32.mrf.mxu0
        %v3961 = vadd.f32 %v3792, %v3960
        %v3962 = vpop.f32.mrf.mxu0
        %v3963 = vadd.f32 %v3794, %v3962
        %3964 = vmatmul.bf16.gmra.mxu0 %v1068
        %v3965 = vpop.f32.mrf.mxu0
        %v3966 = vadd.f32 %v3797, %v3965
        %v3967 = vpop.f32.mrf.mxu0
        %v3968 = vadd.f32 %v3799, %v3967
        %3969 = vmatmul.bf16.gmra.mxu0 %v1076
        %v3970 = vpop.f32.mrf.mxu0
        %v3971 = vadd.f32 %v3802, %v3970
        %v3972 = vpop.f32.mrf.mxu0
        %v3973 = vadd.f32 %v3804, %v3972
        %3974 = vdwg.mxu0
        %3975 = vmatpush.bf16.msra.mxu0 %v2140
        %3976 = vmatpush.bf16.msra.mxu0 %v2136
        %3977 = vmatpush.bf16.msra.mxu0 %v2132
        %3978 = vmatpush.bf16.msra.mxu0 %v2128
        %3979 = vmatpush.bf16.msra.mxu0 %v2124
        %3980 = vmatpush.bf16.msra.mxu0 %v2120
        %3981 = vmatpush.bf16.msra.mxu0 %v2116
        %3982 = vmatpush.bf16.msra.mxu0 %v2112
        %3983 = vmatmul.bf16.gmra.mxu0 %v821
        %v3984 = vpop.f32.mrf.mxu0
        %v3985 = vadd.f32 %v1336, %v3984
        %v3986 = vpop.f32.mrf.mxu0
        %v3987 = vadd.f32 %v1336, %v3986
        %3988 = vmatmul.bf16.gmra.mxu0 %v829
        %v3989 = vpop.f32.mrf.mxu0
        %v3990 = vadd.f32 %v1336, %v3989
        %v3991 = vpop.f32.mrf.mxu0
        %v3992 = vadd.f32 %v1336, %v3991
        %3993 = vmatmul.bf16.gmra.mxu0 %v837
        %v3994 = vpop.f32.mrf.mxu0
        %v3995 = vadd.f32 %v1336, %v3994
        %v3996 = vpop.f32.mrf.mxu0
        %v3997 = vadd.f32 %v1336, %v3996
        %3998 = vmatmul.bf16.gmra.mxu0 %v845
        %v3999 = vpop.f32.mrf.mxu0
        %v4000 = vadd.f32 %v1336, %v3999
        %v4001 = vpop.f32.mrf.mxu0
        %v4002 = vadd.f32 %v1336, %v4001
        %4003 = vmatmul.bf16.gmra.mxu0 %v853
        %v4004 = vpop.f32.mrf.mxu0
        %v4005 = vadd.f32 %v1336, %v4004
        %v4006 = vpop.f32.mrf.mxu0
        %v4007 = vadd.f32 %v1336, %v4006
        %4008 = vmatmul.bf16.gmra.mxu0 %v861
        %v4009 = vpop.f32.mrf.mxu0
        %v4010 = vadd.f32 %v1336, %v4009
        %v4011 = vpop.f32.mrf.mxu0
        %v4012 = vadd.f32 %v1336, %v4011
        %4013 = vmatmul.bf16.gmra.mxu0 %v869
        %v4014 = vpop.f32.mrf.mxu0
        %v4015 = vadd.f32 %v1336, %v4014
        %v4016 = vpop.f32.mrf.mxu0
        %v4017 = vadd.f32 %v1336, %v4016
        %4018 = vmatmul.bf16.gmra.mxu0 %v877
        %v4019 = vpop.f32.mrf.mxu0
        %v4020 = vadd.f32 %v1336, %v4019
        %v4021 = vpop.f32.mrf.mxu0
        %v4022 = vadd.f32 %v1336, %v4021
        %4023 = vmatmul.bf16.gmra.mxu0 %v885
        %v4024 = vpop.f32.mrf.mxu0
        %v4025 = vadd.f32 %v1336, %v4024
        %v4026 = vpop.f32.mrf.mxu0
        %v4027 = vadd.f32 %v1336, %v4026
        %4028 = vmatmul.bf16.gmra.mxu0 %v893
        %v4029 = vpop.f32.mrf.mxu0
        %v4030 = vadd.f32 %v1336, %v4029
        %v4031 = vpop.f32.mrf.mxu0
        %v4032 = vadd.f32 %v1336, %v4031
        %4033 = vmatmul.bf16.gmra.mxu0 %v901
        %v4034 = vpop.f32.mrf.mxu0
        %v4035 = vadd.f32 %v1336, %v4034
        %v4036 = vpop.f32.mrf.mxu0
        %v4037 = vadd.f32 %v1336, %v4036
        %4038 = vmatmul.bf16.gmra.mxu0 %v909
        %v4039 = vpop.f32.mrf.mxu0
        %v4040 = vadd.f32 %v1336, %v4039
        %v4041 = vpop.f32.mrf.mxu0
        %v4042 = vadd.f32 %v1336, %v4041
        %4043 = vmatmul.bf16.gmra.mxu0 %v917
        %v4044 = vpop.f32.mrf.mxu0
        %v4045 = vadd.f32 %v1336, %v4044
        %v4046 = vpop.f32.mrf.mxu0
        %v4047 = vadd.f32 %v1336, %v4046
        %4048 = vmatmul.bf16.gmra.mxu0 %v925
        %v4049 = vpop.f32.mrf.mxu0
        %v4050 = vadd.f32 %v1336, %v4049
        %v4051 = vpop.f32.mrf.mxu0
        %v4052 = vadd.f32 %v1336, %v4051
        %4053 = vmatmul.bf16.gmra.mxu0 %v933
        %v4054 = vpop.f32.mrf.mxu0
        %v4055 = vadd.f32 %v1336, %v4054
        %v4056 = vpop.f32.mrf.mxu0
        %v4057 = vadd.f32 %v1336, %v4056
        %4058 = vmatmul.bf16.gmra.mxu0 %v941
        %v4059 = vpop.f32.mrf.mxu0
        %v4060 = vadd.f32 %v1336, %v4059
        %v4061 = vpop.f32.mrf.mxu0
        %v4062 = vadd.f32 %v1336, %v4061
        %4063 = vmatmul.bf16.gmra.mxu0 %v949
        %v4064 = vpop.f32.mrf.mxu0
        %v4065 = vadd.f32 %v1336, %v4064
        %v4066 = vpop.f32.mrf.mxu0
        %v4067 = vadd.f32 %v1336, %v4066
        %4068 = vmatmul.bf16.gmra.mxu0 %v957
        %v4069 = vpop.f32.mrf.mxu0
        %v4070 = vadd.f32 %v1336, %v4069
        %v4071 = vpop.f32.mrf.mxu0
        %v4072 = vadd.f32 %v1336, %v4071
        %4073 = vmatmul.bf16.gmra.mxu0 %v965
        %v4074 = vpop.f32.mrf.mxu0
        %v4075 = vadd.f32 %v1336, %v4074
        %v4076 = vpop.f32.mrf.mxu0
        %v4077 = vadd.f32 %v1336, %v4076
        %4078 = vmatmul.bf16.gmra.mxu0 %v973
        %v4079 = vpop.f32.mrf.mxu0
        %v4080 = vadd.f32 %v1336, %v4079
        %v4081 = vpop.f32.mrf.mxu0
        %v4082 = vadd.f32 %v1336, %v4081
        %4083 = vmatmul.bf16.gmra.mxu0 %v981
        %v4084 = vpop.f32.mrf.mxu0
        %v4085 = vadd.f32 %v1336, %v4084
        %v4086 = vpop.f32.mrf.mxu0
        %v4087 = vadd.f32 %v1336, %v4086
        %4088 = vmatmul.bf16.gmra.mxu0 %v989
        %v4089 = vpop.f32.mrf.mxu0
        %v4090 = vadd.f32 %v1336, %v4089
        %v4091 = vpop.f32.mrf.mxu0
        %v4092 = vadd.f32 %v1336, %v4091
        %4093 = vmatmul.bf16.gmra.mxu0 %v997
        %v4094 = vpop.f32.mrf.mxu0
        %v4095 = vadd.f32 %v1336, %v4094
        %v4096 = vpop.f32.mrf.mxu0
        %v4097 = vadd.f32 %v1336, %v4096
        %4098 = vmatmul.bf16.gmra.mxu0 %v1005
        %v4099 = vpop.f32.mrf.mxu0
        %v4100 = vadd.f32 %v1336, %v4099
        %v4101 = vpop.f32.mrf.mxu0
        %v4102 = vadd.f32 %v1336, %v4101
        %4103 = vmatmul.bf16.gmra.mxu0 %v1013
        %v4104 = vpop.f32.mrf.mxu0
        %v4105 = vadd.f32 %v1336, %v4104
        %v4106 = vpop.f32.mrf.mxu0
        %v4107 = vadd.f32 %v1336, %v4106
        %4108 = vmatmul.bf16.gmra.mxu0 %v1021
        %v4109 = vpop.f32.mrf.mxu0
        %v4110 = vadd.f32 %v1336, %v4109
        %v4111 = vpop.f32.mrf.mxu0
        %v4112 = vadd.f32 %v1336, %v4111
        %4113 = vmatmul.bf16.gmra.mxu0 %v1029
        %v4114 = vpop.f32.mrf.mxu0
        %v4115 = vadd.f32 %v1336, %v4114
        %v4116 = vpop.f32.mrf.mxu0
        %v4117 = vadd.f32 %v1336, %v4116
        %4118 = vmatmul.bf16.gmra.mxu0 %v1037
        %v4119 = vpop.f32.mrf.mxu0
        %v4120 = vadd.f32 %v1336, %v4119
        %v4121 = vpop.f32.mrf.mxu0
        %v4122 = vadd.f32 %v1336, %v4121
        %4123 = vmatmul.bf16.gmra.mxu0 %v1045
        %v4124 = vpop.f32.mrf.mxu0
        %v4125 = vadd.f32 %v1336, %v4124
        %v4126 = vpop.f32.mrf.mxu0
        %v4127 = vadd.f32 %v1336, %v4126
        %4128 = vmatmul.bf16.gmra.mxu0 %v1053
        %v4129 = vpop.f32.mrf.mxu0
        %v4130 = vadd.f32 %v1336, %v4129
        %v4131 = vpop.f32.mrf.mxu0
        %v4132 = vadd.f32 %v1336, %v4131
        %4133 = vmatmul.bf16.gmra.mxu0 %v1061
        %v4134 = vpop.f32.mrf.mxu0
        %v4135 = vadd.f32 %v1336, %v4134
        %v4136 = vpop.f32.mrf.mxu0
        %v4137 = vadd.f32 %v1336, %v4136
        %4138 = vmatmul.bf16.gmra.mxu0 %v1069
        %v4139 = vpop.f32.mrf.mxu0
        %v4140 = vadd.f32 %v1336, %v4139
        %v4141 = vpop.f32.mrf.mxu0
        %v4142 = vadd.f32 %v1336, %v4141
        %4143 = vdwg.mxu0
        %4144 = vmatpush.bf16.msra.mxu0 %v2172
        %4145 = vmatpush.bf16.msra.mxu0 %v2168
        %4146 = vmatpush.bf16.msra.mxu0 %v2164
        %4147 = vmatpush.bf16.msra.mxu0 %v2160
        %4148 = vmatpush.bf16.msra.mxu0 %v2156
        %4149 = vmatpush.bf16.msra.mxu0 %v2152
        %4150 = vmatpush.bf16.msra.mxu0 %v2148
        %4151 = vmatpush.bf16.msra.mxu0 %v2144
        %4152 = vmatmul.bf16.gmra.mxu0 %v822
        %v4153 = vpop.f32.mrf.mxu0
        %v4154 = vadd.f32 %v3985, %v4153
        %v4155 = vpop.f32.mrf.mxu0
        %v4156 = vadd.f32 %v3987, %v4155
        %4157 = vmatmul.bf16.gmra.mxu0 %v830
        %v4158 = vpop.f32.mrf.mxu0
        %v4159 = vadd.f32 %v3990, %v4158
        %v4160 = vpop.f32.mrf.mxu0
        %v4161 = vadd.f32 %v3992, %v4160
        %4162 = vmatmul.bf16.gmra.mxu0 %v838
        %v4163 = vpop.f32.mrf.mxu0
        %v4164 = vadd.f32 %v3995, %v4163
        %v4165 = vpop.f32.mrf.mxu0
        %v4166 = vadd.f32 %v3997, %v4165
        %4167 = vmatmul.bf16.gmra.mxu0 %v846
        %v4168 = vpop.f32.mrf.mxu0
        %v4169 = vadd.f32 %v4000, %v4168
        %v4170 = vpop.f32.mrf.mxu0
        %v4171 = vadd.f32 %v4002, %v4170
        %4172 = vmatmul.bf16.gmra.mxu0 %v854
        %v4173 = vpop.f32.mrf.mxu0
        %v4174 = vadd.f32 %v4005, %v4173
        %v4175 = vpop.f32.mrf.mxu0
        %v4176 = vadd.f32 %v4007, %v4175
        %4177 = vmatmul.bf16.gmra.mxu0 %v862
        %v4178 = vpop.f32.mrf.mxu0
        %v4179 = vadd.f32 %v4010, %v4178
        %v4180 = vpop.f32.mrf.mxu0
        %v4181 = vadd.f32 %v4012, %v4180
        %4182 = vmatmul.bf16.gmra.mxu0 %v870
        %v4183 = vpop.f32.mrf.mxu0
        %v4184 = vadd.f32 %v4015, %v4183
        %v4185 = vpop.f32.mrf.mxu0
        %v4186 = vadd.f32 %v4017, %v4185
        %4187 = vmatmul.bf16.gmra.mxu0 %v878
        %v4188 = vpop.f32.mrf.mxu0
        %v4189 = vadd.f32 %v4020, %v4188
        %v4190 = vpop.f32.mrf.mxu0
        %v4191 = vadd.f32 %v4022, %v4190
        %4192 = vmatmul.bf16.gmra.mxu0 %v886
        %v4193 = vpop.f32.mrf.mxu0
        %v4194 = vadd.f32 %v4025, %v4193
        %v4195 = vpop.f32.mrf.mxu0
        %v4196 = vadd.f32 %v4027, %v4195
        %4197 = vmatmul.bf16.gmra.mxu0 %v894
        %v4198 = vpop.f32.mrf.mxu0
        %v4199 = vadd.f32 %v4030, %v4198
        %v4200 = vpop.f32.mrf.mxu0
        %v4201 = vadd.f32 %v4032, %v4200
        %4202 = vmatmul.bf16.gmra.mxu0 %v902
        %v4203 = vpop.f32.mrf.mxu0
        %v4204 = vadd.f32 %v4035, %v4203
        %v4205 = vpop.f32.mrf.mxu0
        %v4206 = vadd.f32 %v4037, %v4205
        %4207 = vmatmul.bf16.gmra.mxu0 %v910
        %v4208 = vpop.f32.mrf.mxu0
        %v4209 = vadd.f32 %v4040, %v4208
        %v4210 = vpop.f32.mrf.mxu0
        %v4211 = vadd.f32 %v4042, %v4210
        %4212 = vmatmul.bf16.gmra.mxu0 %v918
        %v4213 = vpop.f32.mrf.mxu0
        %v4214 = vadd.f32 %v4045, %v4213
        %v4215 = vpop.f32.mrf.mxu0
        %v4216 = vadd.f32 %v4047, %v4215
        %4217 = vmatmul.bf16.gmra.mxu0 %v926
        %v4218 = vpop.f32.mrf.mxu0
        %v4219 = vadd.f32 %v4050, %v4218
        %v4220 = vpop.f32.mrf.mxu0
        %v4221 = vadd.f32 %v4052, %v4220
        %4222 = vmatmul.bf16.gmra.mxu0 %v934
        %v4223 = vpop.f32.mrf.mxu0
        %v4224 = vadd.f32 %v4055, %v4223
        %v4225 = vpop.f32.mrf.mxu0
        %v4226 = vadd.f32 %v4057, %v4225
        %4227 = vmatmul.bf16.gmra.mxu0 %v942
        %v4228 = vpop.f32.mrf.mxu0
        %v4229 = vadd.f32 %v4060, %v4228
        %v4230 = vpop.f32.mrf.mxu0
        %v4231 = vadd.f32 %v4062, %v4230
        %4232 = vmatmul.bf16.gmra.mxu0 %v950
        %v4233 = vpop.f32.mrf.mxu0
        %v4234 = vadd.f32 %v4065, %v4233
        %v4235 = vpop.f32.mrf.mxu0
        %v4236 = vadd.f32 %v4067, %v4235
        %4237 = vmatmul.bf16.gmra.mxu0 %v958
        %v4238 = vpop.f32.mrf.mxu0
        %v4239 = vadd.f32 %v4070, %v4238
        %v4240 = vpop.f32.mrf.mxu0
        %v4241 = vadd.f32 %v4072, %v4240
        %4242 = vmatmul.bf16.gmra.mxu0 %v966
        %v4243 = vpop.f32.mrf.mxu0
        %v4244 = vadd.f32 %v4075, %v4243
        %v4245 = vpop.f32.mrf.mxu0
        %v4246 = vadd.f32 %v4077, %v4245
        %4247 = vmatmul.bf16.gmra.mxu0 %v974
        %v4248 = vpop.f32.mrf.mxu0
        %v4249 = vadd.f32 %v4080, %v4248
        %v4250 = vpop.f32.mrf.mxu0
        %v4251 = vadd.f32 %v4082, %v4250
        %4252 = vmatmul.bf16.gmra.mxu0 %v982
        %v4253 = vpop.f32.mrf.mxu0
        %v4254 = vadd.f32 %v4085, %v4253
        %v4255 = vpop.f32.mrf.mxu0
        %v4256 = vadd.f32 %v4087, %v4255
        %4257 = vmatmul.bf16.gmra.mxu0 %v990
        %v4258 = vpop.f32.mrf.mxu0
        %v4259 = vadd.f32 %v4090, %v4258
        %v4260 = vpop.f32.mrf.mxu0
        %v4261 = vadd.f32 %v4092, %v4260
        %4262 = vmatmul.bf16.gmra.mxu0 %v998
        %v4263 = vpop.f32.mrf.mxu0
        %v4264 = vadd.f32 %v4095, %v4263
        %v4265 = vpop.f32.mrf.mxu0
        %v4266 = vadd.f32 %v4097, %v4265
        %4267 = vmatmul.bf16.gmra.mxu0 %v1006
        %v4268 = vpop.f32.mrf.mxu0
        %v4269 = vadd.f32 %v4100, %v4268
        %v4270 = vpop.f32.mrf.mxu0
        %v4271 = vadd.f32 %v4102, %v4270
        %4272 = vmatmul.bf16.gmra.mxu0 %v1014
        %v4273 = vpop.f32.mrf.mxu0
        %v4274 = vadd.f32 %v4105, %v4273
        %v4275 = vpop.f32.mrf.mxu0
        %v4276 = vadd.f32 %v4107, %v4275
        %4277 = vmatmul.bf16.gmra.mxu0 %v1022
        %v4278 = vpop.f32.mrf.mxu0
        %v4279 = vadd.f32 %v4110, %v4278
        %v4280 = vpop.f32.mrf.mxu0
        %v4281 = vadd.f32 %v4112, %v4280
        %4282 = vmatmul.bf16.gmra.mxu0 %v1030
        %v4283 = vpop.f32.mrf.mxu0
        %v4284 = vadd.f32 %v4115, %v4283
        %v4285 = vpop.f32.mrf.mxu0
        %v4286 = vadd.f32 %v4117, %v4285
        %4287 = vmatmul.bf16.gmra.mxu0 %v1038
        %v4288 = vpop.f32.mrf.mxu0
        %v4289 = vadd.f32 %v4120, %v4288
        %v4290 = vpop.f32.mrf.mxu0
        %v4291 = vadd.f32 %v4122, %v4290
        %4292 = vmatmul.bf16.gmra.mxu0 %v1046
        %v4293 = vpop.f32.mrf.mxu0
        %v4294 = vadd.f32 %v4125, %v4293
        %v4295 = vpop.f32.mrf.mxu0
        %v4296 = vadd.f32 %v4127, %v4295
        %4297 = vmatmul.bf16.gmra.mxu0 %v1054
        %v4298 = vpop.f32.mrf.mxu0
        %v4299 = vadd.f32 %v4130, %v4298
        %v4300 = vpop.f32.mrf.mxu0
        %v4301 = vadd.f32 %v4132, %v4300
        %4302 = vmatmul.bf16.gmra.mxu0 %v1062
        %v4303 = vpop.f32.mrf.mxu0
        %v4304 = vadd.f32 %v4135, %v4303
        %v4305 = vpop.f32.mrf.mxu0
        %v4306 = vadd.f32 %v4137, %v4305
        %4307 = vmatmul.bf16.gmra.mxu0 %v1070
        %v4308 = vpop.f32.mrf.mxu0
        %v4309 = vadd.f32 %v4140, %v4308
        %v4310 = vpop.f32.mrf.mxu0
        %v4311 = vadd.f32 %v4142, %v4310
        %4312 = vdwg.mxu0
        %4313 = vmatpush.bf16.msra.mxu0 %v2204
        %4314 = vmatpush.bf16.msra.mxu0 %v2200
        %4315 = vmatpush.bf16.msra.mxu0 %v2196
        %4316 = vmatpush.bf16.msra.mxu0 %v2192
        %4317 = vmatpush.bf16.msra.mxu0 %v2188
        %4318 = vmatpush.bf16.msra.mxu0 %v2184
        %4319 = vmatpush.bf16.msra.mxu0 %v2180
        %4320 = vmatpush.bf16.msra.mxu0 %v2176
        %4321 = vmatmul.bf16.gmra.mxu0 %v823
        %v4322 = vpop.f32.mrf.mxu0
        %v4323 = vadd.f32 %v4154, %v4322
        %v4324 = vpop.f32.mrf.mxu0
        %v4325 = vadd.f32 %v4156, %v4324
        %4326 = vmatmul.bf16.gmra.mxu0 %v831
        %v4327 = vpop.f32.mrf.mxu0
        %v4328 = vadd.f32 %v4159, %v4327
        %v4329 = vpop.f32.mrf.mxu0
        %v4330 = vadd.f32 %v4161, %v4329
        %4331 = vmatmul.bf16.gmra.mxu0 %v839
        %v4332 = vpop.f32.mrf.mxu0
        %v4333 = vadd.f32 %v4164, %v4332
        %v4334 = vpop.f32.mrf.mxu0
        %v4335 = vadd.f32 %v4166, %v4334
        %4336 = vmatmul.bf16.gmra.mxu0 %v847
        %v4337 = vpop.f32.mrf.mxu0
        %v4338 = vadd.f32 %v4169, %v4337
        %v4339 = vpop.f32.mrf.mxu0
        %v4340 = vadd.f32 %v4171, %v4339
        %4341 = vmatmul.bf16.gmra.mxu0 %v855
        %v4342 = vpop.f32.mrf.mxu0
        %v4343 = vadd.f32 %v4174, %v4342
        %v4344 = vpop.f32.mrf.mxu0
        %v4345 = vadd.f32 %v4176, %v4344
        %4346 = vmatmul.bf16.gmra.mxu0 %v863
        %v4347 = vpop.f32.mrf.mxu0
        %v4348 = vadd.f32 %v4179, %v4347
        %v4349 = vpop.f32.mrf.mxu0
        %v4350 = vadd.f32 %v4181, %v4349
        %4351 = vmatmul.bf16.gmra.mxu0 %v871
        %v4352 = vpop.f32.mrf.mxu0
        %v4353 = vadd.f32 %v4184, %v4352
        %v4354 = vpop.f32.mrf.mxu0
        %v4355 = vadd.f32 %v4186, %v4354
        %4356 = vmatmul.bf16.gmra.mxu0 %v879
        %v4357 = vpop.f32.mrf.mxu0
        %v4358 = vadd.f32 %v4189, %v4357
        %v4359 = vpop.f32.mrf.mxu0
        %v4360 = vadd.f32 %v4191, %v4359
        %4361 = vmatmul.bf16.gmra.mxu0 %v887
        %v4362 = vpop.f32.mrf.mxu0
        %v4363 = vadd.f32 %v4194, %v4362
        %v4364 = vpop.f32.mrf.mxu0
        %v4365 = vadd.f32 %v4196, %v4364
        %4366 = vmatmul.bf16.gmra.mxu0 %v895
        %v4367 = vpop.f32.mrf.mxu0
        %v4368 = vadd.f32 %v4199, %v4367
        %v4369 = vpop.f32.mrf.mxu0
        %v4370 = vadd.f32 %v4201, %v4369
        %4371 = vmatmul.bf16.gmra.mxu0 %v903
        %v4372 = vpop.f32.mrf.mxu0
        %v4373 = vadd.f32 %v4204, %v4372
        %v4374 = vpop.f32.mrf.mxu0
        %v4375 = vadd.f32 %v4206, %v4374
        %4376 = vmatmul.bf16.gmra.mxu0 %v911
        %v4377 = vpop.f32.mrf.mxu0
        %v4378 = vadd.f32 %v4209, %v4377
        %v4379 = vpop.f32.mrf.mxu0
        %v4380 = vadd.f32 %v4211, %v4379
        %4381 = vmatmul.bf16.gmra.mxu0 %v919
        %v4382 = vpop.f32.mrf.mxu0
        %v4383 = vadd.f32 %v4214, %v4382
        %v4384 = vpop.f32.mrf.mxu0
        %v4385 = vadd.f32 %v4216, %v4384
        %4386 = vmatmul.bf16.gmra.mxu0 %v927
        %v4387 = vpop.f32.mrf.mxu0
        %v4388 = vadd.f32 %v4219, %v4387
        %v4389 = vpop.f32.mrf.mxu0
        %v4390 = vadd.f32 %v4221, %v4389
        %4391 = vmatmul.bf16.gmra.mxu0 %v935
        %v4392 = vpop.f32.mrf.mxu0
        %v4393 = vadd.f32 %v4224, %v4392
        %v4394 = vpop.f32.mrf.mxu0
        %v4395 = vadd.f32 %v4226, %v4394
        %4396 = vmatmul.bf16.gmra.mxu0 %v943
        %v4397 = vpop.f32.mrf.mxu0
        %v4398 = vadd.f32 %v4229, %v4397
        %v4399 = vpop.f32.mrf.mxu0
        %v4400 = vadd.f32 %v4231, %v4399
        %4401 = vmatmul.bf16.gmra.mxu0 %v951
        %v4402 = vpop.f32.mrf.mxu0
        %v4403 = vadd.f32 %v4234, %v4402
        %v4404 = vpop.f32.mrf.mxu0
        %v4405 = vadd.f32 %v4236, %v4404
        %4406 = vmatmul.bf16.gmra.mxu0 %v959
        %v4407 = vpop.f32.mrf.mxu0
        %v4408 = vadd.f32 %v4239, %v4407
        %v4409 = vpop.f32.mrf.mxu0
        %v4410 = vadd.f32 %v4241, %v4409
        %4411 = vmatmul.bf16.gmra.mxu0 %v967
        %v4412 = vpop.f32.mrf.mxu0
        %v4413 = vadd.f32 %v4244, %v4412
        %v4414 = vpop.f32.mrf.mxu0
        %v4415 = vadd.f32 %v4246, %v4414
        %4416 = vmatmul.bf16.gmra.mxu0 %v975
        %v4417 = vpop.f32.mrf.mxu0
        %v4418 = vadd.f32 %v4249, %v4417
        %v4419 = vpop.f32.mrf.mxu0
        %v4420 = vadd.f32 %v4251, %v4419
        %4421 = vmatmul.bf16.gmra.mxu0 %v983
        %v4422 = vpop.f32.mrf.mxu0
        %v4423 = vadd.f32 %v4254, %v4422
        %v4424 = vpop.f32.mrf.mxu0
        %v4425 = vadd.f32 %v4256, %v4424
        %4426 = vmatmul.bf16.gmra.mxu0 %v991
        %v4427 = vpop.f32.mrf.mxu0
        %v4428 = vadd.f32 %v4259, %v4427
        %v4429 = vpop.f32.mrf.mxu0
        %v4430 = vadd.f32 %v4261, %v4429
        %4431 = vmatmul.bf16.gmra.mxu0 %v999
        %v4432 = vpop.f32.mrf.mxu0
        %v4433 = vadd.f32 %v4264, %v4432
        %v4434 = vpop.f32.mrf.mxu0
        %v4435 = vadd.f32 %v4266, %v4434
        %4436 = vmatmul.bf16.gmra.mxu0 %v1007
        %v4437 = vpop.f32.mrf.mxu0
        %v4438 = vadd.f32 %v4269, %v4437
        %v4439 = vpop.f32.mrf.mxu0
        %v4440 = vadd.f32 %v4271, %v4439
        %4441 = vmatmul.bf16.gmra.mxu0 %v1015
        %v4442 = vpop.f32.mrf.mxu0
        %v4443 = vadd.f32 %v4274, %v4442
        %v4444 = vpop.f32.mrf.mxu0
        %v4445 = vadd.f32 %v4276, %v4444
        %4446 = vmatmul.bf16.gmra.mxu0 %v1023
        %v4447 = vpop.f32.mrf.mxu0
        %v4448 = vadd.f32 %v4279, %v4447
        %v4449 = vpop.f32.mrf.mxu0
        %v4450 = vadd.f32 %v4281, %v4449
        %4451 = vmatmul.bf16.gmra.mxu0 %v1031
        %v4452 = vpop.f32.mrf.mxu0
        %v4453 = vadd.f32 %v4284, %v4452
        %v4454 = vpop.f32.mrf.mxu0
        %v4455 = vadd.f32 %v4286, %v4454
        %4456 = vmatmul.bf16.gmra.mxu0 %v1039
        %v4457 = vpop.f32.mrf.mxu0
        %v4458 = vadd.f32 %v4289, %v4457
        %v4459 = vpop.f32.mrf.mxu0
        %v4460 = vadd.f32 %v4291, %v4459
        %4461 = vmatmul.bf16.gmra.mxu0 %v1047
        %v4462 = vpop.f32.mrf.mxu0
        %v4463 = vadd.f32 %v4294, %v4462
        %v4464 = vpop.f32.mrf.mxu0
        %v4465 = vadd.f32 %v4296, %v4464
        %4466 = vmatmul.bf16.gmra.mxu0 %v1055
        %v4467 = vpop.f32.mrf.mxu0
        %v4468 = vadd.f32 %v4299, %v4467
        %v4469 = vpop.f32.mrf.mxu0
        %v4470 = vadd.f32 %v4301, %v4469
        %4471 = vmatmul.bf16.gmra.mxu0 %v1063
        %v4472 = vpop.f32.mrf.mxu0
        %v4473 = vadd.f32 %v4304, %v4472
        %v4474 = vpop.f32.mrf.mxu0
        %v4475 = vadd.f32 %v4306, %v4474
        %4476 = vmatmul.bf16.gmra.mxu0 %v1071
        %v4477 = vpop.f32.mrf.mxu0
        %v4478 = vadd.f32 %v4309, %v4477
        %v4479 = vpop.f32.mrf.mxu0
        %v4480 = vadd.f32 %v4311, %v4479
        %4481 = vdwg.mxu0
        %4482 = vmatpush.bf16.msra.mxu0 %v2236
        %4483 = vmatpush.bf16.msra.mxu0 %v2232
        %4484 = vmatpush.bf16.msra.mxu0 %v2228
        %4485 = vmatpush.bf16.msra.mxu0 %v2224
        %4486 = vmatpush.bf16.msra.mxu0 %v2220
        %4487 = vmatpush.bf16.msra.mxu0 %v2216
        %4488 = vmatpush.bf16.msra.mxu0 %v2212
        %4489 = vmatpush.bf16.msra.mxu0 %v2208
        %4490 = vmatmul.bf16.gmra.mxu0 %v824
        %v4491 = vpop.f32.mrf.mxu0
        %v4492 = vadd.f32 %v4323, %v4491
        %v4493 = vpop.f32.mrf.mxu0
        %v4494 = vadd.f32 %v4325, %v4493
        %4495 = vmatmul.bf16.gmra.mxu0 %v832
        %v4496 = vpop.f32.mrf.mxu0
        %v4497 = vadd.f32 %v4328, %v4496
        %v4498 = vpop.f32.mrf.mxu0
        %v4499 = vadd.f32 %v4330, %v4498
        %4500 = vmatmul.bf16.gmra.mxu0 %v840
        %v4501 = vpop.f32.mrf.mxu0
        %v4502 = vadd.f32 %v4333, %v4501
        %v4503 = vpop.f32.mrf.mxu0
        %v4504 = vadd.f32 %v4335, %v4503
        %4505 = vmatmul.bf16.gmra.mxu0 %v848
        %v4506 = vpop.f32.mrf.mxu0
        %v4507 = vadd.f32 %v4338, %v4506
        %v4508 = vpop.f32.mrf.mxu0
        %v4509 = vadd.f32 %v4340, %v4508
        %4510 = vmatmul.bf16.gmra.mxu0 %v856
        %v4511 = vpop.f32.mrf.mxu0
        %v4512 = vadd.f32 %v4343, %v4511
        %v4513 = vpop.f32.mrf.mxu0
        %v4514 = vadd.f32 %v4345, %v4513
        %4515 = vmatmul.bf16.gmra.mxu0 %v864
        %v4516 = vpop.f32.mrf.mxu0
        %v4517 = vadd.f32 %v4348, %v4516
        %v4518 = vpop.f32.mrf.mxu0
        %v4519 = vadd.f32 %v4350, %v4518
        %4520 = vmatmul.bf16.gmra.mxu0 %v872
        %v4521 = vpop.f32.mrf.mxu0
        %v4522 = vadd.f32 %v4353, %v4521
        %v4523 = vpop.f32.mrf.mxu0
        %v4524 = vadd.f32 %v4355, %v4523
        %4525 = vmatmul.bf16.gmra.mxu0 %v880
        %v4526 = vpop.f32.mrf.mxu0
        %v4527 = vadd.f32 %v4358, %v4526
        %v4528 = vpop.f32.mrf.mxu0
        %v4529 = vadd.f32 %v4360, %v4528
        %4530 = vmatmul.bf16.gmra.mxu0 %v888
        %v4531 = vpop.f32.mrf.mxu0
        %v4532 = vadd.f32 %v4363, %v4531
        %v4533 = vpop.f32.mrf.mxu0
        %v4534 = vadd.f32 %v4365, %v4533
        %4535 = vmatmul.bf16.gmra.mxu0 %v896
        %v4536 = vpop.f32.mrf.mxu0
        %v4537 = vadd.f32 %v4368, %v4536
        %v4538 = vpop.f32.mrf.mxu0
        %v4539 = vadd.f32 %v4370, %v4538
        %4540 = vmatmul.bf16.gmra.mxu0 %v904
        %v4541 = vpop.f32.mrf.mxu0
        %v4542 = vadd.f32 %v4373, %v4541
        %v4543 = vpop.f32.mrf.mxu0
        %v4544 = vadd.f32 %v4375, %v4543
        %4545 = vmatmul.bf16.gmra.mxu0 %v912
        %v4546 = vpop.f32.mrf.mxu0
        %v4547 = vadd.f32 %v4378, %v4546
        %v4548 = vpop.f32.mrf.mxu0
        %v4549 = vadd.f32 %v4380, %v4548
        %4550 = vmatmul.bf16.gmra.mxu0 %v920
        %v4551 = vpop.f32.mrf.mxu0
        %v4552 = vadd.f32 %v4383, %v4551
        %v4553 = vpop.f32.mrf.mxu0
        %v4554 = vadd.f32 %v4385, %v4553
        %4555 = vmatmul.bf16.gmra.mxu0 %v928
        %v4556 = vpop.f32.mrf.mxu0
        %v4557 = vadd.f32 %v4388, %v4556
        %v4558 = vpop.f32.mrf.mxu0
        %v4559 = vadd.f32 %v4390, %v4558
        %4560 = vmatmul.bf16.gmra.mxu0 %v936
        %v4561 = vpop.f32.mrf.mxu0
        %v4562 = vadd.f32 %v4393, %v4561
        %v4563 = vpop.f32.mrf.mxu0
        %v4564 = vadd.f32 %v4395, %v4563
        %4565 = vmatmul.bf16.gmra.mxu0 %v944
        %v4566 = vpop.f32.mrf.mxu0
        %v4567 = vadd.f32 %v4398, %v4566
        %v4568 = vpop.f32.mrf.mxu0
        %v4569 = vadd.f32 %v4400, %v4568
        %4570 = vmatmul.bf16.gmra.mxu0 %v952
        %v4571 = vpop.f32.mrf.mxu0
        %v4572 = vadd.f32 %v4403, %v4571
        %v4573 = vpop.f32.mrf.mxu0
        %v4574 = vadd.f32 %v4405, %v4573
        %4575 = vmatmul.bf16.gmra.mxu0 %v960
        %v4576 = vpop.f32.mrf.mxu0
        %v4577 = vadd.f32 %v4408, %v4576
        %v4578 = vpop.f32.mrf.mxu0
        %v4579 = vadd.f32 %v4410, %v4578
        %4580 = vmatmul.bf16.gmra.mxu0 %v968
        %v4581 = vpop.f32.mrf.mxu0
        %v4582 = vadd.f32 %v4413, %v4581
        %v4583 = vpop.f32.mrf.mxu0
        %v4584 = vadd.f32 %v4415, %v4583
        %4585 = vmatmul.bf16.gmra.mxu0 %v976
        %v4586 = vpop.f32.mrf.mxu0
        %v4587 = vadd.f32 %v4418, %v4586
        %v4588 = vpop.f32.mrf.mxu0
        %v4589 = vadd.f32 %v4420, %v4588
        %4590 = vmatmul.bf16.gmra.mxu0 %v984
        %v4591 = vpop.f32.mrf.mxu0
        %v4592 = vadd.f32 %v4423, %v4591
        %v4593 = vpop.f32.mrf.mxu0
        %v4594 = vadd.f32 %v4425, %v4593
        %4595 = vmatmul.bf16.gmra.mxu0 %v992
        %v4596 = vpop.f32.mrf.mxu0
        %v4597 = vadd.f32 %v4428, %v4596
        %v4598 = vpop.f32.mrf.mxu0
        %v4599 = vadd.f32 %v4430, %v4598
        %4600 = vmatmul.bf16.gmra.mxu0 %v1000
        %v4601 = vpop.f32.mrf.mxu0
        %v4602 = vadd.f32 %v4433, %v4601
        %v4603 = vpop.f32.mrf.mxu0
        %v4604 = vadd.f32 %v4435, %v4603
        %4605 = vmatmul.bf16.gmra.mxu0 %v1008
        %v4606 = vpop.f32.mrf.mxu0
        %v4607 = vadd.f32 %v4438, %v4606
        %v4608 = vpop.f32.mrf.mxu0
        %v4609 = vadd.f32 %v4440, %v4608
        %4610 = vmatmul.bf16.gmra.mxu0 %v1016
        %v4611 = vpop.f32.mrf.mxu0
        %v4612 = vadd.f32 %v4443, %v4611
        %v4613 = vpop.f32.mrf.mxu0
        %v4614 = vadd.f32 %v4445, %v4613
        %4615 = vmatmul.bf16.gmra.mxu0 %v1024
        %v4616 = vpop.f32.mrf.mxu0
        %v4617 = vadd.f32 %v4448, %v4616
        %v4618 = vpop.f32.mrf.mxu0
        %v4619 = vadd.f32 %v4450, %v4618
        %4620 = vmatmul.bf16.gmra.mxu0 %v1032
        %v4621 = vpop.f32.mrf.mxu0
        %v4622 = vadd.f32 %v4453, %v4621
        %v4623 = vpop.f32.mrf.mxu0
        %v4624 = vadd.f32 %v4455, %v4623
        %4625 = vmatmul.bf16.gmra.mxu0 %v1040
        %v4626 = vpop.f32.mrf.mxu0
        %v4627 = vadd.f32 %v4458, %v4626
        %v4628 = vpop.f32.mrf.mxu0
        %v4629 = vadd.f32 %v4460, %v4628
        %4630 = vmatmul.bf16.gmra.mxu0 %v1048
        %v4631 = vpop.f32.mrf.mxu0
        %v4632 = vadd.f32 %v4463, %v4631
        %v4633 = vpop.f32.mrf.mxu0
        %v4634 = vadd.f32 %v4465, %v4633
        %4635 = vmatmul.bf16.gmra.mxu0 %v1056
        %v4636 = vpop.f32.mrf.mxu0
        %v4637 = vadd.f32 %v4468, %v4636
        %v4638 = vpop.f32.mrf.mxu0
        %v4639 = vadd.f32 %v4470, %v4638
        %4640 = vmatmul.bf16.gmra.mxu0 %v1064
        %v4641 = vpop.f32.mrf.mxu0
        %v4642 = vadd.f32 %v4473, %v4641
        %v4643 = vpop.f32.mrf.mxu0
        %v4644 = vadd.f32 %v4475, %v4643
        %4645 = vmatmul.bf16.gmra.mxu0 %v1072
        %v4646 = vpop.f32.mrf.mxu0
        %v4647 = vadd.f32 %v4478, %v4646
        %v4648 = vpop.f32.mrf.mxu0
        %v4649 = vadd.f32 %v4480, %v4648
        %4650 = vdwg.mxu0
        %4651 = vmatpush.bf16.msra.mxu0 %v2268
        %4652 = vmatpush.bf16.msra.mxu0 %v2264
        %4653 = vmatpush.bf16.msra.mxu0 %v2260
        %4654 = vmatpush.bf16.msra.mxu0 %v2256
        %4655 = vmatpush.bf16.msra.mxu0 %v2252
        %4656 = vmatpush.bf16.msra.mxu0 %v2248
        %4657 = vmatpush.bf16.msra.mxu0 %v2244
        %4658 = vmatpush.bf16.msra.mxu0 %v2240
        %4659 = vmatmul.bf16.gmra.mxu0 %v825
        %v4660 = vpop.f32.mrf.mxu0
        %v4661 = vadd.f32 %v4492, %v4660
        %v4662 = vpop.f32.mrf.mxu0
        %v4663 = vadd.f32 %v4494, %v4662
        %4664 = vmatmul.bf16.gmra.mxu0 %v833
        %v4665 = vpop.f32.mrf.mxu0
        %v4666 = vadd.f32 %v4497, %v4665
        %v4667 = vpop.f32.mrf.mxu0
        %v4668 = vadd.f32 %v4499, %v4667
        %4669 = vmatmul.bf16.gmra.mxu0 %v841
        %v4670 = vpop.f32.mrf.mxu0
        %v4671 = vadd.f32 %v4502, %v4670
        %v4672 = vpop.f32.mrf.mxu0
        %v4673 = vadd.f32 %v4504, %v4672
        %4674 = vmatmul.bf16.gmra.mxu0 %v849
        %v4675 = vpop.f32.mrf.mxu0
        %v4676 = vadd.f32 %v4507, %v4675
        %v4677 = vpop.f32.mrf.mxu0
        %v4678 = vadd.f32 %v4509, %v4677
        %4679 = vmatmul.bf16.gmra.mxu0 %v857
        %v4680 = vpop.f32.mrf.mxu0
        %v4681 = vadd.f32 %v4512, %v4680
        %v4682 = vpop.f32.mrf.mxu0
        %v4683 = vadd.f32 %v4514, %v4682
        %4684 = vmatmul.bf16.gmra.mxu0 %v865
        %v4685 = vpop.f32.mrf.mxu0
        %v4686 = vadd.f32 %v4517, %v4685
        %v4687 = vpop.f32.mrf.mxu0
        %v4688 = vadd.f32 %v4519, %v4687
        %4689 = vmatmul.bf16.gmra.mxu0 %v873
        %v4690 = vpop.f32.mrf.mxu0
        %v4691 = vadd.f32 %v4522, %v4690
        %v4692 = vpop.f32.mrf.mxu0
        %v4693 = vadd.f32 %v4524, %v4692
        %4694 = vmatmul.bf16.gmra.mxu0 %v881
        %v4695 = vpop.f32.mrf.mxu0
        %v4696 = vadd.f32 %v4527, %v4695
        %v4697 = vpop.f32.mrf.mxu0
        %v4698 = vadd.f32 %v4529, %v4697
        %4699 = vmatmul.bf16.gmra.mxu0 %v889
        %v4700 = vpop.f32.mrf.mxu0
        %v4701 = vadd.f32 %v4532, %v4700
        %v4702 = vpop.f32.mrf.mxu0
        %v4703 = vadd.f32 %v4534, %v4702
        %4704 = vmatmul.bf16.gmra.mxu0 %v897
        %v4705 = vpop.f32.mrf.mxu0
        %v4706 = vadd.f32 %v4537, %v4705
        %v4707 = vpop.f32.mrf.mxu0
        %v4708 = vadd.f32 %v4539, %v4707
        %4709 = vmatmul.bf16.gmra.mxu0 %v905
        %v4710 = vpop.f32.mrf.mxu0
        %v4711 = vadd.f32 %v4542, %v4710
        %v4712 = vpop.f32.mrf.mxu0
        %v4713 = vadd.f32 %v4544, %v4712
        %4714 = vmatmul.bf16.gmra.mxu0 %v913
        %v4715 = vpop.f32.mrf.mxu0
        %v4716 = vadd.f32 %v4547, %v4715
        %v4717 = vpop.f32.mrf.mxu0
        %v4718 = vadd.f32 %v4549, %v4717
        %4719 = vmatmul.bf16.gmra.mxu0 %v921
        %v4720 = vpop.f32.mrf.mxu0
        %v4721 = vadd.f32 %v4552, %v4720
        %v4722 = vpop.f32.mrf.mxu0
        %v4723 = vadd.f32 %v4554, %v4722
        %4724 = vmatmul.bf16.gmra.mxu0 %v929
        %v4725 = vpop.f32.mrf.mxu0
        %v4726 = vadd.f32 %v4557, %v4725
        %v4727 = vpop.f32.mrf.mxu0
        %v4728 = vadd.f32 %v4559, %v4727
        %4729 = vmatmul.bf16.gmra.mxu0 %v937
        %v4730 = vpop.f32.mrf.mxu0
        %v4731 = vadd.f32 %v4562, %v4730
        %v4732 = vpop.f32.mrf.mxu0
        %v4733 = vadd.f32 %v4564, %v4732
        %4734 = vmatmul.bf16.gmra.mxu0 %v945
        %v4735 = vpop.f32.mrf.mxu0
        %v4736 = vadd.f32 %v4567, %v4735
        %v4737 = vpop.f32.mrf.mxu0
        %v4738 = vadd.f32 %v4569, %v4737
        %4739 = vmatmul.bf16.gmra.mxu0 %v953
        %v4740 = vpop.f32.mrf.mxu0
        %v4741 = vadd.f32 %v4572, %v4740
        %v4742 = vpop.f32.mrf.mxu0
        %v4743 = vadd.f32 %v4574, %v4742
        %4744 = vmatmul.bf16.gmra.mxu0 %v961
        %v4745 = vpop.f32.mrf.mxu0
        %v4746 = vadd.f32 %v4577, %v4745
        %v4747 = vpop.f32.mrf.mxu0
        %v4748 = vadd.f32 %v4579, %v4747
        %4749 = vmatmul.bf16.gmra.mxu0 %v969
        %v4750 = vpop.f32.mrf.mxu0
        %v4751 = vadd.f32 %v4582, %v4750
        %v4752 = vpop.f32.mrf.mxu0
        %v4753 = vadd.f32 %v4584, %v4752
        %4754 = vmatmul.bf16.gmra.mxu0 %v977
        %v4755 = vpop.f32.mrf.mxu0
        %v4756 = vadd.f32 %v4587, %v4755
        %v4757 = vpop.f32.mrf.mxu0
        %v4758 = vadd.f32 %v4589, %v4757
        %4759 = vmatmul.bf16.gmra.mxu0 %v985
        %v4760 = vpop.f32.mrf.mxu0
        %v4761 = vadd.f32 %v4592, %v4760
        %v4762 = vpop.f32.mrf.mxu0
        %v4763 = vadd.f32 %v4594, %v4762
        %4764 = vmatmul.bf16.gmra.mxu0 %v993
        %v4765 = vpop.f32.mrf.mxu0
        %v4766 = vadd.f32 %v4597, %v4765
        %v4767 = vpop.f32.mrf.mxu0
        %v4768 = vadd.f32 %v4599, %v4767
        %4769 = vmatmul.bf16.gmra.mxu0 %v1001
        %v4770 = vpop.f32.mrf.mxu0
        %v4771 = vadd.f32 %v4602, %v4770
        %v4772 = vpop.f32.mrf.mxu0
        %v4773 = vadd.f32 %v4604, %v4772
        %4774 = vmatmul.bf16.gmra.mxu0 %v1009
        %v4775 = vpop.f32.mrf.mxu0
        %v4776 = vadd.f32 %v4607, %v4775
        %v4777 = vpop.f32.mrf.mxu0
        %v4778 = vadd.f32 %v4609, %v4777
        %4779 = vmatmul.bf16.gmra.mxu0 %v1017
        %v4780 = vpop.f32.mrf.mxu0
        %v4781 = vadd.f32 %v4612, %v4780
        %v4782 = vpop.f32.mrf.mxu0
        %v4783 = vadd.f32 %v4614, %v4782
        %4784 = vmatmul.bf16.gmra.mxu0 %v1025
        %v4785 = vpop.f32.mrf.mxu0
        %v4786 = vadd.f32 %v4617, %v4785
        %v4787 = vpop.f32.mrf.mxu0
        %v4788 = vadd.f32 %v4619, %v4787
        %4789 = vmatmul.bf16.gmra.mxu0 %v1033
        %v4790 = vpop.f32.mrf.mxu0
        %v4791 = vadd.f32 %v4622, %v4790
        %v4792 = vpop.f32.mrf.mxu0
        %v4793 = vadd.f32 %v4624, %v4792
        %4794 = vmatmul.bf16.gmra.mxu0 %v1041
        %v4795 = vpop.f32.mrf.mxu0
        %v4796 = vadd.f32 %v4627, %v4795
        %v4797 = vpop.f32.mrf.mxu0
        %v4798 = vadd.f32 %v4629, %v4797
        %4799 = vmatmul.bf16.gmra.mxu0 %v1049
        %v4800 = vpop.f32.mrf.mxu0
        %v4801 = vadd.f32 %v4632, %v4800
        %v4802 = vpop.f32.mrf.mxu0
        %v4803 = vadd.f32 %v4634, %v4802
        %4804 = vmatmul.bf16.gmra.mxu0 %v1057
        %v4805 = vpop.f32.mrf.mxu0
        %v4806 = vadd.f32 %v4637, %v4805
        %v4807 = vpop.f32.mrf.mxu0
        %v4808 = vadd.f32 %v4639, %v4807
        %4809 = vmatmul.bf16.gmra.mxu0 %v1065
        %v4810 = vpop.f32.mrf.mxu0
        %v4811 = vadd.f32 %v4642, %v4810
        %v4812 = vpop.f32.mrf.mxu0
        %v4813 = vadd.f32 %v4644, %v4812
        %4814 = vmatmul.bf16.gmra.mxu0 %v1073
        %v4815 = vpop.f32.mrf.mxu0
        %v4816 = vadd.f32 %v4647, %v4815
        %v4817 = vpop.f32.mrf.mxu0
        %v4818 = vadd.f32 %v4649, %v4817
        %4819 = vdwg.mxu0
        %4820 = vmatpush.bf16.msra.mxu0 %v2300
        %4821 = vmatpush.bf16.msra.mxu0 %v2296
        %4822 = vmatpush.bf16.msra.mxu0 %v2292
        %4823 = vmatpush.bf16.msra.mxu0 %v2288
        %4824 = vmatpush.bf16.msra.mxu0 %v2284
        %4825 = vmatpush.bf16.msra.mxu0 %v2280
        %4826 = vmatpush.bf16.msra.mxu0 %v2276
        %4827 = vmatpush.bf16.msra.mxu0 %v2272
        %4828 = vmatmul.bf16.gmra.mxu0 %v826
        %v4829 = vpop.f32.mrf.mxu0
        %v4830 = vadd.f32 %v4661, %v4829
        %v4831 = vpop.f32.mrf.mxu0
        %v4832 = vadd.f32 %v4663, %v4831
        %4833 = vmatmul.bf16.gmra.mxu0 %v834
        %v4834 = vpop.f32.mrf.mxu0
        %v4835 = vadd.f32 %v4666, %v4834
        %v4836 = vpop.f32.mrf.mxu0
        %v4837 = vadd.f32 %v4668, %v4836
        %4838 = vmatmul.bf16.gmra.mxu0 %v842
        %v4839 = vpop.f32.mrf.mxu0
        %v4840 = vadd.f32 %v4671, %v4839
        %v4841 = vpop.f32.mrf.mxu0
        %v4842 = vadd.f32 %v4673, %v4841
        %4843 = vmatmul.bf16.gmra.mxu0 %v850
        %v4844 = vpop.f32.mrf.mxu0
        %v4845 = vadd.f32 %v4676, %v4844
        %v4846 = vpop.f32.mrf.mxu0
        %v4847 = vadd.f32 %v4678, %v4846
        %4848 = vmatmul.bf16.gmra.mxu0 %v858
        %v4849 = vpop.f32.mrf.mxu0
        %v4850 = vadd.f32 %v4681, %v4849
        %v4851 = vpop.f32.mrf.mxu0
        %v4852 = vadd.f32 %v4683, %v4851
        %4853 = vmatmul.bf16.gmra.mxu0 %v866
        %v4854 = vpop.f32.mrf.mxu0
        %v4855 = vadd.f32 %v4686, %v4854
        %v4856 = vpop.f32.mrf.mxu0
        %v4857 = vadd.f32 %v4688, %v4856
        %4858 = vmatmul.bf16.gmra.mxu0 %v874
        %v4859 = vpop.f32.mrf.mxu0
        %v4860 = vadd.f32 %v4691, %v4859
        %v4861 = vpop.f32.mrf.mxu0
        %v4862 = vadd.f32 %v4693, %v4861
        %4863 = vmatmul.bf16.gmra.mxu0 %v882
        %v4864 = vpop.f32.mrf.mxu0
        %v4865 = vadd.f32 %v4696, %v4864
        %v4866 = vpop.f32.mrf.mxu0
        %v4867 = vadd.f32 %v4698, %v4866
        %4868 = vmatmul.bf16.gmra.mxu0 %v890
        %v4869 = vpop.f32.mrf.mxu0
        %v4870 = vadd.f32 %v4701, %v4869
        %v4871 = vpop.f32.mrf.mxu0
        %v4872 = vadd.f32 %v4703, %v4871
        %4873 = vmatmul.bf16.gmra.mxu0 %v898
        %v4874 = vpop.f32.mrf.mxu0
        %v4875 = vadd.f32 %v4706, %v4874
        %v4876 = vpop.f32.mrf.mxu0
        %v4877 = vadd.f32 %v4708, %v4876
        %4878 = vmatmul.bf16.gmra.mxu0 %v906
        %v4879 = vpop.f32.mrf.mxu0
        %v4880 = vadd.f32 %v4711, %v4879
        %v4881 = vpop.f32.mrf.mxu0
        %v4882 = vadd.f32 %v4713, %v4881
        %4883 = vmatmul.bf16.gmra.mxu0 %v914
        %v4884 = vpop.f32.mrf.mxu0
        %v4885 = vadd.f32 %v4716, %v4884
        %v4886 = vpop.f32.mrf.mxu0
        %v4887 = vadd.f32 %v4718, %v4886
        %4888 = vmatmul.bf16.gmra.mxu0 %v922
        %v4889 = vpop.f32.mrf.mxu0
        %v4890 = vadd.f32 %v4721, %v4889
        %v4891 = vpop.f32.mrf.mxu0
        %v4892 = vadd.f32 %v4723, %v4891
        %4893 = vmatmul.bf16.gmra.mxu0 %v930
        %v4894 = vpop.f32.mrf.mxu0
        %v4895 = vadd.f32 %v4726, %v4894
        %v4896 = vpop.f32.mrf.mxu0
        %v4897 = vadd.f32 %v4728, %v4896
        %4898 = vmatmul.bf16.gmra.mxu0 %v938
        %v4899 = vpop.f32.mrf.mxu0
        %v4900 = vadd.f32 %v4731, %v4899
        %v4901 = vpop.f32.mrf.mxu0
        %v4902 = vadd.f32 %v4733, %v4901
        %4903 = vmatmul.bf16.gmra.mxu0 %v946
        %v4904 = vpop.f32.mrf.mxu0
        %v4905 = vadd.f32 %v4736, %v4904
        %v4906 = vpop.f32.mrf.mxu0
        %v4907 = vadd.f32 %v4738, %v4906
        %4908 = vmatmul.bf16.gmra.mxu0 %v954
        %v4909 = vpop.f32.mrf.mxu0
        %v4910 = vadd.f32 %v4741, %v4909
        %v4911 = vpop.f32.mrf.mxu0
        %v4912 = vadd.f32 %v4743, %v4911
        %4913 = vmatmul.bf16.gmra.mxu0 %v962
        %v4914 = vpop.f32.mrf.mxu0
        %v4915 = vadd.f32 %v4746, %v4914
        %v4916 = vpop.f32.mrf.mxu0
        %v4917 = vadd.f32 %v4748, %v4916
        %4918 = vmatmul.bf16.gmra.mxu0 %v970
        %v4919 = vpop.f32.mrf.mxu0
        %v4920 = vadd.f32 %v4751, %v4919
        %v4921 = vpop.f32.mrf.mxu0
        %v4922 = vadd.f32 %v4753, %v4921
        %4923 = vmatmul.bf16.gmra.mxu0 %v978
        %v4924 = vpop.f32.mrf.mxu0
        %v4925 = vadd.f32 %v4756, %v4924
        %v4926 = vpop.f32.mrf.mxu0
        %v4927 = vadd.f32 %v4758, %v4926
        %4928 = vmatmul.bf16.gmra.mxu0 %v986
        %v4929 = vpop.f32.mrf.mxu0
        %v4930 = vadd.f32 %v4761, %v4929
        %v4931 = vpop.f32.mrf.mxu0
        %v4932 = vadd.f32 %v4763, %v4931
        %4933 = vmatmul.bf16.gmra.mxu0 %v994
        %v4934 = vpop.f32.mrf.mxu0
        %v4935 = vadd.f32 %v4766, %v4934
        %v4936 = vpop.f32.mrf.mxu0
        %v4937 = vadd.f32 %v4768, %v4936
        %4938 = vmatmul.bf16.gmra.mxu0 %v1002
        %v4939 = vpop.f32.mrf.mxu0
        %v4940 = vadd.f32 %v4771, %v4939
        %v4941 = vpop.f32.mrf.mxu0
        %v4942 = vadd.f32 %v4773, %v4941
        %4943 = vmatmul.bf16.gmra.mxu0 %v1010
        %v4944 = vpop.f32.mrf.mxu0
        %v4945 = vadd.f32 %v4776, %v4944
        %v4946 = vpop.f32.mrf.mxu0
        %v4947 = vadd.f32 %v4778, %v4946
        %4948 = vmatmul.bf16.gmra.mxu0 %v1018
        %v4949 = vpop.f32.mrf.mxu0
        %v4950 = vadd.f32 %v4781, %v4949
        %v4951 = vpop.f32.mrf.mxu0
        %v4952 = vadd.f32 %v4783, %v4951
        %4953 = vmatmul.bf16.gmra.mxu0 %v1026
        %v4954 = vpop.f32.mrf.mxu0
        %v4955 = vadd.f32 %v4786, %v4954
        %v4956 = vpop.f32.mrf.mxu0
        %v4957 = vadd.f32 %v4788, %v4956
        %4958 = vmatmul.bf16.gmra.mxu0 %v1034
        %v4959 = vpop.f32.mrf.mxu0
        %v4960 = vadd.f32 %v4791, %v4959
        %v4961 = vpop.f32.mrf.mxu0
        %v4962 = vadd.f32 %v4793, %v4961
        %4963 = vmatmul.bf16.gmra.mxu0 %v1042
        %v4964 = vpop.f32.mrf.mxu0
        %v4965 = vadd.f32 %v4796, %v4964
        %v4966 = vpop.f32.mrf.mxu0
        %v4967 = vadd.f32 %v4798, %v4966
        %4968 = vmatmul.bf16.gmra.mxu0 %v1050
        %v4969 = vpop.f32.mrf.mxu0
        %v4970 = vadd.f32 %v4801, %v4969
        %v4971 = vpop.f32.mrf.mxu0
        %v4972 = vadd.f32 %v4803, %v4971
        %4973 = vmatmul.bf16.gmra.mxu0 %v1058
        %v4974 = vpop.f32.mrf.mxu0
        %v4975 = vadd.f32 %v4806, %v4974
        %v4976 = vpop.f32.mrf.mxu0
        %v4977 = vadd.f32 %v4808, %v4976
        %4978 = vmatmul.bf16.gmra.mxu0 %v1066
        %v4979 = vpop.f32.mrf.mxu0
        %v4980 = vadd.f32 %v4811, %v4979
        %v4981 = vpop.f32.mrf.mxu0
        %v4982 = vadd.f32 %v4813, %v4981
        %4983 = vmatmul.bf16.gmra.mxu0 %v1074
        %v4984 = vpop.f32.mrf.mxu0
        %v4985 = vadd.f32 %v4816, %v4984
        %v4986 = vpop.f32.mrf.mxu0
        %v4987 = vadd.f32 %v4818, %v4986
        %4988 = vdwg.mxu0
        %4989 = vmatpush.bf16.msra.mxu0 %v2332
        %4990 = vmatpush.bf16.msra.mxu0 %v2328
        %4991 = vmatpush.bf16.msra.mxu0 %v2324
        %4992 = vmatpush.bf16.msra.mxu0 %v2320
        %4993 = vmatpush.bf16.msra.mxu0 %v2316
        %4994 = vmatpush.bf16.msra.mxu0 %v2312
        %4995 = vmatpush.bf16.msra.mxu0 %v2308
        %4996 = vmatpush.bf16.msra.mxu0 %v2304
        %4997 = vmatmul.bf16.gmra.mxu0 %v827
        %v4998 = vpop.f32.mrf.mxu0
        %v4999 = vadd.f32 %v4830, %v4998
        %v5000 = vpop.f32.mrf.mxu0
        %v5001 = vadd.f32 %v4832, %v5000
        %5002 = vmatmul.bf16.gmra.mxu0 %v835
        %v5003 = vpop.f32.mrf.mxu0
        %v5004 = vadd.f32 %v4835, %v5003
        %v5005 = vpop.f32.mrf.mxu0
        %v5006 = vadd.f32 %v4837, %v5005
        %5007 = vmatmul.bf16.gmra.mxu0 %v843
        %v5008 = vpop.f32.mrf.mxu0
        %v5009 = vadd.f32 %v4840, %v5008
        %v5010 = vpop.f32.mrf.mxu0
        %v5011 = vadd.f32 %v4842, %v5010
        %5012 = vmatmul.bf16.gmra.mxu0 %v851
        %v5013 = vpop.f32.mrf.mxu0
        %v5014 = vadd.f32 %v4845, %v5013
        %v5015 = vpop.f32.mrf.mxu0
        %v5016 = vadd.f32 %v4847, %v5015
        %5017 = vmatmul.bf16.gmra.mxu0 %v859
        %v5018 = vpop.f32.mrf.mxu0
        %v5019 = vadd.f32 %v4850, %v5018
        %v5020 = vpop.f32.mrf.mxu0
        %v5021 = vadd.f32 %v4852, %v5020
        %5022 = vmatmul.bf16.gmra.mxu0 %v867
        %v5023 = vpop.f32.mrf.mxu0
        %v5024 = vadd.f32 %v4855, %v5023
        %v5025 = vpop.f32.mrf.mxu0
        %v5026 = vadd.f32 %v4857, %v5025
        %5027 = vmatmul.bf16.gmra.mxu0 %v875
        %v5028 = vpop.f32.mrf.mxu0
        %v5029 = vadd.f32 %v4860, %v5028
        %v5030 = vpop.f32.mrf.mxu0
        %v5031 = vadd.f32 %v4862, %v5030
        %5032 = vmatmul.bf16.gmra.mxu0 %v883
        %v5033 = vpop.f32.mrf.mxu0
        %v5034 = vadd.f32 %v4865, %v5033
        %v5035 = vpop.f32.mrf.mxu0
        %v5036 = vadd.f32 %v4867, %v5035
        %5037 = vmatmul.bf16.gmra.mxu0 %v891
        %v5038 = vpop.f32.mrf.mxu0
        %v5039 = vadd.f32 %v4870, %v5038
        %v5040 = vpop.f32.mrf.mxu0
        %v5041 = vadd.f32 %v4872, %v5040
        %5042 = vmatmul.bf16.gmra.mxu0 %v899
        %v5043 = vpop.f32.mrf.mxu0
        %v5044 = vadd.f32 %v4875, %v5043
        %v5045 = vpop.f32.mrf.mxu0
        %v5046 = vadd.f32 %v4877, %v5045
        %5047 = vmatmul.bf16.gmra.mxu0 %v907
        %v5048 = vpop.f32.mrf.mxu0
        %v5049 = vadd.f32 %v4880, %v5048
        %v5050 = vpop.f32.mrf.mxu0
        %v5051 = vadd.f32 %v4882, %v5050
        %5052 = vmatmul.bf16.gmra.mxu0 %v915
        %v5053 = vpop.f32.mrf.mxu0
        %v5054 = vadd.f32 %v4885, %v5053
        %v5055 = vpop.f32.mrf.mxu0
        %v5056 = vadd.f32 %v4887, %v5055
        %5057 = vmatmul.bf16.gmra.mxu0 %v923
        %v5058 = vpop.f32.mrf.mxu0
        %v5059 = vadd.f32 %v4890, %v5058
        %v5060 = vpop.f32.mrf.mxu0
        %v5061 = vadd.f32 %v4892, %v5060
        %5062 = vmatmul.bf16.gmra.mxu0 %v931
        %v5063 = vpop.f32.mrf.mxu0
        %v5064 = vadd.f32 %v4895, %v5063
        %v5065 = vpop.f32.mrf.mxu0
        %v5066 = vadd.f32 %v4897, %v5065
        %5067 = vmatmul.bf16.gmra.mxu0 %v939
        %v5068 = vpop.f32.mrf.mxu0
        %v5069 = vadd.f32 %v4900, %v5068
        %v5070 = vpop.f32.mrf.mxu0
        %v5071 = vadd.f32 %v4902, %v5070
        %5072 = vmatmul.bf16.gmra.mxu0 %v947
        %v5073 = vpop.f32.mrf.mxu0
        %v5074 = vadd.f32 %v4905, %v5073
        %v5075 = vpop.f32.mrf.mxu0
        %v5076 = vadd.f32 %v4907, %v5075
        %5077 = vmatmul.bf16.gmra.mxu0 %v955
        %v5078 = vpop.f32.mrf.mxu0
        %v5079 = vadd.f32 %v4910, %v5078
        %v5080 = vpop.f32.mrf.mxu0
        %v5081 = vadd.f32 %v4912, %v5080
        %5082 = vmatmul.bf16.gmra.mxu0 %v963
        %v5083 = vpop.f32.mrf.mxu0
        %v5084 = vadd.f32 %v4915, %v5083
        %v5085 = vpop.f32.mrf.mxu0
        %v5086 = vadd.f32 %v4917, %v5085
        %5087 = vmatmul.bf16.gmra.mxu0 %v971
        %v5088 = vpop.f32.mrf.mxu0
        %v5089 = vadd.f32 %v4920, %v5088
        %v5090 = vpop.f32.mrf.mxu0
        %v5091 = vadd.f32 %v4922, %v5090
        %5092 = vmatmul.bf16.gmra.mxu0 %v979
        %v5093 = vpop.f32.mrf.mxu0
        %v5094 = vadd.f32 %v4925, %v5093
        %v5095 = vpop.f32.mrf.mxu0
        %v5096 = vadd.f32 %v4927, %v5095
        %5097 = vmatmul.bf16.gmra.mxu0 %v987
        %v5098 = vpop.f32.mrf.mxu0
        %v5099 = vadd.f32 %v4930, %v5098
        %v5100 = vpop.f32.mrf.mxu0
        %v5101 = vadd.f32 %v4932, %v5100
        %5102 = vmatmul.bf16.gmra.mxu0 %v995
        %v5103 = vpop.f32.mrf.mxu0
        %v5104 = vadd.f32 %v4935, %v5103
        %v5105 = vpop.f32.mrf.mxu0
        %v5106 = vadd.f32 %v4937, %v5105
        %5107 = vmatmul.bf16.gmra.mxu0 %v1003
        %v5108 = vpop.f32.mrf.mxu0
        %v5109 = vadd.f32 %v4940, %v5108
        %v5110 = vpop.f32.mrf.mxu0
        %v5111 = vadd.f32 %v4942, %v5110
        %5112 = vmatmul.bf16.gmra.mxu0 %v1011
        %v5113 = vpop.f32.mrf.mxu0
        %v5114 = vadd.f32 %v4945, %v5113
        %v5115 = vpop.f32.mrf.mxu0
        %v5116 = vadd.f32 %v4947, %v5115
        %5117 = vmatmul.bf16.gmra.mxu0 %v1019
        %v5118 = vpop.f32.mrf.mxu0
        %v5119 = vadd.f32 %v4950, %v5118
        %v5120 = vpop.f32.mrf.mxu0
        %v5121 = vadd.f32 %v4952, %v5120
        %5122 = vmatmul.bf16.gmra.mxu0 %v1027
        %v5123 = vpop.f32.mrf.mxu0
        %v5124 = vadd.f32 %v4955, %v5123
        %v5125 = vpop.f32.mrf.mxu0
        %v5126 = vadd.f32 %v4957, %v5125
        %5127 = vmatmul.bf16.gmra.mxu0 %v1035
        %v5128 = vpop.f32.mrf.mxu0
        %v5129 = vadd.f32 %v4960, %v5128
        %v5130 = vpop.f32.mrf.mxu0
        %v5131 = vadd.f32 %v4962, %v5130
        %5132 = vmatmul.bf16.gmra.mxu0 %v1043
        %v5133 = vpop.f32.mrf.mxu0
        %v5134 = vadd.f32 %v4965, %v5133
        %v5135 = vpop.f32.mrf.mxu0
        %v5136 = vadd.f32 %v4967, %v5135
        %5137 = vmatmul.bf16.gmra.mxu0 %v1051
        %v5138 = vpop.f32.mrf.mxu0
        %v5139 = vadd.f32 %v4970, %v5138
        %v5140 = vpop.f32.mrf.mxu0
        %v5141 = vadd.f32 %v4972, %v5140
        %5142 = vmatmul.bf16.gmra.mxu0 %v1059
        %v5143 = vpop.f32.mrf.mxu0
        %v5144 = vadd.f32 %v4975, %v5143
        %v5145 = vpop.f32.mrf.mxu0
        %v5146 = vadd.f32 %v4977, %v5145
        %5147 = vmatmul.bf16.gmra.mxu0 %v1067
        %v5148 = vpop.f32.mrf.mxu0
        %v5149 = vadd.f32 %v4980, %v5148
        %v5150 = vpop.f32.mrf.mxu0
        %v5151 = vadd.f32 %v4982, %v5150
        %5152 = vmatmul.bf16.gmra.mxu0 %v1075
        %v5153 = vpop.f32.mrf.mxu0
        %v5154 = vadd.f32 %v4985, %v5153
        %v5155 = vpop.f32.mrf.mxu0
        %v5156 = vadd.f32 %v4987, %v5155
        %5157 = vdwg.mxu0
        %5158 = vmatpush.bf16.msra.mxu0 %v2364
        %5159 = vmatpush.bf16.msra.mxu0 %v2360
        %5160 = vmatpush.bf16.msra.mxu0 %v2356
        %5161 = vmatpush.bf16.msra.mxu0 %v2352
        %5162 = vmatpush.bf16.msra.mxu0 %v2348
        %5163 = vmatpush.bf16.msra.mxu0 %v2344
        %5164 = vmatpush.bf16.msra.mxu0 %v2340
        %5165 = vmatpush.bf16.msra.mxu0 %v2336
        %5166 = vmatmul.bf16.gmra.mxu0 %v828
        %v5167 = vpop.f32.mrf.mxu0
        %v5168 = vadd.f32 %v4999, %v5167
        %v5169 = vpop.f32.mrf.mxu0
        %v5170 = vadd.f32 %v5001, %v5169
        %5171 = vmatmul.bf16.gmra.mxu0 %v836
        %v5172 = vpop.f32.mrf.mxu0
        %v5173 = vadd.f32 %v5004, %v5172
        %v5174 = vpop.f32.mrf.mxu0
        %v5175 = vadd.f32 %v5006, %v5174
        %5176 = vmatmul.bf16.gmra.mxu0 %v844
        %v5177 = vpop.f32.mrf.mxu0
        %v5178 = vadd.f32 %v5009, %v5177
        %v5179 = vpop.f32.mrf.mxu0
        %v5180 = vadd.f32 %v5011, %v5179
        %5181 = vmatmul.bf16.gmra.mxu0 %v852
        %v5182 = vpop.f32.mrf.mxu0
        %v5183 = vadd.f32 %v5014, %v5182
        %v5184 = vpop.f32.mrf.mxu0
        %v5185 = vadd.f32 %v5016, %v5184
        %5186 = vmatmul.bf16.gmra.mxu0 %v860
        %v5187 = vpop.f32.mrf.mxu0
        %v5188 = vadd.f32 %v5019, %v5187
        %v5189 = vpop.f32.mrf.mxu0
        %v5190 = vadd.f32 %v5021, %v5189
        %5191 = vmatmul.bf16.gmra.mxu0 %v868
        %v5192 = vpop.f32.mrf.mxu0
        %v5193 = vadd.f32 %v5024, %v5192
        %v5194 = vpop.f32.mrf.mxu0
        %v5195 = vadd.f32 %v5026, %v5194
        %5196 = vmatmul.bf16.gmra.mxu0 %v876
        %v5197 = vpop.f32.mrf.mxu0
        %v5198 = vadd.f32 %v5029, %v5197
        %v5199 = vpop.f32.mrf.mxu0
        %v5200 = vadd.f32 %v5031, %v5199
        %5201 = vmatmul.bf16.gmra.mxu0 %v884
        %v5202 = vpop.f32.mrf.mxu0
        %v5203 = vadd.f32 %v5034, %v5202
        %v5204 = vpop.f32.mrf.mxu0
        %v5205 = vadd.f32 %v5036, %v5204
        %5206 = vmatmul.bf16.gmra.mxu0 %v892
        %v5207 = vpop.f32.mrf.mxu0
        %v5208 = vadd.f32 %v5039, %v5207
        %v5209 = vpop.f32.mrf.mxu0
        %v5210 = vadd.f32 %v5041, %v5209
        %5211 = vmatmul.bf16.gmra.mxu0 %v900
        %v5212 = vpop.f32.mrf.mxu0
        %v5213 = vadd.f32 %v5044, %v5212
        %v5214 = vpop.f32.mrf.mxu0
        %v5215 = vadd.f32 %v5046, %v5214
        %5216 = vmatmul.bf16.gmra.mxu0 %v908
        %v5217 = vpop.f32.mrf.mxu0
        %v5218 = vadd.f32 %v5049, %v5217
        %v5219 = vpop.f32.mrf.mxu0
        %v5220 = vadd.f32 %v5051, %v5219
        %5221 = vmatmul.bf16.gmra.mxu0 %v916
        %v5222 = vpop.f32.mrf.mxu0
        %v5223 = vadd.f32 %v5054, %v5222
        %v5224 = vpop.f32.mrf.mxu0
        %v5225 = vadd.f32 %v5056, %v5224
        %5226 = vmatmul.bf16.gmra.mxu0 %v924
        %v5227 = vpop.f32.mrf.mxu0
        %v5228 = vadd.f32 %v5059, %v5227
        %v5229 = vpop.f32.mrf.mxu0
        %v5230 = vadd.f32 %v5061, %v5229
        %5231 = vmatmul.bf16.gmra.mxu0 %v932
        %v5232 = vpop.f32.mrf.mxu0
        %v5233 = vadd.f32 %v5064, %v5232
        %v5234 = vpop.f32.mrf.mxu0
        %v5235 = vadd.f32 %v5066, %v5234
        %5236 = vmatmul.bf16.gmra.mxu0 %v940
        %v5237 = vpop.f32.mrf.mxu0
        %v5238 = vadd.f32 %v5069, %v5237
        %v5239 = vpop.f32.mrf.mxu0
        %v5240 = vadd.f32 %v5071, %v5239
        %5241 = vmatmul.bf16.gmra.mxu0 %v948
        %v5242 = vpop.f32.mrf.mxu0
        %v5243 = vadd.f32 %v5074, %v5242
        %v5244 = vpop.f32.mrf.mxu0
        %v5245 = vadd.f32 %v5076, %v5244
        %5246 = vmatmul.bf16.gmra.mxu0 %v956
        %v5247 = vpop.f32.mrf.mxu0
        %v5248 = vadd.f32 %v5079, %v5247
        %v5249 = vpop.f32.mrf.mxu0
        %v5250 = vadd.f32 %v5081, %v5249
        %5251 = vmatmul.bf16.gmra.mxu0 %v964
        %v5252 = vpop.f32.mrf.mxu0
        %v5253 = vadd.f32 %v5084, %v5252
        %v5254 = vpop.f32.mrf.mxu0
        %v5255 = vadd.f32 %v5086, %v5254
        %5256 = vmatmul.bf16.gmra.mxu0 %v972
        %v5257 = vpop.f32.mrf.mxu0
        %v5258 = vadd.f32 %v5089, %v5257
        %v5259 = vpop.f32.mrf.mxu0
        %v5260 = vadd.f32 %v5091, %v5259
        %5261 = vmatmul.bf16.gmra.mxu0 %v980
        %v5262 = vpop.f32.mrf.mxu0
        %v5263 = vadd.f32 %v5094, %v5262
        %v5264 = vpop.f32.mrf.mxu0
        %v5265 = vadd.f32 %v5096, %v5264
        %5266 = vmatmul.bf16.gmra.mxu0 %v988
        %v5267 = vpop.f32.mrf.mxu0
        %v5268 = vadd.f32 %v5099, %v5267
        %v5269 = vpop.f32.mrf.mxu0
        %v5270 = vadd.f32 %v5101, %v5269
        %5271 = vmatmul.bf16.gmra.mxu0 %v996
        %v5272 = vpop.f32.mrf.mxu0
        %v5273 = vadd.f32 %v5104, %v5272
        %v5274 = vpop.f32.mrf.mxu0
        %v5275 = vadd.f32 %v5106, %v5274
        %5276 = vmatmul.bf16.gmra.mxu0 %v1004
        %v5277 = vpop.f32.mrf.mxu0
        %v5278 = vadd.f32 %v5109, %v5277
        %v5279 = vpop.f32.mrf.mxu0
        %v5280 = vadd.f32 %v5111, %v5279
        %5281 = vmatmul.bf16.gmra.mxu0 %v1012
        %v5282 = vpop.f32.mrf.mxu0
        %v5283 = vadd.f32 %v5114, %v5282
        %v5284 = vpop.f32.mrf.mxu0
        %v5285 = vadd.f32 %v5116, %v5284
        %5286 = vmatmul.bf16.gmra.mxu0 %v1020
        %v5287 = vpop.f32.mrf.mxu0
        %v5288 = vadd.f32 %v5119, %v5287
        %v5289 = vpop.f32.mrf.mxu0
        %v5290 = vadd.f32 %v5121, %v5289
        %5291 = vmatmul.bf16.gmra.mxu0 %v1028
        %v5292 = vpop.f32.mrf.mxu0
        %v5293 = vadd.f32 %v5124, %v5292
        %v5294 = vpop.f32.mrf.mxu0
        %v5295 = vadd.f32 %v5126, %v5294
        %5296 = vmatmul.bf16.gmra.mxu0 %v1036
        %v5297 = vpop.f32.mrf.mxu0
        %v5298 = vadd.f32 %v5129, %v5297
        %v5299 = vpop.f32.mrf.mxu0
        %v5300 = vadd.f32 %v5131, %v5299
        %5301 = vmatmul.bf16.gmra.mxu0 %v1044
        %v5302 = vpop.f32.mrf.mxu0
        %v5303 = vadd.f32 %v5134, %v5302
        %v5304 = vpop.f32.mrf.mxu0
        %v5305 = vadd.f32 %v5136, %v5304
        %5306 = vmatmul.bf16.gmra.mxu0 %v1052
        %v5307 = vpop.f32.mrf.mxu0
        %v5308 = vadd.f32 %v5139, %v5307
        %v5309 = vpop.f32.mrf.mxu0
        %v5310 = vadd.f32 %v5141, %v5309
        %5311 = vmatmul.bf16.gmra.mxu0 %v1060
        %v5312 = vpop.f32.mrf.mxu0
        %v5313 = vadd.f32 %v5144, %v5312
        %v5314 = vpop.f32.mrf.mxu0
        %v5315 = vadd.f32 %v5146, %v5314
        %5316 = vmatmul.bf16.gmra.mxu0 %v1068
        %v5317 = vpop.f32.mrf.mxu0
        %v5318 = vadd.f32 %v5149, %v5317
        %v5319 = vpop.f32.mrf.mxu0
        %v5320 = vadd.f32 %v5151, %v5319
        %5321 = vmatmul.bf16.gmra.mxu0 %v1076
        %v5322 = vpop.f32.mrf.mxu0
        %v5323 = vadd.f32 %v5154, %v5322
        %v5324 = vpop.f32.mrf.mxu0
        %v5325 = vadd.f32 %v5156, %v5324
        %5326 = vdwg.mxu0
        %5327 = vmatpush.bf16.msra.mxu0 %v2141
        %5328 = vmatpush.bf16.msra.mxu0 %v2137
        %5329 = vmatpush.bf16.msra.mxu0 %v2133
        %5330 = vmatpush.bf16.msra.mxu0 %v2129
        %5331 = vmatpush.bf16.msra.mxu0 %v2125
        %5332 = vmatpush.bf16.msra.mxu0 %v2121
        %5333 = vmatpush.bf16.msra.mxu0 %v2117
        %5334 = vmatpush.bf16.msra.mxu0 %v2113
        %5335 = vmatmul.bf16.gmra.mxu0 %v821
        %v5336 = vpop.f32.mrf.mxu0
        %v5337 = vadd.f32 %v1337, %v5336
        %v5338 = vpop.f32.mrf.mxu0
        %v5339 = vadd.f32 %v1337, %v5338
        %5340 = vmatmul.bf16.gmra.mxu0 %v829
        %v5341 = vpop.f32.mrf.mxu0
        %v5342 = vadd.f32 %v1337, %v5341
        %v5343 = vpop.f32.mrf.mxu0
        %v5344 = vadd.f32 %v1337, %v5343
        %5345 = vmatmul.bf16.gmra.mxu0 %v837
        %v5346 = vpop.f32.mrf.mxu0
        %v5347 = vadd.f32 %v1337, %v5346
        %v5348 = vpop.f32.mrf.mxu0
        %v5349 = vadd.f32 %v1337, %v5348
        %5350 = vmatmul.bf16.gmra.mxu0 %v845
        %v5351 = vpop.f32.mrf.mxu0
        %v5352 = vadd.f32 %v1337, %v5351
        %v5353 = vpop.f32.mrf.mxu0
        %v5354 = vadd.f32 %v1337, %v5353
        %5355 = vmatmul.bf16.gmra.mxu0 %v853
        %v5356 = vpop.f32.mrf.mxu0
        %v5357 = vadd.f32 %v1337, %v5356
        %v5358 = vpop.f32.mrf.mxu0
        %v5359 = vadd.f32 %v1337, %v5358
        %5360 = vmatmul.bf16.gmra.mxu0 %v861
        %v5361 = vpop.f32.mrf.mxu0
        %v5362 = vadd.f32 %v1337, %v5361
        %v5363 = vpop.f32.mrf.mxu0
        %v5364 = vadd.f32 %v1337, %v5363
        %5365 = vmatmul.bf16.gmra.mxu0 %v869
        %v5366 = vpop.f32.mrf.mxu0
        %v5367 = vadd.f32 %v1337, %v5366
        %v5368 = vpop.f32.mrf.mxu0
        %v5369 = vadd.f32 %v1337, %v5368
        %5370 = vmatmul.bf16.gmra.mxu0 %v877
        %v5371 = vpop.f32.mrf.mxu0
        %v5372 = vadd.f32 %v1337, %v5371
        %v5373 = vpop.f32.mrf.mxu0
        %v5374 = vadd.f32 %v1337, %v5373
        %5375 = vmatmul.bf16.gmra.mxu0 %v885
        %v5376 = vpop.f32.mrf.mxu0
        %v5377 = vadd.f32 %v1337, %v5376
        %v5378 = vpop.f32.mrf.mxu0
        %v5379 = vadd.f32 %v1337, %v5378
        %5380 = vmatmul.bf16.gmra.mxu0 %v893
        %v5381 = vpop.f32.mrf.mxu0
        %v5382 = vadd.f32 %v1337, %v5381
        %v5383 = vpop.f32.mrf.mxu0
        %v5384 = vadd.f32 %v1337, %v5383
        %5385 = vmatmul.bf16.gmra.mxu0 %v901
        %v5386 = vpop.f32.mrf.mxu0
        %v5387 = vadd.f32 %v1337, %v5386
        %v5388 = vpop.f32.mrf.mxu0
        %v5389 = vadd.f32 %v1337, %v5388
        %5390 = vmatmul.bf16.gmra.mxu0 %v909
        %v5391 = vpop.f32.mrf.mxu0
        %v5392 = vadd.f32 %v1337, %v5391
        %v5393 = vpop.f32.mrf.mxu0
        %v5394 = vadd.f32 %v1337, %v5393
        %5395 = vmatmul.bf16.gmra.mxu0 %v917
        %v5396 = vpop.f32.mrf.mxu0
        %v5397 = vadd.f32 %v1337, %v5396
        %v5398 = vpop.f32.mrf.mxu0
        %v5399 = vadd.f32 %v1337, %v5398
        %5400 = vmatmul.bf16.gmra.mxu0 %v925
        %v5401 = vpop.f32.mrf.mxu0
        %v5402 = vadd.f32 %v1337, %v5401
        %v5403 = vpop.f32.mrf.mxu0
        %v5404 = vadd.f32 %v1337, %v5403
        %5405 = vmatmul.bf16.gmra.mxu0 %v933
        %v5406 = vpop.f32.mrf.mxu0
        %v5407 = vadd.f32 %v1337, %v5406
        %v5408 = vpop.f32.mrf.mxu0
        %v5409 = vadd.f32 %v1337, %v5408
        %5410 = vmatmul.bf16.gmra.mxu0 %v941
        %v5411 = vpop.f32.mrf.mxu0
        %v5412 = vadd.f32 %v1337, %v5411
        %v5413 = vpop.f32.mrf.mxu0
        %v5414 = vadd.f32 %v1337, %v5413
        %5415 = vmatmul.bf16.gmra.mxu0 %v949
        %v5416 = vpop.f32.mrf.mxu0
        %v5417 = vadd.f32 %v1337, %v5416
        %v5418 = vpop.f32.mrf.mxu0
        %v5419 = vadd.f32 %v1337, %v5418
        %5420 = vmatmul.bf16.gmra.mxu0 %v957
        %v5421 = vpop.f32.mrf.mxu0
        %v5422 = vadd.f32 %v1337, %v5421
        %v5423 = vpop.f32.mrf.mxu0
        %v5424 = vadd.f32 %v1337, %v5423
        %5425 = vmatmul.bf16.gmra.mxu0 %v965
        %v5426 = vpop.f32.mrf.mxu0
        %v5427 = vadd.f32 %v1337, %v5426
        %v5428 = vpop.f32.mrf.mxu0
        %v5429 = vadd.f32 %v1337, %v5428
        %5430 = vmatmul.bf16.gmra.mxu0 %v973
        %v5431 = vpop.f32.mrf.mxu0
        %v5432 = vadd.f32 %v1337, %v5431
        %v5433 = vpop.f32.mrf.mxu0
        %v5434 = vadd.f32 %v1337, %v5433
        %5435 = vmatmul.bf16.gmra.mxu0 %v981
        %v5436 = vpop.f32.mrf.mxu0
        %v5437 = vadd.f32 %v1337, %v5436
        %v5438 = vpop.f32.mrf.mxu0
        %v5439 = vadd.f32 %v1337, %v5438
        %5440 = vmatmul.bf16.gmra.mxu0 %v989
        %v5441 = vpop.f32.mrf.mxu0
        %v5442 = vadd.f32 %v1337, %v5441
        %v5443 = vpop.f32.mrf.mxu0
        %v5444 = vadd.f32 %v1337, %v5443
        %5445 = vmatmul.bf16.gmra.mxu0 %v997
        %v5446 = vpop.f32.mrf.mxu0
        %v5447 = vadd.f32 %v1337, %v5446
        %v5448 = vpop.f32.mrf.mxu0
        %v5449 = vadd.f32 %v1337, %v5448
        %5450 = vmatmul.bf16.gmra.mxu0 %v1005
        %v5451 = vpop.f32.mrf.mxu0
        %v5452 = vadd.f32 %v1337, %v5451
        %v5453 = vpop.f32.mrf.mxu0
        %v5454 = vadd.f32 %v1337, %v5453
        %5455 = vmatmul.bf16.gmra.mxu0 %v1013
        %v5456 = vpop.f32.mrf.mxu0
        %v5457 = vadd.f32 %v1337, %v5456
        %v5458 = vpop.f32.mrf.mxu0
        %v5459 = vadd.f32 %v1337, %v5458
        %5460 = vmatmul.bf16.gmra.mxu0 %v1021
        %v5461 = vpop.f32.mrf.mxu0
        %v5462 = vadd.f32 %v1337, %v5461
        %v5463 = vpop.f32.mrf.mxu0
        %v5464 = vadd.f32 %v1337, %v5463
        %5465 = vmatmul.bf16.gmra.mxu0 %v1029
        %v5466 = vpop.f32.mrf.mxu0
        %v5467 = vadd.f32 %v1337, %v5466
        %v5468 = vpop.f32.mrf.mxu0
        %v5469 = vadd.f32 %v1337, %v5468
        %5470 = vmatmul.bf16.gmra.mxu0 %v1037
        %v5471 = vpop.f32.mrf.mxu0
        %v5472 = vadd.f32 %v1337, %v5471
        %v5473 = vpop.f32.mrf.mxu0
        %v5474 = vadd.f32 %v1337, %v5473
        %5475 = vmatmul.bf16.gmra.mxu0 %v1045
        %v5476 = vpop.f32.mrf.mxu0
        %v5477 = vadd.f32 %v1337, %v5476
        %v5478 = vpop.f32.mrf.mxu0
        %v5479 = vadd.f32 %v1337, %v5478
        %5480 = vmatmul.bf16.gmra.mxu0 %v1053
        %v5481 = vpop.f32.mrf.mxu0
        %v5482 = vadd.f32 %v1337, %v5481
        %v5483 = vpop.f32.mrf.mxu0
        %v5484 = vadd.f32 %v1337, %v5483
        %5485 = vmatmul.bf16.gmra.mxu0 %v1061
        %v5486 = vpop.f32.mrf.mxu0
        %v5487 = vadd.f32 %v1337, %v5486
        %v5488 = vpop.f32.mrf.mxu0
        %v5489 = vadd.f32 %v1337, %v5488
        %5490 = vmatmul.bf16.gmra.mxu0 %v1069
        %v5491 = vpop.f32.mrf.mxu0
        %v5492 = vadd.f32 %v1337, %v5491
        %v5493 = vpop.f32.mrf.mxu0
        %v5494 = vadd.f32 %v1337, %v5493
        %5495 = vdwg.mxu0
        %5496 = vmatpush.bf16.msra.mxu0 %v2173
        %5497 = vmatpush.bf16.msra.mxu0 %v2169
        %5498 = vmatpush.bf16.msra.mxu0 %v2165
        %5499 = vmatpush.bf16.msra.mxu0 %v2161
        %5500 = vmatpush.bf16.msra.mxu0 %v2157
        %5501 = vmatpush.bf16.msra.mxu0 %v2153
        %5502 = vmatpush.bf16.msra.mxu0 %v2149
        %5503 = vmatpush.bf16.msra.mxu0 %v2145
        %5504 = vmatmul.bf16.gmra.mxu0 %v822
        %v5505 = vpop.f32.mrf.mxu0
        %v5506 = vadd.f32 %v5337, %v5505
        %v5507 = vpop.f32.mrf.mxu0
        %v5508 = vadd.f32 %v5339, %v5507
        %5509 = vmatmul.bf16.gmra.mxu0 %v830
        %v5510 = vpop.f32.mrf.mxu0
        %v5511 = vadd.f32 %v5342, %v5510
        %v5512 = vpop.f32.mrf.mxu0
        %v5513 = vadd.f32 %v5344, %v5512
        %5514 = vmatmul.bf16.gmra.mxu0 %v838
        %v5515 = vpop.f32.mrf.mxu0
        %v5516 = vadd.f32 %v5347, %v5515
        %v5517 = vpop.f32.mrf.mxu0
        %v5518 = vadd.f32 %v5349, %v5517
        %5519 = vmatmul.bf16.gmra.mxu0 %v846
        %v5520 = vpop.f32.mrf.mxu0
        %v5521 = vadd.f32 %v5352, %v5520
        %v5522 = vpop.f32.mrf.mxu0
        %v5523 = vadd.f32 %v5354, %v5522
        %5524 = vmatmul.bf16.gmra.mxu0 %v854
        %v5525 = vpop.f32.mrf.mxu0
        %v5526 = vadd.f32 %v5357, %v5525
        %v5527 = vpop.f32.mrf.mxu0
        %v5528 = vadd.f32 %v5359, %v5527
        %5529 = vmatmul.bf16.gmra.mxu0 %v862
        %v5530 = vpop.f32.mrf.mxu0
        %v5531 = vadd.f32 %v5362, %v5530
        %v5532 = vpop.f32.mrf.mxu0
        %v5533 = vadd.f32 %v5364, %v5532
        %5534 = vmatmul.bf16.gmra.mxu0 %v870
        %v5535 = vpop.f32.mrf.mxu0
        %v5536 = vadd.f32 %v5367, %v5535
        %v5537 = vpop.f32.mrf.mxu0
        %v5538 = vadd.f32 %v5369, %v5537
        %5539 = vmatmul.bf16.gmra.mxu0 %v878
        %v5540 = vpop.f32.mrf.mxu0
        %v5541 = vadd.f32 %v5372, %v5540
        %v5542 = vpop.f32.mrf.mxu0
        %v5543 = vadd.f32 %v5374, %v5542
        %5544 = vmatmul.bf16.gmra.mxu0 %v886
        %v5545 = vpop.f32.mrf.mxu0
        %v5546 = vadd.f32 %v5377, %v5545
        %v5547 = vpop.f32.mrf.mxu0
        %v5548 = vadd.f32 %v5379, %v5547
        %5549 = vmatmul.bf16.gmra.mxu0 %v894
        %v5550 = vpop.f32.mrf.mxu0
        %v5551 = vadd.f32 %v5382, %v5550
        %v5552 = vpop.f32.mrf.mxu0
        %v5553 = vadd.f32 %v5384, %v5552
        %5554 = vmatmul.bf16.gmra.mxu0 %v902
        %v5555 = vpop.f32.mrf.mxu0
        %v5556 = vadd.f32 %v5387, %v5555
        %v5557 = vpop.f32.mrf.mxu0
        %v5558 = vadd.f32 %v5389, %v5557
        %5559 = vmatmul.bf16.gmra.mxu0 %v910
        %v5560 = vpop.f32.mrf.mxu0
        %v5561 = vadd.f32 %v5392, %v5560
        %v5562 = vpop.f32.mrf.mxu0
        %v5563 = vadd.f32 %v5394, %v5562
        %5564 = vmatmul.bf16.gmra.mxu0 %v918
        %v5565 = vpop.f32.mrf.mxu0
        %v5566 = vadd.f32 %v5397, %v5565
        %v5567 = vpop.f32.mrf.mxu0
        %v5568 = vadd.f32 %v5399, %v5567
        %5569 = vmatmul.bf16.gmra.mxu0 %v926
        %v5570 = vpop.f32.mrf.mxu0
        %v5571 = vadd.f32 %v5402, %v5570
        %v5572 = vpop.f32.mrf.mxu0
        %v5573 = vadd.f32 %v5404, %v5572
        %5574 = vmatmul.bf16.gmra.mxu0 %v934
        %v5575 = vpop.f32.mrf.mxu0
        %v5576 = vadd.f32 %v5407, %v5575
        %v5577 = vpop.f32.mrf.mxu0
        %v5578 = vadd.f32 %v5409, %v5577
        %5579 = vmatmul.bf16.gmra.mxu0 %v942
        %v5580 = vpop.f32.mrf.mxu0
        %v5581 = vadd.f32 %v5412, %v5580
        %v5582 = vpop.f32.mrf.mxu0
        %v5583 = vadd.f32 %v5414, %v5582
        %5584 = vmatmul.bf16.gmra.mxu0 %v950
        %v5585 = vpop.f32.mrf.mxu0
        %v5586 = vadd.f32 %v5417, %v5585
        %v5587 = vpop.f32.mrf.mxu0
        %v5588 = vadd.f32 %v5419, %v5587
        %5589 = vmatmul.bf16.gmra.mxu0 %v958
        %v5590 = vpop.f32.mrf.mxu0
        %v5591 = vadd.f32 %v5422, %v5590
        %v5592 = vpop.f32.mrf.mxu0
        %v5593 = vadd.f32 %v5424, %v5592
        %5594 = vmatmul.bf16.gmra.mxu0 %v966
        %v5595 = vpop.f32.mrf.mxu0
        %v5596 = vadd.f32 %v5427, %v5595
        %v5597 = vpop.f32.mrf.mxu0
        %v5598 = vadd.f32 %v5429, %v5597
        %5599 = vmatmul.bf16.gmra.mxu0 %v974
        %v5600 = vpop.f32.mrf.mxu0
        %v5601 = vadd.f32 %v5432, %v5600
        %v5602 = vpop.f32.mrf.mxu0
        %v5603 = vadd.f32 %v5434, %v5602
        %5604 = vmatmul.bf16.gmra.mxu0 %v982
        %v5605 = vpop.f32.mrf.mxu0
        %v5606 = vadd.f32 %v5437, %v5605
        %v5607 = vpop.f32.mrf.mxu0
        %v5608 = vadd.f32 %v5439, %v5607
        %5609 = vmatmul.bf16.gmra.mxu0 %v990
        %v5610 = vpop.f32.mrf.mxu0
        %v5611 = vadd.f32 %v5442, %v5610
        %v5612 = vpop.f32.mrf.mxu0
        %v5613 = vadd.f32 %v5444, %v5612
        %5614 = vmatmul.bf16.gmra.mxu0 %v998
        %v5615 = vpop.f32.mrf.mxu0
        %v5616 = vadd.f32 %v5447, %v5615
        %v5617 = vpop.f32.mrf.mxu0
        %v5618 = vadd.f32 %v5449, %v5617
        %5619 = vmatmul.bf16.gmra.mxu0 %v1006
        %v5620 = vpop.f32.mrf.mxu0
        %v5621 = vadd.f32 %v5452, %v5620
        %v5622 = vpop.f32.mrf.mxu0
        %v5623 = vadd.f32 %v5454, %v5622
        %5624 = vmatmul.bf16.gmra.mxu0 %v1014
        %v5625 = vpop.f32.mrf.mxu0
        %v5626 = vadd.f32 %v5457, %v5625
        %v5627 = vpop.f32.mrf.mxu0
        %v5628 = vadd.f32 %v5459, %v5627
        %5629 = vmatmul.bf16.gmra.mxu0 %v1022
        %v5630 = vpop.f32.mrf.mxu0
        %v5631 = vadd.f32 %v5462, %v5630
        %v5632 = vpop.f32.mrf.mxu0
        %v5633 = vadd.f32 %v5464, %v5632
        %5634 = vmatmul.bf16.gmra.mxu0 %v1030
        %v5635 = vpop.f32.mrf.mxu0
        %v5636 = vadd.f32 %v5467, %v5635
        %v5637 = vpop.f32.mrf.mxu0
        %v5638 = vadd.f32 %v5469, %v5637
        %5639 = vmatmul.bf16.gmra.mxu0 %v1038
        %v5640 = vpop.f32.mrf.mxu0
        %v5641 = vadd.f32 %v5472, %v5640
        %v5642 = vpop.f32.mrf.mxu0
        %v5643 = vadd.f32 %v5474, %v5642
        %5644 = vmatmul.bf16.gmra.mxu0 %v1046
        %v5645 = vpop.f32.mrf.mxu0
        %v5646 = vadd.f32 %v5477, %v5645
        %v5647 = vpop.f32.mrf.mxu0
        %v5648 = vadd.f32 %v5479, %v5647
        %5649 = vmatmul.bf16.gmra.mxu0 %v1054
        %v5650 = vpop.f32.mrf.mxu0
        %v5651 = vadd.f32 %v5482, %v5650
        %v5652 = vpop.f32.mrf.mxu0
        %v5653 = vadd.f32 %v5484, %v5652
        %5654 = vmatmul.bf16.gmra.mxu0 %v1062
        %v5655 = vpop.f32.mrf.mxu0
        %v5656 = vadd.f32 %v5487, %v5655
        %v5657 = vpop.f32.mrf.mxu0
        %v5658 = vadd.f32 %v5489, %v5657
        %5659 = vmatmul.bf16.gmra.mxu0 %v1070
        %v5660 = vpop.f32.mrf.mxu0
        %v5661 = vadd.f32 %v5492, %v5660
        %v5662 = vpop.f32.mrf.mxu0
        %v5663 = vadd.f32 %v5494, %v5662
        %5664 = vdwg.mxu0
        %5665 = vmatpush.bf16.msra.mxu0 %v2205
        %5666 = vmatpush.bf16.msra.mxu0 %v2201
        %5667 = vmatpush.bf16.msra.mxu0 %v2197
        %5668 = vmatpush.bf16.msra.mxu0 %v2193
        %5669 = vmatpush.bf16.msra.mxu0 %v2189
        %5670 = vmatpush.bf16.msra.mxu0 %v2185
        %5671 = vmatpush.bf16.msra.mxu0 %v2181
        %5672 = vmatpush.bf16.msra.mxu0 %v2177
        %5673 = vmatmul.bf16.gmra.mxu0 %v823
        %v5674 = vpop.f32.mrf.mxu0
        %v5675 = vadd.f32 %v5506, %v5674
        %v5676 = vpop.f32.mrf.mxu0
        %v5677 = vadd.f32 %v5508, %v5676
        %5678 = vmatmul.bf16.gmra.mxu0 %v831
        %v5679 = vpop.f32.mrf.mxu0
        %v5680 = vadd.f32 %v5511, %v5679
        %v5681 = vpop.f32.mrf.mxu0
        %v5682 = vadd.f32 %v5513, %v5681
        %5683 = vmatmul.bf16.gmra.mxu0 %v839
        %v5684 = vpop.f32.mrf.mxu0
        %v5685 = vadd.f32 %v5516, %v5684
        %v5686 = vpop.f32.mrf.mxu0
        %v5687 = vadd.f32 %v5518, %v5686
        %5688 = vmatmul.bf16.gmra.mxu0 %v847
        %v5689 = vpop.f32.mrf.mxu0
        %v5690 = vadd.f32 %v5521, %v5689
        %v5691 = vpop.f32.mrf.mxu0
        %v5692 = vadd.f32 %v5523, %v5691
        %5693 = vmatmul.bf16.gmra.mxu0 %v855
        %v5694 = vpop.f32.mrf.mxu0
        %v5695 = vadd.f32 %v5526, %v5694
        %v5696 = vpop.f32.mrf.mxu0
        %v5697 = vadd.f32 %v5528, %v5696
        %5698 = vmatmul.bf16.gmra.mxu0 %v863
        %v5699 = vpop.f32.mrf.mxu0
        %v5700 = vadd.f32 %v5531, %v5699
        %v5701 = vpop.f32.mrf.mxu0
        %v5702 = vadd.f32 %v5533, %v5701
        %5703 = vmatmul.bf16.gmra.mxu0 %v871
        %v5704 = vpop.f32.mrf.mxu0
        %v5705 = vadd.f32 %v5536, %v5704
        %v5706 = vpop.f32.mrf.mxu0
        %v5707 = vadd.f32 %v5538, %v5706
        %5708 = vmatmul.bf16.gmra.mxu0 %v879
        %v5709 = vpop.f32.mrf.mxu0
        %v5710 = vadd.f32 %v5541, %v5709
        %v5711 = vpop.f32.mrf.mxu0
        %v5712 = vadd.f32 %v5543, %v5711
        %5713 = vmatmul.bf16.gmra.mxu0 %v887
        %v5714 = vpop.f32.mrf.mxu0
        %v5715 = vadd.f32 %v5546, %v5714
        %v5716 = vpop.f32.mrf.mxu0
        %v5717 = vadd.f32 %v5548, %v5716
        %5718 = vmatmul.bf16.gmra.mxu0 %v895
        %v5719 = vpop.f32.mrf.mxu0
        %v5720 = vadd.f32 %v5551, %v5719
        %v5721 = vpop.f32.mrf.mxu0
        %v5722 = vadd.f32 %v5553, %v5721
        %5723 = vmatmul.bf16.gmra.mxu0 %v903
        %v5724 = vpop.f32.mrf.mxu0
        %v5725 = vadd.f32 %v5556, %v5724
        %v5726 = vpop.f32.mrf.mxu0
        %v5727 = vadd.f32 %v5558, %v5726
        %5728 = vmatmul.bf16.gmra.mxu0 %v911
        %v5729 = vpop.f32.mrf.mxu0
        %v5730 = vadd.f32 %v5561, %v5729
        %v5731 = vpop.f32.mrf.mxu0
        %v5732 = vadd.f32 %v5563, %v5731
        %5733 = vmatmul.bf16.gmra.mxu0 %v919
        %v5734 = vpop.f32.mrf.mxu0
        %v5735 = vadd.f32 %v5566, %v5734
        %v5736 = vpop.f32.mrf.mxu0
        %v5737 = vadd.f32 %v5568, %v5736
        %5738 = vmatmul.bf16.gmra.mxu0 %v927
        %v5739 = vpop.f32.mrf.mxu0
        %v5740 = vadd.f32 %v5571, %v5739
        %v5741 = vpop.f32.mrf.mxu0
        %v5742 = vadd.f32 %v5573, %v5741
        %5743 = vmatmul.bf16.gmra.mxu0 %v935
        %v5744 = vpop.f32.mrf.mxu0
        %v5745 = vadd.f32 %v5576, %v5744
        %v5746 = vpop.f32.mrf.mxu0
        %v5747 = vadd.f32 %v5578, %v5746
        %5748 = vmatmul.bf16.gmra.mxu0 %v943
        %v5749 = vpop.f32.mrf.mxu0
        %v5750 = vadd.f32 %v5581, %v5749
        %v5751 = vpop.f32.mrf.mxu0
        %v5752 = vadd.f32 %v5583, %v5751
        %5753 = vmatmul.bf16.gmra.mxu0 %v951
        %v5754 = vpop.f32.mrf.mxu0
        %v5755 = vadd.f32 %v5586, %v5754
        %v5756 = vpop.f32.mrf.mxu0
        %v5757 = vadd.f32 %v5588, %v5756
        %5758 = vmatmul.bf16.gmra.mxu0 %v959
        %v5759 = vpop.f32.mrf.mxu0
        %v5760 = vadd.f32 %v5591, %v5759
        %v5761 = vpop.f32.mrf.mxu0
        %v5762 = vadd.f32 %v5593, %v5761
        %5763 = vmatmul.bf16.gmra.mxu0 %v967
        %v5764 = vpop.f32.mrf.mxu0
        %v5765 = vadd.f32 %v5596, %v5764
        %v5766 = vpop.f32.mrf.mxu0
        %v5767 = vadd.f32 %v5598, %v5766
        %5768 = vmatmul.bf16.gmra.mxu0 %v975
        %v5769 = vpop.f32.mrf.mxu0
        %v5770 = vadd.f32 %v5601, %v5769
        %v5771 = vpop.f32.mrf.mxu0
        %v5772 = vadd.f32 %v5603, %v5771
        %5773 = vmatmul.bf16.gmra.mxu0 %v983
        %v5774 = vpop.f32.mrf.mxu0
        %v5775 = vadd.f32 %v5606, %v5774
        %v5776 = vpop.f32.mrf.mxu0
        %v5777 = vadd.f32 %v5608, %v5776
        %5778 = vmatmul.bf16.gmra.mxu0 %v991
        %v5779 = vpop.f32.mrf.mxu0
        %v5780 = vadd.f32 %v5611, %v5779
        %v5781 = vpop.f32.mrf.mxu0
        %v5782 = vadd.f32 %v5613, %v5781
        %5783 = vmatmul.bf16.gmra.mxu0 %v999
        %v5784 = vpop.f32.mrf.mxu0
        %v5785 = vadd.f32 %v5616, %v5784
        %v5786 = vpop.f32.mrf.mxu0
        %v5787 = vadd.f32 %v5618, %v5786
        %5788 = vmatmul.bf16.gmra.mxu0 %v1007
        %v5789 = vpop.f32.mrf.mxu0
        %v5790 = vadd.f32 %v5621, %v5789
        %v5791 = vpop.f32.mrf.mxu0
        %v5792 = vadd.f32 %v5623, %v5791
        %5793 = vmatmul.bf16.gmra.mxu0 %v1015
        %v5794 = vpop.f32.mrf.mxu0
        %v5795 = vadd.f32 %v5626, %v5794
        %v5796 = vpop.f32.mrf.mxu0
        %v5797 = vadd.f32 %v5628, %v5796
        %5798 = vmatmul.bf16.gmra.mxu0 %v1023
        %v5799 = vpop.f32.mrf.mxu0
        %v5800 = vadd.f32 %v5631, %v5799
        %v5801 = vpop.f32.mrf.mxu0
        %v5802 = vadd.f32 %v5633, %v5801
        %5803 = vmatmul.bf16.gmra.mxu0 %v1031
        %v5804 = vpop.f32.mrf.mxu0
        %v5805 = vadd.f32 %v5636, %v5804
        %v5806 = vpop.f32.mrf.mxu0
        %v5807 = vadd.f32 %v5638, %v5806
        %5808 = vmatmul.bf16.gmra.mxu0 %v1039
        %v5809 = vpop.f32.mrf.mxu0
        %v5810 = vadd.f32 %v5641, %v5809
        %v5811 = vpop.f32.mrf.mxu0
        %v5812 = vadd.f32 %v5643, %v5811
        %5813 = vmatmul.bf16.gmra.mxu0 %v1047
        %v5814 = vpop.f32.mrf.mxu0
        %v5815 = vadd.f32 %v5646, %v5814
        %v5816 = vpop.f32.mrf.mxu0
        %v5817 = vadd.f32 %v5648, %v5816
        %5818 = vmatmul.bf16.gmra.mxu0 %v1055
        %v5819 = vpop.f32.mrf.mxu0
        %v5820 = vadd.f32 %v5651, %v5819
        %v5821 = vpop.f32.mrf.mxu0
        %v5822 = vadd.f32 %v5653, %v5821
        %5823 = vmatmul.bf16.gmra.mxu0 %v1063
        %v5824 = vpop.f32.mrf.mxu0
        %v5825 = vadd.f32 %v5656, %v5824
        %v5826 = vpop.f32.mrf.mxu0
        %v5827 = vadd.f32 %v5658, %v5826
        %5828 = vmatmul.bf16.gmra.mxu0 %v1071
        %v5829 = vpop.f32.mrf.mxu0
        %v5830 = vadd.f32 %v5661, %v5829
        %v5831 = vpop.f32.mrf.mxu0
        %v5832 = vadd.f32 %v5663, %v5831
        %5833 = vdwg.mxu0
        %5834 = vmatpush.bf16.msra.mxu0 %v2237
        %5835 = vmatpush.bf16.msra.mxu0 %v2233
        %5836 = vmatpush.bf16.msra.mxu0 %v2229
        %5837 = vmatpush.bf16.msra.mxu0 %v2225
        %5838 = vmatpush.bf16.msra.mxu0 %v2221
        %5839 = vmatpush.bf16.msra.mxu0 %v2217
        %5840 = vmatpush.bf16.msra.mxu0 %v2213
        %5841 = vmatpush.bf16.msra.mxu0 %v2209
        %5842 = vmatmul.bf16.gmra.mxu0 %v824
        %v5843 = vpop.f32.mrf.mxu0
        %v5844 = vadd.f32 %v5675, %v5843
        %v5845 = vpop.f32.mrf.mxu0
        %v5846 = vadd.f32 %v5677, %v5845
        %5847 = vmatmul.bf16.gmra.mxu0 %v832
        %v5848 = vpop.f32.mrf.mxu0
        %v5849 = vadd.f32 %v5680, %v5848
        %v5850 = vpop.f32.mrf.mxu0
        %v5851 = vadd.f32 %v5682, %v5850
        %5852 = vmatmul.bf16.gmra.mxu0 %v840
        %v5853 = vpop.f32.mrf.mxu0
        %v5854 = vadd.f32 %v5685, %v5853
        %v5855 = vpop.f32.mrf.mxu0
        %v5856 = vadd.f32 %v5687, %v5855
        %5857 = vmatmul.bf16.gmra.mxu0 %v848
        %v5858 = vpop.f32.mrf.mxu0
        %v5859 = vadd.f32 %v5690, %v5858
        %v5860 = vpop.f32.mrf.mxu0
        %v5861 = vadd.f32 %v5692, %v5860
        %5862 = vmatmul.bf16.gmra.mxu0 %v856
        %v5863 = vpop.f32.mrf.mxu0
        %v5864 = vadd.f32 %v5695, %v5863
        %v5865 = vpop.f32.mrf.mxu0
        %v5866 = vadd.f32 %v5697, %v5865
        %5867 = vmatmul.bf16.gmra.mxu0 %v864
        %v5868 = vpop.f32.mrf.mxu0
        %v5869 = vadd.f32 %v5700, %v5868
        %v5870 = vpop.f32.mrf.mxu0
        %v5871 = vadd.f32 %v5702, %v5870
        %5872 = vmatmul.bf16.gmra.mxu0 %v872
        %v5873 = vpop.f32.mrf.mxu0
        %v5874 = vadd.f32 %v5705, %v5873
        %v5875 = vpop.f32.mrf.mxu0
        %v5876 = vadd.f32 %v5707, %v5875
        %5877 = vmatmul.bf16.gmra.mxu0 %v880
        %v5878 = vpop.f32.mrf.mxu0
        %v5879 = vadd.f32 %v5710, %v5878
        %v5880 = vpop.f32.mrf.mxu0
        %v5881 = vadd.f32 %v5712, %v5880
        %5882 = vmatmul.bf16.gmra.mxu0 %v888
        %v5883 = vpop.f32.mrf.mxu0
        %v5884 = vadd.f32 %v5715, %v5883
        %v5885 = vpop.f32.mrf.mxu0
        %v5886 = vadd.f32 %v5717, %v5885
        %5887 = vmatmul.bf16.gmra.mxu0 %v896
        %v5888 = vpop.f32.mrf.mxu0
        %v5889 = vadd.f32 %v5720, %v5888
        %v5890 = vpop.f32.mrf.mxu0
        %v5891 = vadd.f32 %v5722, %v5890
        %5892 = vmatmul.bf16.gmra.mxu0 %v904
        %v5893 = vpop.f32.mrf.mxu0
        %v5894 = vadd.f32 %v5725, %v5893
        %v5895 = vpop.f32.mrf.mxu0
        %v5896 = vadd.f32 %v5727, %v5895
        %5897 = vmatmul.bf16.gmra.mxu0 %v912
        %v5898 = vpop.f32.mrf.mxu0
        %v5899 = vadd.f32 %v5730, %v5898
        %v5900 = vpop.f32.mrf.mxu0
        %v5901 = vadd.f32 %v5732, %v5900
        %5902 = vmatmul.bf16.gmra.mxu0 %v920
        %v5903 = vpop.f32.mrf.mxu0
        %v5904 = vadd.f32 %v5735, %v5903
        %v5905 = vpop.f32.mrf.mxu0
        %v5906 = vadd.f32 %v5737, %v5905
        %5907 = vmatmul.bf16.gmra.mxu0 %v928
        %v5908 = vpop.f32.mrf.mxu0
        %v5909 = vadd.f32 %v5740, %v5908
        %v5910 = vpop.f32.mrf.mxu0
        %v5911 = vadd.f32 %v5742, %v5910
        %5912 = vmatmul.bf16.gmra.mxu0 %v936
        %v5913 = vpop.f32.mrf.mxu0
        %v5914 = vadd.f32 %v5745, %v5913
        %v5915 = vpop.f32.mrf.mxu0
        %v5916 = vadd.f32 %v5747, %v5915
        %5917 = vmatmul.bf16.gmra.mxu0 %v944
        %v5918 = vpop.f32.mrf.mxu0
        %v5919 = vadd.f32 %v5750, %v5918
        %v5920 = vpop.f32.mrf.mxu0
        %v5921 = vadd.f32 %v5752, %v5920
        %5922 = vmatmul.bf16.gmra.mxu0 %v952
        %v5923 = vpop.f32.mrf.mxu0
        %v5924 = vadd.f32 %v5755, %v5923
        %v5925 = vpop.f32.mrf.mxu0
        %v5926 = vadd.f32 %v5757, %v5925
        %5927 = vmatmul.bf16.gmra.mxu0 %v960
        %v5928 = vpop.f32.mrf.mxu0
        %v5929 = vadd.f32 %v5760, %v5928
        %v5930 = vpop.f32.mrf.mxu0
        %v5931 = vadd.f32 %v5762, %v5930
        %5932 = vmatmul.bf16.gmra.mxu0 %v968
        %v5933 = vpop.f32.mrf.mxu0
        %v5934 = vadd.f32 %v5765, %v5933
        %v5935 = vpop.f32.mrf.mxu0
        %v5936 = vadd.f32 %v5767, %v5935
        %5937 = vmatmul.bf16.gmra.mxu0 %v976
        %v5938 = vpop.f32.mrf.mxu0
        %v5939 = vadd.f32 %v5770, %v5938
        %v5940 = vpop.f32.mrf.mxu0
        %v5941 = vadd.f32 %v5772, %v5940
        %5942 = vmatmul.bf16.gmra.mxu0 %v984
        %v5943 = vpop.f32.mrf.mxu0
        %v5944 = vadd.f32 %v5775, %v5943
        %v5945 = vpop.f32.mrf.mxu0
        %v5946 = vadd.f32 %v5777, %v5945
        %5947 = vmatmul.bf16.gmra.mxu0 %v992
        %v5948 = vpop.f32.mrf.mxu0
        %v5949 = vadd.f32 %v5780, %v5948
        %v5950 = vpop.f32.mrf.mxu0
        %v5951 = vadd.f32 %v5782, %v5950
        %5952 = vmatmul.bf16.gmra.mxu0 %v1000
        %v5953 = vpop.f32.mrf.mxu0
        %v5954 = vadd.f32 %v5785, %v5953
        %v5955 = vpop.f32.mrf.mxu0
        %v5956 = vadd.f32 %v5787, %v5955
        %5957 = vmatmul.bf16.gmra.mxu0 %v1008
        %v5958 = vpop.f32.mrf.mxu0
        %v5959 = vadd.f32 %v5790, %v5958
        %v5960 = vpop.f32.mrf.mxu0
        %v5961 = vadd.f32 %v5792, %v5960
        %5962 = vmatmul.bf16.gmra.mxu0 %v1016
        %v5963 = vpop.f32.mrf.mxu0
        %v5964 = vadd.f32 %v5795, %v5963
        %v5965 = vpop.f32.mrf.mxu0
        %v5966 = vadd.f32 %v5797, %v5965
        %5967 = vmatmul.bf16.gmra.mxu0 %v1024
        %v5968 = vpop.f32.mrf.mxu0
        %v5969 = vadd.f32 %v5800, %v5968
        %v5970 = vpop.f32.mrf.mxu0
        %v5971 = vadd.f32 %v5802, %v5970
        %5972 = vmatmul.bf16.gmra.mxu0 %v1032
        %v5973 = vpop.f32.mrf.mxu0
        %v5974 = vadd.f32 %v5805, %v5973
        %v5975 = vpop.f32.mrf.mxu0
        %v5976 = vadd.f32 %v5807, %v5975
        %5977 = vmatmul.bf16.gmra.mxu0 %v1040
        %v5978 = vpop.f32.mrf.mxu0
        %v5979 = vadd.f32 %v5810, %v5978
        %v5980 = vpop.f32.mrf.mxu0
        %v5981 = vadd.f32 %v5812, %v5980
        %5982 = vmatmul.bf16.gmra.mxu0 %v1048
        %v5983 = vpop.f32.mrf.mxu0
        %v5984 = vadd.f32 %v5815, %v5983
        %v5985 = vpop.f32.mrf.mxu0
        %v5986 = vadd.f32 %v5817, %v5985
        %5987 = vmatmul.bf16.gmra.mxu0 %v1056
        %v5988 = vpop.f32.mrf.mxu0
        %v5989 = vadd.f32 %v5820, %v5988
        %v5990 = vpop.f32.mrf.mxu0
        %v5991 = vadd.f32 %v5822, %v5990
        %5992 = vmatmul.bf16.gmra.mxu0 %v1064
        %v5993 = vpop.f32.mrf.mxu0
        %v5994 = vadd.f32 %v5825, %v5993
        %v5995 = vpop.f32.mrf.mxu0
        %v5996 = vadd.f32 %v5827, %v5995
        %5997 = vmatmul.bf16.gmra.mxu0 %v1072
        %v5998 = vpop.f32.mrf.mxu0
        %v5999 = vadd.f32 %v5830, %v5998
        %v6000 = vpop.f32.mrf.mxu0
        %v6001 = vadd.f32 %v5832, %v6000
        %6002 = vdwg.mxu0
        %6003 = vmatpush.bf16.msra.mxu0 %v2269
        %6004 = vmatpush.bf16.msra.mxu0 %v2265
        %6005 = vmatpush.bf16.msra.mxu0 %v2261
        %6006 = vmatpush.bf16.msra.mxu0 %v2257
        %6007 = vmatpush.bf16.msra.mxu0 %v2253
        %6008 = vmatpush.bf16.msra.mxu0 %v2249
        %6009 = vmatpush.bf16.msra.mxu0 %v2245
        %6010 = vmatpush.bf16.msra.mxu0 %v2241
        %6011 = vmatmul.bf16.gmra.mxu0 %v825
        %v6012 = vpop.f32.mrf.mxu0
        %v6013 = vadd.f32 %v5844, %v6012
        %v6014 = vpop.f32.mrf.mxu0
        %v6015 = vadd.f32 %v5846, %v6014
        %6016 = vmatmul.bf16.gmra.mxu0 %v833
        %v6017 = vpop.f32.mrf.mxu0
        %v6018 = vadd.f32 %v5849, %v6017
        %v6019 = vpop.f32.mrf.mxu0
        %v6020 = vadd.f32 %v5851, %v6019
        %6021 = vmatmul.bf16.gmra.mxu0 %v841
        %v6022 = vpop.f32.mrf.mxu0
        %v6023 = vadd.f32 %v5854, %v6022
        %v6024 = vpop.f32.mrf.mxu0
        %v6025 = vadd.f32 %v5856, %v6024
        %6026 = vmatmul.bf16.gmra.mxu0 %v849
        %v6027 = vpop.f32.mrf.mxu0
        %v6028 = vadd.f32 %v5859, %v6027
        %v6029 = vpop.f32.mrf.mxu0
        %v6030 = vadd.f32 %v5861, %v6029
        %6031 = vmatmul.bf16.gmra.mxu0 %v857
        %v6032 = vpop.f32.mrf.mxu0
        %v6033 = vadd.f32 %v5864, %v6032
        %v6034 = vpop.f32.mrf.mxu0
        %v6035 = vadd.f32 %v5866, %v6034
        %6036 = vmatmul.bf16.gmra.mxu0 %v865
        %v6037 = vpop.f32.mrf.mxu0
        %v6038 = vadd.f32 %v5869, %v6037
        %v6039 = vpop.f32.mrf.mxu0
        %v6040 = vadd.f32 %v5871, %v6039
        %6041 = vmatmul.bf16.gmra.mxu0 %v873
        %v6042 = vpop.f32.mrf.mxu0
        %v6043 = vadd.f32 %v5874, %v6042
        %v6044 = vpop.f32.mrf.mxu0
        %v6045 = vadd.f32 %v5876, %v6044
        %6046 = vmatmul.bf16.gmra.mxu0 %v881
        %v6047 = vpop.f32.mrf.mxu0
        %v6048 = vadd.f32 %v5879, %v6047
        %v6049 = vpop.f32.mrf.mxu0
        %v6050 = vadd.f32 %v5881, %v6049
        %6051 = vmatmul.bf16.gmra.mxu0 %v889
        %v6052 = vpop.f32.mrf.mxu0
        %v6053 = vadd.f32 %v5884, %v6052
        %v6054 = vpop.f32.mrf.mxu0
        %v6055 = vadd.f32 %v5886, %v6054
        %6056 = vmatmul.bf16.gmra.mxu0 %v897
        %v6057 = vpop.f32.mrf.mxu0
        %v6058 = vadd.f32 %v5889, %v6057
        %v6059 = vpop.f32.mrf.mxu0
        %v6060 = vadd.f32 %v5891, %v6059
        %6061 = vmatmul.bf16.gmra.mxu0 %v905
        %v6062 = vpop.f32.mrf.mxu0
        %v6063 = vadd.f32 %v5894, %v6062
        %v6064 = vpop.f32.mrf.mxu0
        %v6065 = vadd.f32 %v5896, %v6064
        %6066 = vmatmul.bf16.gmra.mxu0 %v913
        %v6067 = vpop.f32.mrf.mxu0
        %v6068 = vadd.f32 %v5899, %v6067
        %v6069 = vpop.f32.mrf.mxu0
        %v6070 = vadd.f32 %v5901, %v6069
        %6071 = vmatmul.bf16.gmra.mxu0 %v921
        %v6072 = vpop.f32.mrf.mxu0
        %v6073 = vadd.f32 %v5904, %v6072
        %v6074 = vpop.f32.mrf.mxu0
        %v6075 = vadd.f32 %v5906, %v6074
        %6076 = vmatmul.bf16.gmra.mxu0 %v929
        %v6077 = vpop.f32.mrf.mxu0
        %v6078 = vadd.f32 %v5909, %v6077
        %v6079 = vpop.f32.mrf.mxu0
        %v6080 = vadd.f32 %v5911, %v6079
        %6081 = vmatmul.bf16.gmra.mxu0 %v937
        %v6082 = vpop.f32.mrf.mxu0
        %v6083 = vadd.f32 %v5914, %v6082
        %v6084 = vpop.f32.mrf.mxu0
        %v6085 = vadd.f32 %v5916, %v6084
        %6086 = vmatmul.bf16.gmra.mxu0 %v945
        %v6087 = vpop.f32.mrf.mxu0
        %v6088 = vadd.f32 %v5919, %v6087
        %v6089 = vpop.f32.mrf.mxu0
        %v6090 = vadd.f32 %v5921, %v6089
        %6091 = vmatmul.bf16.gmra.mxu0 %v953
        %v6092 = vpop.f32.mrf.mxu0
        %v6093 = vadd.f32 %v5924, %v6092
        %v6094 = vpop.f32.mrf.mxu0
        %v6095 = vadd.f32 %v5926, %v6094
        %6096 = vmatmul.bf16.gmra.mxu0 %v961
        %v6097 = vpop.f32.mrf.mxu0
        %v6098 = vadd.f32 %v5929, %v6097
        %v6099 = vpop.f32.mrf.mxu0
        %v6100 = vadd.f32 %v5931, %v6099
        %6101 = vmatmul.bf16.gmra.mxu0 %v969
        %v6102 = vpop.f32.mrf.mxu0
        %v6103 = vadd.f32 %v5934, %v6102
        %v6104 = vpop.f32.mrf.mxu0
        %v6105 = vadd.f32 %v5936, %v6104
        %6106 = vmatmul.bf16.gmra.mxu0 %v977
        %v6107 = vpop.f32.mrf.mxu0
        %v6108 = vadd.f32 %v5939, %v6107
        %v6109 = vpop.f32.mrf.mxu0
        %v6110 = vadd.f32 %v5941, %v6109
        %6111 = vmatmul.bf16.gmra.mxu0 %v985
        %v6112 = vpop.f32.mrf.mxu0
        %v6113 = vadd.f32 %v5944, %v6112
        %v6114 = vpop.f32.mrf.mxu0
        %v6115 = vadd.f32 %v5946, %v6114
        %6116 = vmatmul.bf16.gmra.mxu0 %v993
        %v6117 = vpop.f32.mrf.mxu0
        %v6118 = vadd.f32 %v5949, %v6117
        %v6119 = vpop.f32.mrf.mxu0
        %v6120 = vadd.f32 %v5951, %v6119
        %6121 = vmatmul.bf16.gmra.mxu0 %v1001
        %v6122 = vpop.f32.mrf.mxu0
        %v6123 = vadd.f32 %v5954, %v6122
        %v6124 = vpop.f32.mrf.mxu0
        %v6125 = vadd.f32 %v5956, %v6124
        %6126 = vmatmul.bf16.gmra.mxu0 %v1009
        %v6127 = vpop.f32.mrf.mxu0
        %v6128 = vadd.f32 %v5959, %v6127
        %v6129 = vpop.f32.mrf.mxu0
        %v6130 = vadd.f32 %v5961, %v6129
        %6131 = vmatmul.bf16.gmra.mxu0 %v1017
        %v6132 = vpop.f32.mrf.mxu0
        %v6133 = vadd.f32 %v5964, %v6132
        %v6134 = vpop.f32.mrf.mxu0
        %v6135 = vadd.f32 %v5966, %v6134
        %6136 = vmatmul.bf16.gmra.mxu0 %v1025
        %v6137 = vpop.f32.mrf.mxu0
        %v6138 = vadd.f32 %v5969, %v6137
        %v6139 = vpop.f32.mrf.mxu0
        %v6140 = vadd.f32 %v5971, %v6139
        %6141 = vmatmul.bf16.gmra.mxu0 %v1033
        %v6142 = vpop.f32.mrf.mxu0
        %v6143 = vadd.f32 %v5974, %v6142
        %v6144 = vpop.f32.mrf.mxu0
        %v6145 = vadd.f32 %v5976, %v6144
        %6146 = vmatmul.bf16.gmra.mxu0 %v1041
        %v6147 = vpop.f32.mrf.mxu0
        %v6148 = vadd.f32 %v5979, %v6147
        %v6149 = vpop.f32.mrf.mxu0
        %v6150 = vadd.f32 %v5981, %v6149
        %6151 = vmatmul.bf16.gmra.mxu0 %v1049
        %v6152 = vpop.f32.mrf.mxu0
        %v6153 = vadd.f32 %v5984, %v6152
        %v6154 = vpop.f32.mrf.mxu0
        %v6155 = vadd.f32 %v5986, %v6154
        %6156 = vmatmul.bf16.gmra.mxu0 %v1057
        %v6157 = vpop.f32.mrf.mxu0
        %v6158 = vadd.f32 %v5989, %v6157
        %v6159 = vpop.f32.mrf.mxu0
        %v6160 = vadd.f32 %v5991, %v6159
        %6161 = vmatmul.bf16.gmra.mxu0 %v1065
        %v6162 = vpop.f32.mrf.mxu0
        %v6163 = vadd.f32 %v5994, %v6162
        %v6164 = vpop.f32.mrf.mxu0
        %v6165 = vadd.f32 %v5996, %v6164
        %6166 = vmatmul.bf16.gmra.mxu0 %v1073
        %v6167 = vpop.f32.mrf.mxu0
        %v6168 = vadd.f32 %v5999, %v6167
        %v6169 = vpop.f32.mrf.mxu0
        %v6170 = vadd.f32 %v6001, %v6169
        %6171 = vdwg.mxu0
        %6172 = vmatpush.bf16.msra.mxu0 %v2301
        %6173 = vmatpush.bf16.msra.mxu0 %v2297
        %6174 = vmatpush.bf16.msra.mxu0 %v2293
        %6175 = vmatpush.bf16.msra.mxu0 %v2289
        %6176 = vmatpush.bf16.msra.mxu0 %v2285
        %6177 = vmatpush.bf16.msra.mxu0 %v2281
        %6178 = vmatpush.bf16.msra.mxu0 %v2277
        %6179 = vmatpush.bf16.msra.mxu0 %v2273
        %6180 = vmatmul.bf16.gmra.mxu0 %v826
        %v6181 = vpop.f32.mrf.mxu0
        %v6182 = vadd.f32 %v6013, %v6181
        %v6183 = vpop.f32.mrf.mxu0
        %v6184 = vadd.f32 %v6015, %v6183
        %6185 = vmatmul.bf16.gmra.mxu0 %v834
        %v6186 = vpop.f32.mrf.mxu0
        %v6187 = vadd.f32 %v6018, %v6186
        %v6188 = vpop.f32.mrf.mxu0
        %v6189 = vadd.f32 %v6020, %v6188
        %6190 = vmatmul.bf16.gmra.mxu0 %v842
        %v6191 = vpop.f32.mrf.mxu0
        %v6192 = vadd.f32 %v6023, %v6191
        %v6193 = vpop.f32.mrf.mxu0
        %v6194 = vadd.f32 %v6025, %v6193
        %6195 = vmatmul.bf16.gmra.mxu0 %v850
        %v6196 = vpop.f32.mrf.mxu0
        %v6197 = vadd.f32 %v6028, %v6196
        %v6198 = vpop.f32.mrf.mxu0
        %v6199 = vadd.f32 %v6030, %v6198
        %6200 = vmatmul.bf16.gmra.mxu0 %v858
        %v6201 = vpop.f32.mrf.mxu0
        %v6202 = vadd.f32 %v6033, %v6201
        %v6203 = vpop.f32.mrf.mxu0
        %v6204 = vadd.f32 %v6035, %v6203
        %6205 = vmatmul.bf16.gmra.mxu0 %v866
        %v6206 = vpop.f32.mrf.mxu0
        %v6207 = vadd.f32 %v6038, %v6206
        %v6208 = vpop.f32.mrf.mxu0
        %v6209 = vadd.f32 %v6040, %v6208
        %6210 = vmatmul.bf16.gmra.mxu0 %v874
        %v6211 = vpop.f32.mrf.mxu0
        %v6212 = vadd.f32 %v6043, %v6211
        %v6213 = vpop.f32.mrf.mxu0
        %v6214 = vadd.f32 %v6045, %v6213
        %6215 = vmatmul.bf16.gmra.mxu0 %v882
        %v6216 = vpop.f32.mrf.mxu0
        %v6217 = vadd.f32 %v6048, %v6216
        %v6218 = vpop.f32.mrf.mxu0
        %v6219 = vadd.f32 %v6050, %v6218
        %6220 = vmatmul.bf16.gmra.mxu0 %v890
        %v6221 = vpop.f32.mrf.mxu0
        %v6222 = vadd.f32 %v6053, %v6221
        %v6223 = vpop.f32.mrf.mxu0
        %v6224 = vadd.f32 %v6055, %v6223
        %6225 = vmatmul.bf16.gmra.mxu0 %v898
        %v6226 = vpop.f32.mrf.mxu0
        %v6227 = vadd.f32 %v6058, %v6226
        %v6228 = vpop.f32.mrf.mxu0
        %v6229 = vadd.f32 %v6060, %v6228
        %6230 = vmatmul.bf16.gmra.mxu0 %v906
        %v6231 = vpop.f32.mrf.mxu0
        %v6232 = vadd.f32 %v6063, %v6231
        %v6233 = vpop.f32.mrf.mxu0
        %v6234 = vadd.f32 %v6065, %v6233
        %6235 = vmatmul.bf16.gmra.mxu0 %v914
        %v6236 = vpop.f32.mrf.mxu0
        %v6237 = vadd.f32 %v6068, %v6236
        %v6238 = vpop.f32.mrf.mxu0
        %v6239 = vadd.f32 %v6070, %v6238
        %6240 = vmatmul.bf16.gmra.mxu0 %v922
        %v6241 = vpop.f32.mrf.mxu0
        %v6242 = vadd.f32 %v6073, %v6241
        %v6243 = vpop.f32.mrf.mxu0
        %v6244 = vadd.f32 %v6075, %v6243
        %6245 = vmatmul.bf16.gmra.mxu0 %v930
        %v6246 = vpop.f32.mrf.mxu0
        %v6247 = vadd.f32 %v6078, %v6246
        %v6248 = vpop.f32.mrf.mxu0
        %v6249 = vadd.f32 %v6080, %v6248
        %6250 = vmatmul.bf16.gmra.mxu0 %v938
        %v6251 = vpop.f32.mrf.mxu0
        %v6252 = vadd.f32 %v6083, %v6251
        %v6253 = vpop.f32.mrf.mxu0
        %v6254 = vadd.f32 %v6085, %v6253
        %6255 = vmatmul.bf16.gmra.mxu0 %v946
        %v6256 = vpop.f32.mrf.mxu0
        %v6257 = vadd.f32 %v6088, %v6256
        %v6258 = vpop.f32.mrf.mxu0
        %v6259 = vadd.f32 %v6090, %v6258
        %6260 = vmatmul.bf16.gmra.mxu0 %v954
        %v6261 = vpop.f32.mrf.mxu0
        %v6262 = vadd.f32 %v6093, %v6261
        %v6263 = vpop.f32.mrf.mxu0
        %v6264 = vadd.f32 %v6095, %v6263
        %6265 = vmatmul.bf16.gmra.mxu0 %v962
        %v6266 = vpop.f32.mrf.mxu0
        %v6267 = vadd.f32 %v6098, %v6266
        %v6268 = vpop.f32.mrf.mxu0
        %v6269 = vadd.f32 %v6100, %v6268
        %6270 = vmatmul.bf16.gmra.mxu0 %v970
        %v6271 = vpop.f32.mrf.mxu0
        %v6272 = vadd.f32 %v6103, %v6271
        %v6273 = vpop.f32.mrf.mxu0
        %v6274 = vadd.f32 %v6105, %v6273
        %6275 = vmatmul.bf16.gmra.mxu0 %v978
        %v6276 = vpop.f32.mrf.mxu0
        %v6277 = vadd.f32 %v6108, %v6276
        %v6278 = vpop.f32.mrf.mxu0
        %v6279 = vadd.f32 %v6110, %v6278
        %6280 = vmatmul.bf16.gmra.mxu0 %v986
        %v6281 = vpop.f32.mrf.mxu0
        %v6282 = vadd.f32 %v6113, %v6281
        %v6283 = vpop.f32.mrf.mxu0
        %v6284 = vadd.f32 %v6115, %v6283
        %6285 = vmatmul.bf16.gmra.mxu0 %v994
        %v6286 = vpop.f32.mrf.mxu0
        %v6287 = vadd.f32 %v6118, %v6286
        %v6288 = vpop.f32.mrf.mxu0
        %v6289 = vadd.f32 %v6120, %v6288
        %6290 = vmatmul.bf16.gmra.mxu0 %v1002
        %v6291 = vpop.f32.mrf.mxu0
        %v6292 = vadd.f32 %v6123, %v6291
        %v6293 = vpop.f32.mrf.mxu0
        %v6294 = vadd.f32 %v6125, %v6293
        %6295 = vmatmul.bf16.gmra.mxu0 %v1010
        %v6296 = vpop.f32.mrf.mxu0
        %v6297 = vadd.f32 %v6128, %v6296
        %v6298 = vpop.f32.mrf.mxu0
        %v6299 = vadd.f32 %v6130, %v6298
        %6300 = vmatmul.bf16.gmra.mxu0 %v1018
        %v6301 = vpop.f32.mrf.mxu0
        %v6302 = vadd.f32 %v6133, %v6301
        %v6303 = vpop.f32.mrf.mxu0
        %v6304 = vadd.f32 %v6135, %v6303
        %6305 = vmatmul.bf16.gmra.mxu0 %v1026
        %v6306 = vpop.f32.mrf.mxu0
        %v6307 = vadd.f32 %v6138, %v6306
        %v6308 = vpop.f32.mrf.mxu0
        %v6309 = vadd.f32 %v6140, %v6308
        %6310 = vmatmul.bf16.gmra.mxu0 %v1034
        %v6311 = vpop.f32.mrf.mxu0
        %v6312 = vadd.f32 %v6143, %v6311
        %v6313 = vpop.f32.mrf.mxu0
        %v6314 = vadd.f32 %v6145, %v6313
        %6315 = vmatmul.bf16.gmra.mxu0 %v1042
        %v6316 = vpop.f32.mrf.mxu0
        %v6317 = vadd.f32 %v6148, %v6316
        %v6318 = vpop.f32.mrf.mxu0
        %v6319 = vadd.f32 %v6150, %v6318
        %6320 = vmatmul.bf16.gmra.mxu0 %v1050
        %v6321 = vpop.f32.mrf.mxu0
        %v6322 = vadd.f32 %v6153, %v6321
        %v6323 = vpop.f32.mrf.mxu0
        %v6324 = vadd.f32 %v6155, %v6323
        %6325 = vmatmul.bf16.gmra.mxu0 %v1058
        %v6326 = vpop.f32.mrf.mxu0
        %v6327 = vadd.f32 %v6158, %v6326
        %v6328 = vpop.f32.mrf.mxu0
        %v6329 = vadd.f32 %v6160, %v6328
        %6330 = vmatmul.bf16.gmra.mxu0 %v1066
        %v6331 = vpop.f32.mrf.mxu0
        %v6332 = vadd.f32 %v6163, %v6331
        %v6333 = vpop.f32.mrf.mxu0
        %v6334 = vadd.f32 %v6165, %v6333
        %6335 = vmatmul.bf16.gmra.mxu0 %v1074
        %v6336 = vpop.f32.mrf.mxu0
        %v6337 = vadd.f32 %v6168, %v6336
        %v6338 = vpop.f32.mrf.mxu0
        %v6339 = vadd.f32 %v6170, %v6338
        %6340 = vdwg.mxu0
        %6341 = vmatpush.bf16.msra.mxu0 %v2333
        %6342 = vmatpush.bf16.msra.mxu0 %v2329
        %6343 = vmatpush.bf16.msra.mxu0 %v2325
        %6344 = vmatpush.bf16.msra.mxu0 %v2321
        %6345 = vmatpush.bf16.msra.mxu0 %v2317
        %6346 = vmatpush.bf16.msra.mxu0 %v2313
        %6347 = vmatpush.bf16.msra.mxu0 %v2309
        %6348 = vmatpush.bf16.msra.mxu0 %v2305
        %6349 = vmatmul.bf16.gmra.mxu0 %v827
        %v6350 = vpop.f32.mrf.mxu0
        %v6351 = vadd.f32 %v6182, %v6350
        %v6352 = vpop.f32.mrf.mxu0
        %v6353 = vadd.f32 %v6184, %v6352
        %6354 = vmatmul.bf16.gmra.mxu0 %v835
        %v6355 = vpop.f32.mrf.mxu0
        %v6356 = vadd.f32 %v6187, %v6355
        %v6357 = vpop.f32.mrf.mxu0
        %v6358 = vadd.f32 %v6189, %v6357
        %6359 = vmatmul.bf16.gmra.mxu0 %v843
        %v6360 = vpop.f32.mrf.mxu0
        %v6361 = vadd.f32 %v6192, %v6360
        %v6362 = vpop.f32.mrf.mxu0
        %v6363 = vadd.f32 %v6194, %v6362
        %6364 = vmatmul.bf16.gmra.mxu0 %v851
        %v6365 = vpop.f32.mrf.mxu0
        %v6366 = vadd.f32 %v6197, %v6365
        %v6367 = vpop.f32.mrf.mxu0
        %v6368 = vadd.f32 %v6199, %v6367
        %6369 = vmatmul.bf16.gmra.mxu0 %v859
        %v6370 = vpop.f32.mrf.mxu0
        %v6371 = vadd.f32 %v6202, %v6370
        %v6372 = vpop.f32.mrf.mxu0
        %v6373 = vadd.f32 %v6204, %v6372
        %6374 = vmatmul.bf16.gmra.mxu0 %v867
        %v6375 = vpop.f32.mrf.mxu0
        %v6376 = vadd.f32 %v6207, %v6375
        %v6377 = vpop.f32.mrf.mxu0
        %v6378 = vadd.f32 %v6209, %v6377
        %6379 = vmatmul.bf16.gmra.mxu0 %v875
        %v6380 = vpop.f32.mrf.mxu0
        %v6381 = vadd.f32 %v6212, %v6380
        %v6382 = vpop.f32.mrf.mxu0
        %v6383 = vadd.f32 %v6214, %v6382
        %6384 = vmatmul.bf16.gmra.mxu0 %v883
        %v6385 = vpop.f32.mrf.mxu0
        %v6386 = vadd.f32 %v6217, %v6385
        %v6387 = vpop.f32.mrf.mxu0
        %v6388 = vadd.f32 %v6219, %v6387
        %6389 = vmatmul.bf16.gmra.mxu0 %v891
        %v6390 = vpop.f32.mrf.mxu0
        %v6391 = vadd.f32 %v6222, %v6390
        %v6392 = vpop.f32.mrf.mxu0
        %v6393 = vadd.f32 %v6224, %v6392
        %6394 = vmatmul.bf16.gmra.mxu0 %v899
        %v6395 = vpop.f32.mrf.mxu0
        %v6396 = vadd.f32 %v6227, %v6395
        %v6397 = vpop.f32.mrf.mxu0
        %v6398 = vadd.f32 %v6229, %v6397
        %6399 = vmatmul.bf16.gmra.mxu0 %v907
        %v6400 = vpop.f32.mrf.mxu0
        %v6401 = vadd.f32 %v6232, %v6400
        %v6402 = vpop.f32.mrf.mxu0
        %v6403 = vadd.f32 %v6234, %v6402
        %6404 = vmatmul.bf16.gmra.mxu0 %v915
        %v6405 = vpop.f32.mrf.mxu0
        %v6406 = vadd.f32 %v6237, %v6405
        %v6407 = vpop.f32.mrf.mxu0
        %v6408 = vadd.f32 %v6239, %v6407
        %6409 = vmatmul.bf16.gmra.mxu0 %v923
        %v6410 = vpop.f32.mrf.mxu0
        %v6411 = vadd.f32 %v6242, %v6410
        %v6412 = vpop.f32.mrf.mxu0
        %v6413 = vadd.f32 %v6244, %v6412
        %6414 = vmatmul.bf16.gmra.mxu0 %v931
        %v6415 = vpop.f32.mrf.mxu0
        %v6416 = vadd.f32 %v6247, %v6415
        %v6417 = vpop.f32.mrf.mxu0
        %v6418 = vadd.f32 %v6249, %v6417
        %6419 = vmatmul.bf16.gmra.mxu0 %v939
        %v6420 = vpop.f32.mrf.mxu0
        %v6421 = vadd.f32 %v6252, %v6420
        %v6422 = vpop.f32.mrf.mxu0
        %v6423 = vadd.f32 %v6254, %v6422
        %6424 = vmatmul.bf16.gmra.mxu0 %v947
        %v6425 = vpop.f32.mrf.mxu0
        %v6426 = vadd.f32 %v6257, %v6425
        %v6427 = vpop.f32.mrf.mxu0
        %v6428 = vadd.f32 %v6259, %v6427
        %6429 = vmatmul.bf16.gmra.mxu0 %v955
        %v6430 = vpop.f32.mrf.mxu0
        %v6431 = vadd.f32 %v6262, %v6430
        %v6432 = vpop.f32.mrf.mxu0
        %v6433 = vadd.f32 %v6264, %v6432
        %6434 = vmatmul.bf16.gmra.mxu0 %v963
        %v6435 = vpop.f32.mrf.mxu0
        %v6436 = vadd.f32 %v6267, %v6435
        %v6437 = vpop.f32.mrf.mxu0
        %v6438 = vadd.f32 %v6269, %v6437
        %6439 = vmatmul.bf16.gmra.mxu0 %v971
        %v6440 = vpop.f32.mrf.mxu0
        %v6441 = vadd.f32 %v6272, %v6440
        %v6442 = vpop.f32.mrf.mxu0
        %v6443 = vadd.f32 %v6274, %v6442
        %6444 = vmatmul.bf16.gmra.mxu0 %v979
        %v6445 = vpop.f32.mrf.mxu0
        %v6446 = vadd.f32 %v6277, %v6445
        %v6447 = vpop.f32.mrf.mxu0
        %v6448 = vadd.f32 %v6279, %v6447
        %6449 = vmatmul.bf16.gmra.mxu0 %v987
        %v6450 = vpop.f32.mrf.mxu0
        %v6451 = vadd.f32 %v6282, %v6450
        %v6452 = vpop.f32.mrf.mxu0
        %v6453 = vadd.f32 %v6284, %v6452
        %6454 = vmatmul.bf16.gmra.mxu0 %v995
        %v6455 = vpop.f32.mrf.mxu0
        %v6456 = vadd.f32 %v6287, %v6455
        %v6457 = vpop.f32.mrf.mxu0
        %v6458 = vadd.f32 %v6289, %v6457
        %6459 = vmatmul.bf16.gmra.mxu0 %v1003
        %v6460 = vpop.f32.mrf.mxu0
        %v6461 = vadd.f32 %v6292, %v6460
        %v6462 = vpop.f32.mrf.mxu0
        %v6463 = vadd.f32 %v6294, %v6462
        %6464 = vmatmul.bf16.gmra.mxu0 %v1011
        %v6465 = vpop.f32.mrf.mxu0
        %v6466 = vadd.f32 %v6297, %v6465
        %v6467 = vpop.f32.mrf.mxu0
        %v6468 = vadd.f32 %v6299, %v6467
        %6469 = vmatmul.bf16.gmra.mxu0 %v1019
        %v6470 = vpop.f32.mrf.mxu0
        %v6471 = vadd.f32 %v6302, %v6470
        %v6472 = vpop.f32.mrf.mxu0
        %v6473 = vadd.f32 %v6304, %v6472
        %6474 = vmatmul.bf16.gmra.mxu0 %v1027
        %v6475 = vpop.f32.mrf.mxu0
        %v6476 = vadd.f32 %v6307, %v6475
        %v6477 = vpop.f32.mrf.mxu0
        %v6478 = vadd.f32 %v6309, %v6477
        %6479 = vmatmul.bf16.gmra.mxu0 %v1035
        %v6480 = vpop.f32.mrf.mxu0
        %v6481 = vadd.f32 %v6312, %v6480
        %v6482 = vpop.f32.mrf.mxu0
        %v6483 = vadd.f32 %v6314, %v6482
        %6484 = vmatmul.bf16.gmra.mxu0 %v1043
        %v6485 = vpop.f32.mrf.mxu0
        %v6486 = vadd.f32 %v6317, %v6485
        %v6487 = vpop.f32.mrf.mxu0
        %v6488 = vadd.f32 %v6319, %v6487
        %6489 = vmatmul.bf16.gmra.mxu0 %v1051
        %v6490 = vpop.f32.mrf.mxu0
        %v6491 = vadd.f32 %v6322, %v6490
        %v6492 = vpop.f32.mrf.mxu0
        %v6493 = vadd.f32 %v6324, %v6492
        %6494 = vmatmul.bf16.gmra.mxu0 %v1059
        %v6495 = vpop.f32.mrf.mxu0
        %v6496 = vadd.f32 %v6327, %v6495
        %v6497 = vpop.f32.mrf.mxu0
        %v6498 = vadd.f32 %v6329, %v6497
        %6499 = vmatmul.bf16.gmra.mxu0 %v1067
        %v6500 = vpop.f32.mrf.mxu0
        %v6501 = vadd.f32 %v6332, %v6500
        %v6502 = vpop.f32.mrf.mxu0
        %v6503 = vadd.f32 %v6334, %v6502
        %6504 = vmatmul.bf16.gmra.mxu0 %v1075
        %v6505 = vpop.f32.mrf.mxu0
        %v6506 = vadd.f32 %v6337, %v6505
        %v6507 = vpop.f32.mrf.mxu0
        %v6508 = vadd.f32 %v6339, %v6507
        %6509 = vdwg.mxu0
        %6510 = vmatpush.bf16.msra.mxu0 %v2365
        %6511 = vmatpush.bf16.msra.mxu0 %v2361
        %6512 = vmatpush.bf16.msra.mxu0 %v2357
        %6513 = vmatpush.bf16.msra.mxu0 %v2353
        %6514 = vmatpush.bf16.msra.mxu0 %v2349
        %6515 = vmatpush.bf16.msra.mxu0 %v2345
        %6516 = vmatpush.bf16.msra.mxu0 %v2341
        %6517 = vmatpush.bf16.msra.mxu0 %v2337
        %6518 = vmatmul.bf16.gmra.mxu0 %v828
        %v6519 = vpop.f32.mrf.mxu0
        %v6520 = vadd.f32 %v6351, %v6519
        %v6521 = vpop.f32.mrf.mxu0
        %v6522 = vadd.f32 %v6353, %v6521
        %6523 = vmatmul.bf16.gmra.mxu0 %v836
        %v6524 = vpop.f32.mrf.mxu0
        %v6525 = vadd.f32 %v6356, %v6524
        %v6526 = vpop.f32.mrf.mxu0
        %v6527 = vadd.f32 %v6358, %v6526
        %6528 = vmatmul.bf16.gmra.mxu0 %v844
        %v6529 = vpop.f32.mrf.mxu0
        %v6530 = vadd.f32 %v6361, %v6529
        %v6531 = vpop.f32.mrf.mxu0
        %v6532 = vadd.f32 %v6363, %v6531
        %6533 = vmatmul.bf16.gmra.mxu0 %v852
        %v6534 = vpop.f32.mrf.mxu0
        %v6535 = vadd.f32 %v6366, %v6534
        %v6536 = vpop.f32.mrf.mxu0
        %v6537 = vadd.f32 %v6368, %v6536
        %6538 = vmatmul.bf16.gmra.mxu0 %v860
        %v6539 = vpop.f32.mrf.mxu0
        %v6540 = vadd.f32 %v6371, %v6539
        %v6541 = vpop.f32.mrf.mxu0
        %v6542 = vadd.f32 %v6373, %v6541
        %6543 = vmatmul.bf16.gmra.mxu0 %v868
        %v6544 = vpop.f32.mrf.mxu0
        %v6545 = vadd.f32 %v6376, %v6544
        %v6546 = vpop.f32.mrf.mxu0
        %v6547 = vadd.f32 %v6378, %v6546
        %6548 = vmatmul.bf16.gmra.mxu0 %v876
        %v6549 = vpop.f32.mrf.mxu0
        %v6550 = vadd.f32 %v6381, %v6549
        %v6551 = vpop.f32.mrf.mxu0
        %v6552 = vadd.f32 %v6383, %v6551
        %6553 = vmatmul.bf16.gmra.mxu0 %v884
        %v6554 = vpop.f32.mrf.mxu0
        %v6555 = vadd.f32 %v6386, %v6554
        %v6556 = vpop.f32.mrf.mxu0
        %v6557 = vadd.f32 %v6388, %v6556
        %6558 = vmatmul.bf16.gmra.mxu0 %v892
        %v6559 = vpop.f32.mrf.mxu0
        %v6560 = vadd.f32 %v6391, %v6559
        %v6561 = vpop.f32.mrf.mxu0
        %v6562 = vadd.f32 %v6393, %v6561
        %6563 = vmatmul.bf16.gmra.mxu0 %v900
        %v6564 = vpop.f32.mrf.mxu0
        %v6565 = vadd.f32 %v6396, %v6564
        %v6566 = vpop.f32.mrf.mxu0
        %v6567 = vadd.f32 %v6398, %v6566
        %6568 = vmatmul.bf16.gmra.mxu0 %v908
        %v6569 = vpop.f32.mrf.mxu0
        %v6570 = vadd.f32 %v6401, %v6569
        %v6571 = vpop.f32.mrf.mxu0
        %v6572 = vadd.f32 %v6403, %v6571
        %6573 = vmatmul.bf16.gmra.mxu0 %v916
        %v6574 = vpop.f32.mrf.mxu0
        %v6575 = vadd.f32 %v6406, %v6574
        %v6576 = vpop.f32.mrf.mxu0
        %v6577 = vadd.f32 %v6408, %v6576
        %6578 = vmatmul.bf16.gmra.mxu0 %v924
        %v6579 = vpop.f32.mrf.mxu0
        %v6580 = vadd.f32 %v6411, %v6579
        %v6581 = vpop.f32.mrf.mxu0
        %v6582 = vadd.f32 %v6413, %v6581
        %6583 = vmatmul.bf16.gmra.mxu0 %v932
        %v6584 = vpop.f32.mrf.mxu0
        %v6585 = vadd.f32 %v6416, %v6584
        %v6586 = vpop.f32.mrf.mxu0
        %v6587 = vadd.f32 %v6418, %v6586
        %6588 = vmatmul.bf16.gmra.mxu0 %v940
        %v6589 = vpop.f32.mrf.mxu0
        %v6590 = vadd.f32 %v6421, %v6589
        %v6591 = vpop.f32.mrf.mxu0
        %v6592 = vadd.f32 %v6423, %v6591
        %6593 = vmatmul.bf16.gmra.mxu0 %v948
        %v6594 = vpop.f32.mrf.mxu0
        %v6595 = vadd.f32 %v6426, %v6594
        %v6596 = vpop.f32.mrf.mxu0
        %v6597 = vadd.f32 %v6428, %v6596
        %6598 = vmatmul.bf16.gmra.mxu0 %v956
        %v6599 = vpop.f32.mrf.mxu0
        %v6600 = vadd.f32 %v6431, %v6599
        %v6601 = vpop.f32.mrf.mxu0
        %v6602 = vadd.f32 %v6433, %v6601
        %6603 = vmatmul.bf16.gmra.mxu0 %v964
        %v6604 = vpop.f32.mrf.mxu0
        %v6605 = vadd.f32 %v6436, %v6604
        %v6606 = vpop.f32.mrf.mxu0
        %v6607 = vadd.f32 %v6438, %v6606
        %6608 = vmatmul.bf16.gmra.mxu0 %v972
        %v6609 = vpop.f32.mrf.mxu0
        %v6610 = vadd.f32 %v6441, %v6609
        %v6611 = vpop.f32.mrf.mxu0
        %v6612 = vadd.f32 %v6443, %v6611
        %6613 = vmatmul.bf16.gmra.mxu0 %v980
        %v6614 = vpop.f32.mrf.mxu0
        %v6615 = vadd.f32 %v6446, %v6614
        %v6616 = vpop.f32.mrf.mxu0
        %v6617 = vadd.f32 %v6448, %v6616
        %6618 = vmatmul.bf16.gmra.mxu0 %v988
        %v6619 = vpop.f32.mrf.mxu0
        %v6620 = vadd.f32 %v6451, %v6619
        %v6621 = vpop.f32.mrf.mxu0
        %v6622 = vadd.f32 %v6453, %v6621
        %6623 = vmatmul.bf16.gmra.mxu0 %v996
        %v6624 = vpop.f32.mrf.mxu0
        %v6625 = vadd.f32 %v6456, %v6624
        %v6626 = vpop.f32.mrf.mxu0
        %v6627 = vadd.f32 %v6458, %v6626
        %6628 = vmatmul.bf16.gmra.mxu0 %v1004
        %v6629 = vpop.f32.mrf.mxu0
        %v6630 = vadd.f32 %v6461, %v6629
        %v6631 = vpop.f32.mrf.mxu0
        %v6632 = vadd.f32 %v6463, %v6631
        %6633 = vmatmul.bf16.gmra.mxu0 %v1012
        %v6634 = vpop.f32.mrf.mxu0
        %v6635 = vadd.f32 %v6466, %v6634
        %v6636 = vpop.f32.mrf.mxu0
        %v6637 = vadd.f32 %v6468, %v6636
        %6638 = vmatmul.bf16.gmra.mxu0 %v1020
        %v6639 = vpop.f32.mrf.mxu0
        %v6640 = vadd.f32 %v6471, %v6639
        %v6641 = vpop.f32.mrf.mxu0
        %v6642 = vadd.f32 %v6473, %v6641
        %6643 = vmatmul.bf16.gmra.mxu0 %v1028
        %v6644 = vpop.f32.mrf.mxu0
        %v6645 = vadd.f32 %v6476, %v6644
        %v6646 = vpop.f32.mrf.mxu0
        %v6647 = vadd.f32 %v6478, %v6646
        %6648 = vmatmul.bf16.gmra.mxu0 %v1036
        %v6649 = vpop.f32.mrf.mxu0
        %v6650 = vadd.f32 %v6481, %v6649
        %v6651 = vpop.f32.mrf.mxu0
        %v6652 = vadd.f32 %v6483, %v6651
        %6653 = vmatmul.bf16.gmra.mxu0 %v1044
        %v6654 = vpop.f32.mrf.mxu0
        %v6655 = vadd.f32 %v6486, %v6654
        %v6656 = vpop.f32.mrf.mxu0
        %v6657 = vadd.f32 %v6488, %v6656
        %6658 = vmatmul.bf16.gmra.mxu0 %v1052
        %v6659 = vpop.f32.mrf.mxu0
        %v6660 = vadd.f32 %v6491, %v6659
        %v6661 = vpop.f32.mrf.mxu0
        %v6662 = vadd.f32 %v6493, %v6661
        %6663 = vmatmul.bf16.gmra.mxu0 %v1060
        %v6664 = vpop.f32.mrf.mxu0
        %v6665 = vadd.f32 %v6496, %v6664
        %v6666 = vpop.f32.mrf.mxu0
        %v6667 = vadd.f32 %v6498, %v6666
        %6668 = vmatmul.bf16.gmra.mxu0 %v1068
        %v6669 = vpop.f32.mrf.mxu0
        %v6670 = vadd.f32 %v6501, %v6669
        %v6671 = vpop.f32.mrf.mxu0
        %v6672 = vadd.f32 %v6503, %v6671
        %6673 = vmatmul.bf16.gmra.mxu0 %v1076
        %v6674 = vpop.f32.mrf.mxu0
        %v6675 = vadd.f32 %v6506, %v6674
        %v6676 = vpop.f32.mrf.mxu0
        %v6677 = vadd.f32 %v6508, %v6676
        %6678 = vdwg.mxu0
        %6679 = vmatpush.bf16.msra.mxu0 %v2142
        %6680 = vmatpush.bf16.msra.mxu0 %v2138
        %6681 = vmatpush.bf16.msra.mxu0 %v2134
        %6682 = vmatpush.bf16.msra.mxu0 %v2130
        %6683 = vmatpush.bf16.msra.mxu0 %v2126
        %6684 = vmatpush.bf16.msra.mxu0 %v2122
        %6685 = vmatpush.bf16.msra.mxu0 %v2118
        %6686 = vmatpush.bf16.msra.mxu0 %v2114
        %6687 = vmatmul.bf16.gmra.mxu0 %v821
        %v6688 = vpop.f32.mrf.mxu0
        %v6689 = vadd.f32 %v1338, %v6688
        %v6690 = vpop.f32.mrf.mxu0
        %v6691 = vadd.f32 %v1338, %v6690
        %6692 = vmatmul.bf16.gmra.mxu0 %v829
        %v6693 = vpop.f32.mrf.mxu0
        %v6694 = vadd.f32 %v1338, %v6693
        %v6695 = vpop.f32.mrf.mxu0
        %v6696 = vadd.f32 %v1338, %v6695
        %6697 = vmatmul.bf16.gmra.mxu0 %v837
        %v6698 = vpop.f32.mrf.mxu0
        %v6699 = vadd.f32 %v1338, %v6698
        %v6700 = vpop.f32.mrf.mxu0
        %v6701 = vadd.f32 %v1338, %v6700
        %6702 = vmatmul.bf16.gmra.mxu0 %v845
        %v6703 = vpop.f32.mrf.mxu0
        %v6704 = vadd.f32 %v1338, %v6703
        %v6705 = vpop.f32.mrf.mxu0
        %v6706 = vadd.f32 %v1338, %v6705
        %6707 = vmatmul.bf16.gmra.mxu0 %v853
        %v6708 = vpop.f32.mrf.mxu0
        %v6709 = vadd.f32 %v1338, %v6708
        %v6710 = vpop.f32.mrf.mxu0
        %v6711 = vadd.f32 %v1338, %v6710
        %6712 = vmatmul.bf16.gmra.mxu0 %v861
        %v6713 = vpop.f32.mrf.mxu0
        %v6714 = vadd.f32 %v1338, %v6713
        %v6715 = vpop.f32.mrf.mxu0
        %v6716 = vadd.f32 %v1338, %v6715
        %6717 = vmatmul.bf16.gmra.mxu0 %v869
        %v6718 = vpop.f32.mrf.mxu0
        %v6719 = vadd.f32 %v1338, %v6718
        %v6720 = vpop.f32.mrf.mxu0
        %v6721 = vadd.f32 %v1338, %v6720
        %6722 = vmatmul.bf16.gmra.mxu0 %v877
        %v6723 = vpop.f32.mrf.mxu0
        %v6724 = vadd.f32 %v1338, %v6723
        %v6725 = vpop.f32.mrf.mxu0
        %v6726 = vadd.f32 %v1338, %v6725
        %6727 = vmatmul.bf16.gmra.mxu0 %v885
        %v6728 = vpop.f32.mrf.mxu0
        %v6729 = vadd.f32 %v1338, %v6728
        %v6730 = vpop.f32.mrf.mxu0
        %v6731 = vadd.f32 %v1338, %v6730
        %6732 = vmatmul.bf16.gmra.mxu0 %v893
        %v6733 = vpop.f32.mrf.mxu0
        %v6734 = vadd.f32 %v1338, %v6733
        %v6735 = vpop.f32.mrf.mxu0
        %v6736 = vadd.f32 %v1338, %v6735
        %6737 = vmatmul.bf16.gmra.mxu0 %v901
        %v6738 = vpop.f32.mrf.mxu0
        %v6739 = vadd.f32 %v1338, %v6738
        %v6740 = vpop.f32.mrf.mxu0
        %v6741 = vadd.f32 %v1338, %v6740
        %6742 = vmatmul.bf16.gmra.mxu0 %v909
        %v6743 = vpop.f32.mrf.mxu0
        %v6744 = vadd.f32 %v1338, %v6743
        %v6745 = vpop.f32.mrf.mxu0
        %v6746 = vadd.f32 %v1338, %v6745
        %6747 = vmatmul.bf16.gmra.mxu0 %v917
        %v6748 = vpop.f32.mrf.mxu0
        %v6749 = vadd.f32 %v1338, %v6748
        %v6750 = vpop.f32.mrf.mxu0
        %v6751 = vadd.f32 %v1338, %v6750
        %6752 = vmatmul.bf16.gmra.mxu0 %v925
        %v6753 = vpop.f32.mrf.mxu0
        %v6754 = vadd.f32 %v1338, %v6753
        %v6755 = vpop.f32.mrf.mxu0
        %v6756 = vadd.f32 %v1338, %v6755
        %6757 = vmatmul.bf16.gmra.mxu0 %v933
        %v6758 = vpop.f32.mrf.mxu0
        %v6759 = vadd.f32 %v1338, %v6758
        %v6760 = vpop.f32.mrf.mxu0
        %v6761 = vadd.f32 %v1338, %v6760
        %6762 = vmatmul.bf16.gmra.mxu0 %v941
        %v6763 = vpop.f32.mrf.mxu0
        %v6764 = vadd.f32 %v1338, %v6763
        %v6765 = vpop.f32.mrf.mxu0
        %v6766 = vadd.f32 %v1338, %v6765
        %6767 = vmatmul.bf16.gmra.mxu0 %v949
        %v6768 = vpop.f32.mrf.mxu0
        %v6769 = vadd.f32 %v1338, %v6768
        %v6770 = vpop.f32.mrf.mxu0
        %v6771 = vadd.f32 %v1338, %v6770
        %6772 = vmatmul.bf16.gmra.mxu0 %v957
        %v6773 = vpop.f32.mrf.mxu0
        %v6774 = vadd.f32 %v1338, %v6773
        %v6775 = vpop.f32.mrf.mxu0
        %v6776 = vadd.f32 %v1338, %v6775
        %6777 = vmatmul.bf16.gmra.mxu0 %v965
        %v6778 = vpop.f32.mrf.mxu0
        %v6779 = vadd.f32 %v1338, %v6778
        %v6780 = vpop.f32.mrf.mxu0
        %v6781 = vadd.f32 %v1338, %v6780
        %6782 = vmatmul.bf16.gmra.mxu0 %v973
        %v6783 = vpop.f32.mrf.mxu0
        %v6784 = vadd.f32 %v1338, %v6783
        %v6785 = vpop.f32.mrf.mxu0
        %v6786 = vadd.f32 %v1338, %v6785
        %6787 = vmatmul.bf16.gmra.mxu0 %v981
        %v6788 = vpop.f32.mrf.mxu0
        %v6789 = vadd.f32 %v1338, %v6788
        %v6790 = vpop.f32.mrf.mxu0
        %v6791 = vadd.f32 %v1338, %v6790
        %6792 = vmatmul.bf16.gmra.mxu0 %v989
        %v6793 = vpop.f32.mrf.mxu0
        %v6794 = vadd.f32 %v1338, %v6793
        %v6795 = vpop.f32.mrf.mxu0
        %v6796 = vadd.f32 %v1338, %v6795
        %6797 = vmatmul.bf16.gmra.mxu0 %v997
        %v6798 = vpop.f32.mrf.mxu0
        %v6799 = vadd.f32 %v1338, %v6798
        %v6800 = vpop.f32.mrf.mxu0
        %v6801 = vadd.f32 %v1338, %v6800
        %6802 = vmatmul.bf16.gmra.mxu0 %v1005
        %v6803 = vpop.f32.mrf.mxu0
        %v6804 = vadd.f32 %v1338, %v6803
        %v6805 = vpop.f32.mrf.mxu0
        %v6806 = vadd.f32 %v1338, %v6805
        %6807 = vmatmul.bf16.gmra.mxu0 %v1013
        %v6808 = vpop.f32.mrf.mxu0
        %v6809 = vadd.f32 %v1338, %v6808
        %v6810 = vpop.f32.mrf.mxu0
        %v6811 = vadd.f32 %v1338, %v6810
        %6812 = vmatmul.bf16.gmra.mxu0 %v1021
        %v6813 = vpop.f32.mrf.mxu0
        %v6814 = vadd.f32 %v1338, %v6813
        %v6815 = vpop.f32.mrf.mxu0
        %v6816 = vadd.f32 %v1338, %v6815
        %6817 = vmatmul.bf16.gmra.mxu0 %v1029
        %v6818 = vpop.f32.mrf.mxu0
        %v6819 = vadd.f32 %v1338, %v6818
        %v6820 = vpop.f32.mrf.mxu0
        %v6821 = vadd.f32 %v1338, %v6820
        %6822 = vmatmul.bf16.gmra.mxu0 %v1037
        %v6823 = vpop.f32.mrf.mxu0
        %v6824 = vadd.f32 %v1338, %v6823
        %v6825 = vpop.f32.mrf.mxu0
        %v6826 = vadd.f32 %v1338, %v6825
        %6827 = vmatmul.bf16.gmra.mxu0 %v1045
        %v6828 = vpop.f32.mrf.mxu0
        %v6829 = vadd.f32 %v1338, %v6828
        %v6830 = vpop.f32.mrf.mxu0
        %v6831 = vadd.f32 %v1338, %v6830
        %6832 = vmatmul.bf16.gmra.mxu0 %v1053
        %v6833 = vpop.f32.mrf.mxu0
        %v6834 = vadd.f32 %v1338, %v6833
        %v6835 = vpop.f32.mrf.mxu0
        %v6836 = vadd.f32 %v1338, %v6835
        %6837 = vmatmul.bf16.gmra.mxu0 %v1061
        %v6838 = vpop.f32.mrf.mxu0
        %v6839 = vadd.f32 %v1338, %v6838
        %v6840 = vpop.f32.mrf.mxu0
        %v6841 = vadd.f32 %v1338, %v6840
        %6842 = vmatmul.bf16.gmra.mxu0 %v1069
        %v6843 = vpop.f32.mrf.mxu0
        %v6844 = vadd.f32 %v1338, %v6843
        %v6845 = vpop.f32.mrf.mxu0
        %v6846 = vadd.f32 %v1338, %v6845
        %6847 = vdwg.mxu0
        %6848 = vmatpush.bf16.msra.mxu0 %v2174
        %6849 = vmatpush.bf16.msra.mxu0 %v2170
        %6850 = vmatpush.bf16.msra.mxu0 %v2166
        %6851 = vmatpush.bf16.msra.mxu0 %v2162
        %6852 = vmatpush.bf16.msra.mxu0 %v2158
        %6853 = vmatpush.bf16.msra.mxu0 %v2154
        %6854 = vmatpush.bf16.msra.mxu0 %v2150
        %6855 = vmatpush.bf16.msra.mxu0 %v2146
        %6856 = vmatmul.bf16.gmra.mxu0 %v822
        %v6857 = vpop.f32.mrf.mxu0
        %v6858 = vadd.f32 %v6689, %v6857
        %v6859 = vpop.f32.mrf.mxu0
        %v6860 = vadd.f32 %v6691, %v6859
        %6861 = vmatmul.bf16.gmra.mxu0 %v830
        %v6862 = vpop.f32.mrf.mxu0
        %v6863 = vadd.f32 %v6694, %v6862
        %v6864 = vpop.f32.mrf.mxu0
        %v6865 = vadd.f32 %v6696, %v6864
        %6866 = vmatmul.bf16.gmra.mxu0 %v838
        %v6867 = vpop.f32.mrf.mxu0
        %v6868 = vadd.f32 %v6699, %v6867
        %v6869 = vpop.f32.mrf.mxu0
        %v6870 = vadd.f32 %v6701, %v6869
        %6871 = vmatmul.bf16.gmra.mxu0 %v846
        %v6872 = vpop.f32.mrf.mxu0
        %v6873 = vadd.f32 %v6704, %v6872
        %v6874 = vpop.f32.mrf.mxu0
        %v6875 = vadd.f32 %v6706, %v6874
        %6876 = vmatmul.bf16.gmra.mxu0 %v854
        %v6877 = vpop.f32.mrf.mxu0
        %v6878 = vadd.f32 %v6709, %v6877
        %v6879 = vpop.f32.mrf.mxu0
        %v6880 = vadd.f32 %v6711, %v6879
        %6881 = vmatmul.bf16.gmra.mxu0 %v862
        %v6882 = vpop.f32.mrf.mxu0
        %v6883 = vadd.f32 %v6714, %v6882
        %v6884 = vpop.f32.mrf.mxu0
        %v6885 = vadd.f32 %v6716, %v6884
        %6886 = vmatmul.bf16.gmra.mxu0 %v870
        %v6887 = vpop.f32.mrf.mxu0
        %v6888 = vadd.f32 %v6719, %v6887
        %v6889 = vpop.f32.mrf.mxu0
        %v6890 = vadd.f32 %v6721, %v6889
        %6891 = vmatmul.bf16.gmra.mxu0 %v878
        %v6892 = vpop.f32.mrf.mxu0
        %v6893 = vadd.f32 %v6724, %v6892
        %v6894 = vpop.f32.mrf.mxu0
        %v6895 = vadd.f32 %v6726, %v6894
        %6896 = vmatmul.bf16.gmra.mxu0 %v886
        %v6897 = vpop.f32.mrf.mxu0
        %v6898 = vadd.f32 %v6729, %v6897
        %v6899 = vpop.f32.mrf.mxu0
        %v6900 = vadd.f32 %v6731, %v6899
        %6901 = vmatmul.bf16.gmra.mxu0 %v894
        %v6902 = vpop.f32.mrf.mxu0
        %v6903 = vadd.f32 %v6734, %v6902
        %v6904 = vpop.f32.mrf.mxu0
        %v6905 = vadd.f32 %v6736, %v6904
        %6906 = vmatmul.bf16.gmra.mxu0 %v902
        %v6907 = vpop.f32.mrf.mxu0
        %v6908 = vadd.f32 %v6739, %v6907
        %v6909 = vpop.f32.mrf.mxu0
        %v6910 = vadd.f32 %v6741, %v6909
        %6911 = vmatmul.bf16.gmra.mxu0 %v910
        %v6912 = vpop.f32.mrf.mxu0
        %v6913 = vadd.f32 %v6744, %v6912
        %v6914 = vpop.f32.mrf.mxu0
        %v6915 = vadd.f32 %v6746, %v6914
        %6916 = vmatmul.bf16.gmra.mxu0 %v918
        %v6917 = vpop.f32.mrf.mxu0
        %v6918 = vadd.f32 %v6749, %v6917
        %v6919 = vpop.f32.mrf.mxu0
        %v6920 = vadd.f32 %v6751, %v6919
        %6921 = vmatmul.bf16.gmra.mxu0 %v926
        %v6922 = vpop.f32.mrf.mxu0
        %v6923 = vadd.f32 %v6754, %v6922
        %v6924 = vpop.f32.mrf.mxu0
        %v6925 = vadd.f32 %v6756, %v6924
        %6926 = vmatmul.bf16.gmra.mxu0 %v934
        %v6927 = vpop.f32.mrf.mxu0
        %v6928 = vadd.f32 %v6759, %v6927
        %v6929 = vpop.f32.mrf.mxu0
        %v6930 = vadd.f32 %v6761, %v6929
        %6931 = vmatmul.bf16.gmra.mxu0 %v942
        %v6932 = vpop.f32.mrf.mxu0
        %v6933 = vadd.f32 %v6764, %v6932
        %v6934 = vpop.f32.mrf.mxu0
        %v6935 = vadd.f32 %v6766, %v6934
        %6936 = vmatmul.bf16.gmra.mxu0 %v950
        %v6937 = vpop.f32.mrf.mxu0
        %v6938 = vadd.f32 %v6769, %v6937
        %v6939 = vpop.f32.mrf.mxu0
        %v6940 = vadd.f32 %v6771, %v6939
        %6941 = vmatmul.bf16.gmra.mxu0 %v958
        %v6942 = vpop.f32.mrf.mxu0
        %v6943 = vadd.f32 %v6774, %v6942
        %v6944 = vpop.f32.mrf.mxu0
        %v6945 = vadd.f32 %v6776, %v6944
        %6946 = vmatmul.bf16.gmra.mxu0 %v966
        %v6947 = vpop.f32.mrf.mxu0
        %v6948 = vadd.f32 %v6779, %v6947
        %v6949 = vpop.f32.mrf.mxu0
        %v6950 = vadd.f32 %v6781, %v6949
        %6951 = vmatmul.bf16.gmra.mxu0 %v974
        %v6952 = vpop.f32.mrf.mxu0
        %v6953 = vadd.f32 %v6784, %v6952
        %v6954 = vpop.f32.mrf.mxu0
        %v6955 = vadd.f32 %v6786, %v6954
        %6956 = vmatmul.bf16.gmra.mxu0 %v982
        %v6957 = vpop.f32.mrf.mxu0
        %v6958 = vadd.f32 %v6789, %v6957
        %v6959 = vpop.f32.mrf.mxu0
        %v6960 = vadd.f32 %v6791, %v6959
        %6961 = vmatmul.bf16.gmra.mxu0 %v990
        %v6962 = vpop.f32.mrf.mxu0
        %v6963 = vadd.f32 %v6794, %v6962
        %v6964 = vpop.f32.mrf.mxu0
        %v6965 = vadd.f32 %v6796, %v6964
        %6966 = vmatmul.bf16.gmra.mxu0 %v998
        %v6967 = vpop.f32.mrf.mxu0
        %v6968 = vadd.f32 %v6799, %v6967
        %v6969 = vpop.f32.mrf.mxu0
        %v6970 = vadd.f32 %v6801, %v6969
        %6971 = vmatmul.bf16.gmra.mxu0 %v1006
        %v6972 = vpop.f32.mrf.mxu0
        %v6973 = vadd.f32 %v6804, %v6972
        %v6974 = vpop.f32.mrf.mxu0
        %v6975 = vadd.f32 %v6806, %v6974
        %6976 = vmatmul.bf16.gmra.mxu0 %v1014
        %v6977 = vpop.f32.mrf.mxu0
        %v6978 = vadd.f32 %v6809, %v6977
        %v6979 = vpop.f32.mrf.mxu0
        %v6980 = vadd.f32 %v6811, %v6979
        %6981 = vmatmul.bf16.gmra.mxu0 %v1022
        %v6982 = vpop.f32.mrf.mxu0
        %v6983 = vadd.f32 %v6814, %v6982
        %v6984 = vpop.f32.mrf.mxu0
        %v6985 = vadd.f32 %v6816, %v6984
        %6986 = vmatmul.bf16.gmra.mxu0 %v1030
        %v6987 = vpop.f32.mrf.mxu0
        %v6988 = vadd.f32 %v6819, %v6987
        %v6989 = vpop.f32.mrf.mxu0
        %v6990 = vadd.f32 %v6821, %v6989
        %6991 = vmatmul.bf16.gmra.mxu0 %v1038
        %v6992 = vpop.f32.mrf.mxu0
        %v6993 = vadd.f32 %v6824, %v6992
        %v6994 = vpop.f32.mrf.mxu0
        %v6995 = vadd.f32 %v6826, %v6994
        %6996 = vmatmul.bf16.gmra.mxu0 %v1046
        %v6997 = vpop.f32.mrf.mxu0
        %v6998 = vadd.f32 %v6829, %v6997
        %v6999 = vpop.f32.mrf.mxu0
        %v7000 = vadd.f32 %v6831, %v6999
        %7001 = vmatmul.bf16.gmra.mxu0 %v1054
        %v7002 = vpop.f32.mrf.mxu0
        %v7003 = vadd.f32 %v6834, %v7002
        %v7004 = vpop.f32.mrf.mxu0
        %v7005 = vadd.f32 %v6836, %v7004
        %7006 = vmatmul.bf16.gmra.mxu0 %v1062
        %v7007 = vpop.f32.mrf.mxu0
        %v7008 = vadd.f32 %v6839, %v7007
        %v7009 = vpop.f32.mrf.mxu0
        %v7010 = vadd.f32 %v6841, %v7009
        %7011 = vmatmul.bf16.gmra.mxu0 %v1070
        %v7012 = vpop.f32.mrf.mxu0
        %v7013 = vadd.f32 %v6844, %v7012
        %v7014 = vpop.f32.mrf.mxu0
        %v7015 = vadd.f32 %v6846, %v7014
        %7016 = vdwg.mxu0
        %7017 = vmatpush.bf16.msra.mxu0 %v2206
        %7018 = vmatpush.bf16.msra.mxu0 %v2202
        %7019 = vmatpush.bf16.msra.mxu0 %v2198
        %7020 = vmatpush.bf16.msra.mxu0 %v2194
        %7021 = vmatpush.bf16.msra.mxu0 %v2190
        %7022 = vmatpush.bf16.msra.mxu0 %v2186
        %7023 = vmatpush.bf16.msra.mxu0 %v2182
        %7024 = vmatpush.bf16.msra.mxu0 %v2178
        %7025 = vmatmul.bf16.gmra.mxu0 %v823
        %v7026 = vpop.f32.mrf.mxu0
        %v7027 = vadd.f32 %v6858, %v7026
        %v7028 = vpop.f32.mrf.mxu0
        %v7029 = vadd.f32 %v6860, %v7028
        %7030 = vmatmul.bf16.gmra.mxu0 %v831
        %v7031 = vpop.f32.mrf.mxu0
        %v7032 = vadd.f32 %v6863, %v7031
        %v7033 = vpop.f32.mrf.mxu0
        %v7034 = vadd.f32 %v6865, %v7033
        %7035 = vmatmul.bf16.gmra.mxu0 %v839
        %v7036 = vpop.f32.mrf.mxu0
        %v7037 = vadd.f32 %v6868, %v7036
        %v7038 = vpop.f32.mrf.mxu0
        %v7039 = vadd.f32 %v6870, %v7038
        %7040 = vmatmul.bf16.gmra.mxu0 %v847
        %v7041 = vpop.f32.mrf.mxu0
        %v7042 = vadd.f32 %v6873, %v7041
        %v7043 = vpop.f32.mrf.mxu0
        %v7044 = vadd.f32 %v6875, %v7043
        %7045 = vmatmul.bf16.gmra.mxu0 %v855
        %v7046 = vpop.f32.mrf.mxu0
        %v7047 = vadd.f32 %v6878, %v7046
        %v7048 = vpop.f32.mrf.mxu0
        %v7049 = vadd.f32 %v6880, %v7048
        %7050 = vmatmul.bf16.gmra.mxu0 %v863
        %v7051 = vpop.f32.mrf.mxu0
        %v7052 = vadd.f32 %v6883, %v7051
        %v7053 = vpop.f32.mrf.mxu0
        %v7054 = vadd.f32 %v6885, %v7053
        %7055 = vmatmul.bf16.gmra.mxu0 %v871
        %v7056 = vpop.f32.mrf.mxu0
        %v7057 = vadd.f32 %v6888, %v7056
        %v7058 = vpop.f32.mrf.mxu0
        %v7059 = vadd.f32 %v6890, %v7058
        %7060 = vmatmul.bf16.gmra.mxu0 %v879
        %v7061 = vpop.f32.mrf.mxu0
        %v7062 = vadd.f32 %v6893, %v7061
        %v7063 = vpop.f32.mrf.mxu0
        %v7064 = vadd.f32 %v6895, %v7063
        %7065 = vmatmul.bf16.gmra.mxu0 %v887
        %v7066 = vpop.f32.mrf.mxu0
        %v7067 = vadd.f32 %v6898, %v7066
        %v7068 = vpop.f32.mrf.mxu0
        %v7069 = vadd.f32 %v6900, %v7068
        %7070 = vmatmul.bf16.gmra.mxu0 %v895
        %v7071 = vpop.f32.mrf.mxu0
        %v7072 = vadd.f32 %v6903, %v7071
        %v7073 = vpop.f32.mrf.mxu0
        %v7074 = vadd.f32 %v6905, %v7073
        %7075 = vmatmul.bf16.gmra.mxu0 %v903
        %v7076 = vpop.f32.mrf.mxu0
        %v7077 = vadd.f32 %v6908, %v7076
        %v7078 = vpop.f32.mrf.mxu0
        %v7079 = vadd.f32 %v6910, %v7078
        %7080 = vmatmul.bf16.gmra.mxu0 %v911
        %v7081 = vpop.f32.mrf.mxu0
        %v7082 = vadd.f32 %v6913, %v7081
        %v7083 = vpop.f32.mrf.mxu0
        %v7084 = vadd.f32 %v6915, %v7083
        %7085 = vmatmul.bf16.gmra.mxu0 %v919
        %v7086 = vpop.f32.mrf.mxu0
        %v7087 = vadd.f32 %v6918, %v7086
        %v7088 = vpop.f32.mrf.mxu0
        %v7089 = vadd.f32 %v6920, %v7088
        %7090 = vmatmul.bf16.gmra.mxu0 %v927
        %v7091 = vpop.f32.mrf.mxu0
        %v7092 = vadd.f32 %v6923, %v7091
        %v7093 = vpop.f32.mrf.mxu0
        %v7094 = vadd.f32 %v6925, %v7093
        %7095 = vmatmul.bf16.gmra.mxu0 %v935
        %v7096 = vpop.f32.mrf.mxu0
        %v7097 = vadd.f32 %v6928, %v7096
        %v7098 = vpop.f32.mrf.mxu0
        %v7099 = vadd.f32 %v6930, %v7098
        %7100 = vmatmul.bf16.gmra.mxu0 %v943
        %v7101 = vpop.f32.mrf.mxu0
        %v7102 = vadd.f32 %v6933, %v7101
        %v7103 = vpop.f32.mrf.mxu0
        %v7104 = vadd.f32 %v6935, %v7103
        %7105 = vmatmul.bf16.gmra.mxu0 %v951
        %v7106 = vpop.f32.mrf.mxu0
        %v7107 = vadd.f32 %v6938, %v7106
        %v7108 = vpop.f32.mrf.mxu0
        %v7109 = vadd.f32 %v6940, %v7108
        %7110 = vmatmul.bf16.gmra.mxu0 %v959
        %v7111 = vpop.f32.mrf.mxu0
        %v7112 = vadd.f32 %v6943, %v7111
        %v7113 = vpop.f32.mrf.mxu0
        %v7114 = vadd.f32 %v6945, %v7113
        %7115 = vmatmul.bf16.gmra.mxu0 %v967
        %v7116 = vpop.f32.mrf.mxu0
        %v7117 = vadd.f32 %v6948, %v7116
        %v7118 = vpop.f32.mrf.mxu0
        %v7119 = vadd.f32 %v6950, %v7118
        %7120 = vmatmul.bf16.gmra.mxu0 %v975
        %v7121 = vpop.f32.mrf.mxu0
        %v7122 = vadd.f32 %v6953, %v7121
        %v7123 = vpop.f32.mrf.mxu0
        %v7124 = vadd.f32 %v6955, %v7123
        %7125 = vmatmul.bf16.gmra.mxu0 %v983
        %v7126 = vpop.f32.mrf.mxu0
        %v7127 = vadd.f32 %v6958, %v7126
        %v7128 = vpop.f32.mrf.mxu0
        %v7129 = vadd.f32 %v6960, %v7128
        %7130 = vmatmul.bf16.gmra.mxu0 %v991
        %v7131 = vpop.f32.mrf.mxu0
        %v7132 = vadd.f32 %v6963, %v7131
        %v7133 = vpop.f32.mrf.mxu0
        %v7134 = vadd.f32 %v6965, %v7133
        %7135 = vmatmul.bf16.gmra.mxu0 %v999
        %v7136 = vpop.f32.mrf.mxu0
        %v7137 = vadd.f32 %v6968, %v7136
        %v7138 = vpop.f32.mrf.mxu0
        %v7139 = vadd.f32 %v6970, %v7138
        %7140 = vmatmul.bf16.gmra.mxu0 %v1007
        %v7141 = vpop.f32.mrf.mxu0
        %v7142 = vadd.f32 %v6973, %v7141
        %v7143 = vpop.f32.mrf.mxu0
        %v7144 = vadd.f32 %v6975, %v7143
        %7145 = vmatmul.bf16.gmra.mxu0 %v1015
        %v7146 = vpop.f32.mrf.mxu0
        %v7147 = vadd.f32 %v6978, %v7146
        %v7148 = vpop.f32.mrf.mxu0
        %v7149 = vadd.f32 %v6980, %v7148
        %7150 = vmatmul.bf16.gmra.mxu0 %v1023
        %v7151 = vpop.f32.mrf.mxu0
        %v7152 = vadd.f32 %v6983, %v7151
        %v7153 = vpop.f32.mrf.mxu0
        %v7154 = vadd.f32 %v6985, %v7153
        %7155 = vmatmul.bf16.gmra.mxu0 %v1031
        %v7156 = vpop.f32.mrf.mxu0
        %v7157 = vadd.f32 %v6988, %v7156
        %v7158 = vpop.f32.mrf.mxu0
        %v7159 = vadd.f32 %v6990, %v7158
        %7160 = vmatmul.bf16.gmra.mxu0 %v1039
        %v7161 = vpop.f32.mrf.mxu0
        %v7162 = vadd.f32 %v6993, %v7161
        %v7163 = vpop.f32.mrf.mxu0
        %v7164 = vadd.f32 %v6995, %v7163
        %7165 = vmatmul.bf16.gmra.mxu0 %v1047
        %v7166 = vpop.f32.mrf.mxu0
        %v7167 = vadd.f32 %v6998, %v7166
        %v7168 = vpop.f32.mrf.mxu0
        %v7169 = vadd.f32 %v7000, %v7168
        %7170 = vmatmul.bf16.gmra.mxu0 %v1055
        %v7171 = vpop.f32.mrf.mxu0
        %v7172 = vadd.f32 %v7003, %v7171
        %v7173 = vpop.f32.mrf.mxu0
        %v7174 = vadd.f32 %v7005, %v7173
        %7175 = vmatmul.bf16.gmra.mxu0 %v1063
        %v7176 = vpop.f32.mrf.mxu0
        %v7177 = vadd.f32 %v7008, %v7176
        %v7178 = vpop.f32.mrf.mxu0
        %v7179 = vadd.f32 %v7010, %v7178
        %7180 = vmatmul.bf16.gmra.mxu0 %v1071
        %v7181 = vpop.f32.mrf.mxu0
        %v7182 = vadd.f32 %v7013, %v7181
        %v7183 = vpop.f32.mrf.mxu0
        %v7184 = vadd.f32 %v7015, %v7183
        %7185 = vdwg.mxu0
        %7186 = vmatpush.bf16.msra.mxu0 %v2238
        %7187 = vmatpush.bf16.msra.mxu0 %v2234
        %7188 = vmatpush.bf16.msra.mxu0 %v2230
        %7189 = vmatpush.bf16.msra.mxu0 %v2226
        %7190 = vmatpush.bf16.msra.mxu0 %v2222
        %7191 = vmatpush.bf16.msra.mxu0 %v2218
        %7192 = vmatpush.bf16.msra.mxu0 %v2214
        %7193 = vmatpush.bf16.msra.mxu0 %v2210
        %7194 = vmatmul.bf16.gmra.mxu0 %v824
        %v7195 = vpop.f32.mrf.mxu0
        %v7196 = vadd.f32 %v7027, %v7195
        %v7197 = vpop.f32.mrf.mxu0
        %v7198 = vadd.f32 %v7029, %v7197
        %7199 = vmatmul.bf16.gmra.mxu0 %v832
        %v7200 = vpop.f32.mrf.mxu0
        %v7201 = vadd.f32 %v7032, %v7200
        %v7202 = vpop.f32.mrf.mxu0
        %v7203 = vadd.f32 %v7034, %v7202
        %7204 = vmatmul.bf16.gmra.mxu0 %v840
        %v7205 = vpop.f32.mrf.mxu0
        %v7206 = vadd.f32 %v7037, %v7205
        %v7207 = vpop.f32.mrf.mxu0
        %v7208 = vadd.f32 %v7039, %v7207
        %7209 = vmatmul.bf16.gmra.mxu0 %v848
        %v7210 = vpop.f32.mrf.mxu0
        %v7211 = vadd.f32 %v7042, %v7210
        %v7212 = vpop.f32.mrf.mxu0
        %v7213 = vadd.f32 %v7044, %v7212
        %7214 = vmatmul.bf16.gmra.mxu0 %v856
        %v7215 = vpop.f32.mrf.mxu0
        %v7216 = vadd.f32 %v7047, %v7215
        %v7217 = vpop.f32.mrf.mxu0
        %v7218 = vadd.f32 %v7049, %v7217
        %7219 = vmatmul.bf16.gmra.mxu0 %v864
        %v7220 = vpop.f32.mrf.mxu0
        %v7221 = vadd.f32 %v7052, %v7220
        %v7222 = vpop.f32.mrf.mxu0
        %v7223 = vadd.f32 %v7054, %v7222
        %7224 = vmatmul.bf16.gmra.mxu0 %v872
        %v7225 = vpop.f32.mrf.mxu0
        %v7226 = vadd.f32 %v7057, %v7225
        %v7227 = vpop.f32.mrf.mxu0
        %v7228 = vadd.f32 %v7059, %v7227
        %7229 = vmatmul.bf16.gmra.mxu0 %v880
        %v7230 = vpop.f32.mrf.mxu0
        %v7231 = vadd.f32 %v7062, %v7230
        %v7232 = vpop.f32.mrf.mxu0
        %v7233 = vadd.f32 %v7064, %v7232
        %7234 = vmatmul.bf16.gmra.mxu0 %v888
        %v7235 = vpop.f32.mrf.mxu0
        %v7236 = vadd.f32 %v7067, %v7235
        %v7237 = vpop.f32.mrf.mxu0
        %v7238 = vadd.f32 %v7069, %v7237
        %7239 = vmatmul.bf16.gmra.mxu0 %v896
        %v7240 = vpop.f32.mrf.mxu0
        %v7241 = vadd.f32 %v7072, %v7240
        %v7242 = vpop.f32.mrf.mxu0
        %v7243 = vadd.f32 %v7074, %v7242
        %7244 = vmatmul.bf16.gmra.mxu0 %v904
        %v7245 = vpop.f32.mrf.mxu0
        %v7246 = vadd.f32 %v7077, %v7245
        %v7247 = vpop.f32.mrf.mxu0
        %v7248 = vadd.f32 %v7079, %v7247
        %7249 = vmatmul.bf16.gmra.mxu0 %v912
        %v7250 = vpop.f32.mrf.mxu0
        %v7251 = vadd.f32 %v7082, %v7250
        %v7252 = vpop.f32.mrf.mxu0
        %v7253 = vadd.f32 %v7084, %v7252
        %7254 = vmatmul.bf16.gmra.mxu0 %v920
        %v7255 = vpop.f32.mrf.mxu0
        %v7256 = vadd.f32 %v7087, %v7255
        %v7257 = vpop.f32.mrf.mxu0
        %v7258 = vadd.f32 %v7089, %v7257
        %7259 = vmatmul.bf16.gmra.mxu0 %v928
        %v7260 = vpop.f32.mrf.mxu0
        %v7261 = vadd.f32 %v7092, %v7260
        %v7262 = vpop.f32.mrf.mxu0
        %v7263 = vadd.f32 %v7094, %v7262
        %7264 = vmatmul.bf16.gmra.mxu0 %v936
        %v7265 = vpop.f32.mrf.mxu0
        %v7266 = vadd.f32 %v7097, %v7265
        %v7267 = vpop.f32.mrf.mxu0
        %v7268 = vadd.f32 %v7099, %v7267
        %7269 = vmatmul.bf16.gmra.mxu0 %v944
        %v7270 = vpop.f32.mrf.mxu0
        %v7271 = vadd.f32 %v7102, %v7270
        %v7272 = vpop.f32.mrf.mxu0
        %v7273 = vadd.f32 %v7104, %v7272
        %7274 = vmatmul.bf16.gmra.mxu0 %v952
        %v7275 = vpop.f32.mrf.mxu0
        %v7276 = vadd.f32 %v7107, %v7275
        %v7277 = vpop.f32.mrf.mxu0
        %v7278 = vadd.f32 %v7109, %v7277
        %7279 = vmatmul.bf16.gmra.mxu0 %v960
        %v7280 = vpop.f32.mrf.mxu0
        %v7281 = vadd.f32 %v7112, %v7280
        %v7282 = vpop.f32.mrf.mxu0
        %v7283 = vadd.f32 %v7114, %v7282
        %7284 = vmatmul.bf16.gmra.mxu0 %v968
        %v7285 = vpop.f32.mrf.mxu0
        %v7286 = vadd.f32 %v7117, %v7285
        %v7287 = vpop.f32.mrf.mxu0
        %v7288 = vadd.f32 %v7119, %v7287
        %7289 = vmatmul.bf16.gmra.mxu0 %v976
        %v7290 = vpop.f32.mrf.mxu0
        %v7291 = vadd.f32 %v7122, %v7290
        %v7292 = vpop.f32.mrf.mxu0
        %v7293 = vadd.f32 %v7124, %v7292
        %7294 = vmatmul.bf16.gmra.mxu0 %v984
        %v7295 = vpop.f32.mrf.mxu0
        %v7296 = vadd.f32 %v7127, %v7295
        %v7297 = vpop.f32.mrf.mxu0
        %v7298 = vadd.f32 %v7129, %v7297
        %7299 = vmatmul.bf16.gmra.mxu0 %v992
        %v7300 = vpop.f32.mrf.mxu0
        %v7301 = vadd.f32 %v7132, %v7300
        %v7302 = vpop.f32.mrf.mxu0
        %v7303 = vadd.f32 %v7134, %v7302
        %7304 = vmatmul.bf16.gmra.mxu0 %v1000
        %v7305 = vpop.f32.mrf.mxu0
        %v7306 = vadd.f32 %v7137, %v7305
        %v7307 = vpop.f32.mrf.mxu0
        %v7308 = vadd.f32 %v7139, %v7307
        %7309 = vmatmul.bf16.gmra.mxu0 %v1008
        %v7310 = vpop.f32.mrf.mxu0
        %v7311 = vadd.f32 %v7142, %v7310
        %v7312 = vpop.f32.mrf.mxu0
        %v7313 = vadd.f32 %v7144, %v7312
        %7314 = vmatmul.bf16.gmra.mxu0 %v1016
        %v7315 = vpop.f32.mrf.mxu0
        %v7316 = vadd.f32 %v7147, %v7315
        %v7317 = vpop.f32.mrf.mxu0
        %v7318 = vadd.f32 %v7149, %v7317
        %7319 = vmatmul.bf16.gmra.mxu0 %v1024
        %v7320 = vpop.f32.mrf.mxu0
        %v7321 = vadd.f32 %v7152, %v7320
        %v7322 = vpop.f32.mrf.mxu0
        %v7323 = vadd.f32 %v7154, %v7322
        %7324 = vmatmul.bf16.gmra.mxu0 %v1032
        %v7325 = vpop.f32.mrf.mxu0
        %v7326 = vadd.f32 %v7157, %v7325
        %v7327 = vpop.f32.mrf.mxu0
        %v7328 = vadd.f32 %v7159, %v7327
        %7329 = vmatmul.bf16.gmra.mxu0 %v1040
        %v7330 = vpop.f32.mrf.mxu0
        %v7331 = vadd.f32 %v7162, %v7330
        %v7332 = vpop.f32.mrf.mxu0
        %v7333 = vadd.f32 %v7164, %v7332
        %7334 = vmatmul.bf16.gmra.mxu0 %v1048
        %v7335 = vpop.f32.mrf.mxu0
        %v7336 = vadd.f32 %v7167, %v7335
        %v7337 = vpop.f32.mrf.mxu0
        %v7338 = vadd.f32 %v7169, %v7337
        %7339 = vmatmul.bf16.gmra.mxu0 %v1056
        %v7340 = vpop.f32.mrf.mxu0
        %v7341 = vadd.f32 %v7172, %v7340
        %v7342 = vpop.f32.mrf.mxu0
        %v7343 = vadd.f32 %v7174, %v7342
        %7344 = vmatmul.bf16.gmra.mxu0 %v1064
        %v7345 = vpop.f32.mrf.mxu0
        %v7346 = vadd.f32 %v7177, %v7345
        %v7347 = vpop.f32.mrf.mxu0
        %v7348 = vadd.f32 %v7179, %v7347
        %7349 = vmatmul.bf16.gmra.mxu0 %v1072
        %v7350 = vpop.f32.mrf.mxu0
        %v7351 = vadd.f32 %v7182, %v7350
        %v7352 = vpop.f32.mrf.mxu0
        %v7353 = vadd.f32 %v7184, %v7352
        %7354 = vdwg.mxu0
        %7355 = vmatpush.bf16.msra.mxu0 %v2270
        %7356 = vmatpush.bf16.msra.mxu0 %v2266
        %7357 = vmatpush.bf16.msra.mxu0 %v2262
        %7358 = vmatpush.bf16.msra.mxu0 %v2258
        %7359 = vmatpush.bf16.msra.mxu0 %v2254
        %7360 = vmatpush.bf16.msra.mxu0 %v2250
        %7361 = vmatpush.bf16.msra.mxu0 %v2246
        %7362 = vmatpush.bf16.msra.mxu0 %v2242
        %7363 = vmatmul.bf16.gmra.mxu0 %v825
        %v7364 = vpop.f32.mrf.mxu0
        %v7365 = vadd.f32 %v7196, %v7364
        %v7366 = vpop.f32.mrf.mxu0
        %v7367 = vadd.f32 %v7198, %v7366
        %7368 = vmatmul.bf16.gmra.mxu0 %v833
        %v7369 = vpop.f32.mrf.mxu0
        %v7370 = vadd.f32 %v7201, %v7369
        %v7371 = vpop.f32.mrf.mxu0
        %v7372 = vadd.f32 %v7203, %v7371
        %7373 = vmatmul.bf16.gmra.mxu0 %v841
        %v7374 = vpop.f32.mrf.mxu0
        %v7375 = vadd.f32 %v7206, %v7374
        %v7376 = vpop.f32.mrf.mxu0
        %v7377 = vadd.f32 %v7208, %v7376
        %7378 = vmatmul.bf16.gmra.mxu0 %v849
        %v7379 = vpop.f32.mrf.mxu0
        %v7380 = vadd.f32 %v7211, %v7379
        %v7381 = vpop.f32.mrf.mxu0
        %v7382 = vadd.f32 %v7213, %v7381
        %7383 = vmatmul.bf16.gmra.mxu0 %v857
        %v7384 = vpop.f32.mrf.mxu0
        %v7385 = vadd.f32 %v7216, %v7384
        %v7386 = vpop.f32.mrf.mxu0
        %v7387 = vadd.f32 %v7218, %v7386
        %7388 = vmatmul.bf16.gmra.mxu0 %v865
        %v7389 = vpop.f32.mrf.mxu0
        %v7390 = vadd.f32 %v7221, %v7389
        %v7391 = vpop.f32.mrf.mxu0
        %v7392 = vadd.f32 %v7223, %v7391
        %7393 = vmatmul.bf16.gmra.mxu0 %v873
        %v7394 = vpop.f32.mrf.mxu0
        %v7395 = vadd.f32 %v7226, %v7394
        %v7396 = vpop.f32.mrf.mxu0
        %v7397 = vadd.f32 %v7228, %v7396
        %7398 = vmatmul.bf16.gmra.mxu0 %v881
        %v7399 = vpop.f32.mrf.mxu0
        %v7400 = vadd.f32 %v7231, %v7399
        %v7401 = vpop.f32.mrf.mxu0
        %v7402 = vadd.f32 %v7233, %v7401
        %7403 = vmatmul.bf16.gmra.mxu0 %v889
        %v7404 = vpop.f32.mrf.mxu0
        %v7405 = vadd.f32 %v7236, %v7404
        %v7406 = vpop.f32.mrf.mxu0
        %v7407 = vadd.f32 %v7238, %v7406
        %7408 = vmatmul.bf16.gmra.mxu0 %v897
        %v7409 = vpop.f32.mrf.mxu0
        %v7410 = vadd.f32 %v7241, %v7409
        %v7411 = vpop.f32.mrf.mxu0
        %v7412 = vadd.f32 %v7243, %v7411
        %7413 = vmatmul.bf16.gmra.mxu0 %v905
        %v7414 = vpop.f32.mrf.mxu0
        %v7415 = vadd.f32 %v7246, %v7414
        %v7416 = vpop.f32.mrf.mxu0
        %v7417 = vadd.f32 %v7248, %v7416
        %7418 = vmatmul.bf16.gmra.mxu0 %v913
        %v7419 = vpop.f32.mrf.mxu0
        %v7420 = vadd.f32 %v7251, %v7419
        %v7421 = vpop.f32.mrf.mxu0
        %v7422 = vadd.f32 %v7253, %v7421
        %7423 = vmatmul.bf16.gmra.mxu0 %v921
        %v7424 = vpop.f32.mrf.mxu0
        %v7425 = vadd.f32 %v7256, %v7424
        %v7426 = vpop.f32.mrf.mxu0
        %v7427 = vadd.f32 %v7258, %v7426
        %7428 = vmatmul.bf16.gmra.mxu0 %v929
        %v7429 = vpop.f32.mrf.mxu0
        %v7430 = vadd.f32 %v7261, %v7429
        %v7431 = vpop.f32.mrf.mxu0
        %v7432 = vadd.f32 %v7263, %v7431
        %7433 = vmatmul.bf16.gmra.mxu0 %v937
        %v7434 = vpop.f32.mrf.mxu0
        %v7435 = vadd.f32 %v7266, %v7434
        %v7436 = vpop.f32.mrf.mxu0
        %v7437 = vadd.f32 %v7268, %v7436
        %7438 = vmatmul.bf16.gmra.mxu0 %v945
        %v7439 = vpop.f32.mrf.mxu0
        %v7440 = vadd.f32 %v7271, %v7439
        %v7441 = vpop.f32.mrf.mxu0
        %v7442 = vadd.f32 %v7273, %v7441
        %7443 = vmatmul.bf16.gmra.mxu0 %v953
        %v7444 = vpop.f32.mrf.mxu0
        %v7445 = vadd.f32 %v7276, %v7444
        %v7446 = vpop.f32.mrf.mxu0
        %v7447 = vadd.f32 %v7278, %v7446
        %7448 = vmatmul.bf16.gmra.mxu0 %v961
        %v7449 = vpop.f32.mrf.mxu0
        %v7450 = vadd.f32 %v7281, %v7449
        %v7451 = vpop.f32.mrf.mxu0
        %v7452 = vadd.f32 %v7283, %v7451
        %7453 = vmatmul.bf16.gmra.mxu0 %v969
        %v7454 = vpop.f32.mrf.mxu0
        %v7455 = vadd.f32 %v7286, %v7454
        %v7456 = vpop.f32.mrf.mxu0
        %v7457 = vadd.f32 %v7288, %v7456
        %7458 = vmatmul.bf16.gmra.mxu0 %v977
        %v7459 = vpop.f32.mrf.mxu0
        %v7460 = vadd.f32 %v7291, %v7459
        %v7461 = vpop.f32.mrf.mxu0
        %v7462 = vadd.f32 %v7293, %v7461
        %7463 = vmatmul.bf16.gmra.mxu0 %v985
        %v7464 = vpop.f32.mrf.mxu0
        %v7465 = vadd.f32 %v7296, %v7464
        %v7466 = vpop.f32.mrf.mxu0
        %v7467 = vadd.f32 %v7298, %v7466
        %7468 = vmatmul.bf16.gmra.mxu0 %v993
        %v7469 = vpop.f32.mrf.mxu0
        %v7470 = vadd.f32 %v7301, %v7469
        %v7471 = vpop.f32.mrf.mxu0
        %v7472 = vadd.f32 %v7303, %v7471
        %7473 = vmatmul.bf16.gmra.mxu0 %v1001
        %v7474 = vpop.f32.mrf.mxu0
        %v7475 = vadd.f32 %v7306, %v7474
        %v7476 = vpop.f32.mrf.mxu0
        %v7477 = vadd.f32 %v7308, %v7476
        %7478 = vmatmul.bf16.gmra.mxu0 %v1009
        %v7479 = vpop.f32.mrf.mxu0
        %v7480 = vadd.f32 %v7311, %v7479
        %v7481 = vpop.f32.mrf.mxu0
        %v7482 = vadd.f32 %v7313, %v7481
        %7483 = vmatmul.bf16.gmra.mxu0 %v1017
        %v7484 = vpop.f32.mrf.mxu0
        %v7485 = vadd.f32 %v7316, %v7484
        %v7486 = vpop.f32.mrf.mxu0
        %v7487 = vadd.f32 %v7318, %v7486
        %7488 = vmatmul.bf16.gmra.mxu0 %v1025
        %v7489 = vpop.f32.mrf.mxu0
        %v7490 = vadd.f32 %v7321, %v7489
        %v7491 = vpop.f32.mrf.mxu0
        %v7492 = vadd.f32 %v7323, %v7491
        %7493 = vmatmul.bf16.gmra.mxu0 %v1033
        %v7494 = vpop.f32.mrf.mxu0
        %v7495 = vadd.f32 %v7326, %v7494
        %v7496 = vpop.f32.mrf.mxu0
        %v7497 = vadd.f32 %v7328, %v7496
        %7498 = vmatmul.bf16.gmra.mxu0 %v1041
        %v7499 = vpop.f32.mrf.mxu0
        %v7500 = vadd.f32 %v7331, %v7499
        %v7501 = vpop.f32.mrf.mxu0
        %v7502 = vadd.f32 %v7333, %v7501
        %7503 = vmatmul.bf16.gmra.mxu0 %v1049
        %v7504 = vpop.f32.mrf.mxu0
        %v7505 = vadd.f32 %v7336, %v7504
        %v7506 = vpop.f32.mrf.mxu0
        %v7507 = vadd.f32 %v7338, %v7506
        %7508 = vmatmul.bf16.gmra.mxu0 %v1057
        %v7509 = vpop.f32.mrf.mxu0
        %v7510 = vadd.f32 %v7341, %v7509
        %v7511 = vpop.f32.mrf.mxu0
        %v7512 = vadd.f32 %v7343, %v7511
        %7513 = vmatmul.bf16.gmra.mxu0 %v1065
        %v7514 = vpop.f32.mrf.mxu0
        %v7515 = vadd.f32 %v7346, %v7514
        %v7516 = vpop.f32.mrf.mxu0
        %v7517 = vadd.f32 %v7348, %v7516
        %7518 = vmatmul.bf16.gmra.mxu0 %v1073
        %v7519 = vpop.f32.mrf.mxu0
        %v7520 = vadd.f32 %v7351, %v7519
        %v7521 = vpop.f32.mrf.mxu0
        %v7522 = vadd.f32 %v7353, %v7521
        %7523 = vdwg.mxu0
        %7524 = vmatpush.bf16.msra.mxu0 %v2302
        %7525 = vmatpush.bf16.msra.mxu0 %v2298
        %7526 = vmatpush.bf16.msra.mxu0 %v2294
        %7527 = vmatpush.bf16.msra.mxu0 %v2290
        %7528 = vmatpush.bf16.msra.mxu0 %v2286
        %7529 = vmatpush.bf16.msra.mxu0 %v2282
        %7530 = vmatpush.bf16.msra.mxu0 %v2278
        %7531 = vmatpush.bf16.msra.mxu0 %v2274
        %7532 = vmatmul.bf16.gmra.mxu0 %v826
        %v7533 = vpop.f32.mrf.mxu0
        %v7534 = vadd.f32 %v7365, %v7533
        %v7535 = vpop.f32.mrf.mxu0
        %v7536 = vadd.f32 %v7367, %v7535
        %7537 = vmatmul.bf16.gmra.mxu0 %v834
        %v7538 = vpop.f32.mrf.mxu0
        %v7539 = vadd.f32 %v7370, %v7538
        %v7540 = vpop.f32.mrf.mxu0
        %v7541 = vadd.f32 %v7372, %v7540
        %7542 = vmatmul.bf16.gmra.mxu0 %v842
        %v7543 = vpop.f32.mrf.mxu0
        %v7544 = vadd.f32 %v7375, %v7543
        %v7545 = vpop.f32.mrf.mxu0
        %v7546 = vadd.f32 %v7377, %v7545
        %7547 = vmatmul.bf16.gmra.mxu0 %v850
        %v7548 = vpop.f32.mrf.mxu0
        %v7549 = vadd.f32 %v7380, %v7548
        %v7550 = vpop.f32.mrf.mxu0
        %v7551 = vadd.f32 %v7382, %v7550
        %7552 = vmatmul.bf16.gmra.mxu0 %v858
        %v7553 = vpop.f32.mrf.mxu0
        %v7554 = vadd.f32 %v7385, %v7553
        %v7555 = vpop.f32.mrf.mxu0
        %v7556 = vadd.f32 %v7387, %v7555
        %7557 = vmatmul.bf16.gmra.mxu0 %v866
        %v7558 = vpop.f32.mrf.mxu0
        %v7559 = vadd.f32 %v7390, %v7558
        %v7560 = vpop.f32.mrf.mxu0
        %v7561 = vadd.f32 %v7392, %v7560
        %7562 = vmatmul.bf16.gmra.mxu0 %v874
        %v7563 = vpop.f32.mrf.mxu0
        %v7564 = vadd.f32 %v7395, %v7563
        %v7565 = vpop.f32.mrf.mxu0
        %v7566 = vadd.f32 %v7397, %v7565
        %7567 = vmatmul.bf16.gmra.mxu0 %v882
        %v7568 = vpop.f32.mrf.mxu0
        %v7569 = vadd.f32 %v7400, %v7568
        %v7570 = vpop.f32.mrf.mxu0
        %v7571 = vadd.f32 %v7402, %v7570
        %7572 = vmatmul.bf16.gmra.mxu0 %v890
        %v7573 = vpop.f32.mrf.mxu0
        %v7574 = vadd.f32 %v7405, %v7573
        %v7575 = vpop.f32.mrf.mxu0
        %v7576 = vadd.f32 %v7407, %v7575
        %7577 = vmatmul.bf16.gmra.mxu0 %v898
        %v7578 = vpop.f32.mrf.mxu0
        %v7579 = vadd.f32 %v7410, %v7578
        %v7580 = vpop.f32.mrf.mxu0
        %v7581 = vadd.f32 %v7412, %v7580
        %7582 = vmatmul.bf16.gmra.mxu0 %v906
        %v7583 = vpop.f32.mrf.mxu0
        %v7584 = vadd.f32 %v7415, %v7583
        %v7585 = vpop.f32.mrf.mxu0
        %v7586 = vadd.f32 %v7417, %v7585
        %7587 = vmatmul.bf16.gmra.mxu0 %v914
        %v7588 = vpop.f32.mrf.mxu0
        %v7589 = vadd.f32 %v7420, %v7588
        %v7590 = vpop.f32.mrf.mxu0
        %v7591 = vadd.f32 %v7422, %v7590
        %7592 = vmatmul.bf16.gmra.mxu0 %v922
        %v7593 = vpop.f32.mrf.mxu0
        %v7594 = vadd.f32 %v7425, %v7593
        %v7595 = vpop.f32.mrf.mxu0
        %v7596 = vadd.f32 %v7427, %v7595
        %7597 = vmatmul.bf16.gmra.mxu0 %v930
        %v7598 = vpop.f32.mrf.mxu0
        %v7599 = vadd.f32 %v7430, %v7598
        %v7600 = vpop.f32.mrf.mxu0
        %v7601 = vadd.f32 %v7432, %v7600
        %7602 = vmatmul.bf16.gmra.mxu0 %v938
        %v7603 = vpop.f32.mrf.mxu0
        %v7604 = vadd.f32 %v7435, %v7603
        %v7605 = vpop.f32.mrf.mxu0
        %v7606 = vadd.f32 %v7437, %v7605
        %7607 = vmatmul.bf16.gmra.mxu0 %v946
        %v7608 = vpop.f32.mrf.mxu0
        %v7609 = vadd.f32 %v7440, %v7608
        %v7610 = vpop.f32.mrf.mxu0
        %v7611 = vadd.f32 %v7442, %v7610
        %7612 = vmatmul.bf16.gmra.mxu0 %v954
        %v7613 = vpop.f32.mrf.mxu0
        %v7614 = vadd.f32 %v7445, %v7613
        %v7615 = vpop.f32.mrf.mxu0
        %v7616 = vadd.f32 %v7447, %v7615
        %7617 = vmatmul.bf16.gmra.mxu0 %v962
        %v7618 = vpop.f32.mrf.mxu0
        %v7619 = vadd.f32 %v7450, %v7618
        %v7620 = vpop.f32.mrf.mxu0
        %v7621 = vadd.f32 %v7452, %v7620
        %7622 = vmatmul.bf16.gmra.mxu0 %v970
        %v7623 = vpop.f32.mrf.mxu0
        %v7624 = vadd.f32 %v7455, %v7623
        %v7625 = vpop.f32.mrf.mxu0
        %v7626 = vadd.f32 %v7457, %v7625
        %7627 = vmatmul.bf16.gmra.mxu0 %v978
        %v7628 = vpop.f32.mrf.mxu0
        %v7629 = vadd.f32 %v7460, %v7628
        %v7630 = vpop.f32.mrf.mxu0
        %v7631 = vadd.f32 %v7462, %v7630
        %7632 = vmatmul.bf16.gmra.mxu0 %v986
        %v7633 = vpop.f32.mrf.mxu0
        %v7634 = vadd.f32 %v7465, %v7633
        %v7635 = vpop.f32.mrf.mxu0
        %v7636 = vadd.f32 %v7467, %v7635
        %7637 = vmatmul.bf16.gmra.mxu0 %v994
        %v7638 = vpop.f32.mrf.mxu0
        %v7639 = vadd.f32 %v7470, %v7638
        %v7640 = vpop.f32.mrf.mxu0
        %v7641 = vadd.f32 %v7472, %v7640
        %7642 = vmatmul.bf16.gmra.mxu0 %v1002
        %v7643 = vpop.f32.mrf.mxu0
        %v7644 = vadd.f32 %v7475, %v7643
        %v7645 = vpop.f32.mrf.mxu0
        %v7646 = vadd.f32 %v7477, %v7645
        %7647 = vmatmul.bf16.gmra.mxu0 %v1010
        %v7648 = vpop.f32.mrf.mxu0
        %v7649 = vadd.f32 %v7480, %v7648
        %v7650 = vpop.f32.mrf.mxu0
        %v7651 = vadd.f32 %v7482, %v7650
        %7652 = vmatmul.bf16.gmra.mxu0 %v1018
        %v7653 = vpop.f32.mrf.mxu0
        %v7654 = vadd.f32 %v7485, %v7653
        %v7655 = vpop.f32.mrf.mxu0
        %v7656 = vadd.f32 %v7487, %v7655
        %7657 = vmatmul.bf16.gmra.mxu0 %v1026
        %v7658 = vpop.f32.mrf.mxu0
        %v7659 = vadd.f32 %v7490, %v7658
        %v7660 = vpop.f32.mrf.mxu0
        %v7661 = vadd.f32 %v7492, %v7660
        %7662 = vmatmul.bf16.gmra.mxu0 %v1034
        %v7663 = vpop.f32.mrf.mxu0
        %v7664 = vadd.f32 %v7495, %v7663
        %v7665 = vpop.f32.mrf.mxu0
        %v7666 = vadd.f32 %v7497, %v7665
        %7667 = vmatmul.bf16.gmra.mxu0 %v1042
        %v7668 = vpop.f32.mrf.mxu0
        %v7669 = vadd.f32 %v7500, %v7668
        %v7670 = vpop.f32.mrf.mxu0
        %v7671 = vadd.f32 %v7502, %v7670
        %7672 = vmatmul.bf16.gmra.mxu0 %v1050
        %v7673 = vpop.f32.mrf.mxu0
        %v7674 = vadd.f32 %v7505, %v7673
        %v7675 = vpop.f32.mrf.mxu0
        %v7676 = vadd.f32 %v7507, %v7675
        %7677 = vmatmul.bf16.gmra.mxu0 %v1058
        %v7678 = vpop.f32.mrf.mxu0
        %v7679 = vadd.f32 %v7510, %v7678
        %v7680 = vpop.f32.mrf.mxu0
        %v7681 = vadd.f32 %v7512, %v7680
        %7682 = vmatmul.bf16.gmra.mxu0 %v1066
        %v7683 = vpop.f32.mrf.mxu0
        %v7684 = vadd.f32 %v7515, %v7683
        %v7685 = vpop.f32.mrf.mxu0
        %v7686 = vadd.f32 %v7517, %v7685
        %7687 = vmatmul.bf16.gmra.mxu0 %v1074
        %v7688 = vpop.f32.mrf.mxu0
        %v7689 = vadd.f32 %v7520, %v7688
        %v7690 = vpop.f32.mrf.mxu0
        %v7691 = vadd.f32 %v7522, %v7690
        %7692 = vdwg.mxu0
        %7693 = vmatpush.bf16.msra.mxu0 %v2334
        %7694 = vmatpush.bf16.msra.mxu0 %v2330
        %7695 = vmatpush.bf16.msra.mxu0 %v2326
        %7696 = vmatpush.bf16.msra.mxu0 %v2322
        %7697 = vmatpush.bf16.msra.mxu0 %v2318
        %7698 = vmatpush.bf16.msra.mxu0 %v2314
        %7699 = vmatpush.bf16.msra.mxu0 %v2310
        %7700 = vmatpush.bf16.msra.mxu0 %v2306
        %7701 = vmatmul.bf16.gmra.mxu0 %v827
        %v7702 = vpop.f32.mrf.mxu0
        %v7703 = vadd.f32 %v7534, %v7702
        %v7704 = vpop.f32.mrf.mxu0
        %v7705 = vadd.f32 %v7536, %v7704
        %7706 = vmatmul.bf16.gmra.mxu0 %v835
        %v7707 = vpop.f32.mrf.mxu0
        %v7708 = vadd.f32 %v7539, %v7707
        %v7709 = vpop.f32.mrf.mxu0
        %v7710 = vadd.f32 %v7541, %v7709
        %7711 = vmatmul.bf16.gmra.mxu0 %v843
        %v7712 = vpop.f32.mrf.mxu0
        %v7713 = vadd.f32 %v7544, %v7712
        %v7714 = vpop.f32.mrf.mxu0
        %v7715 = vadd.f32 %v7546, %v7714
        %7716 = vmatmul.bf16.gmra.mxu0 %v851
        %v7717 = vpop.f32.mrf.mxu0
        %v7718 = vadd.f32 %v7549, %v7717
        %v7719 = vpop.f32.mrf.mxu0
        %v7720 = vadd.f32 %v7551, %v7719
        %7721 = vmatmul.bf16.gmra.mxu0 %v859
        %v7722 = vpop.f32.mrf.mxu0
        %v7723 = vadd.f32 %v7554, %v7722
        %v7724 = vpop.f32.mrf.mxu0
        %v7725 = vadd.f32 %v7556, %v7724
        %7726 = vmatmul.bf16.gmra.mxu0 %v867
        %v7727 = vpop.f32.mrf.mxu0
        %v7728 = vadd.f32 %v7559, %v7727
        %v7729 = vpop.f32.mrf.mxu0
        %v7730 = vadd.f32 %v7561, %v7729
        %7731 = vmatmul.bf16.gmra.mxu0 %v875
        %v7732 = vpop.f32.mrf.mxu0
        %v7733 = vadd.f32 %v7564, %v7732
        %v7734 = vpop.f32.mrf.mxu0
        %v7735 = vadd.f32 %v7566, %v7734
        %7736 = vmatmul.bf16.gmra.mxu0 %v883
        %v7737 = vpop.f32.mrf.mxu0
        %v7738 = vadd.f32 %v7569, %v7737
        %v7739 = vpop.f32.mrf.mxu0
        %v7740 = vadd.f32 %v7571, %v7739
        %7741 = vmatmul.bf16.gmra.mxu0 %v891
        %v7742 = vpop.f32.mrf.mxu0
        %v7743 = vadd.f32 %v7574, %v7742
        %v7744 = vpop.f32.mrf.mxu0
        %v7745 = vadd.f32 %v7576, %v7744
        %7746 = vmatmul.bf16.gmra.mxu0 %v899
        %v7747 = vpop.f32.mrf.mxu0
        %v7748 = vadd.f32 %v7579, %v7747
        %v7749 = vpop.f32.mrf.mxu0
        %v7750 = vadd.f32 %v7581, %v7749
        %7751 = vmatmul.bf16.gmra.mxu0 %v907
        %v7752 = vpop.f32.mrf.mxu0
        %v7753 = vadd.f32 %v7584, %v7752
        %v7754 = vpop.f32.mrf.mxu0
        %v7755 = vadd.f32 %v7586, %v7754
        %7756 = vmatmul.bf16.gmra.mxu0 %v915
        %v7757 = vpop.f32.mrf.mxu0
        %v7758 = vadd.f32 %v7589, %v7757
        %v7759 = vpop.f32.mrf.mxu0
        %v7760 = vadd.f32 %v7591, %v7759
        %7761 = vmatmul.bf16.gmra.mxu0 %v923
        %v7762 = vpop.f32.mrf.mxu0
        %v7763 = vadd.f32 %v7594, %v7762
        %v7764 = vpop.f32.mrf.mxu0
        %v7765 = vadd.f32 %v7596, %v7764
        %7766 = vmatmul.bf16.gmra.mxu0 %v931
        %v7767 = vpop.f32.mrf.mxu0
        %v7768 = vadd.f32 %v7599, %v7767
        %v7769 = vpop.f32.mrf.mxu0
        %v7770 = vadd.f32 %v7601, %v7769
        %7771 = vmatmul.bf16.gmra.mxu0 %v939
        %v7772 = vpop.f32.mrf.mxu0
        %v7773 = vadd.f32 %v7604, %v7772
        %v7774 = vpop.f32.mrf.mxu0
        %v7775 = vadd.f32 %v7606, %v7774
        %7776 = vmatmul.bf16.gmra.mxu0 %v947
        %v7777 = vpop.f32.mrf.mxu0
        %v7778 = vadd.f32 %v7609, %v7777
        %v7779 = vpop.f32.mrf.mxu0
        %v7780 = vadd.f32 %v7611, %v7779
        %7781 = vmatmul.bf16.gmra.mxu0 %v955
        %v7782 = vpop.f32.mrf.mxu0
        %v7783 = vadd.f32 %v7614, %v7782
        %v7784 = vpop.f32.mrf.mxu0
        %v7785 = vadd.f32 %v7616, %v7784
        %7786 = vmatmul.bf16.gmra.mxu0 %v963
        %v7787 = vpop.f32.mrf.mxu0
        %v7788 = vadd.f32 %v7619, %v7787
        %v7789 = vpop.f32.mrf.mxu0
        %v7790 = vadd.f32 %v7621, %v7789
        %7791 = vmatmul.bf16.gmra.mxu0 %v971
        %v7792 = vpop.f32.mrf.mxu0
        %v7793 = vadd.f32 %v7624, %v7792
        %v7794 = vpop.f32.mrf.mxu0
        %v7795 = vadd.f32 %v7626, %v7794
        %7796 = vmatmul.bf16.gmra.mxu0 %v979
        %v7797 = vpop.f32.mrf.mxu0
        %v7798 = vadd.f32 %v7629, %v7797
        %v7799 = vpop.f32.mrf.mxu0
        %v7800 = vadd.f32 %v7631, %v7799
        %7801 = vmatmul.bf16.gmra.mxu0 %v987
        %v7802 = vpop.f32.mrf.mxu0
        %v7803 = vadd.f32 %v7634, %v7802
        %v7804 = vpop.f32.mrf.mxu0
        %v7805 = vadd.f32 %v7636, %v7804
        %7806 = vmatmul.bf16.gmra.mxu0 %v995
        %v7807 = vpop.f32.mrf.mxu0
        %v7808 = vadd.f32 %v7639, %v7807
        %v7809 = vpop.f32.mrf.mxu0
        %v7810 = vadd.f32 %v7641, %v7809
        %7811 = vmatmul.bf16.gmra.mxu0 %v1003
        %v7812 = vpop.f32.mrf.mxu0
        %v7813 = vadd.f32 %v7644, %v7812
        %v7814 = vpop.f32.mrf.mxu0
        %v7815 = vadd.f32 %v7646, %v7814
        %7816 = vmatmul.bf16.gmra.mxu0 %v1011
        %v7817 = vpop.f32.mrf.mxu0
        %v7818 = vadd.f32 %v7649, %v7817
        %v7819 = vpop.f32.mrf.mxu0
        %v7820 = vadd.f32 %v7651, %v7819
        %7821 = vmatmul.bf16.gmra.mxu0 %v1019
        %v7822 = vpop.f32.mrf.mxu0
        %v7823 = vadd.f32 %v7654, %v7822
        %v7824 = vpop.f32.mrf.mxu0
        %v7825 = vadd.f32 %v7656, %v7824
        %7826 = vmatmul.bf16.gmra.mxu0 %v1027
        %v7827 = vpop.f32.mrf.mxu0
        %v7828 = vadd.f32 %v7659, %v7827
        %v7829 = vpop.f32.mrf.mxu0
        %v7830 = vadd.f32 %v7661, %v7829
        %7831 = vmatmul.bf16.gmra.mxu0 %v1035
        %v7832 = vpop.f32.mrf.mxu0
        %v7833 = vadd.f32 %v7664, %v7832
        %v7834 = vpop.f32.mrf.mxu0
        %v7835 = vadd.f32 %v7666, %v7834
        %7836 = vmatmul.bf16.gmra.mxu0 %v1043
        %v7837 = vpop.f32.mrf.mxu0
        %v7838 = vadd.f32 %v7669, %v7837
        %v7839 = vpop.f32.mrf.mxu0
        %v7840 = vadd.f32 %v7671, %v7839
        %7841 = vmatmul.bf16.gmra.mxu0 %v1051
        %v7842 = vpop.f32.mrf.mxu0
        %v7843 = vadd.f32 %v7674, %v7842
        %v7844 = vpop.f32.mrf.mxu0
        %v7845 = vadd.f32 %v7676, %v7844
        %7846 = vmatmul.bf16.gmra.mxu0 %v1059
        %v7847 = vpop.f32.mrf.mxu0
        %v7848 = vadd.f32 %v7679, %v7847
        %v7849 = vpop.f32.mrf.mxu0
        %v7850 = vadd.f32 %v7681, %v7849
        %7851 = vmatmul.bf16.gmra.mxu0 %v1067
        %v7852 = vpop.f32.mrf.mxu0
        %v7853 = vadd.f32 %v7684, %v7852
        %v7854 = vpop.f32.mrf.mxu0
        %v7855 = vadd.f32 %v7686, %v7854
        %7856 = vmatmul.bf16.gmra.mxu0 %v1075
        %v7857 = vpop.f32.mrf.mxu0
        %v7858 = vadd.f32 %v7689, %v7857
        %v7859 = vpop.f32.mrf.mxu0
        %v7860 = vadd.f32 %v7691, %v7859
        %7861 = vdwg.mxu0
        %7862 = vmatpush.bf16.msra.mxu0 %v2366
        %7863 = vmatpush.bf16.msra.mxu0 %v2362
        %7864 = vmatpush.bf16.msra.mxu0 %v2358
        %7865 = vmatpush.bf16.msra.mxu0 %v2354
        %7866 = vmatpush.bf16.msra.mxu0 %v2350
        %7867 = vmatpush.bf16.msra.mxu0 %v2346
        %7868 = vmatpush.bf16.msra.mxu0 %v2342
        %7869 = vmatpush.bf16.msra.mxu0 %v2338
        %7870 = vmatmul.bf16.gmra.mxu0 %v828
        %v7871 = vpop.f32.mrf.mxu0
        %v7872 = vadd.f32 %v7703, %v7871
        %v7873 = vpop.f32.mrf.mxu0
        %v7874 = vadd.f32 %v7705, %v7873
        %7875 = vmatmul.bf16.gmra.mxu0 %v836
        %v7876 = vpop.f32.mrf.mxu0
        %v7877 = vadd.f32 %v7708, %v7876
        %v7878 = vpop.f32.mrf.mxu0
        %v7879 = vadd.f32 %v7710, %v7878
        %7880 = vmatmul.bf16.gmra.mxu0 %v844
        %v7881 = vpop.f32.mrf.mxu0
        %v7882 = vadd.f32 %v7713, %v7881
        %v7883 = vpop.f32.mrf.mxu0
        %v7884 = vadd.f32 %v7715, %v7883
        %7885 = vmatmul.bf16.gmra.mxu0 %v852
        %v7886 = vpop.f32.mrf.mxu0
        %v7887 = vadd.f32 %v7718, %v7886
        %v7888 = vpop.f32.mrf.mxu0
        %v7889 = vadd.f32 %v7720, %v7888
        %7890 = vmatmul.bf16.gmra.mxu0 %v860
        %v7891 = vpop.f32.mrf.mxu0
        %v7892 = vadd.f32 %v7723, %v7891
        %v7893 = vpop.f32.mrf.mxu0
        %v7894 = vadd.f32 %v7725, %v7893
        %7895 = vmatmul.bf16.gmra.mxu0 %v868
        %v7896 = vpop.f32.mrf.mxu0
        %v7897 = vadd.f32 %v7728, %v7896
        %v7898 = vpop.f32.mrf.mxu0
        %v7899 = vadd.f32 %v7730, %v7898
        %7900 = vmatmul.bf16.gmra.mxu0 %v876
        %v7901 = vpop.f32.mrf.mxu0
        %v7902 = vadd.f32 %v7733, %v7901
        %v7903 = vpop.f32.mrf.mxu0
        %v7904 = vadd.f32 %v7735, %v7903
        %7905 = vmatmul.bf16.gmra.mxu0 %v884
        %v7906 = vpop.f32.mrf.mxu0
        %v7907 = vadd.f32 %v7738, %v7906
        %v7908 = vpop.f32.mrf.mxu0
        %v7909 = vadd.f32 %v7740, %v7908
        %7910 = vmatmul.bf16.gmra.mxu0 %v892
        %v7911 = vpop.f32.mrf.mxu0
        %v7912 = vadd.f32 %v7743, %v7911
        %v7913 = vpop.f32.mrf.mxu0
        %v7914 = vadd.f32 %v7745, %v7913
        %7915 = vmatmul.bf16.gmra.mxu0 %v900
        %v7916 = vpop.f32.mrf.mxu0
        %v7917 = vadd.f32 %v7748, %v7916
        %v7918 = vpop.f32.mrf.mxu0
        %v7919 = vadd.f32 %v7750, %v7918
        %7920 = vmatmul.bf16.gmra.mxu0 %v908
        %v7921 = vpop.f32.mrf.mxu0
        %v7922 = vadd.f32 %v7753, %v7921
        %v7923 = vpop.f32.mrf.mxu0
        %v7924 = vadd.f32 %v7755, %v7923
        %7925 = vmatmul.bf16.gmra.mxu0 %v916
        %v7926 = vpop.f32.mrf.mxu0
        %v7927 = vadd.f32 %v7758, %v7926
        %v7928 = vpop.f32.mrf.mxu0
        %v7929 = vadd.f32 %v7760, %v7928
        %7930 = vmatmul.bf16.gmra.mxu0 %v924
        %v7931 = vpop.f32.mrf.mxu0
        %v7932 = vadd.f32 %v7763, %v7931
        %v7933 = vpop.f32.mrf.mxu0
        %v7934 = vadd.f32 %v7765, %v7933
        %7935 = vmatmul.bf16.gmra.mxu0 %v932
        %v7936 = vpop.f32.mrf.mxu0
        %v7937 = vadd.f32 %v7768, %v7936
        %v7938 = vpop.f32.mrf.mxu0
        %v7939 = vadd.f32 %v7770, %v7938
        %7940 = vmatmul.bf16.gmra.mxu0 %v940
        %v7941 = vpop.f32.mrf.mxu0
        %v7942 = vadd.f32 %v7773, %v7941
        %v7943 = vpop.f32.mrf.mxu0
        %v7944 = vadd.f32 %v7775, %v7943
        %7945 = vmatmul.bf16.gmra.mxu0 %v948
        %v7946 = vpop.f32.mrf.mxu0
        %v7947 = vadd.f32 %v7778, %v7946
        %v7948 = vpop.f32.mrf.mxu0
        %v7949 = vadd.f32 %v7780, %v7948
        %7950 = vmatmul.bf16.gmra.mxu0 %v956
        %v7951 = vpop.f32.mrf.mxu0
        %v7952 = vadd.f32 %v7783, %v7951
        %v7953 = vpop.f32.mrf.mxu0
        %v7954 = vadd.f32 %v7785, %v7953
        %7955 = vmatmul.bf16.gmra.mxu0 %v964
        %v7956 = vpop.f32.mrf.mxu0
        %v7957 = vadd.f32 %v7788, %v7956
        %v7958 = vpop.f32.mrf.mxu0
        %v7959 = vadd.f32 %v7790, %v7958
        %7960 = vmatmul.bf16.gmra.mxu0 %v972
        %v7961 = vpop.f32.mrf.mxu0
        %v7962 = vadd.f32 %v7793, %v7961
        %v7963 = vpop.f32.mrf.mxu0
        %v7964 = vadd.f32 %v7795, %v7963
        %7965 = vmatmul.bf16.gmra.mxu0 %v980
        %v7966 = vpop.f32.mrf.mxu0
        %v7967 = vadd.f32 %v7798, %v7966
        %v7968 = vpop.f32.mrf.mxu0
        %v7969 = vadd.f32 %v7800, %v7968
        %7970 = vmatmul.bf16.gmra.mxu0 %v988
        %v7971 = vpop.f32.mrf.mxu0
        %v7972 = vadd.f32 %v7803, %v7971
        %v7973 = vpop.f32.mrf.mxu0
        %v7974 = vadd.f32 %v7805, %v7973
        %7975 = vmatmul.bf16.gmra.mxu0 %v996
        %v7976 = vpop.f32.mrf.mxu0
        %v7977 = vadd.f32 %v7808, %v7976
        %v7978 = vpop.f32.mrf.mxu0
        %v7979 = vadd.f32 %v7810, %v7978
        %7980 = vmatmul.bf16.gmra.mxu0 %v1004
        %v7981 = vpop.f32.mrf.mxu0
        %v7982 = vadd.f32 %v7813, %v7981
        %v7983 = vpop.f32.mrf.mxu0
        %v7984 = vadd.f32 %v7815, %v7983
        %7985 = vmatmul.bf16.gmra.mxu0 %v1012
        %v7986 = vpop.f32.mrf.mxu0
        %v7987 = vadd.f32 %v7818, %v7986
        %v7988 = vpop.f32.mrf.mxu0
        %v7989 = vadd.f32 %v7820, %v7988
        %7990 = vmatmul.bf16.gmra.mxu0 %v1020
        %v7991 = vpop.f32.mrf.mxu0
        %v7992 = vadd.f32 %v7823, %v7991
        %v7993 = vpop.f32.mrf.mxu0
        %v7994 = vadd.f32 %v7825, %v7993
        %7995 = vmatmul.bf16.gmra.mxu0 %v1028
        %v7996 = vpop.f32.mrf.mxu0
        %v7997 = vadd.f32 %v7828, %v7996
        %v7998 = vpop.f32.mrf.mxu0
        %v7999 = vadd.f32 %v7830, %v7998
        %8000 = vmatmul.bf16.gmra.mxu0 %v1036
        %v8001 = vpop.f32.mrf.mxu0
        %v8002 = vadd.f32 %v7833, %v8001
        %v8003 = vpop.f32.mrf.mxu0
        %v8004 = vadd.f32 %v7835, %v8003
        %8005 = vmatmul.bf16.gmra.mxu0 %v1044
        %v8006 = vpop.f32.mrf.mxu0
        %v8007 = vadd.f32 %v7838, %v8006
        %v8008 = vpop.f32.mrf.mxu0
        %v8009 = vadd.f32 %v7840, %v8008
        %8010 = vmatmul.bf16.gmra.mxu0 %v1052
        %v8011 = vpop.f32.mrf.mxu0
        %v8012 = vadd.f32 %v7843, %v8011
        %v8013 = vpop.f32.mrf.mxu0
        %v8014 = vadd.f32 %v7845, %v8013
        %8015 = vmatmul.bf16.gmra.mxu0 %v1060
        %v8016 = vpop.f32.mrf.mxu0
        %v8017 = vadd.f32 %v7848, %v8016
        %v8018 = vpop.f32.mrf.mxu0
        %v8019 = vadd.f32 %v7850, %v8018
        %8020 = vmatmul.bf16.gmra.mxu0 %v1068
        %v8021 = vpop.f32.mrf.mxu0
        %v8022 = vadd.f32 %v7853, %v8021
        %v8023 = vpop.f32.mrf.mxu0
        %v8024 = vadd.f32 %v7855, %v8023
        %8025 = vmatmul.bf16.gmra.mxu0 %v1076
        %v8026 = vpop.f32.mrf.mxu0
        %v8027 = vadd.f32 %v7858, %v8026
        %v8028 = vpop.f32.mrf.mxu0
        %v8029 = vadd.f32 %v7860, %v8028
        %8030 = vdwg.mxu0
        %v8031 = vtanh.pop %v3816
        %v8032 = vtanh.pop %v5168
        %v8033 = vtanh.pop %v3818
        %v8034 = vtanh.pop %v5170
        %v8035 = vtanh.pop %v3821
        %v8036 = vtanh.pop %v5173
        %v8037 = vtanh.pop %v3823
        %v8038 = vtanh.pop %v5175
        %v8039 = vtanh.pop %v3826
        %v8040 = vtanh.pop %v5178
        %v8041 = vtanh.pop %v3828
        %v8042 = vtanh.pop %v5180
        %v8043 = vtanh.pop %v3831
        %v8044 = vtanh.pop %v5183
        %v8045 = vtanh.pop %v3833
        %v8046 = vtanh.pop %v5185
        %v8047 = vtanh.pop %v3836
        %v8048 = vtanh.pop %v5188
        %v8049 = vtanh.pop %v3838
        %v8050 = vtanh.pop %v5190
        %v8051 = vtanh.pop %v3841
        %v8052 = vtanh.pop %v5193
        %v8053 = vtanh.pop %v3843
        %v8054 = vtanh.pop %v5195
        %v8055 = vtanh.pop %v3846
        %v8056 = vtanh.pop %v5198
        %v8057 = vtanh.pop %v3848
        %v8058 = vtanh.pop %v5200
        %v8059 = vtanh.pop %v3851
        %v8060 = vtanh.pop %v5203
        %v8061 = vtanh.pop %v3853
        %v8062 = vtanh.pop %v5205
        %v8063 = vtanh.pop %v3856
        %v8064 = vtanh.pop %v5208
        %v8065 = vtanh.pop %v3858
        %v8066 = vtanh.pop %v5210
        %v8067 = vtanh.pop %v3861
        %v8068 = vtanh.pop %v5213
        %v8069 = vtanh.pop %v3863
        %v8070 = vtanh.pop %v5215
        %v8071 = vtanh.pop %v3866
        %v8072 = vtanh.pop %v5218
        %v8073 = vtanh.pop %v3868
        %v8074 = vtanh.pop %v5220
        %v8075 = vtanh.pop %v3871
        %v8076 = vtanh.pop %v5223
        %v8077 = vtanh.pop %v3873
        %v8078 = vtanh.pop %v5225
        %v8079 = vtanh.pop %v3876
        %v8080 = vtanh.pop %v5228
        %v8081 = vtanh.pop %v3878
        %v8082 = vtanh.pop %v5230
        %v8083 = vtanh.pop %v3881
        %v8084 = vtanh.pop %v5233
        %v8085 = vtanh.pop %v3883
        %v8086 = vtanh.pop %v5235
        %v8087 = vtanh.pop %v3886
        %v8088 = vtanh.pop %v5238
        %v8089 = vtanh.pop %v3888
        %v8090 = vtanh.pop %v5240
        %v8091 = vtanh.pop %v3891
        %v8092 = vtanh.pop %v5243
        %v8093 = vtanh.pop %v3893
        %v8094 = vtanh.pop %v5245
        %v8095 = vtanh.pop %v3896
        %v8096 = vtanh.pop %v5248
        %v8097 = vtanh.pop %v3898
        %v8098 = vtanh.pop %v5250
        %v8099 = vtanh.pop %v3901
        %v8100 = vtanh.pop %v5253
        %v8101 = vtanh.pop %v3903
        %v8102 = vtanh.pop %v5255
        %v8103 = vtanh.pop %v3906
        %v8104 = vtanh.pop %v5258
        %v8105 = vtanh.pop %v3908
        %v8106 = vtanh.pop %v5260
        %v8107 = vtanh.pop %v3911
        %v8108 = vtanh.pop %v5263
        %v8109 = vtanh.pop %v3913
        %v8110 = vtanh.pop %v5265
        %v8111 = vtanh.pop %v3916
        %v8112 = vtanh.pop %v5268
        %v8113 = vtanh.pop %v3918
        %v8114 = vtanh.pop %v5270
        %v8115 = vtanh.pop %v3921
        %v8116 = vtanh.pop %v5273
        %v8117 = vtanh.pop %v3923
        %v8118 = vtanh.pop %v5275
        %v8119 = vtanh.pop %v3926
        %v8120 = vtanh.pop %v5278
        %v8121 = vtanh.pop %v3928
        %v8122 = vtanh.pop %v5280
        %v8123 = vtanh.pop %v3931
        %v8124 = vtanh.pop %v5283
        %v8125 = vtanh.pop %v3933
        %v8126 = vtanh.pop %v5285
        %v8127 = vtanh.pop %v3936
        %v8128 = vtanh.pop %v5288
        %v8129 = vtanh.pop %v3938
        %v8130 = vtanh.pop %v5290
        %v8131 = vtanh.pop %v3941
        %v8132 = vtanh.pop %v5293
        %v8133 = vtanh.pop %v3943
        %v8134 = vtanh.pop %v5295
        %v8135 = vtanh.pop %v3946
        %v8136 = vtanh.pop %v5298
        %v8137 = vtanh.pop %v3948
        %v8138 = vtanh.pop %v5300
        %v8139 = vtanh.pop %v3951
        %v8140 = vtanh.pop %v5303
        %v8141 = vtanh.pop %v3953
        %v8142 = vtanh.pop %v5305
        %v8143 = vtanh.pop %v3956
        %v8144 = vtanh.pop %v5308
        %v8145 = vtanh.pop %v3958
        %v8146 = vtanh.pop %v5310
        %v8147 = vtanh.pop %v3961
        %v8148 = vtanh.pop %v5313
        %v8149 = vtanh.pop %v3963
        %v8150 = vtanh.pop %v5315
        %v8151 = vtanh.pop %v3966
        %v8152 = vtanh.pop %v5318
        %v8153 = vtanh.pop %v3968
        %v8154 = vtanh.pop %v5320
        %v8155 = vtanh.pop %v3971
        %v8156 = vtanh.pop %v5323
        %v8157 = vtanh.pop %v3973
        %v8158 = vtanh.pop %v5325
        %v8159 = vmul.f32 %v6520, 0.5
        %v8160 = vmul.f32 %v7872, 0.5
        %v8161 = vmul.f32 %v6522, 0.5
        %v8162 = vmul.f32 %v7874, 0.5
        %v8163 = vmul.f32 %v6525, 0.5
        %v8164 = vmul.f32 %v7877, 0.5
        %v8165 = vmul.f32 %v6527, 0.5
        %v8166 = vmul.f32 %v7879, 0.5
        %v8167 = vmul.f32 %v6530, 0.5
        %v8168 = vmul.f32 %v7882, 0.5
        %v8169 = vmul.f32 %v6532, 0.5
        %v8170 = vmul.f32 %v7884, 0.5
        %v8171 = vmul.f32 %v6535, 0.5
        %v8172 = vmul.f32 %v7887, 0.5
        %v8173 = vmul.f32 %v6537, 0.5
        %v8174 = vmul.f32 %v7889, 0.5
        %v8175 = vmul.f32 %v6540, 0.5
        %v8176 = vmul.f32 %v7892, 0.5
        %v8177 = vmul.f32 %v6542, 0.5
        %v8178 = vmul.f32 %v7894, 0.5
        %v8179 = vmul.f32 %v6545, 0.5
        %v8180 = vmul.f32 %v7897, 0.5
        %v8181 = vmul.f32 %v6547, 0.5
        %v8182 = vmul.f32 %v7899, 0.5
        %v8183 = vmul.f32 %v6550, 0.5
        %v8184 = vmul.f32 %v7902, 0.5
        %v8185 = vmul.f32 %v6552, 0.5
        %v8186 = vmul.f32 %v7904, 0.5
        %v8187 = vmul.f32 %v6555, 0.5
        %v8188 = vmul.f32 %v7907, 0.5
        %v8189 = vmul.f32 %v6557, 0.5
        %v8190 = vmul.f32 %v7909, 0.5
        %v8191 = vmul.f32 %v6560, 0.5
        %v8192 = vmul.f32 %v7912, 0.5
        %v8193 = vmul.f32 %v6562, 0.5
        %v8194 = vmul.f32 %v7914, 0.5
        %v8195 = vmul.f32 %v6565, 0.5
        %v8196 = vmul.f32 %v7917, 0.5
        %v8197 = vmul.f32 %v6567, 0.5
        %v8198 = vmul.f32 %v7919, 0.5
        %v8199 = vmul.f32 %v6570, 0.5
        %v8200 = vmul.f32 %v7922, 0.5
        %v8201 = vmul.f32 %v6572, 0.5
        %v8202 = vmul.f32 %v7924, 0.5
        %v8203 = vmul.f32 %v6575, 0.5
        %v8204 = vmul.f32 %v7927, 0.5
        %v8205 = vmul.f32 %v6577, 0.5
        %v8206 = vmul.f32 %v7929, 0.5
        %v8207 = vmul.f32 %v6580, 0.5
        %v8208 = vmul.f32 %v7932, 0.5
        %v8209 = vmul.f32 %v6582, 0.5
        %v8210 = vmul.f32 %v7934, 0.5
        %v8211 = vmul.f32 %v6585, 0.5
        %v8212 = vmul.f32 %v7937, 0.5
        %v8213 = vmul.f32 %v6587, 0.5
        %v8214 = vmul.f32 %v7939, 0.5
        %v8215 = vmul.f32 %v6590, 0.5
        %v8216 = vmul.f32 %v7942, 0.5
        %v8217 = vmul.f32 %v6592, 0.5
        %v8218 = vmul.f32 %v7944, 0.5
        %v8219 = vmul.f32 %v6595, 0.5
        %v8220 = vmul.f32 %v7947, 0.5
        %v8221 = vmul.f32 %v6597, 0.5
        %v8222 = vmul.f32 %v7949, 0.5
        %v8223 = vmul.f32 %v6600, 0.5
        %v8224 = vmul.f32 %v7952, 0.5
        %v8225 = vmul.f32 %v6602, 0.5
        %v8226 = vmul.f32 %v7954, 0.5
        %v8227 = vmul.f32 %v6605, 0.5
        %v8228 = vmul.f32 %v7957, 0.5
        %v8229 = vmul.f32 %v6607, 0.5
        %v8230 = vmul.f32 %v7959, 0.5
        %v8231 = vmul.f32 %v6610, 0.5
        %v8232 = vmul.f32 %v7962, 0.5
        %v8233 = vmul.f32 %v6612, 0.5
        %v8234 = vmul.f32 %v7964, 0.5
        %v8235 = vmul.f32 %v6615, 0.5
        %v8236 = vmul.f32 %v7967, 0.5
        %v8237 = vmul.f32 %v6617, 0.5
        %v8238 = vmul.f32 %v7969, 0.5
        %v8239 = vmul.f32 %v6620, 0.5
        %v8240 = vmul.f32 %v7972, 0.5
        %v8241 = vmul.f32 %v6622, 0.5
        %v8242 = vmul.f32 %v7974, 0.5
        %v8243 = vmul.f32 %v6625, 0.5
        %v8244 = vmul.f32 %v7977, 0.5
        %v8245 = vmul.f32 %v6627, 0.5
        %v8246 = vmul.f32 %v7979, 0.5
        %v8247 = vmul.f32 %v6630, 0.5
        %v8248 = vmul.f32 %v7982, 0.5
        %v8249 = vmul.f32 %v6632, 0.5
        %v8250 = vmul.f32 %v7984, 0.5
        %v8251 = vmul.f32 %v6635, 0.5
        %v8252 = vmul.f32 %v7987, 0.5
        %v8253 = vmul.f32 %v6637, 0.5
        %v8254 = vmul.f32 %v7989, 0.5
        %v8255 = vmul.f32 %v6640, 0.5
        %v8256 = vmul.f32 %v7992, 0.5
        %v8257 = vmul.f32 %v6642, 0.5
        %v8258 = vmul.f32 %v7994, 0.5
        %v8259 = vmul.f32 %v6645, 0.5
        %v8260 = vmul.f32 %v7997, 0.5
        %v8261 = vmul.f32 %v6647, 0.5
        %v8262 = vmul.f32 %v7999, 0.5
        %v8263 = vmul.f32 %v6650, 0.5
        %v8264 = vmul.f32 %v8002, 0.5
        %v8265 = vmul.f32 %v6652, 0.5
        %v8266 = vmul.f32 %v8004, 0.5
        %v8267 = vmul.f32 %v6655, 0.5
        %v8268 = vmul.f32 %v8007, 0.5
        %v8269 = vmul.f32 %v6657, 0.5
        %v8270 = vmul.f32 %v8009, 0.5
        %v8271 = vmul.f32 %v6660, 0.5
        %v8272 = vmul.f32 %v8012, 0.5
        %v8273 = vmul.f32 %v6662, 0.5
        %v8274 = vmul.f32 %v8014, 0.5
        %v8275 = vmul.f32 %v6665, 0.5
        %v8276 = vmul.f32 %v8017, 0.5
        %v8277 = vmul.f32 %v6667, 0.5
        %v8278 = vmul.f32 %v8019, 0.5
        %v8279 = vmul.f32 %v6670, 0.5
        %v8280 = vmul.f32 %v8022, 0.5
        %v8281 = vmul.f32 %v6672, 0.5
        %v8282 = vmul.f32 %v8024, 0.5
        %v8283 = vmul.f32 %v6675, 0.5
        %v8284 = vmul.f32 %v8027, 0.5
        %v8285 = vmul.f32 %v6677, 0.5
        %v8286 = vmul.f32 %v8029, 0.5
        %v8287 = vtanh.pop %v8159
        %v8288 = vtanh.pop %v8160
        %v8289 = vtanh.pop %v8161
        %v8290 = vtanh.pop %v8162
        %v8291 = vtanh.pop %v8163
        %v8292 = vtanh.pop %v8164
        %v8293 = vtanh.pop %v8165
        %v8294 = vtanh.pop %v8166
        %v8295 = vtanh.pop %v8167
        %v8296 = vtanh.pop %v8168
        %v8297 = vtanh.pop %v8169
        %v8298 = vtanh.pop %v8170
        %v8299 = vtanh.pop %v8171
        %v8300 = vtanh.pop %v8172
        %v8301 = vtanh.pop %v8173
        %v8302 = vtanh.pop %v8174
        %v8303 = vtanh.pop %v8175
        %v8304 = vtanh.pop %v8176
        %v8305 = vtanh.pop %v8177
        %v8306 = vtanh.pop %v8178
        %v8307 = vtanh.pop %v8179
        %v8308 = vtanh.pop %v8180
        %v8309 = vtanh.pop %v8181
        %v8310 = vtanh.pop %v8182
        %v8311 = vtanh.pop %v8183
        %v8312 = vtanh.pop %v8184
        %v8313 = vtanh.pop %v8185
        %v8314 = vtanh.pop %v8186
        %v8315 = vtanh.pop %v8187
        %v8316 = vtanh.pop %v8188
        %v8317 = vtanh.pop %v8189
        %v8318 = vtanh.pop %v8190
        %v8319 = vtanh.pop %v8191
        %v8320 = vtanh.pop %v8192
        %v8321 = vtanh.pop %v8193
        %v8322 = vtanh.pop %v8194
        %v8323 = vtanh.pop %v8195
        %v8324 = vtanh.pop %v8196
        %v8325 = vtanh.pop %v8197
        %v8326 = vtanh.pop %v8198
        %v8327 = vtanh.pop %v8199
        %v8328 = vtanh.pop %v8200
        %v8329 = vtanh.pop %v8201
        %v8330 = vtanh.pop %v8202
        %v8331 = vtanh.pop %v8203
        %v8332 = vtanh.pop %v8204
        %v8333 = vtanh.pop %v8205
        %v8334 = vtanh.pop %v8206
        %v8335 = vtanh.pop %v8207
        %v8336 = vtanh.pop %v8208
        %v8337 = vtanh.pop %v8209
        %v8338 = vtanh.pop %v8210
        %v8339 = vtanh.pop %v8211
        %v8340 = vtanh.pop %v8212
        %v8341 = vtanh.pop %v8213
        %v8342 = vtanh.pop %v8214
        %v8343 = vtanh.pop %v8215
        %v8344 = vtanh.pop %v8216
        %v8345 = vtanh.pop %v8217
        %v8346 = vtanh.pop %v8218
        %v8347 = vtanh.pop %v8219
        %v8348 = vtanh.pop %v8220
        %v8349 = vtanh.pop %v8221
        %v8350 = vtanh.pop %v8222
        %v8351 = vtanh.pop %v8223
        %v8352 = vtanh.pop %v8224
        %v8353 = vtanh.pop %v8225
        %v8354 = vtanh.pop %v8226
        %v8355 = vtanh.pop %v8227
        %v8356 = vtanh.pop %v8228
        %v8357 = vtanh.pop %v8229
        %v8358 = vtanh.pop %v8230
        %v8359 = vtanh.pop %v8231
        %v8360 = vtanh.pop %v8232
        %v8361 = vtanh.pop %v8233
        %v8362 = vtanh.pop %v8234
        %v8363 = vtanh.pop %v8235
        %v8364 = vtanh.pop %v8236
        %v8365 = vtanh.pop %v8237
        %v8366 = vtanh.pop %v8238
        %v8367 = vtanh.pop %v8239
        %v8368 = vtanh.pop %v8240
        %v8369 = vtanh.pop %v8241
        %v8370 = vtanh.pop %v8242
        %v8371 = vtanh.pop %v8243
        %v8372 = vtanh.pop %v8244
        %v8373 = vtanh.pop %v8245
        %v8374 = vtanh.pop %v8246
        %v8375 = vtanh.pop %v8247
        %v8376 = vtanh.pop %v8248
        %v8377 = vtanh.pop %v8249
        %v8378 = vtanh.pop %v8250
        %v8379 = vtanh.pop %v8251
        %v8380 = vtanh.pop %v8252
        %v8381 = vtanh.pop %v8253
        %v8382 = vtanh.pop %v8254
        %v8383 = vtanh.pop %v8255
        %v8384 = vtanh.pop %v8256
        %v8385 = vtanh.pop %v8257
        %v8386 = vtanh.pop %v8258
        %v8387 = vtanh.pop %v8259
        %v8388 = vtanh.pop %v8260
        %v8389 = vtanh.pop %v8261
        %v8390 = vtanh.pop %v8262
        %v8391 = vtanh.pop %v8263
        %v8392 = vtanh.pop %v8264
        %v8393 = vtanh.pop %v8265
        %v8394 = vtanh.pop %v8266
        %v8395 = vtanh.pop %v8267
        %v8396 = vtanh.pop %v8268
        %v8397 = vtanh.pop %v8269
        %v8398 = vtanh.pop %v8270
        %v8399 = vtanh.pop %v8271
        %v8400 = vtanh.pop %v8272
        %v8401 = vtanh.pop %v8273
        %v8402 = vtanh.pop %v8274
        %v8403 = vtanh.pop %v8275
        %v8404 = vtanh.pop %v8276
        %v8405 = vtanh.pop %v8277
        %v8406 = vtanh.pop %v8278
        %v8407 = vtanh.pop %v8279
        %v8408 = vtanh.pop %v8280
        %v8409 = vtanh.pop %v8281
        %v8410 = vtanh.pop %v8282
        %v8411 = vtanh.pop %v8283
        %v8412 = vtanh.pop %v8284
        %v8413 = vtanh.pop %v8285
        %v8414 = vtanh.pop %v8286
        %v8415 = vadd.f32 %v8287, 1.0
        %v8416 = vadd.f32 %v8288, 1.0
        %v8417 = vadd.f32 %v8289, 1.0
        %v8418 = vadd.f32 %v8290, 1.0
        %v8419 = vadd.f32 %v8291, 1.0
        %v8420 = vadd.f32 %v8292, 1.0
        %v8421 = vadd.f32 %v8293, 1.0
        %v8422 = vadd.f32 %v8294, 1.0
        %v8423 = vadd.f32 %v8295, 1.0
        %v8424 = vadd.f32 %v8296, 1.0
        %v8425 = vadd.f32 %v8297, 1.0
        %v8426 = vadd.f32 %v8298, 1.0
        %v8427 = vadd.f32 %v8299, 1.0
        %v8428 = vadd.f32 %v8300, 1.0
        %v8429 = vadd.f32 %v8301, 1.0
        %v8430 = vadd.f32 %v8302, 1.0
        %v8431 = vadd.f32 %v8303, 1.0
        %v8432 = vadd.f32 %v8304, 1.0
        %v8433 = vadd.f32 %v8305, 1.0
        %v8434 = vadd.f32 %v8306, 1.0
        %v8435 = vadd.f32 %v8307, 1.0
        %v8436 = vadd.f32 %v8308, 1.0
        %v8437 = vadd.f32 %v8309, 1.0
        %v8438 = vadd.f32 %v8310, 1.0
        %v8439 = vadd.f32 %v8311, 1.0
        %v8440 = vadd.f32 %v8312, 1.0
        %v8441 = vadd.f32 %v8313, 1.0
        %v8442 = vadd.f32 %v8314, 1.0
        %v8443 = vadd.f32 %v8315, 1.0
        %v8444 = vadd.f32 %v8316, 1.0
        %v8445 = vadd.f32 %v8317, 1.0
        %v8446 = vadd.f32 %v8318, 1.0
        %v8447 = vadd.f32 %v8319, 1.0
        %v8448 = vadd.f32 %v8320, 1.0
        %v8449 = vadd.f32 %v8321, 1.0
        %v8450 = vadd.f32 %v8322, 1.0
        %v8451 = vadd.f32 %v8323, 1.0
        %v8452 = vadd.f32 %v8324, 1.0
        %v8453 = vadd.f32 %v8325, 1.0
        %v8454 = vadd.f32 %v8326, 1.0
        %v8455 = vadd.f32 %v8327, 1.0
        %v8456 = vadd.f32 %v8328, 1.0
        %v8457 = vadd.f32 %v8329, 1.0
        %v8458 = vadd.f32 %v8330, 1.0
        %v8459 = vadd.f32 %v8331, 1.0
        %v8460 = vadd.f32 %v8332, 1.0
        %v8461 = vadd.f32 %v8333, 1.0
        %v8462 = vadd.f32 %v8334, 1.0
        %v8463 = vadd.f32 %v8335, 1.0
        %v8464 = vadd.f32 %v8336, 1.0
        %v8465 = vadd.f32 %v8337, 1.0
        %v8466 = vadd.f32 %v8338, 1.0
        %v8467 = vadd.f32 %v8339, 1.0
        %v8468 = vadd.f32 %v8340, 1.0
        %v8469 = vadd.f32 %v8341, 1.0
        %v8470 = vadd.f32 %v8342, 1.0
        %v8471 = vadd.f32 %v8343, 1.0
        %v8472 = vadd.f32 %v8344, 1.0
        %v8473 = vadd.f32 %v8345, 1.0
        %v8474 = vadd.f32 %v8346, 1.0
        %v8475 = vadd.f32 %v8347, 1.0
        %v8476 = vadd.f32 %v8348, 1.0
        %v8477 = vadd.f32 %v8349, 1.0
        %v8478 = vadd.f32 %v8350, 1.0
        %v8479 = vadd.f32 %v8351, 1.0
        %v8480 = vadd.f32 %v8352, 1.0
        %v8481 = vadd.f32 %v8353, 1.0
        %v8482 = vadd.f32 %v8354, 1.0
        %v8483 = vadd.f32 %v8355, 1.0
        %v8484 = vadd.f32 %v8356, 1.0
        %v8485 = vadd.f32 %v8357, 1.0
        %v8486 = vadd.f32 %v8358, 1.0
        %v8487 = vadd.f32 %v8359, 1.0
        %v8488 = vadd.f32 %v8360, 1.0
        %v8489 = vadd.f32 %v8361, 1.0
        %v8490 = vadd.f32 %v8362, 1.0
        %v8491 = vadd.f32 %v8363, 1.0
        %v8492 = vadd.f32 %v8364, 1.0
        %v8493 = vadd.f32 %v8365, 1.0
        %v8494 = vadd.f32 %v8366, 1.0
        %v8495 = vadd.f32 %v8367, 1.0
        %v8496 = vadd.f32 %v8368, 1.0
        %v8497 = vadd.f32 %v8369, 1.0
        %v8498 = vadd.f32 %v8370, 1.0
        %v8499 = vadd.f32 %v8371, 1.0
        %v8500 = vadd.f32 %v8372, 1.0
        %v8501 = vadd.f32 %v8373, 1.0
        %v8502 = vadd.f32 %v8374, 1.0
        %v8503 = vadd.f32 %v8375, 1.0
        %v8504 = vadd.f32 %v8376, 1.0
        %v8505 = vadd.f32 %v8377, 1.0
        %v8506 = vadd.f32 %v8378, 1.0
        %v8507 = vadd.f32 %v8379, 1.0
        %v8508 = vadd.f32 %v8380, 1.0
        %v8509 = vadd.f32 %v8381, 1.0
        %v8510 = vadd.f32 %v8382, 1.0
        %v8511 = vadd.f32 %v8383, 1.0
        %v8512 = vadd.f32 %v8384, 1.0
        %v8513 = vadd.f32 %v8385, 1.0
        %v8514 = vadd.f32 %v8386, 1.0
        %v8515 = vadd.f32 %v8387, 1.0
        %v8516 = vadd.f32 %v8388, 1.0
        %v8517 = vadd.f32 %v8389, 1.0
        %v8518 = vadd.f32 %v8390, 1.0
        %v8519 = vadd.f32 %v8391, 1.0
        %v8520 = vadd.f32 %v8392, 1.0
        %v8521 = vadd.f32 %v8393, 1.0
        %v8522 = vadd.f32 %v8394, 1.0
        %v8523 = vadd.f32 %v8395, 1.0
        %v8524 = vadd.f32 %v8396, 1.0
        %v8525 = vadd.f32 %v8397, 1.0
        %v8526 = vadd.f32 %v8398, 1.0
        %v8527 = vadd.f32 %v8399, 1.0
        %v8528 = vadd.f32 %v8400, 1.0
        %v8529 = vadd.f32 %v8401, 1.0
        %v8530 = vadd.f32 %v8402, 1.0
        %v8531 = vadd.f32 %v8403, 1.0
        %v8532 = vadd.f32 %v8404, 1.0
        %v8533 = vadd.f32 %v8405, 1.0
        %v8534 = vadd.f32 %v8406, 1.0
        %v8535 = vadd.f32 %v8407, 1.0
        %v8536 = vadd.f32 %v8408, 1.0
        %v8537 = vadd.f32 %v8409, 1.0
        %v8538 = vadd.f32 %v8410, 1.0
        %v8539 = vadd.f32 %v8411, 1.0
        %v8540 = vadd.f32 %v8412, 1.0
        %v8541 = vadd.f32 %v8413, 1.0
        %v8542 = vadd.f32 %v8414, 1.0
        %v8543 = vmul.f32 %v8415, 0.5
        %v8544 = vmul.f32 %v8416, 0.5
        %v8545 = vmul.f32 %v8417, 0.5
        %v8546 = vmul.f32 %v8418, 0.5
        %v8547 = vmul.f32 %v8419, 0.5
        %v8548 = vmul.f32 %v8420, 0.5
        %v8549 = vmul.f32 %v8421, 0.5
        %v8550 = vmul.f32 %v8422, 0.5
        %v8551 = vmul.f32 %v8423, 0.5
        %v8552 = vmul.f32 %v8424, 0.5
        %v8553 = vmul.f32 %v8425, 0.5
        %v8554 = vmul.f32 %v8426, 0.5
        %v8555 = vmul.f32 %v8427, 0.5
        %v8556 = vmul.f32 %v8428, 0.5
        %v8557 = vmul.f32 %v8429, 0.5
        %v8558 = vmul.f32 %v8430, 0.5
        %v8559 = vmul.f32 %v8431, 0.5
        %v8560 = vmul.f32 %v8432, 0.5
        %v8561 = vmul.f32 %v8433, 0.5
        %v8562 = vmul.f32 %v8434, 0.5
        %v8563 = vmul.f32 %v8435, 0.5
        %v8564 = vmul.f32 %v8436, 0.5
        %v8565 = vmul.f32 %v8437, 0.5
        %v8566 = vmul.f32 %v8438, 0.5
        %v8567 = vmul.f32 %v8439, 0.5
        %v8568 = vmul.f32 %v8440, 0.5
        %v8569 = vmul.f32 %v8441, 0.5
        %v8570 = vmul.f32 %v8442, 0.5
        %v8571 = vmul.f32 %v8443, 0.5
        %v8572 = vmul.f32 %v8444, 0.5
        %v8573 = vmul.f32 %v8445, 0.5
        %v8574 = vmul.f32 %v8446, 0.5
        %v8575 = vmul.f32 %v8447, 0.5
        %v8576 = vmul.f32 %v8448, 0.5
        %v8577 = vmul.f32 %v8449, 0.5
        %v8578 = vmul.f32 %v8450, 0.5
        %v8579 = vmul.f32 %v8451, 0.5
        %v8580 = vmul.f32 %v8452, 0.5
        %v8581 = vmul.f32 %v8453, 0.5
        %v8582 = vmul.f32 %v8454, 0.5
        %v8583 = vmul.f32 %v8455, 0.5
        %v8584 = vmul.f32 %v8456, 0.5
        %v8585 = vmul.f32 %v8457, 0.5
        %v8586 = vmul.f32 %v8458, 0.5
        %v8587 = vmul.f32 %v8459, 0.5
        %v8588 = vmul.f32 %v8460, 0.5
        %v8589 = vmul.f32 %v8461, 0.5
        %v8590 = vmul.f32 %v8462, 0.5
        %v8591 = vmul.f32 %v8463, 0.5
        %v8592 = vmul.f32 %v8464, 0.5
        %v8593 = vmul.f32 %v8465, 0.5
        %v8594 = vmul.f32 %v8466, 0.5
        %v8595 = vmul.f32 %v8467, 0.5
        %v8596 = vmul.f32 %v8468, 0.5
        %v8597 = vmul.f32 %v8469, 0.5
        %v8598 = vmul.f32 %v8470, 0.5
        %v8599 = vmul.f32 %v8471, 0.5
        %v8600 = vmul.f32 %v8472, 0.5
        %v8601 = vmul.f32 %v8473, 0.5
        %v8602 = vmul.f32 %v8474, 0.5
        %v8603 = vmul.f32 %v8475, 0.5
        %v8604 = vmul.f32 %v8476, 0.5
        %v8605 = vmul.f32 %v8477, 0.5
        %v8606 = vmul.f32 %v8478, 0.5
        %v8607 = vmul.f32 %v8479, 0.5
        %v8608 = vmul.f32 %v8480, 0.5
        %v8609 = vmul.f32 %v8481, 0.5
        %v8610 = vmul.f32 %v8482, 0.5
        %v8611 = vmul.f32 %v8483, 0.5
        %v8612 = vmul.f32 %v8484, 0.5
        %v8613 = vmul.f32 %v8485, 0.5
        %v8614 = vmul.f32 %v8486, 0.5
        %v8615 = vmul.f32 %v8487, 0.5
        %v8616 = vmul.f32 %v8488, 0.5
        %v8617 = vmul.f32 %v8489, 0.5
        %v8618 = vmul.f32 %v8490, 0.5
        %v8619 = vmul.f32 %v8491, 0.5
        %v8620 = vmul.f32 %v8492, 0.5
        %v8621 = vmul.f32 %v8493, 0.5
        %v8622 = vmul.f32 %v8494, 0.5
        %v8623 = vmul.f32 %v8495, 0.5
        %v8624 = vmul.f32 %v8496, 0.5
        %v8625 = vmul.f32 %v8497, 0.5
        %v8626 = vmul.f32 %v8498, 0.5
        %v8627 = vmul.f32 %v8499, 0.5
        %v8628 = vmul.f32 %v8500, 0.5
        %v8629 = vmul.f32 %v8501, 0.5
        %v8630 = vmul.f32 %v8502, 0.5
        %v8631 = vmul.f32 %v8503, 0.5
        %v8632 = vmul.f32 %v8504, 0.5
        %v8633 = vmul.f32 %v8505, 0.5
        %v8634 = vmul.f32 %v8506, 0.5
        %v8635 = vmul.f32 %v8507, 0.5
        %v8636 = vmul.f32 %v8508, 0.5
        %v8637 = vmul.f32 %v8509, 0.5
        %v8638 = vmul.f32 %v8510, 0.5
        %v8639 = vmul.f32 %v8511, 0.5
        %v8640 = vmul.f32 %v8512, 0.5
        %v8641 = vmul.f32 %v8513, 0.5
        %v8642 = vmul.f32 %v8514, 0.5
        %v8643 = vmul.f32 %v8515, 0.5
        %v8644 = vmul.f32 %v8516, 0.5
        %v8645 = vmul.f32 %v8517, 0.5
        %v8646 = vmul.f32 %v8518, 0.5
        %v8647 = vmul.f32 %v8519, 0.5
        %v8648 = vmul.f32 %v8520, 0.5
        %v8649 = vmul.f32 %v8521, 0.5
        %v8650 = vmul.f32 %v8522, 0.5
        %v8651 = vmul.f32 %v8523, 0.5
        %v8652 = vmul.f32 %v8524, 0.5
        %v8653 = vmul.f32 %v8525, 0.5
        %v8654 = vmul.f32 %v8526, 0.5
        %v8655 = vmul.f32 %v8527, 0.5
        %v8656 = vmul.f32 %v8528, 0.5
        %v8657 = vmul.f32 %v8529, 0.5
        %v8658 = vmul.f32 %v8530, 0.5
        %v8659 = vmul.f32 %v8531, 0.5
        %v8660 = vmul.f32 %v8532, 0.5
        %v8661 = vmul.f32 %v8533, 0.5
        %v8662 = vmul.f32 %v8534, 0.5
        %v8663 = vmul.f32 %v8535, 0.5
        %v8664 = vmul.f32 %v8536, 0.5
        %v8665 = vmul.f32 %v8537, 0.5
        %v8666 = vmul.f32 %v8538, 0.5
        %v8667 = vmul.f32 %v8539, 0.5
        %v8668 = vmul.f32 %v8540, 0.5
        %v8669 = vmul.f32 %v8541, 0.5
        %v8670 = vmul.f32 %v8542, 0.5
        %v8671 = vmul.f32 %v8031, %v8543
        %v8672 = vmul.f32 %v8032, %v8544
        %v8673 = vmul.f32 %v8033, %v8545
        %v8674 = vmul.f32 %v8034, %v8546
        %v8675 = vmul.f32 %v8035, %v8547
        %v8676 = vmul.f32 %v8036, %v8548
        %v8677 = vmul.f32 %v8037, %v8549
        %v8678 = vmul.f32 %v8038, %v8550
        %v8679 = vmul.f32 %v8039, %v8551
        %v8680 = vmul.f32 %v8040, %v8552
        %v8681 = vmul.f32 %v8041, %v8553
        %v8682 = vmul.f32 %v8042, %v8554
        %v8683 = vmul.f32 %v8043, %v8555
        %v8684 = vmul.f32 %v8044, %v8556
        %v8685 = vmul.f32 %v8045, %v8557
        %v8686 = vmul.f32 %v8046, %v8558
        %v8687 = vmul.f32 %v8047, %v8559
        %v8688 = vmul.f32 %v8048, %v8560
        %v8689 = vmul.f32 %v8049, %v8561
        %v8690 = vmul.f32 %v8050, %v8562
        %v8691 = vmul.f32 %v8051, %v8563
        %v8692 = vmul.f32 %v8052, %v8564
        %v8693 = vmul.f32 %v8053, %v8565
        %v8694 = vmul.f32 %v8054, %v8566
        %v8695 = vmul.f32 %v8055, %v8567
        %v8696 = vmul.f32 %v8056, %v8568
        %v8697 = vmul.f32 %v8057, %v8569
        %v8698 = vmul.f32 %v8058, %v8570
        %v8699 = vmul.f32 %v8059, %v8571
        %v8700 = vmul.f32 %v8060, %v8572
        %v8701 = vmul.f32 %v8061, %v8573
        %v8702 = vmul.f32 %v8062, %v8574
        %v8703 = vmul.f32 %v8063, %v8575
        %v8704 = vmul.f32 %v8064, %v8576
        %v8705 = vmul.f32 %v8065, %v8577
        %v8706 = vmul.f32 %v8066, %v8578
        %v8707 = vmul.f32 %v8067, %v8579
        %v8708 = vmul.f32 %v8068, %v8580
        %v8709 = vmul.f32 %v8069, %v8581
        %v8710 = vmul.f32 %v8070, %v8582
        %v8711 = vmul.f32 %v8071, %v8583
        %v8712 = vmul.f32 %v8072, %v8584
        %v8713 = vmul.f32 %v8073, %v8585
        %v8714 = vmul.f32 %v8074, %v8586
        %v8715 = vmul.f32 %v8075, %v8587
        %v8716 = vmul.f32 %v8076, %v8588
        %v8717 = vmul.f32 %v8077, %v8589
        %v8718 = vmul.f32 %v8078, %v8590
        %v8719 = vmul.f32 %v8079, %v8591
        %v8720 = vmul.f32 %v8080, %v8592
        %v8721 = vmul.f32 %v8081, %v8593
        %v8722 = vmul.f32 %v8082, %v8594
        %v8723 = vmul.f32 %v8083, %v8595
        %v8724 = vmul.f32 %v8084, %v8596
        %v8725 = vmul.f32 %v8085, %v8597
        %v8726 = vmul.f32 %v8086, %v8598
        %v8727 = vmul.f32 %v8087, %v8599
        %v8728 = vmul.f32 %v8088, %v8600
        %v8729 = vmul.f32 %v8089, %v8601
        %v8730 = vmul.f32 %v8090, %v8602
        %v8731 = vmul.f32 %v8091, %v8603
        %v8732 = vmul.f32 %v8092, %v8604
        %v8733 = vmul.f32 %v8093, %v8605
        %v8734 = vmul.f32 %v8094, %v8606
        %v8735 = vmul.f32 %v8095, %v8607
        %v8736 = vmul.f32 %v8096, %v8608
        %v8737 = vmul.f32 %v8097, %v8609
        %v8738 = vmul.f32 %v8098, %v8610
        %v8739 = vmul.f32 %v8099, %v8611
        %v8740 = vmul.f32 %v8100, %v8612
        %v8741 = vmul.f32 %v8101, %v8613
        %v8742 = vmul.f32 %v8102, %v8614
        %v8743 = vmul.f32 %v8103, %v8615
        %v8744 = vmul.f32 %v8104, %v8616
        %v8745 = vmul.f32 %v8105, %v8617
        %v8746 = vmul.f32 %v8106, %v8618
        %v8747 = vmul.f32 %v8107, %v8619
        %v8748 = vmul.f32 %v8108, %v8620
        %v8749 = vmul.f32 %v8109, %v8621
        %v8750 = vmul.f32 %v8110, %v8622
        %v8751 = vmul.f32 %v8111, %v8623
        %v8752 = vmul.f32 %v8112, %v8624
        %v8753 = vmul.f32 %v8113, %v8625
        %v8754 = vmul.f32 %v8114, %v8626
        %v8755 = vmul.f32 %v8115, %v8627
        %v8756 = vmul.f32 %v8116, %v8628
        %v8757 = vmul.f32 %v8117, %v8629
        %v8758 = vmul.f32 %v8118, %v8630
        %v8759 = vmul.f32 %v8119, %v8631
        %v8760 = vmul.f32 %v8120, %v8632
        %v8761 = vmul.f32 %v8121, %v8633
        %v8762 = vmul.f32 %v8122, %v8634
        %v8763 = vmul.f32 %v8123, %v8635
        %v8764 = vmul.f32 %v8124, %v8636
        %v8765 = vmul.f32 %v8125, %v8637
        %v8766 = vmul.f32 %v8126, %v8638
        %v8767 = vmul.f32 %v8127, %v8639
        %v8768 = vmul.f32 %v8128, %v8640
        %v8769 = vmul.f32 %v8129, %v8641
        %v8770 = vmul.f32 %v8130, %v8642
        %v8771 = vmul.f32 %v8131, %v8643
        %v8772 = vmul.f32 %v8132, %v8644
        %v8773 = vmul.f32 %v8133, %v8645
        %v8774 = vmul.f32 %v8134, %v8646
        %v8775 = vmul.f32 %v8135, %v8647
        %v8776 = vmul.f32 %v8136, %v8648
        %v8777 = vmul.f32 %v8137, %v8649
        %v8778 = vmul.f32 %v8138, %v8650
        %v8779 = vmul.f32 %v8139, %v8651
        %v8780 = vmul.f32 %v8140, %v8652
        %v8781 = vmul.f32 %v8141, %v8653
        %v8782 = vmul.f32 %v8142, %v8654
        %v8783 = vmul.f32 %v8143, %v8655
        %v8784 = vmul.f32 %v8144, %v8656
        %v8785 = vmul.f32 %v8145, %v8657
        %v8786 = vmul.f32 %v8146, %v8658
        %v8787 = vmul.f32 %v8147, %v8659
        %v8788 = vmul.f32 %v8148, %v8660
        %v8789 = vmul.f32 %v8149, %v8661
        %v8790 = vmul.f32 %v8150, %v8662
        %v8791 = vmul.f32 %v8151, %v8663
        %v8792 = vmul.f32 %v8152, %v8664
        %v8793 = vmul.f32 %v8153, %v8665
        %v8794 = vmul.f32 %v8154, %v8666
        %v8795 = vmul.f32 %v8155, %v8667
        %v8796 = vmul.f32 %v8156, %v8668
        %v8797 = vmul.f32 %v8157, %v8669
        %v8798 = vmul.f32 %v8158, %v8670
        %v8799 = vld [vmem:[#allocation9] sm:$0x3]
        %v8801 = vperm.slane %v8799, 0
        %v8802 = vperm.slane %v8799, 1
        %v8805 = vmul.f32 %v8671, %v8801
        %v8806 = vmul.f32 %v8672, %v8802
        %v8807 = vmul.f32 %v8673, %v8801
        %v8808 = vmul.f32 %v8674, %v8802
        %v8809 = vmul.f32 %v8675, %v8801
        %v8810 = vmul.f32 %v8676, %v8802
        %v8811 = vmul.f32 %v8677, %v8801
        %v8812 = vmul.f32 %v8678, %v8802
        %v8813 = vmul.f32 %v8679, %v8801
        %v8814 = vmul.f32 %v8680, %v8802
        %v8815 = vmul.f32 %v8681, %v8801
        %v8816 = vmul.f32 %v8682, %v8802
        %v8817 = vmul.f32 %v8683, %v8801
        %v8818 = vmul.f32 %v8684, %v8802
        %v8819 = vmul.f32 %v8685, %v8801
        %v8820 = vmul.f32 %v8686, %v8802
        %v8821 = vmul.f32 %v8687, %v8801
        %v8822 = vmul.f32 %v8688, %v8802
        %v8823 = vmul.f32 %v8689, %v8801
        %v8824 = vmul.f32 %v8690, %v8802
        %v8825 = vmul.f32 %v8691, %v8801
        %v8826 = vmul.f32 %v8692, %v8802
        %v8827 = vmul.f32 %v8693, %v8801
        %v8828 = vmul.f32 %v8694, %v8802
        %v8829 = vmul.f32 %v8695, %v8801
        %v8830 = vmul.f32 %v8696, %v8802
        %v8831 = vmul.f32 %v8697, %v8801
        %v8832 = vmul.f32 %v8698, %v8802
        %v8833 = vmul.f32 %v8699, %v8801
        %v8834 = vmul.f32 %v8700, %v8802
        %v8835 = vmul.f32 %v8701, %v8801
        %v8836 = vmul.f32 %v8702, %v8802
        %v8837 = vmul.f32 %v8703, %v8801
        %v8838 = vmul.f32 %v8704, %v8802
        %v8839 = vmul.f32 %v8705, %v8801
        %v8840 = vmul.f32 %v8706, %v8802
        %v8841 = vmul.f32 %v8707, %v8801
        %v8842 = vmul.f32 %v8708, %v8802
        %v8843 = vmul.f32 %v8709, %v8801
        %v8844 = vmul.f32 %v8710, %v8802
        %v8845 = vmul.f32 %v8711, %v8801
        %v8846 = vmul.f32 %v8712, %v8802
        %v8847 = vmul.f32 %v8713, %v8801
        %v8848 = vmul.f32 %v8714, %v8802
        %v8849 = vmul.f32 %v8715, %v8801
        %v8850 = vmul.f32 %v8716, %v8802
        %v8851 = vmul.f32 %v8717, %v8801
        %v8852 = vmul.f32 %v8718, %v8802
        %v8853 = vmul.f32 %v8719, %v8801
        %v8854 = vmul.f32 %v8720, %v8802
        %v8855 = vmul.f32 %v8721, %v8801
        %v8856 = vmul.f32 %v8722, %v8802
        %v8857 = vmul.f32 %v8723, %v8801
        %v8858 = vmul.f32 %v8724, %v8802
        %v8859 = vmul.f32 %v8725, %v8801
        %v8860 = vmul.f32 %v8726, %v8802
        %v8861 = vmul.f32 %v8727, %v8801
        %v8862 = vmul.f32 %v8728, %v8802
        %v8863 = vmul.f32 %v8729, %v8801
        %v8864 = vmul.f32 %v8730, %v8802
        %v8865 = vmul.f32 %v8731, %v8801
        %v8866 = vmul.f32 %v8732, %v8802
        %v8867 = vmul.f32 %v8733, %v8801
        %v8868 = vmul.f32 %v8734, %v8802
        %v8869 = vmul.f32 %v8735, %v8801
        %v8870 = vmul.f32 %v8736, %v8802
        %v8871 = vmul.f32 %v8737, %v8801
        %v8872 = vmul.f32 %v8738, %v8802
        %v8873 = vmul.f32 %v8739, %v8801
        %v8874 = vmul.f32 %v8740, %v8802
        %v8875 = vmul.f32 %v8741, %v8801
        %v8876 = vmul.f32 %v8742, %v8802
        %v8877 = vmul.f32 %v8743, %v8801
        %v8878 = vmul.f32 %v8744, %v8802
        %v8879 = vmul.f32 %v8745, %v8801
        %v8880 = vmul.f32 %v8746, %v8802
        %v8881 = vmul.f32 %v8747, %v8801
        %v8882 = vmul.f32 %v8748, %v8802
        %v8883 = vmul.f32 %v8749, %v8801
        %v8884 = vmul.f32 %v8750, %v8802
        %v8885 = vmul.f32 %v8751, %v8801
        %v8886 = vmul.f32 %v8752, %v8802
        %v8887 = vmul.f32 %v8753, %v8801
        %v8888 = vmul.f32 %v8754, %v8802
        %v8889 = vmul.f32 %v8755, %v8801
        %v8890 = vmul.f32 %v8756, %v8802
        %v8891 = vmul.f32 %v8757, %v8801
        %v8892 = vmul.f32 %v8758, %v8802
        %v8893 = vmul.f32 %v8759, %v8801
        %v8894 = vmul.f32 %v8760, %v8802
        %v8895 = vmul.f32 %v8761, %v8801
        %v8896 = vmul.f32 %v8762, %v8802
        %v8897 = vmul.f32 %v8763, %v8801
        %v8898 = vmul.f32 %v8764, %v8802
        %v8899 = vmul.f32 %v8765, %v8801
        %v8900 = vmul.f32 %v8766, %v8802
        %v8901 = vmul.f32 %v8767, %v8801
        %v8902 = vmul.f32 %v8768, %v8802
        %v8903 = vmul.f32 %v8769, %v8801
        %v8904 = vmul.f32 %v8770, %v8802
        %v8905 = vmul.f32 %v8771, %v8801
        %v8906 = vmul.f32 %v8772, %v8802
        %v8907 = vmul.f32 %v8773, %v8801
        %v8908 = vmul.f32 %v8774, %v8802
        %v8909 = vmul.f32 %v8775, %v8801
        %v8910 = vmul.f32 %v8776, %v8802
        %v8911 = vmul.f32 %v8777, %v8801
        %v8912 = vmul.f32 %v8778, %v8802
        %v8913 = vmul.f32 %v8779, %v8801
        %v8914 = vmul.f32 %v8780, %v8802
        %v8915 = vmul.f32 %v8781, %v8801
        %v8916 = vmul.f32 %v8782, %v8802
        %v8917 = vmul.f32 %v8783, %v8801
        %v8918 = vmul.f32 %v8784, %v8802
        %v8919 = vmul.f32 %v8785, %v8801
        %v8920 = vmul.f32 %v8786, %v8802
        %v8921 = vmul.f32 %v8787, %v8801
        %v8922 = vmul.f32 %v8788, %v8802
        %v8923 = vmul.f32 %v8789, %v8801
        %v8924 = vmul.f32 %v8790, %v8802
        %v8925 = vmul.f32 %v8791, %v8801
        %v8926 = vmul.f32 %v8792, %v8802
        %v8927 = vmul.f32 %v8793, %v8801
        %v8928 = vmul.f32 %v8794, %v8802
        %v8929 = vmul.f32 %v8795, %v8801
        %v8930 = vmul.f32 %v8796, %v8802
        %v8931 = vmul.f32 %v8797, %v8801
        %v8932 = vmul.f32 %v8798, %v8802
        %v8933 = vadd.f32 %v8805, %v8806
        %8934 = vadd.xlane.f32.xlu0 %v8933
        %v8935 = vpop.xlane.xlu0 %8934
        %v8936 = vadd.f32 %v8807, %v8808
        %8937 = vadd.xlane.f32.xlu0 %v8936
        %v8938 = vpop.xlane.xlu0 %8937
        %v8939 = vadd.f32 %v8809, %v8810
        %8940 = vadd.xlane.f32.xlu0 %v8939
        %v8941 = vpop.xlane.xlu0 %8940
        %v8942 = vadd.f32 %v8811, %v8812
        %8943 = vadd.xlane.f32.xlu0 %v8942
        %v8944 = vpop.xlane.xlu0 %8943
        %v8945 = vadd.f32 %v8813, %v8814
        %8946 = vadd.xlane.f32.xlu0 %v8945
        %v8947 = vpop.xlane.xlu0 %8946
        %v8948 = vadd.f32 %v8815, %v8816
        %8949 = vadd.xlane.f32.xlu0 %v8948
        %v8950 = vpop.xlane.xlu0 %8949
        %v8951 = vadd.f32 %v8817, %v8818
        %8952 = vadd.xlane.f32.xlu0 %v8951
        %v8953 = vpop.xlane.xlu0 %8952
        %v8954 = vadd.f32 %v8819, %v8820
        %8955 = vadd.xlane.f32.xlu0 %v8954
        %v8956 = vpop.xlane.xlu0 %8955
        %v8957 = vadd.f32 %v8821, %v8822
        %8958 = vadd.xlane.f32.xlu0 %v8957
        %v8959 = vpop.xlane.xlu0 %8958
        %v8960 = vadd.f32 %v8823, %v8824
        %8961 = vadd.xlane.f32.xlu0 %v8960
        %v8962 = vpop.xlane.xlu0 %8961
        %v8963 = vadd.f32 %v8825, %v8826
        %8964 = vadd.xlane.f32.xlu0 %v8963
        %v8965 = vpop.xlane.xlu0 %8964
        %v8966 = vadd.f32 %v8827, %v8828
        %8967 = vadd.xlane.f32.xlu0 %v8966
        %v8968 = vpop.xlane.xlu0 %8967
        %v8969 = vadd.f32 %v8829, %v8830
        %8970 = vadd.xlane.f32.xlu0 %v8969
        %v8971 = vpop.xlane.xlu0 %8970
        %v8972 = vadd.f32 %v8831, %v8832
        %8973 = vadd.xlane.f32.xlu0 %v8972
        %v8974 = vpop.xlane.xlu0 %8973
        %v8975 = vadd.f32 %v8833, %v8834
        %8976 = vadd.xlane.f32.xlu0 %v8975
        %v8977 = vpop.xlane.xlu0 %8976
        %v8978 = vadd.f32 %v8835, %v8836
        %8979 = vadd.xlane.f32.xlu0 %v8978
        %v8980 = vpop.xlane.xlu0 %8979
        %v8981 = vadd.f32 %v8837, %v8838
        %8982 = vadd.xlane.f32.xlu0 %v8981
        %v8983 = vpop.xlane.xlu0 %8982
        %v8984 = vadd.f32 %v8839, %v8840
        %8985 = vadd.xlane.f32.xlu0 %v8984
        %v8986 = vpop.xlane.xlu0 %8985
        %v8987 = vadd.f32 %v8841, %v8842
        %8988 = vadd.xlane.f32.xlu0 %v8987
        %v8989 = vpop.xlane.xlu0 %8988
        %v8990 = vadd.f32 %v8843, %v8844
        %8991 = vadd.xlane.f32.xlu0 %v8990
        %v8992 = vpop.xlane.xlu0 %8991
        %v8993 = vadd.f32 %v8845, %v8846
        %8994 = vadd.xlane.f32.xlu0 %v8993
        %v8995 = vpop.xlane.xlu0 %8994
        %v8996 = vadd.f32 %v8847, %v8848
        %8997 = vadd.xlane.f32.xlu0 %v8996
        %v8998 = vpop.xlane.xlu0 %8997
        %v8999 = vadd.f32 %v8849, %v8850
        %9000 = vadd.xlane.f32.xlu0 %v8999
        %v9001 = vpop.xlane.xlu0 %9000
        %v9002 = vadd.f32 %v8851, %v8852
        %9003 = vadd.xlane.f32.xlu0 %v9002
        %v9004 = vpop.xlane.xlu0 %9003
        %v9005 = vadd.f32 %v8853, %v8854
        %9006 = vadd.xlane.f32.xlu0 %v9005
        %v9007 = vpop.xlane.xlu0 %9006
        %v9008 = vadd.f32 %v8855, %v8856
        %9009 = vadd.xlane.f32.xlu0 %v9008
        %v9010 = vpop.xlane.xlu0 %9009
        %v9011 = vadd.f32 %v8857, %v8858
        %9012 = vadd.xlane.f32.xlu0 %v9011
        %v9013 = vpop.xlane.xlu0 %9012
        %v9014 = vadd.f32 %v8859, %v8860
        %9015 = vadd.xlane.f32.xlu0 %v9014
        %v9016 = vpop.xlane.xlu0 %9015
        %v9017 = vadd.f32 %v8861, %v8862
        %9018 = vadd.xlane.f32.xlu0 %v9017
        %v9019 = vpop.xlane.xlu0 %9018
        %v9020 = vadd.f32 %v8863, %v8864
        %9021 = vadd.xlane.f32.xlu0 %v9020
        %v9022 = vpop.xlane.xlu0 %9021
        %v9023 = vadd.f32 %v8865, %v8866
        %9024 = vadd.xlane.f32.xlu0 %v9023
        %v9025 = vpop.xlane.xlu0 %9024
        %v9026 = vadd.f32 %v8867, %v8868
        %9027 = vadd.xlane.f32.xlu0 %v9026
        %v9028 = vpop.xlane.xlu0 %9027
        %v9029 = vadd.f32 %v8869, %v8870
        %9030 = vadd.xlane.f32.xlu0 %v9029
        %v9031 = vpop.xlane.xlu0 %9030
        %v9032 = vadd.f32 %v8871, %v8872
        %9033 = vadd.xlane.f32.xlu0 %v9032
        %v9034 = vpop.xlane.xlu0 %9033
        %v9035 = vadd.f32 %v8873, %v8874
        %9036 = vadd.xlane.f32.xlu0 %v9035
        %v9037 = vpop.xlane.xlu0 %9036
        %v9038 = vadd.f32 %v8875, %v8876
        %9039 = vadd.xlane.f32.xlu0 %v9038
        %v9040 = vpop.xlane.xlu0 %9039
        %v9041 = vadd.f32 %v8877, %v8878
        %9042 = vadd.xlane.f32.xlu0 %v9041
        %v9043 = vpop.xlane.xlu0 %9042
        %v9044 = vadd.f32 %v8879, %v8880
        %9045 = vadd.xlane.f32.xlu0 %v9044
        %v9046 = vpop.xlane.xlu0 %9045
        %v9047 = vadd.f32 %v8881, %v8882
        %9048 = vadd.xlane.f32.xlu0 %v9047
        %v9049 = vpop.xlane.xlu0 %9048
        %v9050 = vadd.f32 %v8883, %v8884
        %9051 = vadd.xlane.f32.xlu0 %v9050
        %v9052 = vpop.xlane.xlu0 %9051
        %v9053 = vadd.f32 %v8885, %v8886
        %9054 = vadd.xlane.f32.xlu0 %v9053
        %v9055 = vpop.xlane.xlu0 %9054
        %v9056 = vadd.f32 %v8887, %v8888
        %9057 = vadd.xlane.f32.xlu0 %v9056
        %v9058 = vpop.xlane.xlu0 %9057
        %v9059 = vadd.f32 %v8889, %v8890
        %9060 = vadd.xlane.f32.xlu0 %v9059
        %v9061 = vpop.xlane.xlu0 %9060
        %v9062 = vadd.f32 %v8891, %v8892
        %9063 = vadd.xlane.f32.xlu0 %v9062
        %v9064 = vpop.xlane.xlu0 %9063
        %v9065 = vadd.f32 %v8893, %v8894
        %9066 = vadd.xlane.f32.xlu0 %v9065
        %v9067 = vpop.xlane.xlu0 %9066
        %v9068 = vadd.f32 %v8895, %v8896
        %9069 = vadd.xlane.f32.xlu0 %v9068
        %v9070 = vpop.xlane.xlu0 %9069
        %v9071 = vadd.f32 %v8897, %v8898
        %9072 = vadd.xlane.f32.xlu0 %v9071
        %v9073 = vpop.xlane.xlu0 %9072
        %v9074 = vadd.f32 %v8899, %v8900
        %9075 = vadd.xlane.f32.xlu0 %v9074
        %v9076 = vpop.xlane.xlu0 %9075
        %v9077 = vadd.f32 %v8901, %v8902
        %9078 = vadd.xlane.f32.xlu0 %v9077
        %v9079 = vpop.xlane.xlu0 %9078
        %v9080 = vadd.f32 %v8903, %v8904
        %9081 = vadd.xlane.f32.xlu0 %v9080
        %v9082 = vpop.xlane.xlu0 %9081
        %v9083 = vadd.f32 %v8905, %v8906
        %9084 = vadd.xlane.f32.xlu0 %v9083
        %v9085 = vpop.xlane.xlu0 %9084
        %v9086 = vadd.f32 %v8907, %v8908
        %9087 = vadd.xlane.f32.xlu0 %v9086
        %v9088 = vpop.xlane.xlu0 %9087
        %v9089 = vadd.f32 %v8909, %v8910
        %9090 = vadd.xlane.f32.xlu0 %v9089
        %v9091 = vpop.xlane.xlu0 %9090
        %v9092 = vadd.f32 %v8911, %v8912
        %9093 = vadd.xlane.f32.xlu0 %v9092
        %v9094 = vpop.xlane.xlu0 %9093
        %v9095 = vadd.f32 %v8913, %v8914
        %9096 = vadd.xlane.f32.xlu0 %v9095
        %v9097 = vpop.xlane.xlu0 %9096
        %v9098 = vadd.f32 %v8915, %v8916
        %9099 = vadd.xlane.f32.xlu0 %v9098
        %v9100 = vpop.xlane.xlu0 %9099
        %v9101 = vadd.f32 %v8917, %v8918
        %9102 = vadd.xlane.f32.xlu0 %v9101
        %v9103 = vpop.xlane.xlu0 %9102
        %v9104 = vadd.f32 %v8919, %v8920
        %9105 = vadd.xlane.f32.xlu0 %v9104
        %v9106 = vpop.xlane.xlu0 %9105
        %v9107 = vadd.f32 %v8921, %v8922
        %9108 = vadd.xlane.f32.xlu0 %v9107
        %v9109 = vpop.xlane.xlu0 %9108
        %v9110 = vadd.f32 %v8923, %v8924
        %9111 = vadd.xlane.f32.xlu0 %v9110
        %v9112 = vpop.xlane.xlu0 %9111
        %v9113 = vadd.f32 %v8925, %v8926
        %9114 = vadd.xlane.f32.xlu0 %v9113
        %v9115 = vpop.xlane.xlu0 %9114
        %v9116 = vadd.f32 %v8927, %v8928
        %9117 = vadd.xlane.f32.xlu0 %v9116
        %v9118 = vpop.xlane.xlu0 %9117
        %v9119 = vadd.f32 %v8929, %v8930
        %9120 = vadd.xlane.f32.xlu0 %v9119
        %v9121 = vpop.xlane.xlu0 %9120
        %v9122 = vadd.f32 %v8931, %v8932
        %9123 = vadd.xlane.f32.xlu0 %v9122
        %v9124 = vpop.xlane.xlu0 %9123
        %v9125 = vld [vmem:[#allocation2] sm:$0x1]
        %9127 = vset.pattern.permute.xlu0 0
        %9128 = vperm.xlu0 %9127, %v9125
        %v9129 = vpop.permute.xlu0 %9128
        %v9131 = vperm.slane %v9129, 0
        %v9132 = vadd.f32 %v8935, %v9131
        %v9133 = vadd.f32 %v8938, %v9131
        %v9134 = vadd.f32 %v8941, %v9131
        %v9135 = vadd.f32 %v8944, %v9131
        %v9136 = vadd.f32 %v8947, %v9131
        %v9137 = vadd.f32 %v8950, %v9131
        %v9138 = vadd.f32 %v8953, %v9131
        %v9139 = vadd.f32 %v8956, %v9131
        %v9140 = vadd.f32 %v8959, %v9131
        %v9141 = vadd.f32 %v8962, %v9131
        %v9142 = vadd.f32 %v8965, %v9131
        %v9143 = vadd.f32 %v8968, %v9131
        %v9144 = vadd.f32 %v8971, %v9131
        %v9145 = vadd.f32 %v8974, %v9131
        %v9146 = vadd.f32 %v8977, %v9131
        %v9147 = vadd.f32 %v8980, %v9131
        %v9148 = vadd.f32 %v8983, %v9131
        %v9149 = vadd.f32 %v8986, %v9131
        %v9150 = vadd.f32 %v8989, %v9131
        %v9151 = vadd.f32 %v8992, %v9131
        %v9152 = vadd.f32 %v8995, %v9131
        %v9153 = vadd.f32 %v8998, %v9131
        %v9154 = vadd.f32 %v9001, %v9131
        %v9155 = vadd.f32 %v9004, %v9131
        %v9156 = vadd.f32 %v9007, %v9131
        %v9157 = vadd.f32 %v9010, %v9131
        %v9158 = vadd.f32 %v9013, %v9131
        %v9159 = vadd.f32 %v9016, %v9131
        %v9160 = vadd.f32 %v9019, %v9131
        %v9161 = vadd.f32 %v9022, %v9131
        %v9162 = vadd.f32 %v9025, %v9131
        %v9163 = vadd.f32 %v9028, %v9131
        %v9164 = vadd.f32 %v9031, %v9131
        %v9165 = vadd.f32 %v9034, %v9131
        %v9166 = vadd.f32 %v9037, %v9131
        %v9167 = vadd.f32 %v9040, %v9131
        %v9168 = vadd.f32 %v9043, %v9131
        %v9169 = vadd.f32 %v9046, %v9131
        %v9170 = vadd.f32 %v9049, %v9131
        %v9171 = vadd.f32 %v9052, %v9131
        %v9172 = vadd.f32 %v9055, %v9131
        %v9173 = vadd.f32 %v9058, %v9131
        %v9174 = vadd.f32 %v9061, %v9131
        %v9175 = vadd.f32 %v9064, %v9131
        %v9176 = vadd.f32 %v9067, %v9131
        %v9177 = vadd.f32 %v9070, %v9131
        %v9178 = vadd.f32 %v9073, %v9131
        %v9179 = vadd.f32 %v9076, %v9131
        %v9180 = vadd.f32 %v9079, %v9131
        %v9181 = vadd.f32 %v9082, %v9131
        %v9182 = vadd.f32 %v9085, %v9131
        %v9183 = vadd.f32 %v9088, %v9131
        %v9184 = vadd.f32 %v9091, %v9131
        %v9185 = vadd.f32 %v9094, %v9131
        %v9186 = vadd.f32 %v9097, %v9131
        %v9187 = vadd.f32 %v9100, %v9131
        %v9188 = vadd.f32 %v9103, %v9131
        %v9189 = vadd.f32 %v9106, %v9131
        %v9190 = vadd.f32 %v9109, %v9131
        %v9191 = vadd.f32 %v9112, %v9131
        %v9192 = vadd.f32 %v9115, %v9131
        %v9193 = vadd.f32 %v9118, %v9131
        %v9194 = vadd.f32 %v9121, %v9131
        %v9195 = vadd.f32 %v9124, %v9131
        %v9260 = vperm.slane %v9132, 0
        %v9261 = vperm.slane %v9132, 1
        %v9262 = vperm.slane %v9132, 2
        %v9263 = vperm.slane %v9132, 3
        %v9264 = vperm.slane %v9132, 4
        %v9265 = vperm.slane %v9132, 5
        %v9266 = vperm.slane %v9132, 6
        %v9267 = vperm.slane %v9132, 7
        %v9268 = vperm.slane %v9133, 0
        %v9269 = vperm.slane %v9133, 1
        %v9270 = vperm.slane %v9133, 2
        %v9271 = vperm.slane %v9133, 3
        %v9272 = vperm.slane %v9133, 4
        %v9273 = vperm.slane %v9133, 5
        %v9274 = vperm.slane %v9133, 6
        %v9275 = vperm.slane %v9133, 7
        %v9276 = vperm.slane %v9134, 0
        %v9277 = vperm.slane %v9134, 1
        %v9278 = vperm.slane %v9134, 2
        %v9279 = vperm.slane %v9134, 3
        %v9280 = vperm.slane %v9134, 4
        %v9281 = vperm.slane %v9134, 5
        %v9282 = vperm.slane %v9134, 6
        %v9283 = vperm.slane %v9134, 7
        %v9284 = vperm.slane %v9135, 0
        %v9285 = vperm.slane %v9135, 1
        %v9286 = vperm.slane %v9135, 2
        %v9287 = vperm.slane %v9135, 3
        %v9288 = vperm.slane %v9135, 4
        %v9289 = vperm.slane %v9135, 5
        %v9290 = vperm.slane %v9135, 6
        %v9291 = vperm.slane %v9135, 7
        %v9292 = vperm.slane %v9136, 0
        %v9293 = vperm.slane %v9136, 1
        %v9294 = vperm.slane %v9136, 2
        %v9295 = vperm.slane %v9136, 3
        %v9296 = vperm.slane %v9136, 4
        %v9297 = vperm.slane %v9136, 5
        %v9298 = vperm.slane %v9136, 6
        %v9299 = vperm.slane %v9136, 7
        %v9300 = vperm.slane %v9137, 0
        %v9301 = vperm.slane %v9137, 1
        %v9302 = vperm.slane %v9137, 2
        %v9303 = vperm.slane %v9137, 3
        %v9304 = vperm.slane %v9137, 4
        %v9305 = vperm.slane %v9137, 5
        %v9306 = vperm.slane %v9137, 6
        %v9307 = vperm.slane %v9137, 7
        %v9308 = vperm.slane %v9138, 0
        %v9309 = vperm.slane %v9138, 1
        %v9310 = vperm.slane %v9138, 2
        %v9311 = vperm.slane %v9138, 3
        %v9312 = vperm.slane %v9138, 4
        %v9313 = vperm.slane %v9138, 5
        %v9314 = vperm.slane %v9138, 6
        %v9315 = vperm.slane %v9138, 7
        %v9316 = vperm.slane %v9139, 0
        %v9317 = vperm.slane %v9139, 1
        %v9318 = vperm.slane %v9139, 2
        %v9319 = vperm.slane %v9139, 3
        %v9320 = vperm.slane %v9139, 4
        %v9321 = vperm.slane %v9139, 5
        %v9322 = vperm.slane %v9139, 6
        %v9323 = vperm.slane %v9139, 7
        %v9324 = vperm.slane %v9140, 0
        %v9325 = vperm.slane %v9140, 1
        %v9326 = vperm.slane %v9140, 2
        %v9327 = vperm.slane %v9140, 3
        %v9328 = vperm.slane %v9140, 4
        %v9329 = vperm.slane %v9140, 5
        %v9330 = vperm.slane %v9140, 6
        %v9331 = vperm.slane %v9140, 7
        %v9332 = vperm.slane %v9141, 0
        %v9333 = vperm.slane %v9141, 1
        %v9334 = vperm.slane %v9141, 2
        %v9335 = vperm.slane %v9141, 3
        %v9336 = vperm.slane %v9141, 4
        %v9337 = vperm.slane %v9141, 5
        %v9338 = vperm.slane %v9141, 6
        %v9339 = vperm.slane %v9141, 7
        %v9340 = vperm.slane %v9142, 0
        %v9341 = vperm.slane %v9142, 1
        %v9342 = vperm.slane %v9142, 2
        %v9343 = vperm.slane %v9142, 3
        %v9344 = vperm.slane %v9142, 4
        %v9345 = vperm.slane %v9142, 5
        %v9346 = vperm.slane %v9142, 6
        %v9347 = vperm.slane %v9142, 7
        %v9348 = vperm.slane %v9143, 0
        %v9349 = vperm.slane %v9143, 1
        %v9350 = vperm.slane %v9143, 2
        %v9351 = vperm.slane %v9143, 3
        %v9352 = vperm.slane %v9143, 4
        %v9353 = vperm.slane %v9143, 5
        %v9354 = vperm.slane %v9143, 6
        %v9355 = vperm.slane %v9143, 7
        %v9356 = vperm.slane %v9144, 0
        %v9357 = vperm.slane %v9144, 1
        %v9358 = vperm.slane %v9144, 2
        %v9359 = vperm.slane %v9144, 3
        %v9360 = vperm.slane %v9144, 4
        %v9361 = vperm.slane %v9144, 5
        %v9362 = vperm.slane %v9144, 6
        %v9363 = vperm.slane %v9144, 7
        %v9364 = vperm.slane %v9145, 0
        %v9365 = vperm.slane %v9145, 1
        %v9366 = vperm.slane %v9145, 2
        %v9367 = vperm.slane %v9145, 3
        %v9368 = vperm.slane %v9145, 4
        %v9369 = vperm.slane %v9145, 5
        %v9370 = vperm.slane %v9145, 6
        %v9371 = vperm.slane %v9145, 7
        %v9372 = vperm.slane %v9146, 0
        %v9373 = vperm.slane %v9146, 1
        %v9374 = vperm.slane %v9146, 2
        %v9375 = vperm.slane %v9146, 3
        %v9376 = vperm.slane %v9146, 4
        %v9377 = vperm.slane %v9146, 5
        %v9378 = vperm.slane %v9146, 6
        %v9379 = vperm.slane %v9146, 7
        %v9380 = vperm.slane %v9147, 0
        %v9381 = vperm.slane %v9147, 1
        %v9382 = vperm.slane %v9147, 2
        %v9383 = vperm.slane %v9147, 3
        %v9384 = vperm.slane %v9147, 4
        %v9385 = vperm.slane %v9147, 5
        %v9386 = vperm.slane %v9147, 6
        %v9387 = vperm.slane %v9147, 7
        %v9388 = vperm.slane %v9148, 0
        %v9389 = vperm.slane %v9148, 1
        %v9390 = vperm.slane %v9148, 2
        %v9391 = vperm.slane %v9148, 3
        %v9392 = vperm.slane %v9148, 4
        %v9393 = vperm.slane %v9148, 5
        %v9394 = vperm.slane %v9148, 6
        %v9395 = vperm.slane %v9148, 7
        %v9396 = vperm.slane %v9149, 0
        %v9397 = vperm.slane %v9149, 1
        %v9398 = vperm.slane %v9149, 2
        %v9399 = vperm.slane %v9149, 3
        %v9400 = vperm.slane %v9149, 4
        %v9401 = vperm.slane %v9149, 5
        %v9402 = vperm.slane %v9149, 6
        %v9403 = vperm.slane %v9149, 7
        %v9404 = vperm.slane %v9150, 0
        %v9405 = vperm.slane %v9150, 1
        %v9406 = vperm.slane %v9150, 2
        %v9407 = vperm.slane %v9150, 3
        %v9408 = vperm.slane %v9150, 4
        %v9409 = vperm.slane %v9150, 5
        %v9410 = vperm.slane %v9150, 6
        %v9411 = vperm.slane %v9150, 7
        %v9412 = vperm.slane %v9151, 0
        %v9413 = vperm.slane %v9151, 1
        %v9414 = vperm.slane %v9151, 2
        %v9415 = vperm.slane %v9151, 3
        %v9416 = vperm.slane %v9151, 4
        %v9417 = vperm.slane %v9151, 5
        %v9418 = vperm.slane %v9151, 6
        %v9419 = vperm.slane %v9151, 7
        %v9420 = vperm.slane %v9152, 0
        %v9421 = vperm.slane %v9152, 1
        %v9422 = vperm.slane %v9152, 2
        %v9423 = vperm.slane %v9152, 3
        %v9424 = vperm.slane %v9152, 4
        %v9425 = vperm.slane %v9152, 5
        %v9426 = vperm.slane %v9152, 6
        %v9427 = vperm.slane %v9152, 7
        %v9428 = vperm.slane %v9153, 0
        %v9429 = vperm.slane %v9153, 1
        %v9430 = vperm.slane %v9153, 2
        %v9431 = vperm.slane %v9153, 3
        %v9432 = vperm.slane %v9153, 4
        %v9433 = vperm.slane %v9153, 5
        %v9434 = vperm.slane %v9153, 6
        %v9435 = vperm.slane %v9153, 7
        %v9436 = vperm.slane %v9154, 0
        %v9437 = vperm.slane %v9154, 1
        %v9438 = vperm.slane %v9154, 2
        %v9439 = vperm.slane %v9154, 3
        %v9440 = vperm.slane %v9154, 4
        %v9441 = vperm.slane %v9154, 5
        %v9442 = vperm.slane %v9154, 6
        %v9443 = vperm.slane %v9154, 7
        %v9444 = vperm.slane %v9155, 0
        %v9445 = vperm.slane %v9155, 1
        %v9446 = vperm.slane %v9155, 2
        %v9447 = vperm.slane %v9155, 3
        %v9448 = vperm.slane %v9155, 4
        %v9449 = vperm.slane %v9155, 5
        %v9450 = vperm.slane %v9155, 6
        %v9451 = vperm.slane %v9155, 7
        %v9452 = vperm.slane %v9156, 0
        %v9453 = vperm.slane %v9156, 1
        %v9454 = vperm.slane %v9156, 2
        %v9455 = vperm.slane %v9156, 3
        %v9456 = vperm.slane %v9156, 4
        %v9457 = vperm.slane %v9156, 5
        %v9458 = vperm.slane %v9156, 6
        %v9459 = vperm.slane %v9156, 7
        %v9460 = vperm.slane %v9157, 0
        %v9461 = vperm.slane %v9157, 1
        %v9462 = vperm.slane %v9157, 2
        %v9463 = vperm.slane %v9157, 3
        %v9464 = vperm.slane %v9157, 4
        %v9465 = vperm.slane %v9157, 5
        %v9466 = vperm.slane %v9157, 6
        %v9467 = vperm.slane %v9157, 7
        %v9468 = vperm.slane %v9158, 0
        %v9469 = vperm.slane %v9158, 1
        %v9470 = vperm.slane %v9158, 2
        %v9471 = vperm.slane %v9158, 3
        %v9472 = vperm.slane %v9158, 4
        %v9473 = vperm.slane %v9158, 5
        %v9474 = vperm.slane %v9158, 6
        %v9475 = vperm.slane %v9158, 7
        %v9476 = vperm.slane %v9159, 0
        %v9477 = vperm.slane %v9159, 1
        %v9478 = vperm.slane %v9159, 2
        %v9479 = vperm.slane %v9159, 3
        %v9480 = vperm.slane %v9159, 4
        %v9481 = vperm.slane %v9159, 5
        %v9482 = vperm.slane %v9159, 6
        %v9483 = vperm.slane %v9159, 7
        %v9484 = vperm.slane %v9160, 0
        %v9485 = vperm.slane %v9160, 1
        %v9486 = vperm.slane %v9160, 2
        %v9487 = vperm.slane %v9160, 3
        %v9488 = vperm.slane %v9160, 4
        %v9489 = vperm.slane %v9160, 5
        %v9490 = vperm.slane %v9160, 6
        %v9491 = vperm.slane %v9160, 7
        %v9492 = vperm.slane %v9161, 0
        %v9493 = vperm.slane %v9161, 1
        %v9494 = vperm.slane %v9161, 2
        %v9495 = vperm.slane %v9161, 3
        %v9496 = vperm.slane %v9161, 4
        %v9497 = vperm.slane %v9161, 5
        %v9498 = vperm.slane %v9161, 6
        %v9499 = vperm.slane %v9161, 7
        %v9500 = vperm.slane %v9162, 0
        %v9501 = vperm.slane %v9162, 1
        %v9502 = vperm.slane %v9162, 2
        %v9503 = vperm.slane %v9162, 3
        %v9504 = vperm.slane %v9162, 4
        %v9505 = vperm.slane %v9162, 5
        %v9506 = vperm.slane %v9162, 6
        %v9507 = vperm.slane %v9162, 7
        %v9508 = vperm.slane %v9163, 0
        %v9509 = vperm.slane %v9163, 1
        %v9510 = vperm.slane %v9163, 2
        %v9511 = vperm.slane %v9163, 3
        %v9512 = vperm.slane %v9163, 4
        %v9513 = vperm.slane %v9163, 5
        %v9514 = vperm.slane %v9163, 6
        %v9515 = vperm.slane %v9163, 7
        %v9516 = vperm.slane %v9164, 0
        %v9517 = vperm.slane %v9164, 1
        %v9518 = vperm.slane %v9164, 2
        %v9519 = vperm.slane %v9164, 3
        %v9520 = vperm.slane %v9164, 4
        %v9521 = vperm.slane %v9164, 5
        %v9522 = vperm.slane %v9164, 6
        %v9523 = vperm.slane %v9164, 7
        %v9524 = vperm.slane %v9165, 0
        %v9525 = vperm.slane %v9165, 1
        %v9526 = vperm.slane %v9165, 2
        %v9527 = vperm.slane %v9165, 3
        %v9528 = vperm.slane %v9165, 4
        %v9529 = vperm.slane %v9165, 5
        %v9530 = vperm.slane %v9165, 6
        %v9531 = vperm.slane %v9165, 7
        %v9532 = vperm.slane %v9166, 0
        %v9533 = vperm.slane %v9166, 1
        %v9534 = vperm.slane %v9166, 2
        %v9535 = vperm.slane %v9166, 3
        %v9536 = vperm.slane %v9166, 4
        %v9537 = vperm.slane %v9166, 5
        %v9538 = vperm.slane %v9166, 6
        %v9539 = vperm.slane %v9166, 7
        %v9540 = vperm.slane %v9167, 0
        %v9541 = vperm.slane %v9167, 1
        %v9542 = vperm.slane %v9167, 2
        %v9543 = vperm.slane %v9167, 3
        %v9544 = vperm.slane %v9167, 4
        %v9545 = vperm.slane %v9167, 5
        %v9546 = vperm.slane %v9167, 6
        %v9547 = vperm.slane %v9167, 7
        %v9548 = vperm.slane %v9168, 0
        %v9549 = vperm.slane %v9168, 1
        %v9550 = vperm.slane %v9168, 2
        %v9551 = vperm.slane %v9168, 3
        %v9552 = vperm.slane %v9168, 4
        %v9553 = vperm.slane %v9168, 5
        %v9554 = vperm.slane %v9168, 6
        %v9555 = vperm.slane %v9168, 7
        %v9556 = vperm.slane %v9169, 0
        %v9557 = vperm.slane %v9169, 1
        %v9558 = vperm.slane %v9169, 2
        %v9559 = vperm.slane %v9169, 3
        %v9560 = vperm.slane %v9169, 4
        %v9561 = vperm.slane %v9169, 5
        %v9562 = vperm.slane %v9169, 6
        %v9563 = vperm.slane %v9169, 7
        %v9564 = vperm.slane %v9170, 0
        %v9565 = vperm.slane %v9170, 1
        %v9566 = vperm.slane %v9170, 2
        %v9567 = vperm.slane %v9170, 3
        %v9568 = vperm.slane %v9170, 4
        %v9569 = vperm.slane %v9170, 5
        %v9570 = vperm.slane %v9170, 6
        %v9571 = vperm.slane %v9170, 7
        %v9572 = vperm.slane %v9171, 0
        %v9573 = vperm.slane %v9171, 1
        %v9574 = vperm.slane %v9171, 2
        %v9575 = vperm.slane %v9171, 3
        %v9576 = vperm.slane %v9171, 4
        %v9577 = vperm.slane %v9171, 5
        %v9578 = vperm.slane %v9171, 6
        %v9579 = vperm.slane %v9171, 7
        %v9580 = vperm.slane %v9172, 0
        %v9581 = vperm.slane %v9172, 1
        %v9582 = vperm.slane %v9172, 2
        %v9583 = vperm.slane %v9172, 3
        %v9584 = vperm.slane %v9172, 4
        %v9585 = vperm.slane %v9172, 5
        %v9586 = vperm.slane %v9172, 6
        %v9587 = vperm.slane %v9172, 7
        %v9588 = vperm.slane %v9173, 0
        %v9589 = vperm.slane %v9173, 1
        %v9590 = vperm.slane %v9173, 2
        %v9591 = vperm.slane %v9173, 3
        %v9592 = vperm.slane %v9173, 4
        %v9593 = vperm.slane %v9173, 5
        %v9594 = vperm.slane %v9173, 6
        %v9595 = vperm.slane %v9173, 7
        %v9596 = vperm.slane %v9174, 0
        %v9597 = vperm.slane %v9174, 1
        %v9598 = vperm.slane %v9174, 2
        %v9599 = vperm.slane %v9174, 3
        %v9600 = vperm.slane %v9174, 4
        %v9601 = vperm.slane %v9174, 5
        %v9602 = vperm.slane %v9174, 6
        %v9603 = vperm.slane %v9174, 7
        %v9604 = vperm.slane %v9175, 0
        %v9605 = vperm.slane %v9175, 1
        %v9606 = vperm.slane %v9175, 2
        %v9607 = vperm.slane %v9175, 3
        %v9608 = vperm.slane %v9175, 4
        %v9609 = vperm.slane %v9175, 5
        %v9610 = vperm.slane %v9175, 6
        %v9611 = vperm.slane %v9175, 7
        %v9612 = vperm.slane %v9176, 0
        %v9613 = vperm.slane %v9176, 1
        %v9614 = vperm.slane %v9176, 2
        %v9615 = vperm.slane %v9176, 3
        %v9616 = vperm.slane %v9176, 4
        %v9617 = vperm.slane %v9176, 5
        %v9618 = vperm.slane %v9176, 6
        %v9619 = vperm.slane %v9176, 7
        %v9620 = vperm.slane %v9177, 0
        %v9621 = vperm.slane %v9177, 1
        %v9622 = vperm.slane %v9177, 2
        %v9623 = vperm.slane %v9177, 3
        %v9624 = vperm.slane %v9177, 4
        %v9625 = vperm.slane %v9177, 5
        %v9626 = vperm.slane %v9177, 6
        %v9627 = vperm.slane %v9177, 7
        %v9628 = vperm.slane %v9178, 0
        %v9629 = vperm.slane %v9178, 1
        %v9630 = vperm.slane %v9178, 2
        %v9631 = vperm.slane %v9178, 3
        %v9632 = vperm.slane %v9178, 4
        %v9633 = vperm.slane %v9178, 5
        %v9634 = vperm.slane %v9178, 6
        %v9635 = vperm.slane %v9178, 7
        %v9636 = vperm.slane %v9179, 0
        %v9637 = vperm.slane %v9179, 1
        %v9638 = vperm.slane %v9179, 2
        %v9639 = vperm.slane %v9179, 3
        %v9640 = vperm.slane %v9179, 4
        %v9641 = vperm.slane %v9179, 5
        %v9642 = vperm.slane %v9179, 6
        %v9643 = vperm.slane %v9179, 7
        %v9644 = vperm.slane %v9180, 0
        %v9645 = vperm.slane %v9180, 1
        %v9646 = vperm.slane %v9180, 2
        %v9647 = vperm.slane %v9180, 3
        %v9648 = vperm.slane %v9180, 4
        %v9649 = vperm.slane %v9180, 5
        %v9650 = vperm.slane %v9180, 6
        %v9651 = vperm.slane %v9180, 7
        %v9652 = vperm.slane %v9181, 0
        %v9653 = vperm.slane %v9181, 1
        %v9654 = vperm.slane %v9181, 2
        %v9655 = vperm.slane %v9181, 3
        %v9656 = vperm.slane %v9181, 4
        %v9657 = vperm.slane %v9181, 5
        %v9658 = vperm.slane %v9181, 6
        %v9659 = vperm.slane %v9181, 7
        %v9660 = vperm.slane %v9182, 0
        %v9661 = vperm.slane %v9182, 1
        %v9662 = vperm.slane %v9182, 2
        %v9663 = vperm.slane %v9182, 3
        %v9664 = vperm.slane %v9182, 4
        %v9665 = vperm.slane %v9182, 5
        %v9666 = vperm.slane %v9182, 6
        %v9667 = vperm.slane %v9182, 7
        %v9668 = vperm.slane %v9183, 0
        %v9669 = vperm.slane %v9183, 1
        %v9670 = vperm.slane %v9183, 2
        %v9671 = vperm.slane %v9183, 3
        %v9672 = vperm.slane %v9183, 4
        %v9673 = vperm.slane %v9183, 5
        %v9674 = vperm.slane %v9183, 6
        %v9675 = vperm.slane %v9183, 7
        %v9676 = vperm.slane %v9184, 0
        %v9677 = vperm.slane %v9184, 1
        %v9678 = vperm.slane %v9184, 2
        %v9679 = vperm.slane %v9184, 3
        %v9680 = vperm.slane %v9184, 4
        %v9681 = vperm.slane %v9184, 5
        %v9682 = vperm.slane %v9184, 6
        %v9683 = vperm.slane %v9184, 7
        %v9684 = vperm.slane %v9185, 0
        %v9685 = vperm.slane %v9185, 1
        %v9686 = vperm.slane %v9185, 2
        %v9687 = vperm.slane %v9185, 3
        %v9688 = vperm.slane %v9185, 4
        %v9689 = vperm.slane %v9185, 5
        %v9690 = vperm.slane %v9185, 6
        %v9691 = vperm.slane %v9185, 7
        %v9692 = vperm.slane %v9186, 0
        %v9693 = vperm.slane %v9186, 1
        %v9694 = vperm.slane %v9186, 2
        %v9695 = vperm.slane %v9186, 3
        %v9696 = vperm.slane %v9186, 4
        %v9697 = vperm.slane %v9186, 5
        %v9698 = vperm.slane %v9186, 6
        %v9699 = vperm.slane %v9186, 7
        %v9700 = vperm.slane %v9187, 0
        %v9701 = vperm.slane %v9187, 1
        %v9702 = vperm.slane %v9187, 2
        %v9703 = vperm.slane %v9187, 3
        %v9704 = vperm.slane %v9187, 4
        %v9705 = vperm.slane %v9187, 5
        %v9706 = vperm.slane %v9187, 6
        %v9707 = vperm.slane %v9187, 7
        %v9708 = vperm.slane %v9188, 0
        %v9709 = vperm.slane %v9188, 1
        %v9710 = vperm.slane %v9188, 2
        %v9711 = vperm.slane %v9188, 3
        %v9712 = vperm.slane %v9188, 4
        %v9713 = vperm.slane %v9188, 5
        %v9714 = vperm.slane %v9188, 6
        %v9715 = vperm.slane %v9188, 7
        %v9716 = vperm.slane %v9189, 0
        %v9717 = vperm.slane %v9189, 1
        %v9718 = vperm.slane %v9189, 2
        %v9719 = vperm.slane %v9189, 3
        %v9720 = vperm.slane %v9189, 4
        %v9721 = vperm.slane %v9189, 5
        %v9722 = vperm.slane %v9189, 6
        %v9723 = vperm.slane %v9189, 7
        %v9724 = vperm.slane %v9190, 0
        %v9725 = vperm.slane %v9190, 1
        %v9726 = vperm.slane %v9190, 2
        %v9727 = vperm.slane %v9190, 3
        %v9728 = vperm.slane %v9190, 4
        %v9729 = vperm.slane %v9190, 5
        %v9730 = vperm.slane %v9190, 6
        %v9731 = vperm.slane %v9190, 7
        %v9732 = vperm.slane %v9191, 0
        %v9733 = vperm.slane %v9191, 1
        %v9734 = vperm.slane %v9191, 2
        %v9735 = vperm.slane %v9191, 3
        %v9736 = vperm.slane %v9191, 4
        %v9737 = vperm.slane %v9191, 5
        %v9738 = vperm.slane %v9191, 6
        %v9739 = vperm.slane %v9191, 7
        %v9740 = vperm.slane %v9192, 0
        %v9741 = vperm.slane %v9192, 1
        %v9742 = vperm.slane %v9192, 2
        %v9743 = vperm.slane %v9192, 3
        %v9744 = vperm.slane %v9192, 4
        %v9745 = vperm.slane %v9192, 5
        %v9746 = vperm.slane %v9192, 6
        %v9747 = vperm.slane %v9192, 7
        %v9748 = vperm.slane %v9193, 0
        %v9749 = vperm.slane %v9193, 1
        %v9750 = vperm.slane %v9193, 2
        %v9751 = vperm.slane %v9193, 3
        %v9752 = vperm.slane %v9193, 4
        %v9753 = vperm.slane %v9193, 5
        %v9754 = vperm.slane %v9193, 6
        %v9755 = vperm.slane %v9193, 7
        %v9756 = vperm.slane %v9194, 0
        %v9757 = vperm.slane %v9194, 1
        %v9758 = vperm.slane %v9194, 2
        %v9759 = vperm.slane %v9194, 3
        %v9760 = vperm.slane %v9194, 4
        %v9761 = vperm.slane %v9194, 5
        %v9762 = vperm.slane %v9194, 6
        %v9763 = vperm.slane %v9194, 7
        %v9764 = vperm.slane %v9195, 0
        %v9765 = vperm.slane %v9195, 1
        %v9766 = vperm.slane %v9195, 2
        %v9767 = vperm.slane %v9195, 3
        %v9768 = vperm.slane %v9195, 4
        %v9769 = vperm.slane %v9195, 5
        %v9770 = vperm.slane %v9195, 6
        %v9771 = vperm.slane %v9195, 7
        %9772 = vst [vmem:[#allocation1] ss:$9 sm:$0xff] %v9260
        %s9773 = scalar_lea.vmem [#allocation1], 1
        %9774 = vst [vmem:[%s9773] ss:$9 sm:$0xff] %v9261
        %s9775 = scalar_lea.vmem [#allocation1], 2
        %9776 = vst [vmem:[%s9775] ss:$9 sm:$0xff] %v9262
        %s9777 = scalar_lea.vmem [#allocation1], 3
        %9778 = vst [vmem:[%s9777] ss:$9 sm:$0xff] %v9263
        %s9779 = scalar_lea.vmem [#allocation1], 4
        %9780 = vst [vmem:[%s9779] ss:$9 sm:$0xff] %v9264
        %s9781 = scalar_lea.vmem [#allocation1], 5
        %9782 = vst [vmem:[%s9781] ss:$9 sm:$0xff] %v9265
        %s9783 = scalar_lea.vmem [#allocation1], 6
        %9784 = vst [vmem:[%s9783] ss:$9 sm:$0xff] %v9266
        %s9785 = scalar_lea.vmem [#allocation1], 7
        %9786 = vst [vmem:[%s9785] ss:$9 sm:$0xff] %v9267
        %v9787 = vld [vmem:[#allocation1] sm:$0xff]
        %9788 = vst [vmem:[#allocation1] ss:$9 sm:$0xff] %v9268
        %9789 = vst [vmem:[%s9773] ss:$9 sm:$0xff] %v9269
        %9790 = vst [vmem:[%s9775] ss:$9 sm:$0xff] %v9270
        %9791 = vst [vmem:[%s9777] ss:$9 sm:$0xff] %v9271
        %9792 = vst [vmem:[%s9779] ss:$9 sm:$0xff] %v9272
        %9793 = vst [vmem:[%s9781] ss:$9 sm:$0xff] %v9273
        %9794 = vst [vmem:[%s9783] ss:$9 sm:$0xff] %v9274
        %9795 = vst [vmem:[%s9785] ss:$9 sm:$0xff] %v9275
        %v9796 = vld [vmem:[#allocation1] sm:$0xff]
        %9797 = vst [vmem:[#allocation1] ss:$9 sm:$0xff] %v9276
        %9798 = vst [vmem:[%s9773] ss:$9 sm:$0xff] %v9277
        %9799 = vst [vmem:[%s9775] ss:$9 sm:$0xff] %v9278
        %9800 = vst [vmem:[%s9777] ss:$9 sm:$0xff] %v9279
        %9801 = vst [vmem:[%s9779] ss:$9 sm:$0xff] %v9280
        %9802 = vst [vmem:[%s9781] ss:$9 sm:$0xff] %v9281
        %9803 = vst [vmem:[%s9783] ss:$9 sm:$0xff] %v9282
        %9804 = vst [vmem:[%s9785] ss:$9 sm:$0xff] %v9283
        %v9805 = vld [vmem:[#allocation1] sm:$0xff]
        %9806 = vst [vmem:[#allocation1] ss:$9 sm:$0xff] %v9284
        %9807 = vst [vmem:[%s9773] ss:$9 sm:$0xff] %v9285
        %9808 = vst [vmem:[%s9775] ss:$9 sm:$0xff] %v9286
        %9809 = vst [vmem:[%s9777] ss:$9 sm:$0xff] %v9287
        %9810 = vst [vmem:[%s9779] ss:$9 sm:$0xff] %v9288
        %9811 = vst [vmem:[%s9781] ss:$9 sm:$0xff] %v9289
        %9812 = vst [vmem:[%s9783] ss:$9 sm:$0xff] %v9290
        %9813 = vst [vmem:[%s9785] ss:$9 sm:$0xff] %v9291
        %v9814 = vld [vmem:[#allocation1] sm:$0xff]
        %9815 = vst [vmem:[#allocation1] ss:$9 sm:$0xff] %v9292
        %9816 = vst [vmem:[%s9773] ss:$9 sm:$0xff] %v9293
        %9817 = vst [vmem:[%s9775] ss:$9 sm:$0xff] %v9294
        %9818 = vst [vmem:[%s9777] ss:$9 sm:$0xff] %v9295
        %9819 = vst [vmem:[%s9779] ss:$9 sm:$0xff] %v9296
        %9820 = vst [vmem:[%s9781] ss:$9 sm:$0xff] %v9297
        %9821 = vst [vmem:[%s9783] ss:$9 sm:$0xff] %v9298
        %9822 = vst [vmem:[%s9785] ss:$9 sm:$0xff] %v9299
        %v9823 = vld [vmem:[#allocation1] sm:$0xff]
        %9824 = vst [vmem:[#allocation1] ss:$9 sm:$0xff] %v9300
        %9825 = vst [vmem:[%s9773] ss:$9 sm:$0xff] %v9301
        %9826 = vst [vmem:[%s9775] ss:$9 sm:$0xff] %v9302
        %9827 = vst [vmem:[%s9777] ss:$9 sm:$0xff] %v9303
        %9828 = vst [vmem:[%s9779] ss:$9 sm:$0xff] %v9304
        %9829 = vst [vmem:[%s9781] ss:$9 sm:$0xff] %v9305
        %9830 = vst [vmem:[%s9783] ss:$9 sm:$0xff] %v9306
        %9831 = vst [vmem:[%s9785] ss:$9 sm:$0xff] %v9307
        %v9832 = vld [vmem:[#allocation1] sm:$0xff]
        %9833 = vst [vmem:[#allocation1] ss:$9 sm:$0xff] %v9308
        %9834 = vst [vmem:[%s9773] ss:$9 sm:$0xff] %v9309
        %9835 = vst [vmem:[%s9775] ss:$9 sm:$0xff] %v9310
        %9836 = vst [vmem:[%s9777] ss:$9 sm:$0xff] %v9311
        %9837 = vst [vmem:[%s9779] ss:$9 sm:$0xff] %v9312
        %9838 = vst [vmem:[%s9781] ss:$9 sm:$0xff] %v9313
        %9839 = vst [vmem:[%s9783] ss:$9 sm:$0xff] %v9314
        %9840 = vst [vmem:[%s9785] ss:$9 sm:$0xff] %v9315
        %v9841 = vld [vmem:[#allocation1] sm:$0xff]
        %9842 = vst [vmem:[#allocation1] ss:$9 sm:$0xff] %v9316
        %9843 = vst [vmem:[%s9773] ss:$9 sm:$0xff] %v9317
        %9844 = vst [vmem:[%s9775] ss:$9 sm:$0xff] %v9318
        %9845 = vst [vmem:[%s9777] ss:$9 sm:$0xff] %v9319
        %9846 = vst [vmem:[%s9779] ss:$9 sm:$0xff] %v9320
        %9847 = vst [vmem:[%s9781] ss:$9 sm:$0xff] %v9321
        %9848 = vst [vmem:[%s9783] ss:$9 sm:$0xff] %v9322
        %9849 = vst [vmem:[%s9785] ss:$9 sm:$0xff] %v9323
        %v9850 = vld [vmem:[#allocation1] sm:$0xff]
        %9851 = vst [vmem:[#allocation1] ss:$9 sm:$0xff] %v9324
        %9852 = vst [vmem:[%s9773] ss:$9 sm:$0xff] %v9325
        %9853 = vst [vmem:[%s9775] ss:$9 sm:$0xff] %v9326
        %9854 = vst [vmem:[%s9777] ss:$9 sm:$0xff] %v9327
        %9855 = vst [vmem:[%s9779] ss:$9 sm:$0xff] %v9328
        %9856 = vst [vmem:[%s9781] ss:$9 sm:$0xff] %v9329
        %9857 = vst [vmem:[%s9783] ss:$9 sm:$0xff] %v9330
        %9858 = vst [vmem:[%s9785] ss:$9 sm:$0xff] %v9331
        %v9859 = vld [vmem:[#allocation1] sm:$0xff]
        %9860 = vst [vmem:[#allocation1] ss:$9 sm:$0xff] %v9332
        %9861 = vst [vmem:[%s9773] ss:$9 sm:$0xff] %v9333
        %9862 = vst [vmem:[%s9775] ss:$9 sm:$0xff] %v9334
        %9863 = vst [vmem:[%s9777] ss:$9 sm:$0xff] %v9335
        %9864 = vst [vmem:[%s9779] ss:$9 sm:$0xff] %v9336
        %9865 = vst [vmem:[%s9781] ss:$9 sm:$0xff] %v9337
        %9866 = vst [vmem:[%s9783] ss:$9 sm:$0xff] %v9338
        %9867 = vst [vmem:[%s9785] ss:$9 sm:$0xff] %v9339
        %v9868 = vld [vmem:[#allocation1] sm:$0xff]
        %9869 = vst [vmem:[#allocation1] ss:$9 sm:$0xff] %v9340
        %9870 = vst [vmem:[%s9773] ss:$9 sm:$0xff] %v9341
        %9871 = vst [vmem:[%s9775] ss:$9 sm:$0xff] %v9342
        %9872 = vst [vmem:[%s9777] ss:$9 sm:$0xff] %v9343
        %9873 = vst [vmem:[%s9779] ss:$9 sm:$0xff] %v9344
        %9874 = vst [vmem:[%s9781] ss:$9 sm:$0xff] %v9345
        %9875 = vst [vmem:[%s9783] ss:$9 sm:$0xff] %v9346
        %9876 = vst [vmem:[%s9785] ss:$9 sm:$0xff] %v9347
        %v9877 = vld [vmem:[#allocation1] sm:$0xff]
        %9878 = vst [vmem:[#allocation1] ss:$9 sm:$0xff] %v9348
        %9879 = vst [vmem:[%s9773] ss:$9 sm:$0xff] %v9349
        %9880 = vst [vmem:[%s9775] ss:$9 sm:$0xff] %v9350
        %9881 = vst [vmem:[%s9777] ss:$9 sm:$0xff] %v9351
        %9882 = vst [vmem:[%s9779] ss:$9 sm:$0xff] %v9352
        %9883 = vst [vmem:[%s9781] ss:$9 sm:$0xff] %v9353
        %9884 = vst [vmem:[%s9783] ss:$9 sm:$0xff] %v9354
        %9885 = vst [vmem:[%s9785] ss:$9 sm:$0xff] %v9355
        %v9886 = vld [vmem:[#allocation1] sm:$0xff]
        %9887 = vst [vmem:[#allocation1] ss:$9 sm:$0xff] %v9356
        %9888 = vst [vmem:[%s9773] ss:$9 sm:$0xff] %v9357
        %9889 = vst [vmem:[%s9775] ss:$9 sm:$0xff] %v9358
        %9890 = vst [vmem:[%s9777] ss:$9 sm:$0xff] %v9359
        %9891 = vst [vmem:[%s9779] ss:$9 sm:$0xff] %v9360
        %9892 = vst [vmem:[%s9781] ss:$9 sm:$0xff] %v9361
        %9893 = vst [vmem:[%s9783] ss:$9 sm:$0xff] %v9362
        %9894 = vst [vmem:[%s9785] ss:$9 sm:$0xff] %v9363
        %v9895 = vld [vmem:[#allocation1] sm:$0xff]
        %9896 = vst [vmem:[#allocation1] ss:$9 sm:$0xff] %v9364
        %9897 = vst [vmem:[%s9773] ss:$9 sm:$0xff] %v9365
        %9898 = vst [vmem:[%s9775] ss:$9 sm:$0xff] %v9366
        %9899 = vst [vmem:[%s9777] ss:$9 sm:$0xff] %v9367
        %9900 = vst [vmem:[%s9779] ss:$9 sm:$0xff] %v9368
        %9901 = vst [vmem:[%s9781] ss:$9 sm:$0xff] %v9369
        %9902 = vst [vmem:[%s9783] ss:$9 sm:$0xff] %v9370
        %9903 = vst [vmem:[%s9785] ss:$9 sm:$0xff] %v9371
        %v9904 = vld [vmem:[#allocation1] sm:$0xff]
        %9905 = vst [vmem:[#allocation1] ss:$9 sm:$0xff] %v9372
        %9906 = vst [vmem:[%s9773] ss:$9 sm:$0xff] %v9373
        %9907 = vst [vmem:[%s9775] ss:$9 sm:$0xff] %v9374
        %9908 = vst [vmem:[%s9777] ss:$9 sm:$0xff] %v9375
        %9909 = vst [vmem:[%s9779] ss:$9 sm:$0xff] %v9376
        %9910 = vst [vmem:[%s9781] ss:$9 sm:$0xff] %v9377
        %9911 = vst [vmem:[%s9783] ss:$9 sm:$0xff] %v9378
        %9912 = vst [vmem:[%s9785] ss:$9 sm:$0xff] %v9379
        %v9913 = vld [vmem:[#allocation1] sm:$0xff]
        %9914 = vst [vmem:[#allocation1] ss:$9 sm:$0xff] %v9380
        %9915 = vst [vmem:[%s9773] ss:$9 sm:$0xff] %v9381
        %9916 = vst [vmem:[%s9775] ss:$9 sm:$0xff] %v9382
        %9917 = vst [vmem:[%s9777] ss:$9 sm:$0xff] %v9383
        %9918 = vst [vmem:[%s9779] ss:$9 sm:$0xff] %v9384
        %9919 = vst [vmem:[%s9781] ss:$9 sm:$0xff] %v9385
        %9920 = vst [vmem:[%s9783] ss:$9 sm:$0xff] %v9386
        %9921 = vst [vmem:[%s9785] ss:$9 sm:$0xff] %v9387
        %v9922 = vld [vmem:[#allocation1] sm:$0xff]
        %9923 = vst [vmem:[#allocation1] ss:$9 sm:$0xff] %v9388
        %9924 = vst [vmem:[%s9773] ss:$9 sm:$0xff] %v9389
        %9925 = vst [vmem:[%s9775] ss:$9 sm:$0xff] %v9390
        %9926 = vst [vmem:[%s9777] ss:$9 sm:$0xff] %v9391
        %9927 = vst [vmem:[%s9779] ss:$9 sm:$0xff] %v9392
        %9928 = vst [vmem:[%s9781] ss:$9 sm:$0xff] %v9393
        %9929 = vst [vmem:[%s9783] ss:$9 sm:$0xff] %v9394
        %9930 = vst [vmem:[%s9785] ss:$9 sm:$0xff] %v9395
        %v9931 = vld [vmem:[#allocation1] sm:$0xff]
        %9932 = vst [vmem:[#allocation1] ss:$9 sm:$0xff] %v9396
        %9933 = vst [vmem:[%s9773] ss:$9 sm:$0xff] %v9397
        %9934 = vst [vmem:[%s9775] ss:$9 sm:$0xff] %v9398
        %9935 = vst [vmem:[%s9777] ss:$9 sm:$0xff] %v9399
        %9936 = vst [vmem:[%s9779] ss:$9 sm:$0xff] %v9400
        %9937 = vst [vmem:[%s9781] ss:$9 sm:$0xff] %v9401
        %9938 = vst [vmem:[%s9783] ss:$9 sm:$0xff] %v9402
        %9939 = vst [vmem:[%s9785] ss:$9 sm:$0xff] %v9403
        %v9940 = vld [vmem:[#allocation1] sm:$0xff]
        %9941 = vst [vmem:[#allocation1] ss:$9 sm:$0xff] %v9404
        %9942 = vst [vmem:[%s9773] ss:$9 sm:$0xff] %v9405
        %9943 = vst [vmem:[%s9775] ss:$9 sm:$0xff] %v9406
        %9944 = vst [vmem:[%s9777] ss:$9 sm:$0xff] %v9407
        %9945 = vst [vmem:[%s9779] ss:$9 sm:$0xff] %v9408
        %9946 = vst [vmem:[%s9781] ss:$9 sm:$0xff] %v9409
        %9947 = vst [vmem:[%s9783] ss:$9 sm:$0xff] %v9410
        %9948 = vst [vmem:[%s9785] ss:$9 sm:$0xff] %v9411
        %v9949 = vld [vmem:[#allocation1] sm:$0xff]
        %9950 = vst [vmem:[#allocation1] ss:$9 sm:$0xff] %v9412
        %9951 = vst [vmem:[%s9773] ss:$9 sm:$0xff] %v9413
        %9952 = vst [vmem:[%s9775] ss:$9 sm:$0xff] %v9414
        %9953 = vst [vmem:[%s9777] ss:$9 sm:$0xff] %v9415
        %9954 = vst [vmem:[%s9779] ss:$9 sm:$0xff] %v9416
        %9955 = vst [vmem:[%s9781] ss:$9 sm:$0xff] %v9417
        %9956 = vst [vmem:[%s9783] ss:$9 sm:$0xff] %v9418
        %9957 = vst [vmem:[%s9785] ss:$9 sm:$0xff] %v9419
        %v9958 = vld [vmem:[#allocation1] sm:$0xff]
        %9959 = vst [vmem:[#allocation1] ss:$9 sm:$0xff] %v9420
        %9960 = vst [vmem:[%s9773] ss:$9 sm:$0xff] %v9421
        %9961 = vst [vmem:[%s9775] ss:$9 sm:$0xff] %v9422
        %9962 = vst [vmem:[%s9777] ss:$9 sm:$0xff] %v9423
        %9963 = vst [vmem:[%s9779] ss:$9 sm:$0xff] %v9424
        %9964 = vst [vmem:[%s9781] ss:$9 sm:$0xff] %v9425
        %9965 = vst [vmem:[%s9783] ss:$9 sm:$0xff] %v9426
        %9966 = vst [vmem:[%s9785] ss:$9 sm:$0xff] %v9427
        %v9967 = vld [vmem:[#allocation1] sm:$0xff]
        %9968 = vst [vmem:[#allocation1] ss:$9 sm:$0xff] %v9428
        %9969 = vst [vmem:[%s9773] ss:$9 sm:$0xff] %v9429
        %9970 = vst [vmem:[%s9775] ss:$9 sm:$0xff] %v9430
        %9971 = vst [vmem:[%s9777] ss:$9 sm:$0xff] %v9431
        %9972 = vst [vmem:[%s9779] ss:$9 sm:$0xff] %v9432
        %9973 = vst [vmem:[%s9781] ss:$9 sm:$0xff] %v9433
        %9974 = vst [vmem:[%s9783] ss:$9 sm:$0xff] %v9434
        %9975 = vst [vmem:[%s9785] ss:$9 sm:$0xff] %v9435
        %v9976 = vld [vmem:[#allocation1] sm:$0xff]
        %9977 = vst [vmem:[#allocation1] ss:$9 sm:$0xff] %v9436
        %9978 = vst [vmem:[%s9773] ss:$9 sm:$0xff] %v9437
        %9979 = vst [vmem:[%s9775] ss:$9 sm:$0xff] %v9438
        %9980 = vst [vmem:[%s9777] ss:$9 sm:$0xff] %v9439
        %9981 = vst [vmem:[%s9779] ss:$9 sm:$0xff] %v9440
        %9982 = vst [vmem:[%s9781] ss:$9 sm:$0xff] %v9441
        %9983 = vst [vmem:[%s9783] ss:$9 sm:$0xff] %v9442
        %9984 = vst [vmem:[%s9785] ss:$9 sm:$0xff] %v9443
        %v9985 = vld [vmem:[#allocation1] sm:$0xff]
        %9986 = vst [vmem:[#allocation1] ss:$9 sm:$0xff] %v9444
        %9987 = vst [vmem:[%s9773] ss:$9 sm:$0xff] %v9445
        %9988 = vst [vmem:[%s9775] ss:$9 sm:$0xff] %v9446
        %9989 = vst [vmem:[%s9777] ss:$9 sm:$0xff] %v9447
        %9990 = vst [vmem:[%s9779] ss:$9 sm:$0xff] %v9448
        %9991 = vst [vmem:[%s9781] ss:$9 sm:$0xff] %v9449
        %9992 = vst [vmem:[%s9783] ss:$9 sm:$0xff] %v9450
        %9993 = vst [vmem:[%s9785] ss:$9 sm:$0xff] %v9451
        %v9994 = vld [vmem:[#allocation1] sm:$0xff]
        %9995 = vst [vmem:[#allocation1] ss:$9 sm:$0xff] %v9452
        %9996 = vst [vmem:[%s9773] ss:$9 sm:$0xff] %v9453
        %9997 = vst [vmem:[%s9775] ss:$9 sm:$0xff] %v9454
        %9998 = vst [vmem:[%s9777] ss:$9 sm:$0xff] %v9455
        %9999 = vst [vmem:[%s9779] ss:$9 sm:$0xff] %v9456
        %10000 = vst [vmem:[%s9781] ss:$9 sm:$0xff] %v9457
        %10001 = vst [vmem:[%s9783] ss:$9 sm:$0xff] %v9458
        %10002 = vst [vmem:[%s9785] ss:$9 sm:$0xff] %v9459
        %v10003 = vld [vmem:[#allocation1] sm:$0xff]
        %10004 = vst [vmem:[#allocation1] ss:$9 sm:$0xff] %v9460
        %10005 = vst [vmem:[%s9773] ss:$9 sm:$0xff] %v9461
        %10006 = vst [vmem:[%s9775] ss:$9 sm:$0xff] %v9462
        %10007 = vst [vmem:[%s9777] ss:$9 sm:$0xff] %v9463
        %10008 = vst [vmem:[%s9779] ss:$9 sm:$0xff] %v9464
        %10009 = vst [vmem:[%s9781] ss:$9 sm:$0xff] %v9465
        %10010 = vst [vmem:[%s9783] ss:$9 sm:$0xff] %v9466
        %10011 = vst [vmem:[%s9785] ss:$9 sm:$0xff] %v9467
        %v10012 = vld [vmem:[#allocation1] sm:$0xff]
        %10013 = vst [vmem:[#allocation1] ss:$9 sm:$0xff] %v9468
        %10014 = vst [vmem:[%s9773] ss:$9 sm:$0xff] %v9469
        %10015 = vst [vmem:[%s9775] ss:$9 sm:$0xff] %v9470
        %10016 = vst [vmem:[%s9777] ss:$9 sm:$0xff] %v9471
        %10017 = vst [vmem:[%s9779] ss:$9 sm:$0xff] %v9472
        %10018 = vst [vmem:[%s9781] ss:$9 sm:$0xff] %v9473
        %10019 = vst [vmem:[%s9783] ss:$9 sm:$0xff] %v9474
        %10020 = vst [vmem:[%s9785] ss:$9 sm:$0xff] %v9475
        %v10021 = vld [vmem:[#allocation1] sm:$0xff]
        %10022 = vst [vmem:[#allocation1] ss:$9 sm:$0xff] %v9476
        %10023 = vst [vmem:[%s9773] ss:$9 sm:$0xff] %v9477
        %10024 = vst [vmem:[%s9775] ss:$9 sm:$0xff] %v9478
        %10025 = vst [vmem:[%s9777] ss:$9 sm:$0xff] %v9479
        %10026 = vst [vmem:[%s9779] ss:$9 sm:$0xff] %v9480
        %10027 = vst [vmem:[%s9781] ss:$9 sm:$0xff] %v9481
        %10028 = vst [vmem:[%s9783] ss:$9 sm:$0xff] %v9482
        %10029 = vst [vmem:[%s9785] ss:$9 sm:$0xff] %v9483
        %v10030 = vld [vmem:[#allocation1] sm:$0xff]
        %10031 = vst [vmem:[#allocation1] ss:$9 sm:$0xff] %v9484
        %10032 = vst [vmem:[%s9773] ss:$9 sm:$0xff] %v9485
        %10033 = vst [vmem:[%s9775] ss:$9 sm:$0xff] %v9486
        %10034 = vst [vmem:[%s9777] ss:$9 sm:$0xff] %v9487
        %10035 = vst [vmem:[%s9779] ss:$9 sm:$0xff] %v9488
        %10036 = vst [vmem:[%s9781] ss:$9 sm:$0xff] %v9489
        %10037 = vst [vmem:[%s9783] ss:$9 sm:$0xff] %v9490
        %10038 = vst [vmem:[%s9785] ss:$9 sm:$0xff] %v9491
        %v10039 = vld [vmem:[#allocation1] sm:$0xff]
        %10040 = vst [vmem:[#allocation1] ss:$9 sm:$0xff] %v9492
        %10041 = vst [vmem:[%s9773] ss:$9 sm:$0xff] %v9493
        %10042 = vst [vmem:[%s9775] ss:$9 sm:$0xff] %v9494
        %10043 = vst [vmem:[%s9777] ss:$9 sm:$0xff] %v9495
        %10044 = vst [vmem:[%s9779] ss:$9 sm:$0xff] %v9496
        %10045 = vst [vmem:[%s9781] ss:$9 sm:$0xff] %v9497
        %10046 = vst [vmem:[%s9783] ss:$9 sm:$0xff] %v9498
        %10047 = vst [vmem:[%s9785] ss:$9 sm:$0xff] %v9499
        %v10048 = vld [vmem:[#allocation1] sm:$0xff]
        %10049 = vst [vmem:[#allocation1] ss:$9 sm:$0xff] %v9500
        %10050 = vst [vmem:[%s9773] ss:$9 sm:$0xff] %v9501
        %10051 = vst [vmem:[%s9775] ss:$9 sm:$0xff] %v9502
        %10052 = vst [vmem:[%s9777] ss:$9 sm:$0xff] %v9503
        %10053 = vst [vmem:[%s9779] ss:$9 sm:$0xff] %v9504
        %10054 = vst [vmem:[%s9781] ss:$9 sm:$0xff] %v9505
        %10055 = vst [vmem:[%s9783] ss:$9 sm:$0xff] %v9506
        %10056 = vst [vmem:[%s9785] ss:$9 sm:$0xff] %v9507
        %v10057 = vld [vmem:[#allocation1] sm:$0xff]
        %10058 = vst [vmem:[#allocation1] ss:$9 sm:$0xff] %v9508
        %10059 = vst [vmem:[%s9773] ss:$9 sm:$0xff] %v9509
        %10060 = vst [vmem:[%s9775] ss:$9 sm:$0xff] %v9510
        %10061 = vst [vmem:[%s9777] ss:$9 sm:$0xff] %v9511
        %10062 = vst [vmem:[%s9779] ss:$9 sm:$0xff] %v9512
        %10063 = vst [vmem:[%s9781] ss:$9 sm:$0xff] %v9513
        %10064 = vst [vmem:[%s9783] ss:$9 sm:$0xff] %v9514
        %10065 = vst [vmem:[%s9785] ss:$9 sm:$0xff] %v9515
        %v10066 = vld [vmem:[#allocation1] sm:$0xff]
        %10067 = vst [vmem:[#allocation1] ss:$9 sm:$0xff] %v9516
        %10068 = vst [vmem:[%s9773] ss:$9 sm:$0xff] %v9517
        %10069 = vst [vmem:[%s9775] ss:$9 sm:$0xff] %v9518
        %10070 = vst [vmem:[%s9777] ss:$9 sm:$0xff] %v9519
        %10071 = vst [vmem:[%s9779] ss:$9 sm:$0xff] %v9520
        %10072 = vst [vmem:[%s9781] ss:$9 sm:$0xff] %v9521
        %10073 = vst [vmem:[%s9783] ss:$9 sm:$0xff] %v9522
        %10074 = vst [vmem:[%s9785] ss:$9 sm:$0xff] %v9523
        %v10075 = vld [vmem:[#allocation1] sm:$0xff]
        %10076 = vst [vmem:[#allocation1] ss:$9 sm:$0xff] %v9524
        %10077 = vst [vmem:[%s9773] ss:$9 sm:$0xff] %v9525
        %10078 = vst [vmem:[%s9775] ss:$9 sm:$0xff] %v9526
        %10079 = vst [vmem:[%s9777] ss:$9 sm:$0xff] %v9527
        %10080 = vst [vmem:[%s9779] ss:$9 sm:$0xff] %v9528
        %10081 = vst [vmem:[%s9781] ss:$9 sm:$0xff] %v9529
        %10082 = vst [vmem:[%s9783] ss:$9 sm:$0xff] %v9530
        %10083 = vst [vmem:[%s9785] ss:$9 sm:$0xff] %v9531
        %v10084 = vld [vmem:[#allocation1] sm:$0xff]
        %10085 = vst [vmem:[#allocation1] ss:$9 sm:$0xff] %v9532
        %10086 = vst [vmem:[%s9773] ss:$9 sm:$0xff] %v9533
        %10087 = vst [vmem:[%s9775] ss:$9 sm:$0xff] %v9534
        %10088 = vst [vmem:[%s9777] ss:$9 sm:$0xff] %v9535
        %10089 = vst [vmem:[%s9779] ss:$9 sm:$0xff] %v9536
        %10090 = vst [vmem:[%s9781] ss:$9 sm:$0xff] %v9537
        %10091 = vst [vmem:[%s9783] ss:$9 sm:$0xff] %v9538
        %10092 = vst [vmem:[%s9785] ss:$9 sm:$0xff] %v9539
        %v10093 = vld [vmem:[#allocation1] sm:$0xff]
        %10094 = vst [vmem:[#allocation1] ss:$9 sm:$0xff] %v9540
        %10095 = vst [vmem:[%s9773] ss:$9 sm:$0xff] %v9541
        %10096 = vst [vmem:[%s9775] ss:$9 sm:$0xff] %v9542
        %10097 = vst [vmem:[%s9777] ss:$9 sm:$0xff] %v9543
        %10098 = vst [vmem:[%s9779] ss:$9 sm:$0xff] %v9544
        %10099 = vst [vmem:[%s9781] ss:$9 sm:$0xff] %v9545
        %10100 = vst [vmem:[%s9783] ss:$9 sm:$0xff] %v9546
        %10101 = vst [vmem:[%s9785] ss:$9 sm:$0xff] %v9547
        %v10102 = vld [vmem:[#allocation1] sm:$0xff]
        %10103 = vst [vmem:[#allocation1] ss:$9 sm:$0xff] %v9548
        %10104 = vst [vmem:[%s9773] ss:$9 sm:$0xff] %v9549
        %10105 = vst [vmem:[%s9775] ss:$9 sm:$0xff] %v9550
        %10106 = vst [vmem:[%s9777] ss:$9 sm:$0xff] %v9551
        %10107 = vst [vmem:[%s9779] ss:$9 sm:$0xff] %v9552
        %10108 = vst [vmem:[%s9781] ss:$9 sm:$0xff] %v9553
        %10109 = vst [vmem:[%s9783] ss:$9 sm:$0xff] %v9554
        %10110 = vst [vmem:[%s9785] ss:$9 sm:$0xff] %v9555
        %v10111 = vld [vmem:[#allocation1] sm:$0xff]
        %10112 = vst [vmem:[#allocation1] ss:$9 sm:$0xff] %v9556
        %10113 = vst [vmem:[%s9773] ss:$9 sm:$0xff] %v9557
        %10114 = vst [vmem:[%s9775] ss:$9 sm:$0xff] %v9558
        %10115 = vst [vmem:[%s9777] ss:$9 sm:$0xff] %v9559
        %10116 = vst [vmem:[%s9779] ss:$9 sm:$0xff] %v9560
        %10117 = vst [vmem:[%s9781] ss:$9 sm:$0xff] %v9561
        %10118 = vst [vmem:[%s9783] ss:$9 sm:$0xff] %v9562
        %10119 = vst [vmem:[%s9785] ss:$9 sm:$0xff] %v9563
        %v10120 = vld [vmem:[#allocation1] sm:$0xff]
        %10121 = vst [vmem:[#allocation1] ss:$9 sm:$0xff] %v9564
        %10122 = vst [vmem:[%s9773] ss:$9 sm:$0xff] %v9565
        %10123 = vst [vmem:[%s9775] ss:$9 sm:$0xff] %v9566
        %10124 = vst [vmem:[%s9777] ss:$9 sm:$0xff] %v9567
        %10125 = vst [vmem:[%s9779] ss:$9 sm:$0xff] %v9568
        %10126 = vst [vmem:[%s9781] ss:$9 sm:$0xff] %v9569
        %10127 = vst [vmem:[%s9783] ss:$9 sm:$0xff] %v9570
        %10128 = vst [vmem:[%s9785] ss:$9 sm:$0xff] %v9571
        %v10129 = vld [vmem:[#allocation1] sm:$0xff]
        %10130 = vst [vmem:[#allocation1] ss:$9 sm:$0xff] %v9572
        %10131 = vst [vmem:[%s9773] ss:$9 sm:$0xff] %v9573
        %10132 = vst [vmem:[%s9775] ss:$9 sm:$0xff] %v9574
        %10133 = vst [vmem:[%s9777] ss:$9 sm:$0xff] %v9575
        %10134 = vst [vmem:[%s9779] ss:$9 sm:$0xff] %v9576
        %10135 = vst [vmem:[%s9781] ss:$9 sm:$0xff] %v9577
        %10136 = vst [vmem:[%s9783] ss:$9 sm:$0xff] %v9578
        %10137 = vst [vmem:[%s9785] ss:$9 sm:$0xff] %v9579
        %v10138 = vld [vmem:[#allocation1] sm:$0xff]
        %10139 = vst [vmem:[#allocation1] ss:$9 sm:$0xff] %v9580
        %10140 = vst [vmem:[%s9773] ss:$9 sm:$0xff] %v9581
        %10141 = vst [vmem:[%s9775] ss:$9 sm:$0xff] %v9582
        %10142 = vst [vmem:[%s9777] ss:$9 sm:$0xff] %v9583
        %10143 = vst [vmem:[%s9779] ss:$9 sm:$0xff] %v9584
        %10144 = vst [vmem:[%s9781] ss:$9 sm:$0xff] %v9585
        %10145 = vst [vmem:[%s9783] ss:$9 sm:$0xff] %v9586
        %10146 = vst [vmem:[%s9785] ss:$9 sm:$0xff] %v9587
        %v10147 = vld [vmem:[#allocation1] sm:$0xff]
        %10148 = vst [vmem:[#allocation1] ss:$9 sm:$0xff] %v9588
        %10149 = vst [vmem:[%s9773] ss:$9 sm:$0xff] %v9589
        %10150 = vst [vmem:[%s9775] ss:$9 sm:$0xff] %v9590
        %10151 = vst [vmem:[%s9777] ss:$9 sm:$0xff] %v9591
        %10152 = vst [vmem:[%s9779] ss:$9 sm:$0xff] %v9592
        %10153 = vst [vmem:[%s9781] ss:$9 sm:$0xff] %v9593
        %10154 = vst [vmem:[%s9783] ss:$9 sm:$0xff] %v9594
        %10155 = vst [vmem:[%s9785] ss:$9 sm:$0xff] %v9595
        %v10156 = vld [vmem:[#allocation1] sm:$0xff]
        %10157 = vst [vmem:[#allocation1] ss:$9 sm:$0xff] %v9596
        %10158 = vst [vmem:[%s9773] ss:$9 sm:$0xff] %v9597
        %10159 = vst [vmem:[%s9775] ss:$9 sm:$0xff] %v9598
        %10160 = vst [vmem:[%s9777] ss:$9 sm:$0xff] %v9599
        %10161 = vst [vmem:[%s9779] ss:$9 sm:$0xff] %v9600
        %10162 = vst [vmem:[%s9781] ss:$9 sm:$0xff] %v9601
        %10163 = vst [vmem:[%s9783] ss:$9 sm:$0xff] %v9602
        %10164 = vst [vmem:[%s9785] ss:$9 sm:$0xff] %v9603
        %v10165 = vld [vmem:[#allocation1] sm:$0xff]
        %10166 = vst [vmem:[#allocation1] ss:$9 sm:$0xff] %v9604
        %10167 = vst [vmem:[%s9773] ss:$9 sm:$0xff] %v9605
        %10168 = vst [vmem:[%s9775] ss:$9 sm:$0xff] %v9606
        %10169 = vst [vmem:[%s9777] ss:$9 sm:$0xff] %v9607
        %10170 = vst [vmem:[%s9779] ss:$9 sm:$0xff] %v9608
        %10171 = vst [vmem:[%s9781] ss:$9 sm:$0xff] %v9609
        %10172 = vst [vmem:[%s9783] ss:$9 sm:$0xff] %v9610
        %10173 = vst [vmem:[%s9785] ss:$9 sm:$0xff] %v9611
        %v10174 = vld [vmem:[#allocation1] sm:$0xff]
        %10175 = vst [vmem:[#allocation1] ss:$9 sm:$0xff] %v9612
        %10176 = vst [vmem:[%s9773] ss:$9 sm:$0xff] %v9613
        %10177 = vst [vmem:[%s9775] ss:$9 sm:$0xff] %v9614
        %10178 = vst [vmem:[%s9777] ss:$9 sm:$0xff] %v9615
        %10179 = vst [vmem:[%s9779] ss:$9 sm:$0xff] %v9616
        %10180 = vst [vmem:[%s9781] ss:$9 sm:$0xff] %v9617
        %10181 = vst [vmem:[%s9783] ss:$9 sm:$0xff] %v9618
        %10182 = vst [vmem:[%s9785] ss:$9 sm:$0xff] %v9619
        %v10183 = vld [vmem:[#allocation1] sm:$0xff]
        %10184 = vst [vmem:[#allocation1] ss:$9 sm:$0xff] %v9620
        %10185 = vst [vmem:[%s9773] ss:$9 sm:$0xff] %v9621
        %10186 = vst [vmem:[%s9775] ss:$9 sm:$0xff] %v9622
        %10187 = vst [vmem:[%s9777] ss:$9 sm:$0xff] %v9623
        %10188 = vst [vmem:[%s9779] ss:$9 sm:$0xff] %v9624
        %10189 = vst [vmem:[%s9781] ss:$9 sm:$0xff] %v9625
        %10190 = vst [vmem:[%s9783] ss:$9 sm:$0xff] %v9626
        %10191 = vst [vmem:[%s9785] ss:$9 sm:$0xff] %v9627
        %v10192 = vld [vmem:[#allocation1] sm:$0xff]
        %10193 = vst [vmem:[#allocation1] ss:$9 sm:$0xff] %v9628
        %10194 = vst [vmem:[%s9773] ss:$9 sm:$0xff] %v9629
        %10195 = vst [vmem:[%s9775] ss:$9 sm:$0xff] %v9630
        %10196 = vst [vmem:[%s9777] ss:$9 sm:$0xff] %v9631
        %10197 = vst [vmem:[%s9779] ss:$9 sm:$0xff] %v9632
        %10198 = vst [vmem:[%s9781] ss:$9 sm:$0xff] %v9633
        %10199 = vst [vmem:[%s9783] ss:$9 sm:$0xff] %v9634
        %10200 = vst [vmem:[%s9785] ss:$9 sm:$0xff] %v9635
        %v10201 = vld [vmem:[#allocation1] sm:$0xff]
        %10202 = vst [vmem:[#allocation1] ss:$9 sm:$0xff] %v9636
        %10203 = vst [vmem:[%s9773] ss:$9 sm:$0xff] %v9637
        %10204 = vst [vmem:[%s9775] ss:$9 sm:$0xff] %v9638
        %10205 = vst [vmem:[%s9777] ss:$9 sm:$0xff] %v9639
        %10206 = vst [vmem:[%s9779] ss:$9 sm:$0xff] %v9640
        %10207 = vst [vmem:[%s9781] ss:$9 sm:$0xff] %v9641
        %10208 = vst [vmem:[%s9783] ss:$9 sm:$0xff] %v9642
        %10209 = vst [vmem:[%s9785] ss:$9 sm:$0xff] %v9643
        %v10210 = vld [vmem:[#allocation1] sm:$0xff]
        %10211 = vst [vmem:[#allocation1] ss:$9 sm:$0xff] %v9644
        %10212 = vst [vmem:[%s9773] ss:$9 sm:$0xff] %v9645
        %10213 = vst [vmem:[%s9775] ss:$9 sm:$0xff] %v9646
        %10214 = vst [vmem:[%s9777] ss:$9 sm:$0xff] %v9647
        %10215 = vst [vmem:[%s9779] ss:$9 sm:$0xff] %v9648
        %10216 = vst [vmem:[%s9781] ss:$9 sm:$0xff] %v9649
        %10217 = vst [vmem:[%s9783] ss:$9 sm:$0xff] %v9650
        %10218 = vst [vmem:[%s9785] ss:$9 sm:$0xff] %v9651
        %v10219 = vld [vmem:[#allocation1] sm:$0xff]
        %10220 = vst [vmem:[#allocation1] ss:$9 sm:$0xff] %v9652
        %10221 = vst [vmem:[%s9773] ss:$9 sm:$0xff] %v9653
        %10222 = vst [vmem:[%s9775] ss:$9 sm:$0xff] %v9654
        %10223 = vst [vmem:[%s9777] ss:$9 sm:$0xff] %v9655
        %10224 = vst [vmem:[%s9779] ss:$9 sm:$0xff] %v9656
        %10225 = vst [vmem:[%s9781] ss:$9 sm:$0xff] %v9657
        %10226 = vst [vmem:[%s9783] ss:$9 sm:$0xff] %v9658
        %10227 = vst [vmem:[%s9785] ss:$9 sm:$0xff] %v9659
        %v10228 = vld [vmem:[#allocation1] sm:$0xff]
        %10229 = vst [vmem:[#allocation1] ss:$9 sm:$0xff] %v9660
        %10230 = vst [vmem:[%s9773] ss:$9 sm:$0xff] %v9661
        %10231 = vst [vmem:[%s9775] ss:$9 sm:$0xff] %v9662
        %10232 = vst [vmem:[%s9777] ss:$9 sm:$0xff] %v9663
        %10233 = vst [vmem:[%s9779] ss:$9 sm:$0xff] %v9664
        %10234 = vst [vmem:[%s9781] ss:$9 sm:$0xff] %v9665
        %10235 = vst [vmem:[%s9783] ss:$9 sm:$0xff] %v9666
        %10236 = vst [vmem:[%s9785] ss:$9 sm:$0xff] %v9667
        %v10237 = vld [vmem:[#allocation1] sm:$0xff]
        %10238 = vst [vmem:[#allocation1] ss:$9 sm:$0xff] %v9668
        %10239 = vst [vmem:[%s9773] ss:$9 sm:$0xff] %v9669
        %10240 = vst [vmem:[%s9775] ss:$9 sm:$0xff] %v9670
        %10241 = vst [vmem:[%s9777] ss:$9 sm:$0xff] %v9671
        %10242 = vst [vmem:[%s9779] ss:$9 sm:$0xff] %v9672
        %10243 = vst [vmem:[%s9781] ss:$9 sm:$0xff] %v9673
        %10244 = vst [vmem:[%s9783] ss:$9 sm:$0xff] %v9674
        %10245 = vst [vmem:[%s9785] ss:$9 sm:$0xff] %v9675
        %v10246 = vld [vmem:[#allocation1] sm:$0xff]
        %10247 = vst [vmem:[#allocation1] ss:$9 sm:$0xff] %v9676
        %10248 = vst [vmem:[%s9773] ss:$9 sm:$0xff] %v9677
        %10249 = vst [vmem:[%s9775] ss:$9 sm:$0xff] %v9678
        %10250 = vst [vmem:[%s9777] ss:$9 sm:$0xff] %v9679
        %10251 = vst [vmem:[%s9779] ss:$9 sm:$0xff] %v9680
        %10252 = vst [vmem:[%s9781] ss:$9 sm:$0xff] %v9681
        %10253 = vst [vmem:[%s9783] ss:$9 sm:$0xff] %v9682
        %10254 = vst [vmem:[%s9785] ss:$9 sm:$0xff] %v9683
        %v10255 = vld [vmem:[#allocation1] sm:$0xff]
        %10256 = vst [vmem:[#allocation1] ss:$9 sm:$0xff] %v9684
        %10257 = vst [vmem:[%s9773] ss:$9 sm:$0xff] %v9685
        %10258 = vst [vmem:[%s9775] ss:$9 sm:$0xff] %v9686
        %10259 = vst [vmem:[%s9777] ss:$9 sm:$0xff] %v9687
        %10260 = vst [vmem:[%s9779] ss:$9 sm:$0xff] %v9688
        %10261 = vst [vmem:[%s9781] ss:$9 sm:$0xff] %v9689
        %10262 = vst [vmem:[%s9783] ss:$9 sm:$0xff] %v9690
        %10263 = vst [vmem:[%s9785] ss:$9 sm:$0xff] %v9691
        %v10264 = vld [vmem:[#allocation1] sm:$0xff]
        %10265 = vst [vmem:[#allocation1] ss:$9 sm:$0xff] %v9692
        %10266 = vst [vmem:[%s9773] ss:$9 sm:$0xff] %v9693
        %10267 = vst [vmem:[%s9775] ss:$9 sm:$0xff] %v9694
        %10268 = vst [vmem:[%s9777] ss:$9 sm:$0xff] %v9695
        %10269 = vst [vmem:[%s9779] ss:$9 sm:$0xff] %v9696
        %10270 = vst [vmem:[%s9781] ss:$9 sm:$0xff] %v9697
        %10271 = vst [vmem:[%s9783] ss:$9 sm:$0xff] %v9698
        %10272 = vst [vmem:[%s9785] ss:$9 sm:$0xff] %v9699
        %v10273 = vld [vmem:[#allocation1] sm:$0xff]
        %10274 = vst [vmem:[#allocation1] ss:$9 sm:$0xff] %v9700
        %10275 = vst [vmem:[%s9773] ss:$9 sm:$0xff] %v9701
        %10276 = vst [vmem:[%s9775] ss:$9 sm:$0xff] %v9702
        %10277 = vst [vmem:[%s9777] ss:$9 sm:$0xff] %v9703
        %10278 = vst [vmem:[%s9779] ss:$9 sm:$0xff] %v9704
        %10279 = vst [vmem:[%s9781] ss:$9 sm:$0xff] %v9705
        %10280 = vst [vmem:[%s9783] ss:$9 sm:$0xff] %v9706
        %10281 = vst [vmem:[%s9785] ss:$9 sm:$0xff] %v9707
        %v10282 = vld [vmem:[#allocation1] sm:$0xff]
        %10283 = vst [vmem:[#allocation1] ss:$9 sm:$0xff] %v9708
        %10284 = vst [vmem:[%s9773] ss:$9 sm:$0xff] %v9709
        %10285 = vst [vmem:[%s9775] ss:$9 sm:$0xff] %v9710
        %10286 = vst [vmem:[%s9777] ss:$9 sm:$0xff] %v9711
        %10287 = vst [vmem:[%s9779] ss:$9 sm:$0xff] %v9712
        %10288 = vst [vmem:[%s9781] ss:$9 sm:$0xff] %v9713
        %10289 = vst [vmem:[%s9783] ss:$9 sm:$0xff] %v9714
        %10290 = vst [vmem:[%s9785] ss:$9 sm:$0xff] %v9715
        %v10291 = vld [vmem:[#allocation1] sm:$0xff]
        %10292 = vst [vmem:[#allocation1] ss:$9 sm:$0xff] %v9716
        %10293 = vst [vmem:[%s9773] ss:$9 sm:$0xff] %v9717
        %10294 = vst [vmem:[%s9775] ss:$9 sm:$0xff] %v9718
        %10295 = vst [vmem:[%s9777] ss:$9 sm:$0xff] %v9719
        %10296 = vst [vmem:[%s9779] ss:$9 sm:$0xff] %v9720
        %10297 = vst [vmem:[%s9781] ss:$9 sm:$0xff] %v9721
        %10298 = vst [vmem:[%s9783] ss:$9 sm:$0xff] %v9722
        %10299 = vst [vmem:[%s9785] ss:$9 sm:$0xff] %v9723
        %v10300 = vld [vmem:[#allocation1] sm:$0xff]
        %10301 = vst [vmem:[#allocation1] ss:$9 sm:$0xff] %v9724
        %10302 = vst [vmem:[%s9773] ss:$9 sm:$0xff] %v9725
        %10303 = vst [vmem:[%s9775] ss:$9 sm:$0xff] %v9726
        %10304 = vst [vmem:[%s9777] ss:$9 sm:$0xff] %v9727
        %10305 = vst [vmem:[%s9779] ss:$9 sm:$0xff] %v9728
        %10306 = vst [vmem:[%s9781] ss:$9 sm:$0xff] %v9729
        %10307 = vst [vmem:[%s9783] ss:$9 sm:$0xff] %v9730
        %10308 = vst [vmem:[%s9785] ss:$9 sm:$0xff] %v9731
        %v10309 = vld [vmem:[#allocation1] sm:$0xff]
        %10310 = vst [vmem:[#allocation1] ss:$9 sm:$0xff] %v9732
        %10311 = vst [vmem:[%s9773] ss:$9 sm:$0xff] %v9733
        %10312 = vst [vmem:[%s9775] ss:$9 sm:$0xff] %v9734
        %10313 = vst [vmem:[%s9777] ss:$9 sm:$0xff] %v9735
        %10314 = vst [vmem:[%s9779] ss:$9 sm:$0xff] %v9736
        %10315 = vst [vmem:[%s9781] ss:$9 sm:$0xff] %v9737
        %10316 = vst [vmem:[%s9783] ss:$9 sm:$0xff] %v9738
        %10317 = vst [vmem:[%s9785] ss:$9 sm:$0xff] %v9739
        %v10318 = vld [vmem:[#allocation1] sm:$0xff]
        %10319 = vst [vmem:[#allocation1] ss:$9 sm:$0xff] %v9740
        %10320 = vst [vmem:[%s9773] ss:$9 sm:$0xff] %v9741
        %10321 = vst [vmem:[%s9775] ss:$9 sm:$0xff] %v9742
        %10322 = vst [vmem:[%s9777] ss:$9 sm:$0xff] %v9743
        %10323 = vst [vmem:[%s9779] ss:$9 sm:$0xff] %v9744
        %10324 = vst [vmem:[%s9781] ss:$9 sm:$0xff] %v9745
        %10325 = vst [vmem:[%s9783] ss:$9 sm:$0xff] %v9746
        %10326 = vst [vmem:[%s9785] ss:$9 sm:$0xff] %v9747
        %v10327 = vld [vmem:[#allocation1] sm:$0xff]
        %10328 = vst [vmem:[#allocation1] ss:$9 sm:$0xff] %v9748
        %10329 = vst [vmem:[%s9773] ss:$9 sm:$0xff] %v9749
        %10330 = vst [vmem:[%s9775] ss:$9 sm:$0xff] %v9750
        %10331 = vst [vmem:[%s9777] ss:$9 sm:$0xff] %v9751
        %10332 = vst [vmem:[%s9779] ss:$9 sm:$0xff] %v9752
        %10333 = vst [vmem:[%s9781] ss:$9 sm:$0xff] %v9753
        %10334 = vst [vmem:[%s9783] ss:$9 sm:$0xff] %v9754
        %10335 = vst [vmem:[%s9785] ss:$9 sm:$0xff] %v9755
        %v10336 = vld [vmem:[#allocation1] sm:$0xff]
        %10337 = vst [vmem:[#allocation1] ss:$9 sm:$0xff] %v9756
        %10338 = vst [vmem:[%s9773] ss:$9 sm:$0xff] %v9757
        %10339 = vst [vmem:[%s9775] ss:$9 sm:$0xff] %v9758
        %10340 = vst [vmem:[%s9777] ss:$9 sm:$0xff] %v9759
        %10341 = vst [vmem:[%s9779] ss:$9 sm:$0xff] %v9760
        %10342 = vst [vmem:[%s9781] ss:$9 sm:$0xff] %v9761
        %10343 = vst [vmem:[%s9783] ss:$9 sm:$0xff] %v9762
        %10344 = vst [vmem:[%s9785] ss:$9 sm:$0xff] %v9763
        %v10345 = vld [vmem:[#allocation1] sm:$0xff]
        %10346 = vst [vmem:[#allocation1] ss:$9 sm:$0xff] %v9764
        %10347 = vst [vmem:[%s9773] ss:$9 sm:$0xff] %v9765
        %10348 = vst [vmem:[%s9775] ss:$9 sm:$0xff] %v9766
        %10349 = vst [vmem:[%s9777] ss:$9 sm:$0xff] %v9767
        %10350 = vst [vmem:[%s9779] ss:$9 sm:$0xff] %v9768
        %10351 = vst [vmem:[%s9781] ss:$9 sm:$0xff] %v9769
        %10352 = vst [vmem:[%s9783] ss:$9 sm:$0xff] %v9770
        %10353 = vst [vmem:[%s9785] ss:$9 sm:$0xff] %v9771
        %v10354 = vld [vmem:[#allocation1] sm:$0xff]
        %10355 = vset.pattern.permute.xlu0 0
        %10356 = vperm.xlu0 %10355, %v9787
        %v10357 = vpop.permute.xlu0 %10356
        %10358 = vset.pattern.permute.xlu0 0
        %10359 = vperm.xlu0 %10358, %v9796
        %v10360 = vpop.permute.xlu0 %10359
        %10361 = vset.pattern.permute.xlu0 0
        %10362 = vperm.xlu0 %10361, %v9805
        %v10363 = vpop.permute.xlu0 %10362
        %10364 = vset.pattern.permute.xlu0 0
        %10365 = vperm.xlu0 %10364, %v9814
        %v10366 = vpop.permute.xlu0 %10365
        %10367 = vset.pattern.permute.xlu0 0
        %10368 = vperm.xlu0 %10367, %v9823
        %v10369 = vpop.permute.xlu0 %10368
        %10370 = vset.pattern.permute.xlu0 0
        %10371 = vperm.xlu0 %10370, %v9832
        %v10372 = vpop.permute.xlu0 %10371
        %10373 = vset.pattern.permute.xlu0 0
        %10374 = vperm.xlu0 %10373, %v9841
        %v10375 = vpop.permute.xlu0 %10374
        %10376 = vset.pattern.permute.xlu0 0
        %10377 = vperm.xlu0 %10376, %v9850
        %v10378 = vpop.permute.xlu0 %10377
        %10379 = vset.pattern.permute.xlu0 0
        %10380 = vperm.xlu0 %10379, %v9859
        %v10381 = vpop.permute.xlu0 %10380
        %10382 = vset.pattern.permute.xlu0 0
        %10383 = vperm.xlu0 %10382, %v9868
        %v10384 = vpop.permute.xlu0 %10383
        %10385 = vset.pattern.permute.xlu0 0
        %10386 = vperm.xlu0 %10385, %v9877
        %v10387 = vpop.permute.xlu0 %10386
        %10388 = vset.pattern.permute.xlu0 0
        %10389 = vperm.xlu0 %10388, %v9886
        %v10390 = vpop.permute.xlu0 %10389
        %10391 = vset.pattern.permute.xlu0 0
        %10392 = vperm.xlu0 %10391, %v9895
        %v10393 = vpop.permute.xlu0 %10392
        %10394 = vset.pattern.permute.xlu0 0
        %10395 = vperm.xlu0 %10394, %v9904
        %v10396 = vpop.permute.xlu0 %10395
        %10397 = vset.pattern.permute.xlu0 0
        %10398 = vperm.xlu0 %10397, %v9913
        %v10399 = vpop.permute.xlu0 %10398
        %10400 = vset.pattern.permute.xlu0 0
        %10401 = vperm.xlu0 %10400, %v9922
        %v10402 = vpop.permute.xlu0 %10401
        %10403 = vset.pattern.permute.xlu0 0
        %10404 = vperm.xlu0 %10403, %v9931
        %v10405 = vpop.permute.xlu0 %10404
        %10406 = vset.pattern.permute.xlu0 0
        %10407 = vperm.xlu0 %10406, %v9940
        %v10408 = vpop.permute.xlu0 %10407
        %10409 = vset.pattern.permute.xlu0 0
        %10410 = vperm.xlu0 %10409, %v9949
        %v10411 = vpop.permute.xlu0 %10410
        %10412 = vset.pattern.permute.xlu0 0
        %10413 = vperm.xlu0 %10412, %v9958
        %v10414 = vpop.permute.xlu0 %10413
        %10415 = vset.pattern.permute.xlu0 0
        %10416 = vperm.xlu0 %10415, %v9967
        %v10417 = vpop.permute.xlu0 %10416
        %10418 = vset.pattern.permute.xlu0 0
        %10419 = vperm.xlu0 %10418, %v9976
        %v10420 = vpop.permute.xlu0 %10419
        %10421 = vset.pattern.permute.xlu0 0
        %10422 = vperm.xlu0 %10421, %v9985
        %v10423 = vpop.permute.xlu0 %10422
        %10424 = vset.pattern.permute.xlu0 0
        %10425 = vperm.xlu0 %10424, %v9994
        %v10426 = vpop.permute.xlu0 %10425
        %10427 = vset.pattern.permute.xlu0 0
        %10428 = vperm.xlu0 %10427, %v10003
        %v10429 = vpop.permute.xlu0 %10428
        %10430 = vset.pattern.permute.xlu0 0
        %10431 = vperm.xlu0 %10430, %v10012
        %v10432 = vpop.permute.xlu0 %10431
        %10433 = vset.pattern.permute.xlu0 0
        %10434 = vperm.xlu0 %10433, %v10021
        %v10435 = vpop.permute.xlu0 %10434
        %10436 = vset.pattern.permute.xlu0 0
        %10437 = vperm.xlu0 %10436, %v10030
        %v10438 = vpop.permute.xlu0 %10437
        %10439 = vset.pattern.permute.xlu0 0
        %10440 = vperm.xlu0 %10439, %v10039
        %v10441 = vpop.permute.xlu0 %10440
        %10442 = vset.pattern.permute.xlu0 0
        %10443 = vperm.xlu0 %10442, %v10048
        %v10444 = vpop.permute.xlu0 %10443
        %10445 = vset.pattern.permute.xlu0 0
        %10446 = vperm.xlu0 %10445, %v10057
        %v10447 = vpop.permute.xlu0 %10446
        %10448 = vset.pattern.permute.xlu0 0
        %10449 = vperm.xlu0 %10448, %v10066
        %v10450 = vpop.permute.xlu0 %10449
        %10451 = vset.pattern.permute.xlu0 0
        %10452 = vperm.xlu0 %10451, %v10075
        %v10453 = vpop.permute.xlu0 %10452
        %10454 = vset.pattern.permute.xlu0 0
        %10455 = vperm.xlu0 %10454, %v10084
        %v10456 = vpop.permute.xlu0 %10455
        %10457 = vset.pattern.permute.xlu0 0
        %10458 = vperm.xlu0 %10457, %v10093
        %v10459 = vpop.permute.xlu0 %10458
        %10460 = vset.pattern.permute.xlu0 0
        %10461 = vperm.xlu0 %10460, %v10102
        %v10462 = vpop.permute.xlu0 %10461
        %10463 = vset.pattern.permute.xlu0 0
        %10464 = vperm.xlu0 %10463, %v10111
        %v10465 = vpop.permute.xlu0 %10464
        %10466 = vset.pattern.permute.xlu0 0
        %10467 = vperm.xlu0 %10466, %v10120
        %v10468 = vpop.permute.xlu0 %10467
        %10469 = vset.pattern.permute.xlu0 0
        %10470 = vperm.xlu0 %10469, %v10129
        %v10471 = vpop.permute.xlu0 %10470
        %10472 = vset.pattern.permute.xlu0 0
        %10473 = vperm.xlu0 %10472, %v10138
        %v10474 = vpop.permute.xlu0 %10473
        %10475 = vset.pattern.permute.xlu0 0
        %10476 = vperm.xlu0 %10475, %v10147
        %v10477 = vpop.permute.xlu0 %10476
        %10478 = vset.pattern.permute.xlu0 0
        %10479 = vperm.xlu0 %10478, %v10156
        %v10480 = vpop.permute.xlu0 %10479
        %10481 = vset.pattern.permute.xlu0 0
        %10482 = vperm.xlu0 %10481, %v10165
        %v10483 = vpop.permute.xlu0 %10482
        %10484 = vset.pattern.permute.xlu0 0
        %10485 = vperm.xlu0 %10484, %v10174
        %v10486 = vpop.permute.xlu0 %10485
        %10487 = vset.pattern.permute.xlu0 0
        %10488 = vperm.xlu0 %10487, %v10183
        %v10489 = vpop.permute.xlu0 %10488
        %10490 = vset.pattern.permute.xlu0 0
        %10491 = vperm.xlu0 %10490, %v10192
        %v10492 = vpop.permute.xlu0 %10491
        %10493 = vset.pattern.permute.xlu0 0
        %10494 = vperm.xlu0 %10493, %v10201
        %v10495 = vpop.permute.xlu0 %10494
        %10496 = vset.pattern.permute.xlu0 0
        %10497 = vperm.xlu0 %10496, %v10210
        %v10498 = vpop.permute.xlu0 %10497
        %10499 = vset.pattern.permute.xlu0 0
        %10500 = vperm.xlu0 %10499, %v10219
        %v10501 = vpop.permute.xlu0 %10500
        %10502 = vset.pattern.permute.xlu0 0
        %10503 = vperm.xlu0 %10502, %v10228
        %v10504 = vpop.permute.xlu0 %10503
        %10505 = vset.pattern.permute.xlu0 0
        %10506 = vperm.xlu0 %10505, %v10237
        %v10507 = vpop.permute.xlu0 %10506
        %10508 = vset.pattern.permute.xlu0 0
        %10509 = vperm.xlu0 %10508, %v10246
        %v10510 = vpop.permute.xlu0 %10509
        %10511 = vset.pattern.permute.xlu0 0
        %10512 = vperm.xlu0 %10511, %v10255
        %v10513 = vpop.permute.xlu0 %10512
        %10514 = vset.pattern.permute.xlu0 0
        %10515 = vperm.xlu0 %10514, %v10264
        %v10516 = vpop.permute.xlu0 %10515
        %10517 = vset.pattern.permute.xlu0 0
        %10518 = vperm.xlu0 %10517, %v10273
        %v10519 = vpop.permute.xlu0 %10518
        %10520 = vset.pattern.permute.xlu0 0
        %10521 = vperm.xlu0 %10520, %v10282
        %v10522 = vpop.permute.xlu0 %10521
        %10523 = vset.pattern.permute.xlu0 0
        %10524 = vperm.xlu0 %10523, %v10291
        %v10525 = vpop.permute.xlu0 %10524
        %10526 = vset.pattern.permute.xlu0 0
        %10527 = vperm.xlu0 %10526, %v10300
        %v10528 = vpop.permute.xlu0 %10527
        %10529 = vset.pattern.permute.xlu0 0
        %10530 = vperm.xlu0 %10529, %v10309
        %v10531 = vpop.permute.xlu0 %10530
        %10532 = vset.pattern.permute.xlu0 0
        %10533 = vperm.xlu0 %10532, %v10318
        %v10534 = vpop.permute.xlu0 %10533
        %10535 = vset.pattern.permute.xlu0 0
        %10536 = vperm.xlu0 %10535, %v10327
        %v10537 = vpop.permute.xlu0 %10536
        %10538 = vset.pattern.permute.xlu0 0
        %10539 = vperm.xlu0 %10538, %v10336
        %v10540 = vpop.permute.xlu0 %10539
        %10541 = vset.pattern.permute.xlu0 0
        %10542 = vperm.xlu0 %10541, %v10345
        %v10543 = vpop.permute.xlu0 %10542
        %10544 = vset.pattern.permute.xlu0 0
        %10545 = vperm.xlu0 %10544, %v10354
        %v10546 = vpop.permute.xlu0 %10545
        %v10547 = vlaneseq
        %v10548 = vand.u32 %v10547, 127
        %v10549 = vperm.slane %v10357, %v10548
        %v10550 = vadd.s32 %v10548, 4294967288
        %v10551 = vperm.slane %v10360, %v10550
        %vm10552 = vcmask 130112
        %v10553 = vsel %vm10552, %v10551, %v10549
        %v10554 = vadd.s32 %v10548, 4294967280
        %v10555 = vperm.slane %v10363, %v10554
        %vm10556 = vcmask 195712
        %v10557 = vsel %vm10556, %v10555, %v10553
        %v10558 = vadd.s32 %v10548, 4294967272
        %v10559 = vperm.slane %v10366, %v10558
        %vm10560 = vcmask 261312
        %v10561 = vsel %vm10560, %v10559, %v10557
        %v10562 = vadd.s32 %v10548, 4294967264
        %v10563 = vperm.slane %v10369, %v10562
        %vm10564 = vcmask 326912
        %v10565 = vsel %vm10564, %v10563, %v10561
        %v10566 = vadd.s32 %v10548, 4294967256
        %v10567 = vperm.slane %v10372, %v10566
        %vm10568 = vcmask 392512
        %v10569 = vsel %vm10568, %v10567, %v10565
        %v10570 = vadd.s32 %v10548, 4294967248
        %v10571 = vperm.slane %v10375, %v10570
        %vm10572 = vcmask 458112
        %v10573 = vsel %vm10572, %v10571, %v10569
        %v10574 = vadd.s32 %v10548, 4294967240
        %v10575 = vperm.slane %v10378, %v10574
        %vm10576 = vcmask 523712
        %v10577 = vsel %vm10576, %v10575, %v10573
        %v10578 = vadd.s32 %v10548, 4294967232
        %v10579 = vperm.slane %v10381, %v10578
        %vm10580 = vcmask 589312
        %v10581 = vsel %vm10580, %v10579, %v10577
        %v10582 = vadd.s32 %v10548, 4294967224
        %v10583 = vperm.slane %v10384, %v10582
        %vm10584 = vcmask 654912
        %v10585 = vsel %vm10584, %v10583, %v10581
        %v10586 = vadd.s32 %v10548, 4294967216
        %v10587 = vperm.slane %v10387, %v10586
        %vm10588 = vcmask 720512
        %v10589 = vsel %vm10588, %v10587, %v10585
        %v10590 = vadd.s32 %v10548, 4294967208
        %v10591 = vperm.slane %v10390, %v10590
        %vm10592 = vcmask 786112
        %v10593 = vsel %vm10592, %v10591, %v10589
        %v10594 = vadd.s32 %v10548, 4294967200
        %v10595 = vperm.slane %v10393, %v10594
        %vm10596 = vcmask 851712
        %v10597 = vsel %vm10596, %v10595, %v10593
        %v10598 = vadd.s32 %v10548, 4294967192
        %v10599 = vperm.slane %v10396, %v10598
        %vm10600 = vcmask 917312
        %v10601 = vsel %vm10600, %v10599, %v10597
        %v10602 = vadd.s32 %v10548, 4294967184
        %v10603 = vperm.slane %v10399, %v10602
        %vm10604 = vcmask 982912
        %v10605 = vsel %vm10604, %v10603, %v10601
        %v10606 = vadd.s32 %v10548, 4294967176
        %v10607 = vperm.slane %v10402, %v10606
        %vm10608 = vcmask 1048512
        %v10609 = vsel %vm10608, %v10607, %v10605
        %v10610 = vperm.slane %v10405, %v10548
        %v10611 = vperm.slane %v10408, %v10550
        %v10612 = vsel %vm10552, %v10611, %v10610
        %v10613 = vperm.slane %v10411, %v10554
        %v10614 = vsel %vm10556, %v10613, %v10612
        %v10615 = vperm.slane %v10414, %v10558
        %v10616 = vsel %vm10560, %v10615, %v10614
        %v10617 = vperm.slane %v10417, %v10562
        %v10618 = vsel %vm10564, %v10617, %v10616
        %v10619 = vperm.slane %v10420, %v10566
        %v10620 = vsel %vm10568, %v10619, %v10618
        %v10621 = vperm.slane %v10423, %v10570
        %v10622 = vsel %vm10572, %v10621, %v10620
        %v10623 = vperm.slane %v10426, %v10574
        %v10624 = vsel %vm10576, %v10623, %v10622
        %v10625 = vperm.slane %v10429, %v10578
        %v10626 = vsel %vm10580, %v10625, %v10624
        %v10627 = vperm.slane %v10432, %v10582
        %v10628 = vsel %vm10584, %v10627, %v10626
        %v10629 = vperm.slane %v10435, %v10586
        %v10630 = vsel %vm10588, %v10629, %v10628
        %v10631 = vperm.slane %v10438, %v10590
        %v10632 = vsel %vm10592, %v10631, %v10630
        %v10633 = vperm.slane %v10441, %v10594
        %v10634 = vsel %vm10596, %v10633, %v10632
        %v10635 = vperm.slane %v10444, %v10598
        %v10636 = vsel %vm10600, %v10635, %v10634
        %v10637 = vperm.slane %v10447, %v10602
        %v10638 = vsel %vm10604, %v10637, %v10636
        %v10639 = vperm.slane %v10450, %v10606
        %v10640 = vsel %vm10608, %v10639, %v10638
        %v10641 = vperm.slane %v10453, %v10548
        %v10642 = vperm.slane %v10456, %v10550
        %v10643 = vsel %vm10552, %v10642, %v10641
        %v10644 = vperm.slane %v10459, %v10554
        %v10645 = vsel %vm10556, %v10644, %v10643
        %v10646 = vperm.slane %v10462, %v10558
        %v10647 = vsel %vm10560, %v10646, %v10645
        %v10648 = vperm.slane %v10465, %v10562
        %v10649 = vsel %vm10564, %v10648, %v10647
        %v10650 = vperm.slane %v10468, %v10566
        %v10651 = vsel %vm10568, %v10650, %v10649
        %v10652 = vperm.slane %v10471, %v10570
        %v10653 = vsel %vm10572, %v10652, %v10651
        %v10654 = vperm.slane %v10474, %v10574
        %v10655 = vsel %vm10576, %v10654, %v10653
        %v10656 = vperm.slane %v10477, %v10578
        %v10657 = vsel %vm10580, %v10656, %v10655
        %v10658 = vperm.slane %v10480, %v10582
        %v10659 = vsel %vm10584, %v10658, %v10657
        %v10660 = vperm.slane %v10483, %v10586
        %v10661 = vsel %vm10588, %v10660, %v10659
        %v10662 = vperm.slane %v10486, %v10590
        %v10663 = vsel %vm10592, %v10662, %v10661
        %v10664 = vperm.slane %v10489, %v10594
        %v10665 = vsel %vm10596, %v10664, %v10663
        %v10666 = vperm.slane %v10492, %v10598
        %v10667 = vsel %vm10600, %v10666, %v10665
        %v10668 = vperm.slane %v10495, %v10602
        %v10669 = vsel %vm10604, %v10668, %v10667
        %v10670 = vperm.slane %v10498, %v10606
        %v10671 = vsel %vm10608, %v10670, %v10669
        %v10672 = vperm.slane %v10501, %v10548
        %v10673 = vperm.slane %v10504, %v10550
        %v10674 = vsel %vm10552, %v10673, %v10672
        %v10675 = vperm.slane %v10507, %v10554
        %v10676 = vsel %vm10556, %v10675, %v10674
        %v10677 = vperm.slane %v10510, %v10558
        %v10678 = vsel %vm10560, %v10677, %v10676
        %v10679 = vperm.slane %v10513, %v10562
        %v10680 = vsel %vm10564, %v10679, %v10678
        %v10681 = vperm.slane %v10516, %v10566
        %v10682 = vsel %vm10568, %v10681, %v10680
        %v10683 = vperm.slane %v10519, %v10570
        %v10684 = vsel %vm10572, %v10683, %v10682
        %v10685 = vperm.slane %v10522, %v10574
        %v10686 = vsel %vm10576, %v10685, %v10684
        %v10687 = vperm.slane %v10525, %v10578
        %v10688 = vsel %vm10580, %v10687, %v10686
        %v10689 = vperm.slane %v10528, %v10582
        %v10690 = vsel %vm10584, %v10689, %v10688
        %v10691 = vperm.slane %v10531, %v10586
        %v10692 = vsel %vm10588, %v10691, %v10690
        %v10693 = vperm.slane %v10534, %v10590
        %v10694 = vsel %vm10592, %v10693, %v10692
        %v10695 = vperm.slane %v10537, %v10594
        %v10696 = vsel %vm10596, %v10695, %v10694
        %v10697 = vperm.slane %v10540, %v10598
        %v10698 = vsel %vm10600, %v10697, %v10696
        %v10699 = vperm.slane %v10543, %v10602
        %v10700 = vsel %vm10604, %v10699, %v10698
        %v10701 = vperm.slane %v10546, %v10606
        %v10702 = vsel %vm10608, %v10701, %v10700
        %v10703 = vrot.slane %v10640, 7
        %v10704 = vrot.slane %v10671, 6
        %v10705 = vrot.slane %v10702, 5
        %vm10706 = vcmask 1040384
        %v10707 = vsel %vm10706, %v10609, %v10703
        %vm10708 = vcmask 1042434
        %v10709 = vsel %vm10708, %v10704, %v10705
        %vm10710 = vcmask 1041408
        %v10711 = vsel %vm10710, %v10707, %v10709
        %v10713 = vlaneseq
        %vm10714 = vcmp.ge.s32.totalorder %v10713, 0
        %vm10715 = vcmp.lt.s32.totalorder %v10713, 512
        %vm10716 = vmand %vm10714, %vm10715
        %10717 = vst.msk [vmem:[%s301] sm:$0xf] %vm10716, %v10711
        %s10718 = sand.u32 %s144, 1
        %s10719 = scalar_lea.sflag [#allocation5], %s10718
        %s10720 = sand.u32 %s144, 1
        %s10721 = smul.addr %s10720, 4
        %s10722 = scalar_lea.vmem [#allocation11], %s10721
        // Predicated region
        $region57: #{tpu_custom_call.1} parent=39 // pred_check
          %p10723 = pneg %p154
        $region58: #{tpu_custom_call.1} parent=39 // pred_check_branch
          %10725 = sbr.rel (%p10723) target = $region60
        $region59: #{tpu_custom_call.1} parent=39 // pred_region
          %s10726 = smul.u32 4, %s26
          %10728 = vsyncadd %s10719, 0
          %s10729 = scalar_lea.hbm %s5, %s10726
          %s10731 = sshll.u32 %s10722, 4
          %s10732 = int_to_ptr.vmem [resolvable:$true] %s10731
          %s10733 = sshll.u32 %s10729, 4
          %s10734 = int_to_ptr.hbm [resolvable:$true] %s10733
          %10736 = dma.vmem_to_hbm [thread:$0]  %s10732, 64, %s10734, %s10719
        $region60: #{tpu_custom_call.1} parent=39 // pred_fallthru
          _
      $region40: #{tpu_custom_call.1} parent=5 // pred_fallthru
        _
      %p10737 = scmp.le.s32.totalorder 2, %s21
      // Predicated region
      $region61: #{tpu_custom_call.1} parent=5 // pred_check
        %p10738 = pneg %p10737
      $region62: #{tpu_custom_call.1} parent=5 // pred_check_branch
        %10740 = sbr.rel (%p10738) target = $region64
      $region63: #{tpu_custom_call.1} parent=5 // pred_region
        %s10741 = ssub.s32 %s21, 2
        // Predicated region
        $region65: #{tpu_custom_call.1} parent=63 // pred_check
          %p10742 = pneg %p160
        $region66: #{tpu_custom_call.1} parent=63 // pred_check_branch
          %10744 = sbr.rel (%p10742) target = $region68
        $region67: #{tpu_custom_call.1} parent=63 // pred_region
          %s10745 = sand.u32 %s145, 1
          %s10746 = scalar_lea.sflag [#allocation5], %s10745
          %s10747 = sand.u32 %s145, 1
          %s10748 = smul.addr %s10747, 4
          %s10749 = scalar_lea.vmem [#allocation11], %s10748
          %10751 = dma.done %s10746, 64
        $region68: #{tpu_custom_call.1} parent=63 // pred_fallthru
          _
      $region64: #{tpu_custom_call.1} parent=5 // pred_fallthru
        _
    $region6: #{tpu_custom_call.1} parent=1 // loop_footer
      %s25 = sadd.s32 1, %s21
    $region7: #{tpu_custom_call.1} parent=1 // loop_footer_branch
      %20 = sbr.rel target = $region3
    $region8: #{tpu_custom_call.1} parent=1 // loop_exit
      _
    %10752 = vsyncpa [#allocation4], 1
    %s10753 = scalar_lea.sflag [#allocation4], 1
    %10754 = vsyncpa %s10753, 1
    %10755 = vsyncpa [#allocation7], 1
    %10756 = vsyncpa [#allocation10], 1
    %10757 = vsyncpa [#allocation5], 1
    %s10758 = scalar_lea.sflag [#allocation5], 1
    %10759 = vsyncpa %s10758, 1

</llo_original>
